<compile_context>
chip_gen: v5e
topology: v5e:2x2
jax: 0.10.0
libtpu: 0.0.40
codegen_flags: <defaults>
</compile_context>

<pallas_src>
import jax
import jax.numpy as jnp
from jax.experimental import pallas as pl
from jax.experimental.pallas import tpu as pltpu

NUM_FEATURE = 2048          # num_feature in the PyTorch module
BOTTLENECK = 256            # bottleneck_layer1: Linear(2048, 256)
NUM_CLASSES = 65            # len(dset_classes)
NUM_CLASSES_PAD = 128       # lane-dense padded classifier width (sliced to 65)


def _round_up(n, m):
    return ((n + m - 1) // m) * m


def _nbytes(shape, dtype):
    n = 1
    for d in shape:
        n *= int(d)
    return n * jnp.dtype(dtype).itemsize


def _vmem_limit_cap():
    """Generation-aware VMEM budget cap (leave headroom for Mosaic scratch)."""
    try:
        phys = int(pltpu.get_tpu_info().vmem_capacity_bytes)
    except Exception:
        phys = 64 << 20          # assume the smallest (v7x) if the query fails
    return max(phys - (16 << 20), 32 << 20)


def bsp_cdan_kernel(x_ref, wfc_ref, bfc_ref, wbn_ref, bbn_ref, wcl_ref, bcl_ref,
                    out_ref, outc_ref, acc_ref):
    k = pl.program_id(1)

    @pl.when(k == 0)
    def _():
        # Start the accumulator at the broadcast fc bias: saves a (tb,2048) f32
        # add in the epilogue.
        acc_ref[...] = jnp.broadcast_to(bfc_ref[...], acc_ref.shape)

    # feature = model_fc(x): K-tiled bf16 matmul with f32 accumulation in VMEM.
    acc_ref[...] += jnp.dot(x_ref[...], wfc_ref[...],
                            preferred_element_type=jnp.float32)

    @pl.when(k == pl.num_programs(1) - 1)
    def _():
        feat = acc_ref[...]                                      # f32, bias included
        # out = Dropout(ReLU(Linear(feature)))  -- dropout is identity in eval.
        bn = jnp.dot(feat.astype(jnp.bfloat16), wbn_ref[...],
                     preferred_element_type=jnp.float32) + bbn_ref[...]
        bn = jnp.maximum(bn, 0.0)
        out_ref[...] = bn
        # outC = classifier(out)  (lane-padded to 128; wrapper slices to 65).
        outc_ref[...] = jnp.dot(bn.astype(jnp.bfloat16), wcl_ref[...],
                                preferred_element_type=jnp.float32) + bcl_ref[...]


def prepare_params(params, in_features, *, tk_max=2048):
    """One-time operand prep (call once, reuse across forward calls).

    Casts weights to bf16, zero-pads wfc along K to a tile-friendly Kp and the
    classifier width to NUM_CLASSES_PAD. Zero padding is result-neutral.
    """
    wfc, bfc, wbn, bbn, wcl, bcl = params
    K = int(in_features)

    Kp = _round_up(K, 128)
    if Kp <= tk_max:
        tk = Kp
    else:
        tk = tk_max
        Kp = _round_up(K, tk)

    wfc_p = jnp.zeros((Kp, NUM_FEATURE), jnp.bfloat16).at[:K, :].set(
        wfc.astype(jnp.bfloat16))
    wbn_b = wbn.astype(jnp.bfloat16)
    wcl_p = jnp.zeros((BOTTLENECK, NUM_CLASSES_PAD), jnp.bfloat16).at[
        :, :NUM_CLASSES].set(wcl.astype(jnp.bfloat16))
    bfc_f = bfc.astype(jnp.float32).reshape(1, NUM_FEATURE)
    bbn_f = bbn.astype(jnp.float32).reshape(1, BOTTLENECK)
    bcl_p = jnp.zeros((1, NUM_CLASSES_PAD), jnp.float32).at[
        :, :NUM_CLASSES].set(bcl.astype(jnp.float32).reshape(1, NUM_CLASSES))

    return {
        "wfc": wfc_p, "bfc": bfc_f, "wbn": wbn_b, "bbn": bbn_f,
        "wcl": wcl_p, "bcl": bcl_p, "K": K, "Kp": Kp, "tk": tk,
    }


def bsp_cdan_forward(x, prepared, *, tb_max=512):
    """Returns (out [B, 256], outC [B, 65]) exactly like BSP_CDAN.forward."""
    wfc_p = prepared["wfc"]
    bfc_f = prepared["bfc"]
    wbn_b = prepared["wbn"]
    bbn_f = prepared["bbn"]
    wcl_p = prepared["wcl"]
    bcl_p = prepared["bcl"]
    K, Kp, tk = prepared["K"], prepared["Kp"], prepared["tk"]

    B = x.shape[0]

    # ---- batch tiling: one batch tile whenever possible so wfc is streamed
    #      from HBM exactly once (weight traffic no longer scales with Bp/tb).
    Bp = _round_up(max(B, 16), 16)
    if Bp <= tb_max:
        tb = Bp
    else:
        tb = tb_max
        Bp = _round_up(Bp, tb)

    # ---- activation prep: single cast-to-bf16 + zero-pad pass ----
    x_pad = jnp.zeros((Bp, Kp), jnp.bfloat16).at[:B, :K].set(
        x.reshape(B, -1).astype(jnp.bfloat16))

    grid = (Bp // tb, Kp // tk)   # (batch tiles "parallel", K reduction last)

    in_specs = [
        pl.BlockSpec((tb, tk), lambda i, k: (i, k)),                        # x
        pl.BlockSpec((tk, NUM_FEATURE), lambda i, k: (k, 0)),               # wfc
        pl.BlockSpec((1, NUM_FEATURE), lambda i, k: (0, 0)),                # bfc
        pl.BlockSpec((NUM_FEATURE, BOTTLENECK), lambda i, k: (0, 0)),       # wbn
        pl.BlockSpec((1, BOTTLENECK), lambda i, k: (0, 0)),                 # bbn
        pl.BlockSpec((BOTTLENECK, NUM_CLASSES_PAD), lambda i, k: (0, 0)),   # wcl
        pl.BlockSpec((1, NUM_CLASSES_PAD), lambda i, k: (0, 0)),            # bcl
    ]
    out_specs = (
        pl.BlockSpec((tb, BOTTLENECK), lambda i, k: (i, 0)),
        pl.BlockSpec((tb, NUM_CLASSES_PAD), lambda i, k: (i, 0)),
    )
    out_shapes = (
        jax.ShapeDtypeStruct((Bp, BOTTLENECK), jnp.float32),
        jax.ShapeDtypeStruct((Bp, NUM_CLASSES_PAD), jnp.float32),
    )
    scratch_shapes = [pltpu.VMEM((tb, NUM_FEATURE), jnp.float32)]

    # ---- VMEM budget from actual tile sizes (2x double-buffer + scratch),
    #      capped generation-aware (leaves headroom on v7x's 64 MiB) ----
    block_bytes = (
        _nbytes((tb, tk), jnp.bfloat16)
        + _nbytes((tk, NUM_FEATURE), jnp.bfloat16)
        + _nbytes((1, NUM_FEATURE), jnp.float32)
        + _nbytes((NUM_FEATURE, BOTTLENECK), jnp.bfloat16)
        + _nbytes((1, BOTTLENECK), jnp.float32)
        + _nbytes((BOTTLENECK, NUM_CLASSES_PAD), jnp.bfloat16)
        + _nbytes((1, NUM_CLASSES_PAD), jnp.float32)
        + _nbytes((tb, BOTTLENECK), jnp.float32)
        + _nbytes((tb, NUM_CLASSES_PAD), jnp.float32)
    )
    scratch_bytes = _nbytes((tb, NUM_FEATURE), jnp.float32)
    vmem_limit = int(min(2 * block_bytes + scratch_bytes + (8 << 20),
                         _vmem_limit_cap()))

    flops = 2 * Bp * (Kp * NUM_FEATURE
                      + NUM_FEATURE * BOTTLENECK
                      + BOTTLENECK * NUM_CLASSES_PAD)
    bytes_accessed = (
        _nbytes(x_pad.shape, x_pad.dtype) + _nbytes(wfc_p.shape, wfc_p.dtype)
        + _nbytes(wbn_b.shape, wbn_b.dtype) + _nbytes(wcl_p.shape, wcl_p.dtype)
        + _nbytes(bfc_f.shape, bfc_f.dtype) + _nbytes(bbn_f.shape, bbn_f.dtype)
        + _nbytes(bcl_p.shape, bcl_p.dtype)
        + _nbytes((Bp, BOTTLENECK), jnp.float32)
        + _nbytes((Bp, NUM_CLASSES_PAD), jnp.float32))
    cost = pl.CostEstimate(flops=flops, transcendentals=0,
                           bytes_accessed=bytes_accessed)

    out_p, outc_p = pl.pallas_call(
        bsp_cdan_kernel,
        out_shape=out_shapes,
        grid_spec=pltpu.PrefetchScalarGridSpec(
            num_scalar_prefetch=0,
            grid=grid,
            in_specs=in_specs,
            out_specs=out_specs,
            scratch_shapes=scratch_shapes),
        compiler_params=pltpu.CompilerParams(
            dimension_semantics=("parallel", "arbitrary"),
            vmem_limit_bytes=vmem_limit),
        cost_estimate=cost,
    )(x_pad, wfc_p, bfc_f, wbn_b, bbn_f, wcl_p, bcl_p)

    return out_p[:B, :], outc_p[:B, :NUM_CLASSES]


def init_params(key, in_features):
    """Deterministic parameter init mirroring init_weights (xavier_normal_ for
    Linear weights, zeros for biases). Weights stored as [in, out] so the kernel
    computes x @ W + b  (==  x @ W_torch.T + b)."""
    k_fc, k_bn, k_cl = jax.random.split(key, 3)

    def xavier_normal(k, fan_in, fan_out):
        std = jnp.sqrt(2.0 / (fan_in + fan_out))
        return (std * jax.random.normal(k, (fan_in, fan_out))).astype(jnp.float32)

    wfc = xavier_normal(k_fc, in_features, NUM_FEATURE)
    bfc = jnp.zeros((1, NUM_FEATURE), jnp.float32)
    wbn = xavier_normal(k_bn, NUM_FEATURE, BOTTLENECK)
    bbn = jnp.zeros((1, BOTTLENECK), jnp.float32)
    wcl = xavier_normal(k_cl, BOTTLENECK, NUM_CLASSES)
    bcl = jnp.zeros((1, NUM_CLASSES), jnp.float32)
    return (wfc, bfc, wbn, bbn, wcl, bcl)


if __name__ == "__main__":
    key = jax.random.PRNGKey(0)
    k_x, k_p = jax.random.split(key)

    # Small NCHW input consistent with an image-feature pipeline.
    B, C, H, W = 2, 4, 16, 16
    x = jax.random.normal(k_x, (B, C, H, W), dtype=jnp.float32)

    params = init_params(k_p, C * H * W)
    prepared = prepare_params(params, C * H * W)          # one-time weight prep
    prepared = jax.block_until_ready(prepared)

    out, outC = bsp_cdan_forward(x, prepared)
    out, outC = jax.block_until_ready(out), jax.block_until_ready(outC)

    # Pure-JAX reference with the same bf16 matmul inputs / f32 accumulation.
    wfc, bfc, wbn, bbn, wcl, bcl = params
    xb = x.reshape(B, -1).astype(jnp.bfloat16)
    feat_r = jnp.dot(xb, wfc.astype(jnp.bfloat16),
                     preferred_element_type=jnp.float32) + bfc
    out_r = jnp.maximum(
        jnp.dot(feat_r.astype(jnp.bfloat16), wbn.astype(jnp.bfloat16),
                preferred_element_type=jnp.float32) + bbn, 0.0)
    outC_r = jnp.dot(out_r.astype(jnp.bfloat16), wcl.astype(jnp.bfloat16),
                     preferred_element_type=jnp.float32) + bcl

    assert out.shape == (B, BOTTLENECK) and outC.shape == (B, NUM_CLASSES)
    assert jnp.allclose(out, out_r, atol=3e-2, rtol=3e-2)
    assert jnp.allclose(outC, outC_r, atol=3e-2, rtol=3e-2)

    print("KERNEL_OK")
</pallas_src>

<mosaic_0001>
module attributes {stable_mosaic.version = 11 : i64} {
  func.func @bsp_cdan_kernel(%arg0: i32, %arg1: i32, %arg2: memref<16x1024xbf16, #tpu.memory_space<vmem>>, %arg3: memref<1024x2048xbf16, #tpu.memory_space<vmem>>, %arg4: memref<1x2048xf32, #tpu.memory_space<vmem>>, %arg5: memref<2048x256xbf16, #tpu.memory_space<vmem>>, %arg6: memref<1x256xf32, #tpu.memory_space<vmem>>, %arg7: memref<256x128xbf16, #tpu.memory_space<vmem>>, %arg8: memref<1x128xf32, #tpu.memory_space<vmem>>, %arg9: memref<16x256xf32, #tpu.memory_space<vmem>>, %arg10: memref<16x128xf32, #tpu.memory_space<vmem>>, %arg11: memref<16x2048xf32, #tpu.memory_space<vmem>>) attributes {dimension_semantics = [#tpu.dimension_semantics<parallel>, #tpu.dimension_semantics<arbitrary>], iteration_bounds = array<i64: 1, 1>, scalar_prefetch = 0 : i64, scratch_operands = 1 : i64, tpu.core_type = #tpu.core_type<tc>, window_params = [{transform_indices = @transform_0, window_bounds = array<i64: 16, 1024>}, {transform_indices = @transform_1, window_bounds = array<i64: 1024, 2048>}, {pipeline_mode = #tpu.pipeline_mode<synchronous>, transform_indices = @transform_2, window_bounds = array<i64: 1, 2048>}, {pipeline_mode = #tpu.pipeline_mode<synchronous>, transform_indices = @transform_3, window_bounds = array<i64: 2048, 256>}, {pipeline_mode = #tpu.pipeline_mode<synchronous>, transform_indices = @transform_4, window_bounds = array<i64: 1, 256>}, {pipeline_mode = #tpu.pipeline_mode<synchronous>, transform_indices = @transform_5, window_bounds = array<i64: 256, 128>}, {pipeline_mode = #tpu.pipeline_mode<synchronous>, transform_indices = @transform_6, window_bounds = array<i64: 1, 128>}, {transform_indices = @transform_7, window_bounds = array<i64: 16, 256>}, {transform_indices = @transform_8, window_bounds = array<i64: 16, 128>}]} {
    %c0_i32 = arith.constant 0 : i32
    %0 = arith.cmpi eq, %arg1, %c0_i32 : i32
    %1 = arith.extui %0 : i1 to i32
    %c0_i32_0 = arith.constant 0 : i32
    %2 = arith.cmpi ne, %1, %c0_i32_0 : i32
    scf.if %2 {
      %c0_10 = arith.constant 0 : index
      %c0_11 = arith.constant 0 : index
      %12 = vector.load %arg4[%c0_10, %c0_11] : memref<1x2048xf32, #tpu.memory_space<vmem>>, vector<1x2048xf32>
      %13 = vector.shape_cast %12 : vector<1x2048xf32> to vector<1x2048xf32>
      %14 = vector.broadcast %13 : vector<1x2048xf32> to vector<16x2048xf32>
      %c0_12 = arith.constant 0 : index
      %c0_13 = arith.constant 0 : index
      %15 = vector.load %arg11[%c0_12, %c0_13] : memref<16x2048xf32, #tpu.memory_space<vmem>>, vector<16x2048xf32>
      tpu.vector_store %arg11[%c0_12, %c0_13], %14 {strides = array<i32>} : memref<16x2048xf32, #tpu.memory_space<vmem>>, vector<16x2048xf32>,
    } else {
    }
    %c0 = arith.constant 0 : index
    %c0_1 = arith.constant 0 : index
    %3 = vector.load %arg11[%c0, %c0_1] : memref<16x2048xf32, #tpu.memory_space<vmem>>, vector<16x2048xf32>
    %c0_2 = arith.constant 0 : index
    %c0_3 = arith.constant 0 : index
    %4 = vector.load %arg2[%c0_2, %c0_3] : memref<16x1024xbf16, #tpu.memory_space<vmem>>, vector<16x1024xbf16>
    %c0_4 = arith.constant 0 : index
    %c0_5 = arith.constant 0 : index
    %5 = vector.load %arg3[%c0_4, %c0_5] : memref<1024x2048xbf16, #tpu.memory_space<vmem>>, vector<1024x2048xbf16>
    %cst = arith.constant dense<0.000000e+00> : vector<16x2048xf32>
    %6 = tpu.matmul %4, %5, %cst {dimension_numbers = #tpu.dot_dimension_numbers<[1], [0], [0], [1], [0, 0, 1, 1], [], []>} : vector<16x1024xbf16>, vector<1024x2048xbf16>, vector<16x2048xf32> -> vector<16x2048xf32>
    %7 = arith.addf %3, %6 : vector<16x2048xf32>
    %c0_6 = arith.constant 0 : index
    %c0_7 = arith.constant 0 : index
    %8 = vector.load %arg11[%c0_6, %c0_7] : memref<16x2048xf32, #tpu.memory_space<vmem>>, vector<16x2048xf32>
    tpu.vector_store %arg11[%c0_6, %c0_7], %7 {strides = array<i32>} : memref<16x2048xf32, #tpu.memory_space<vmem>>, vector<16x2048xf32>,
    %c0_i32_8 = arith.constant 0 : i32
    %9 = arith.cmpi eq, %arg1, %c0_i32_8 : i32
    %10 = arith.extui %9 : i1 to i32
    %c0_i32_9 = arith.constant 0 : i32
    %11 = arith.cmpi ne, %10, %c0_i32_9 : i32
    scf.if %11 {
      %c0_10 = arith.constant 0 : index
      %c0_11 = arith.constant 0 : index
      %12 = vector.load %arg11[%c0_10, %c0_11] : memref<16x2048xf32, #tpu.memory_space<vmem>>, vector<16x2048xf32>
      %13 = arith.truncf %12 : vector<16x2048xf32> to vector<16x2048xbf16>
      %c0_12 = arith.constant 0 : index
      %c0_13 = arith.constant 0 : index
      %14 = vector.load %arg5[%c0_12, %c0_13] : memref<2048x256xbf16, #tpu.memory_space<vmem>>, vector<2048x256xbf16>
      %cst_14 = arith.constant dense<0.000000e+00> : vector<16x256xf32>
      %15 = tpu.matmul %13, %14, %cst_14 {dimension_numbers = #tpu.dot_dimension_numbers<[1], [0], [0], [1], [0, 0, 1, 1], [], []>} : vector<16x2048xbf16>, vector<2048x256xbf16>, vector<16x256xf32> -> vector<16x256xf32>
      %c0_15 = arith.constant 0 : index
      %c0_16 = arith.constant 0 : index
      %16 = vector.load %arg6[%c0_15, %c0_16] : memref<1x256xf32, #tpu.memory_space<vmem>>, vector<1x256xf32>
      %17 = vector.broadcast %16 : vector<1x256xf32> to vector<16x256xf32>
      %18 = arith.addf %15, %17 : vector<16x256xf32>
      %cst_17 = arith.constant 0.000000e+00 : f32
      %19 = vector.broadcast %cst_17 : f32 to vector<16x256xf32>
      %20 = arith.maximumf %18, %19 : vector<16x256xf32>
      %c0_18 = arith.constant 0 : index
      %c0_19 = arith.constant 0 : index
      %21 = vector.load %arg9[%c0_18, %c0_19] : memref<16x256xf32, #tpu.memory_space<vmem>>, vector<16x256xf32>
      tpu.vector_store %arg9[%c0_18, %c0_19], %20 {strides = array<i32>} : memref<16x256xf32, #tpu.memory_space<vmem>>, vector<16x256xf32>,
      %22 = arith.truncf %20 : vector<16x256xf32> to vector<16x256xbf16>
      %c0_20 = arith.constant 0 : index
      %c0_21 = arith.constant 0 : index
      %23 = vector.load %arg7[%c0_20, %c0_21] : memref<256x128xbf16, #tpu.memory_space<vmem>>, vector<256x128xbf16>
      %cst_22 = arith.constant dense<0.000000e+00> : vector<16x128xf32>
      %24 = tpu.matmul %22, %23, %cst_22 {dimension_numbers = #tpu.dot_dimension_numbers<[1], [0], [0], [1], [0, 0, 1, 1], [], []>} : vector<16x256xbf16>, vector<256x128xbf16>, vector<16x128xf32> -> vector<16x128xf32>
      %c0_23 = arith.constant 0 : index
      %c0_24 = arith.constant 0 : index
      %25 = vector.load %arg8[%c0_23, %c0_24] : memref<1x128xf32, #tpu.memory_space<vmem>>, vector<1x128xf32>
      %26 = vector.broadcast %25 : vector<1x128xf32> to vector<16x128xf32>
      %27 = arith.addf %24, %26 : vector<16x128xf32>
      %c0_25 = arith.constant 0 : index
      %c0_26 = arith.constant 0 : index
      %28 = vector.load %arg10[%c0_25, %c0_26] : memref<16x128xf32, #tpu.memory_space<vmem>>, vector<16x128xf32>
      tpu.vector_store %arg10[%c0_25, %c0_26], %27 {strides = array<i32>} : memref<16x128xf32, #tpu.memory_space<vmem>>, vector<16x128xf32>,
    } else {
    }
    return
  }
  func.func @transform_0(%arg0: i32, %arg1: i32) -> (i32, i32) {
    %c0_i32 = arith.constant 0 : i32
    return %arg0, %arg1 : i32, i32
  }
  func.func @transform_1(%arg0: i32, %arg1: i32) -> (i32, i32) {
    %c0_i32 = arith.constant 0 : i32
    %c0_i32_0 = arith.constant 0 : i32
    return %arg1, %c0_i32 : i32, i32
  }
  func.func @transform_2(%arg0: i32, %arg1: i32) -> (i32, i32) {
    %c0_i32 = arith.constant 0 : i32
    %c0_i32_0 = arith.constant 0 : i32
    %c0_i32_1 = arith.constant 0 : i32
    return %c0_i32, %c0_i32_0 : i32, i32
  }
  func.func @transform_3(%arg0: i32, %arg1: i32) -> (i32, i32) {
    %c0_i32 = arith.constant 0 : i32
    %c0_i32_0 = arith.constant 0 : i32
    %c0_i32_1 = arith.constant 0 : i32
    return %c0_i32, %c0_i32_0 : i32, i32
  }
  func.func @transform_4(%arg0: i32, %arg1: i32) -> (i32, i32) {
    %c0_i32 = arith.constant 0 : i32
    %c0_i32_0 = arith.constant 0 : i32
    %c0_i32_1 = arith.constant 0 : i32
    return %c0_i32, %c0_i32_0 : i32, i32
  }
  func.func @transform_5(%arg0: i32, %arg1: i32) -> (i32, i32) {
    %c0_i32 = arith.constant 0 : i32
    %c0_i32_0 = arith.constant 0 : i32
    %c0_i32_1 = arith.constant 0 : i32
    return %c0_i32, %c0_i32_0 : i32, i32
  }
  func.func @transform_6(%arg0: i32, %arg1: i32) -> (i32, i32) {
    %c0_i32 = arith.constant 0 : i32
    %c0_i32_0 = arith.constant 0 : i32
    %c0_i32_1 = arith.constant 0 : i32
    return %c0_i32, %c0_i32_0 : i32, i32
  }
  func.func @transform_7(%arg0: i32, %arg1: i32) -> (i32, i32) {
    %c0_i32 = arith.constant 0 : i32
    %c0_i32_0 = arith.constant 0 : i32
    return %arg0, %c0_i32 : i32, i32
  }
  func.func @transform_8(%arg0: i32, %arg1: i32) -> (i32, i32) {
    %c0_i32 = arith.constant 0 : i32
    %c0_i32_0 = arith.constant 0 : i32
    return %arg0, %c0_i32 : i32, i32
  }
}

</mosaic_0001>

<llo_original>
// kernel: tpu_custom_call.1
$region0: #{tpu_custom_call.1}
  #allocation0 [shape = 'u32[]', space=smem, size = 0x4, offset = 0x4, fixed_abs, tag = 'smem constant byte address 0x4 - core index']
  #allocation1 [shape = 'u32[72,128]{1,0:T(1,128)}', space=vmem, size = 0x9000, scoped, tag = 'internal scratch']
  #allocation2 [shape = 'f32[16,2048]{1,0:T(8,128)}', space=vmem, size = 0x20000, scoped, tag = 'scratch operand']
  %s0 = inlined_call_operand.hbm [shape: bf16[16,1024], index: 0, kind: input, shape index: {}]
  %s1 = inlined_call_operand.hbm [shape: bf16[1024,2048], index: 1, kind: input, shape index: {}]
  %s2 = inlined_call_operand.hbm [shape: f32[1,2048], index: 2, kind: input, shape index: {}]
  %s3 = inlined_call_operand.hbm [shape: bf16[2048,256], index: 3, kind: input, shape index: {}]
  %s4 = inlined_call_operand.hbm [shape: f32[1,256], index: 4, kind: input, shape index: {}]
  %s5 = inlined_call_operand.hbm [shape: bf16[256,128], index: 5, kind: input, shape index: {}]
  %s6 = inlined_call_operand.hbm [shape: f32[1,128], index: 6, kind: input, shape index: {}]
  %s7 = inlined_call_operand.hbm [shape: f32[16,256], index: 7, kind: output, shape index: {0}]
  %s8 = inlined_call_operand.hbm [shape: f32[16,128], index: 8, kind: output, shape index: {1}]
  %9 = xla_tuple %s7, %s8
  %s10 = sld [smem:[#allocation0]]
  $region82: #{tpu_custom_call.1} parent=0
    _
  %s12 = ssub.s32 1, %s10
  %s13 = scalar_select 0, %s12, %s10
  $region1: #{tpu_custom_call.1} parent=0
    #allocation3 [shape = 'u8[32768]{0}', space=vmem, size = 0x8000, scoped, tag = 'input window, operand 0, single buffered']
    #allocation4 [shape = 's32[1]{0}', space=sflag, size = 0x4, scoped, tag = 'scoped memory for tpu_custom_call.1']
    #allocation5 [shape = 's32[1]{0}', space=sflag, size = 0x4, scoped, tag = 'scoped memory for tpu_custom_call.1']
    #allocation6 [shape = 'u8[4194304]{0}', space=vmem, size = 0x400000, scoped, tag = 'input window, operand 1, single buffered']
    #allocation7 [shape = 's32[1]{0}', space=sflag, size = 0x4, scoped, tag = 'scoped memory for tpu_custom_call.1']
    #allocation8 [shape = 'u8[8192]{0}', space=vmem, size = 0x2000, scoped, tag = 'input window, operand 2, single buffered']
    #allocation9 [shape = 'u8[1048576]{0}', space=vmem, size = 0x100000, scoped, tag = 'input window, operand 3, single buffered']
    #allocation10 [shape = 's32[1]{0}', space=sflag, size = 0x4, scoped, tag = 'scoped memory for tpu_custom_call.1']
    #allocation11 [shape = 'u8[1024]{0}', space=vmem, size = 0x400, scoped, tag = 'input window, operand 4, single buffered']
    #allocation12 [shape = 'u8[65536]{0}', space=vmem, size = 0x10000, scoped, tag = 'input window, operand 5, single buffered']
    #allocation13 [shape = 's32[1]{0}', space=sflag, size = 0x4, scoped, tag = 'scoped memory for tpu_custom_call.1']
    #allocation14 [shape = 'u8[512]{0}', space=vmem, size = 0x400, scoped, tag = 'input window, operand 6, single buffered']
    #allocation15 [shape = 'u8[16384]{0}', space=vmem, size = 0x4000, scoped, tag = 'output window, operand 0, single buffered']
    #allocation16 [shape = 'u8[8192]{0}', space=vmem, size = 0x2000, scoped, tag = 'output window, operand 1, single buffered']
    #allocation17 [shape = 's32[1]{0}', space=sflag, size = 0x4, scoped, tag = 'scoped memory for tpu_custom_call.1']
    %14 = vsyncpa [#allocation4], 0
    %15 = vsyncpa [#allocation7], 0
    %16 = vsyncpa [#allocation10], 0
    %17 = vsyncpa [#allocation13], 0
    %18 = vsyncpa [#allocation5], 0
    %19 = vsyncpa [#allocation17], 0
    // Predicated region
    $region2: #{tpu_custom_call.1} parent=1 // pred_check
      _
    $region3: #{tpu_custom_call.1} parent=1 // pred_check_branch
      %21 = sbr.rel (0) target = $region5
    $region4: #{tpu_custom_call.1} parent=1 // pred_region
      %23 = vsyncadd [#allocation4], 0
      %s24 = sshll.u32 %s0, 4
      %s25 = int_to_ptr.hbm [resolvable:$true] %s24
      %s26 = sshll.u32 [#allocation3], 4
      %s27 = int_to_ptr.vmem [resolvable:$true] %s26
      %32 = dma.hbm_to_vmem [thread:$0]  %s25, 1024, %s27, [#allocation4], 512, 512, 32
    $region5: #{tpu_custom_call.1} parent=1 // pred_fallthru
      _
    // Predicated region
    $region6: #{tpu_custom_call.1} parent=1 // pred_check
      _
    $region7: #{tpu_custom_call.1} parent=1 // pred_check_branch
      %34 = sbr.rel (0) target = $region9
    $region8: #{tpu_custom_call.1} parent=1 // pred_region
      %36 = vsyncadd [#allocation7], 0
      %s37 = sshll.u32 %s1, 4
      %s38 = int_to_ptr.hbm [resolvable:$true] %s37
      %s39 = sshll.u32 [#allocation6], 4
      %s40 = int_to_ptr.vmem [resolvable:$true] %s39
      %45 = dma.hbm_to_vmem [thread:$0]  %s38, 131072, %s40, [#allocation7], 1024, 1024, 64
    $region9: #{tpu_custom_call.1} parent=1 // pred_fallthru
      _
    // Predicated region
    $region10: #{tpu_custom_call.1} parent=1 // pred_check
      _
    $region11: #{tpu_custom_call.1} parent=1 // pred_check_branch
      %47 = sbr.rel (0) target = $region13
    $region12: #{tpu_custom_call.1} parent=1 // pred_region
      %49 = vsyncadd [#allocation7], 0
      %s51 = sshll.u32 %s2, 4
      %s52 = int_to_ptr.hbm [resolvable:$true] %s51
      %s53 = sshll.u32 [#allocation8], 4
      %s54 = int_to_ptr.vmem [resolvable:$true] %s53
      %56 = dma.hbm_to_vmem [thread:$0]  %s52, 256, %s54, [#allocation7]
    $region13: #{tpu_custom_call.1} parent=1 // pred_fallthru
      _
    // Predicated region
    $region14: #{tpu_custom_call.1} parent=1 // pred_check
      _
    $region15: #{tpu_custom_call.1} parent=1 // pred_check_branch
      %58 = sbr.rel (0) target = $region17
    $region16: #{tpu_custom_call.1} parent=1 // pred_region
      %60 = vsyncadd [#allocation10], 0
      %s61 = sshll.u32 %s3, 4
      %s62 = int_to_ptr.hbm [resolvable:$true] %s61
      %s63 = sshll.u32 [#allocation9], 4
      %s64 = int_to_ptr.vmem [resolvable:$true] %s63
      %69 = dma.hbm_to_vmem [thread:$0]  %s62, 32768, %s64, [#allocation10], 128, 128, 8
    $region17: #{tpu_custom_call.1} parent=1 // pred_fallthru
      _
    // Predicated region
    $region18: #{tpu_custom_call.1} parent=1 // pred_check
      _
    $region19: #{tpu_custom_call.1} parent=1 // pred_check_branch
      %71 = sbr.rel (0) target = $region21
    $region20: #{tpu_custom_call.1} parent=1 // pred_region
      %73 = vsyncadd [#allocation10], 0
      %s75 = sshll.u32 %s4, 4
      %s76 = int_to_ptr.hbm [resolvable:$true] %s75
      %s77 = sshll.u32 [#allocation11], 4
      %s78 = int_to_ptr.vmem [resolvable:$true] %s77
      %80 = dma.hbm_to_vmem [thread:$0]  %s76, 32, %s78, [#allocation10]
    $region21: #{tpu_custom_call.1} parent=1 // pred_fallthru
      _
    // Predicated region
    $region22: #{tpu_custom_call.1} parent=1 // pred_check
      _
    $region23: #{tpu_custom_call.1} parent=1 // pred_check_branch
      %82 = sbr.rel (0) target = $region25
    $region24: #{tpu_custom_call.1} parent=1 // pred_region
      %84 = vsyncadd [#allocation13], 0
      %s85 = sshll.u32 %s5, 4
      %s86 = int_to_ptr.hbm [resolvable:$true] %s85
      %s87 = sshll.u32 [#allocation12], 4
      %s88 = int_to_ptr.vmem [resolvable:$true] %s87
      %93 = dma.hbm_to_vmem [thread:$0]  %s86, 2048, %s88, [#allocation13], 64, 64, 4
    $region25: #{tpu_custom_call.1} parent=1 // pred_fallthru
      _
    // Predicated region
    $region26: #{tpu_custom_call.1} parent=1 // pred_check
      _
    $region27: #{tpu_custom_call.1} parent=1 // pred_check_branch
      %95 = sbr.rel (0) target = $region29
    $region28: #{tpu_custom_call.1} parent=1 // pred_region
      %97 = vsyncadd [#allocation13], 0
      %s99 = sshll.u32 %s6, 4
      %s100 = int_to_ptr.hbm [resolvable:$true] %s99
      %s101 = sshll.u32 [#allocation14], 4
      %s102 = int_to_ptr.vmem [resolvable:$true] %s101
      %104 = dma.hbm_to_vmem [thread:$0]  %s100, 16, %s102, [#allocation13]
    $region29: #{tpu_custom_call.1} parent=1 // pred_fallthru
      _
    // Predicated region
    $region30: #{tpu_custom_call.1} parent=1 // pred_check
      _
    $region31: #{tpu_custom_call.1} parent=1 // pred_check_branch
      %106 = sbr.rel (0) target = $region33
    $region32: #{tpu_custom_call.1} parent=1 // pred_region
      %108 = dma.done [#allocation4], 1024
    $region33: #{tpu_custom_call.1} parent=1 // pred_fallthru
      _
    // Predicated region
    $region34: #{tpu_custom_call.1} parent=1 // pred_check
      _
    $region35: #{tpu_custom_call.1} parent=1 // pred_check_branch
      %110 = sbr.rel (0) target = $region37
    $region36: #{tpu_custom_call.1} parent=1 // pred_region
      %112 = dma.done [#allocation7], 131072
    $region37: #{tpu_custom_call.1} parent=1 // pred_fallthru
      _
    // Predicated region
    $region38: #{tpu_custom_call.1} parent=1 // pred_check
      _
    $region39: #{tpu_custom_call.1} parent=1 // pred_check_branch
      %114 = sbr.rel (0) target = $region41
    $region40: #{tpu_custom_call.1} parent=1 // pred_region
      %116 = dma.done [#allocation7], 256
    $region41: #{tpu_custom_call.1} parent=1 // pred_fallthru
      _
    // Predicated region
    $region42: #{tpu_custom_call.1} parent=1 // pred_check
      _
    $region43: #{tpu_custom_call.1} parent=1 // pred_check_branch
      %118 = sbr.rel (0) target = $region45
    $region44: #{tpu_custom_call.1} parent=1 // pred_region
      %120 = dma.done [#allocation10], 32768
    $region45: #{tpu_custom_call.1} parent=1 // pred_fallthru
      _
    // Predicated region
    $region46: #{tpu_custom_call.1} parent=1 // pred_check
      _
    $region47: #{tpu_custom_call.1} parent=1 // pred_check_branch
      %122 = sbr.rel (0) target = $region49
    $region48: #{tpu_custom_call.1} parent=1 // pred_region
      %124 = dma.done [#allocation10], 32
    $region49: #{tpu_custom_call.1} parent=1 // pred_fallthru
      _
    // Predicated region
    $region50: #{tpu_custom_call.1} parent=1 // pred_check
      _
    $region51: #{tpu_custom_call.1} parent=1 // pred_check_branch
      %126 = sbr.rel (0) target = $region53
    $region52: #{tpu_custom_call.1} parent=1 // pred_region
      %128 = dma.done [#allocation13], 2048
    $region53: #{tpu_custom_call.1} parent=1 // pred_fallthru
      _
    // Predicated region
    $region54: #{tpu_custom_call.1} parent=1 // pred_check
      _
    $region55: #{tpu_custom_call.1} parent=1 // pred_check_branch
      %130 = sbr.rel (0) target = $region57
    $region56: #{tpu_custom_call.1} parent=1 // pred_region
      %132 = dma.done [#allocation13], 16
    $region57: #{tpu_custom_call.1} parent=1 // pred_fallthru
      _
    %p133 = scmp.eq.s32.totalorder 0, 0
    // Predicated region
    $region58: #{tpu_custom_call.1} parent=1 // pred_check
      %p134 = pneg %p133
    $region59: #{tpu_custom_call.1} parent=1 // pred_check_branch
      %136 = sbr.rel (%p134) target = $region61
    $region60: #{tpu_custom_call.1} parent=1 // pred_region
      %v137 = vld [vmem:[#allocation8] sm:$0xff]
      %v138 = vld [vmem:[#allocation8 + $0x8] sm:$0xff]
      %v141 = vperm.slane %v137, 0
      %v142 = vperm.slane %v137, 1
      %v143 = vperm.slane %v137, 2
      %v144 = vperm.slane %v137, 3
      %v145 = vperm.slane %v137, 4
      %v146 = vperm.slane %v137, 5
      %v147 = vperm.slane %v137, 6
      %v148 = vperm.slane %v137, 7
      %v149 = vperm.slane %v138, 0
      %v150 = vperm.slane %v138, 1
      %v151 = vperm.slane %v138, 2
      %v152 = vperm.slane %v138, 3
      %v153 = vperm.slane %v138, 4
      %v154 = vperm.slane %v138, 5
      %v155 = vperm.slane %v138, 6
      %v156 = vperm.slane %v138, 7
      %173 = vst [vmem:[#allocation2] sm:$0xff] %v141
      %174 = vst [vmem:[#allocation2 + $0x8] sm:$0xff] %v142
      %175 = vst [vmem:[#allocation2 + $0x10] sm:$0xff] %v143
      %176 = vst [vmem:[#allocation2 + $0x18] sm:$0xff] %v144
      %177 = vst [vmem:[#allocation2 + $0x20] sm:$0xff] %v145
      %178 = vst [vmem:[#allocation2 + $0x28] sm:$0xff] %v146
      %179 = vst [vmem:[#allocation2 + $0x30] sm:$0xff] %v147
      %180 = vst [vmem:[#allocation2 + $0x38] sm:$0xff] %v148
      %181 = vst [vmem:[#allocation2 + $0x40] sm:$0xff] %v149
      %182 = vst [vmem:[#allocation2 + $0x48] sm:$0xff] %v150
      %183 = vst [vmem:[#allocation2 + $0x50] sm:$0xff] %v151
      %184 = vst [vmem:[#allocation2 + $0x58] sm:$0xff] %v152
      %185 = vst [vmem:[#allocation2 + $0x60] sm:$0xff] %v153
      %186 = vst [vmem:[#allocation2 + $0x68] sm:$0xff] %v154
      %187 = vst [vmem:[#allocation2 + $0x70] sm:$0xff] %v155
      %188 = vst [vmem:[#allocation2 + $0x78] sm:$0xff] %v156
      %189 = vst [vmem:[#allocation2 + $0x80] sm:$0xff] %v141
      %190 = vst [vmem:[#allocation2 + $0x88] sm:$0xff] %v142
      %191 = vst [vmem:[#allocation2 + $0x90] sm:$0xff] %v143
      %192 = vst [vmem:[#allocation2 + $0x98] sm:$0xff] %v144
      %193 = vst [vmem:[#allocation2 + $0xa0] sm:$0xff] %v145
      %194 = vst [vmem:[#allocation2 + $0xa8] sm:$0xff] %v146
      %195 = vst [vmem:[#allocation2 + $0xb0] sm:$0xff] %v147
      %196 = vst [vmem:[#allocation2 + $0xb8] sm:$0xff] %v148
      %197 = vst [vmem:[#allocation2 + $0xc0] sm:$0xff] %v149
      %198 = vst [vmem:[#allocation2 + $0xc8] sm:$0xff] %v150
      %199 = vst [vmem:[#allocation2 + $0xd0] sm:$0xff] %v151
      %200 = vst [vmem:[#allocation2 + $0xd8] sm:$0xff] %v152
      %201 = vst [vmem:[#allocation2 + $0xe0] sm:$0xff] %v153
      %202 = vst [vmem:[#allocation2 + $0xe8] sm:$0xff] %v154
      %203 = vst [vmem:[#allocation2 + $0xf0] sm:$0xff] %v155
      %204 = vst [vmem:[#allocation2 + $0xf8] sm:$0xff] %v156
    $region61: #{tpu_custom_call.1} parent=1 // pred_fallthru
      _
    %v205 = vld [vmem:[#allocation2] sm:$0xff]
    %v206 = vld [vmem:[#allocation2 + $0x8] sm:$0xff]
    %v207 = vld [vmem:[#allocation2 + $0x10] sm:$0xff]
    %v208 = vld [vmem:[#allocation2 + $0x18] sm:$0xff]
    %v209 = vld [vmem:[#allocation2 + $0x20] sm:$0xff]
    %v210 = vld [vmem:[#allocation2 + $0x28] sm:$0xff]
    %v211 = vld [vmem:[#allocation2 + $0x30] sm:$0xff]
    %v212 = vld [vmem:[#allocation2 + $0x38] sm:$0xff]
    %v213 = vld [vmem:[#allocation2 + $0x40] sm:$0xff]
    %v214 = vld [vmem:[#allocation2 + $0x48] sm:$0xff]
    %v215 = vld [vmem:[#allocation2 + $0x50] sm:$0xff]
    %v216 = vld [vmem:[#allocation2 + $0x58] sm:$0xff]
    %v217 = vld [vmem:[#allocation2 + $0x60] sm:$0xff]
    %v218 = vld [vmem:[#allocation2 + $0x68] sm:$0xff]
    %v219 = vld [vmem:[#allocation2 + $0x70] sm:$0xff]
    %v220 = vld [vmem:[#allocation2 + $0x78] sm:$0xff]
    %v221 = vld [vmem:[#allocation2 + $0x80] sm:$0xff]
    %v222 = vld [vmem:[#allocation2 + $0x88] sm:$0xff]
    %v223 = vld [vmem:[#allocation2 + $0x90] sm:$0xff]
    %v224 = vld [vmem:[#allocation2 + $0x98] sm:$0xff]
    %v225 = vld [vmem:[#allocation2 + $0xa0] sm:$0xff]
    %v226 = vld [vmem:[#allocation2 + $0xa8] sm:$0xff]
    %v227 = vld [vmem:[#allocation2 + $0xb0] sm:$0xff]
    %v228 = vld [vmem:[#allocation2 + $0xb8] sm:$0xff]
    %v229 = vld [vmem:[#allocation2 + $0xc0] sm:$0xff]
    %v230 = vld [vmem:[#allocation2 + $0xc8] sm:$0xff]
    %v231 = vld [vmem:[#allocation2 + $0xd0] sm:$0xff]
    %v232 = vld [vmem:[#allocation2 + $0xd8] sm:$0xff]
    %v233 = vld [vmem:[#allocation2 + $0xe0] sm:$0xff]
    %v234 = vld [vmem:[#allocation2 + $0xe8] sm:$0xff]
    %v235 = vld [vmem:[#allocation2 + $0xf0] sm:$0xff]
    %v236 = vld [vmem:[#allocation2 + $0xf8] sm:$0xff]
    %v237 = vld [vmem:[#allocation3] sm:$0xff]
    %v238 = vld [vmem:[#allocation3 + $0x8] sm:$0xff]
    %v239 = vld [vmem:[#allocation3 + $0x10] sm:$0xff]
    %v240 = vld [vmem:[#allocation3 + $0x18] sm:$0xff]
    %v241 = vld [vmem:[#allocation3 + $0x20] sm:$0xff]
    %v242 = vld [vmem:[#allocation3 + $0x28] sm:$0xff]
    %v243 = vld [vmem:[#allocation3 + $0x30] sm:$0xff]
    %v244 = vld [vmem:[#allocation3 + $0x38] sm:$0xff]
    %v245 = vld [vmem:[#allocation6] sm:$0xff]
    %v246 = vld [vmem:[#allocation6 + $0x8] sm:$0xff]
    %v247 = vld [vmem:[#allocation6 + $0x10] sm:$0xff]
    %v248 = vld [vmem:[#allocation6 + $0x18] sm:$0xff]
    %v249 = vld [vmem:[#allocation6 + $0x20] sm:$0xff]
    %v250 = vld [vmem:[#allocation6 + $0x28] sm:$0xff]
    %v251 = vld [vmem:[#allocation6 + $0x30] sm:$0xff]
    %v252 = vld [vmem:[#allocation6 + $0x38] sm:$0xff]
    %v253 = vld [vmem:[#allocation6 + $0x40] sm:$0xff]
    %v254 = vld [vmem:[#allocation6 + $0x48] sm:$0xff]
    %v255 = vld [vmem:[#allocation6 + $0x50] sm:$0xff]
    %v256 = vld [vmem:[#allocation6 + $0x58] sm:$0xff]
    %v257 = vld [vmem:[#allocation6 + $0x60] sm:$0xff]
    %v258 = vld [vmem:[#allocation6 + $0x68] sm:$0xff]
    %v259 = vld [vmem:[#allocation6 + $0x70] sm:$0xff]
    %v260 = vld [vmem:[#allocation6 + $0x78] sm:$0xff]
    %v261 = vld [vmem:[#allocation6 + $0x80] sm:$0xff]
    %v262 = vld [vmem:[#allocation6 + $0x88] sm:$0xff]
    %v263 = vld [vmem:[#allocation6 + $0x90] sm:$0xff]
    %v264 = vld [vmem:[#allocation6 + $0x98] sm:$0xff]
    %v265 = vld [vmem:[#allocation6 + $0xa0] sm:$0xff]
    %v266 = vld [vmem:[#allocation6 + $0xa8] sm:$0xff]
    %v267 = vld [vmem:[#allocation6 + $0xb0] sm:$0xff]
    %v268 = vld [vmem:[#allocation6 + $0xb8] sm:$0xff]
    %v269 = vld [vmem:[#allocation6 + $0xc0] sm:$0xff]
    %v270 = vld [vmem:[#allocation6 + $0xc8] sm:$0xff]
    %v271 = vld [vmem:[#allocation6 + $0xd0] sm:$0xff]
    %v272 = vld [vmem:[#allocation6 + $0xd8] sm:$0xff]
    %v273 = vld [vmem:[#allocation6 + $0xe0] sm:$0xff]
    %v274 = vld [vmem:[#allocation6 + $0xe8] sm:$0xff]
    %v275 = vld [vmem:[#allocation6 + $0xf0] sm:$0xff]
    %v276 = vld [vmem:[#allocation6 + $0xf8] sm:$0xff]
    %v277 = vld [vmem:[#allocation6 + $0x100] sm:$0xff]
    %v278 = vld [vmem:[#allocation6 + $0x108] sm:$0xff]
    %v279 = vld [vmem:[#allocation6 + $0x110] sm:$0xff]
    %v280 = vld [vmem:[#allocation6 + $0x118] sm:$0xff]
    %v281 = vld [vmem:[#allocation6 + $0x120] sm:$0xff]
    %v282 = vld [vmem:[#allocation6 + $0x128] sm:$0xff]
    %v283 = vld [vmem:[#allocation6 + $0x130] sm:$0xff]
    %v284 = vld [vmem:[#allocation6 + $0x138] sm:$0xff]
    %v285 = vld [vmem:[#allocation6 + $0x140] sm:$0xff]
    %v286 = vld [vmem:[#allocation6 + $0x148] sm:$0xff]
    %v287 = vld [vmem:[#allocation6 + $0x150] sm:$0xff]
    %v288 = vld [vmem:[#allocation6 + $0x158] sm:$0xff]
    %v289 = vld [vmem:[#allocation6 + $0x160] sm:$0xff]
    %v290 = vld [vmem:[#allocation6 + $0x168] sm:$0xff]
    %v291 = vld [vmem:[#allocation6 + $0x170] sm:$0xff]
    %v292 = vld [vmem:[#allocation6 + $0x178] sm:$0xff]
    %v293 = vld [vmem:[#allocation6 + $0x180] sm:$0xff]
    %v294 = vld [vmem:[#allocation6 + $0x188] sm:$0xff]
    %v295 = vld [vmem:[#allocation6 + $0x190] sm:$0xff]
    %v296 = vld [vmem:[#allocation6 + $0x198] sm:$0xff]
    %v297 = vld [vmem:[#allocation6 + $0x1a0] sm:$0xff]
    %v298 = vld [vmem:[#allocation6 + $0x1a8] sm:$0xff]
    %v299 = vld [vmem:[#allocation6 + $0x1b0] sm:$0xff]
    %v300 = vld [vmem:[#allocation6 + $0x1b8] sm:$0xff]
    %v301 = vld [vmem:[#allocation6 + $0x1c0] sm:$0xff]
    %v302 = vld [vmem:[#allocation6 + $0x1c8] sm:$0xff]
    %v303 = vld [vmem:[#allocation6 + $0x1d0] sm:$0xff]
    %v304 = vld [vmem:[#allocation6 + $0x1d8] sm:$0xff]
    %v305 = vld [vmem:[#allocation6 + $0x1e0] sm:$0xff]
    %v306 = vld [vmem:[#allocation6 + $0x1e8] sm:$0xff]
    %v307 = vld [vmem:[#allocation6 + $0x1f0] sm:$0xff]
    %v308 = vld [vmem:[#allocation6 + $0x1f8] sm:$0xff]
    %v309 = vld [vmem:[#allocation6 + $0x200] sm:$0xff]
    %v310 = vld [vmem:[#allocation6 + $0x208] sm:$0xff]
    %v311 = vld [vmem:[#allocation6 + $0x210] sm:$0xff]
    %v312 = vld [vmem:[#allocation6 + $0x218] sm:$0xff]
    %v313 = vld [vmem:[#allocation6 + $0x220] sm:$0xff]
    %v314 = vld [vmem:[#allocation6 + $0x228] sm:$0xff]
    %v315 = vld [vmem:[#allocation6 + $0x230] sm:$0xff]
    %v316 = vld [vmem:[#allocation6 + $0x238] sm:$0xff]
    %v317 = vld [vmem:[#allocation6 + $0x240] sm:$0xff]
    %v318 = vld [vmem:[#allocation6 + $0x248] sm:$0xff]
    %v319 = vld [vmem:[#allocation6 + $0x250] sm:$0xff]
    %v320 = vld [vmem:[#allocation6 + $0x258] sm:$0xff]
    %v321 = vld [vmem:[#allocation6 + $0x260] sm:$0xff]
    %v322 = vld [vmem:[#allocation6 + $0x268] sm:$0xff]
    %v323 = vld [vmem:[#allocation6 + $0x270] sm:$0xff]
    %v324 = vld [vmem:[#allocation6 + $0x278] sm:$0xff]
    %v325 = vld [vmem:[#allocation6 + $0x280] sm:$0xff]
    %v326 = vld [vmem:[#allocation6 + $0x288] sm:$0xff]
    %v327 = vld [vmem:[#allocation6 + $0x290] sm:$0xff]
    %v328 = vld [vmem:[#allocation6 + $0x298] sm:$0xff]
    %v329 = vld [vmem:[#allocation6 + $0x2a0] sm:$0xff]
    %v330 = vld [vmem:[#allocation6 + $0x2a8] sm:$0xff]
    %v331 = vld [vmem:[#allocation6 + $0x2b0] sm:$0xff]
    %v332 = vld [vmem:[#allocation6 + $0x2b8] sm:$0xff]
    %v333 = vld [vmem:[#allocation6 + $0x2c0] sm:$0xff]
    %v334 = vld [vmem:[#allocation6 + $0x2c8] sm:$0xff]
    %v335 = vld [vmem:[#allocation6 + $0x2d0] sm:$0xff]
    %v336 = vld [vmem:[#allocation6 + $0x2d8] sm:$0xff]
    %v337 = vld [vmem:[#allocation6 + $0x2e0] sm:$0xff]
    %v338 = vld [vmem:[#allocation6 + $0x2e8] sm:$0xff]
    %v339 = vld [vmem:[#allocation6 + $0x2f0] sm:$0xff]
    %v340 = vld [vmem:[#allocation6 + $0x2f8] sm:$0xff]
    %v341 = vld [vmem:[#allocation6 + $0x300] sm:$0xff]
    %v342 = vld [vmem:[#allocation6 + $0x308] sm:$0xff]
    %v343 = vld [vmem:[#allocation6 + $0x310] sm:$0xff]
    %v344 = vld [vmem:[#allocation6 + $0x318] sm:$0xff]
    %v345 = vld [vmem:[#allocation6 + $0x320] sm:$0xff]
    %v346 = vld [vmem:[#allocation6 + $0x328] sm:$0xff]
    %v347 = vld [vmem:[#allocation6 + $0x330] sm:$0xff]
    %v348 = vld [vmem:[#allocation6 + $0x338] sm:$0xff]
    %v349 = vld [vmem:[#allocation6 + $0x340] sm:$0xff]
    %v350 = vld [vmem:[#allocation6 + $0x348] sm:$0xff]
    %v351 = vld [vmem:[#allocation6 + $0x350] sm:$0xff]
    %v352 = vld [vmem:[#allocation6 + $0x358] sm:$0xff]
    %v353 = vld [vmem:[#allocation6 + $0x360] sm:$0xff]
    %v354 = vld [vmem:[#allocation6 + $0x368] sm:$0xff]
    %v355 = vld [vmem:[#allocation6 + $0x370] sm:$0xff]
    %v356 = vld [vmem:[#allocation6 + $0x378] sm:$0xff]
    %v357 = vld [vmem:[#allocation6 + $0x380] sm:$0xff]
    %v358 = vld [vmem:[#allocation6 + $0x388] sm:$0xff]
    %v359 = vld [vmem:[#allocation6 + $0x390] sm:$0xff]
    %v360 = vld [vmem:[#allocation6 + $0x398] sm:$0xff]
    %v361 = vld [vmem:[#allocation6 + $0x3a0] sm:$0xff]
    %v362 = vld [vmem:[#allocation6 + $0x3a8] sm:$0xff]
    %v363 = vld [vmem:[#allocation6 + $0x3b0] sm:$0xff]
    %v364 = vld [vmem:[#allocation6 + $0x3b8] sm:$0xff]
    %v365 = vld [vmem:[#allocation6 + $0x3c0] sm:$0xff]
    %v366 = vld [vmem:[#allocation6 + $0x3c8] sm:$0xff]
    %v367 = vld [vmem:[#allocation6 + $0x3d0] sm:$0xff]
    %v368 = vld [vmem:[#allocation6 + $0x3d8] sm:$0xff]
    %v369 = vld [vmem:[#allocation6 + $0x3e0] sm:$0xff]
    %v370 = vld [vmem:[#allocation6 + $0x3e8] sm:$0xff]
    %v371 = vld [vmem:[#allocation6 + $0x3f0] sm:$0xff]
    %v372 = vld [vmem:[#allocation6 + $0x3f8] sm:$0xff]
    %v373 = vld [vmem:[#allocation6 + $0x400] sm:$0xff]
    %v374 = vld [vmem:[#allocation6 + $0x408] sm:$0xff]
    %v375 = vld [vmem:[#allocation6 + $0x410] sm:$0xff]
    %v376 = vld [vmem:[#allocation6 + $0x418] sm:$0xff]
    %v377 = vld [vmem:[#allocation6 + $0x420] sm:$0xff]
    %v378 = vld [vmem:[#allocation6 + $0x428] sm:$0xff]
    %v379 = vld [vmem:[#allocation6 + $0x430] sm:$0xff]
    %v380 = vld [vmem:[#allocation6 + $0x438] sm:$0xff]
    %v381 = vld [vmem:[#allocation6 + $0x440] sm:$0xff]
    %v382 = vld [vmem:[#allocation6 + $0x448] sm:$0xff]
    %v383 = vld [vmem:[#allocation6 + $0x450] sm:$0xff]
    %v384 = vld [vmem:[#allocation6 + $0x458] sm:$0xff]
    %v385 = vld [vmem:[#allocation6 + $0x460] sm:$0xff]
    %v386 = vld [vmem:[#allocation6 + $0x468] sm:$0xff]
    %v387 = vld [vmem:[#allocation6 + $0x470] sm:$0xff]
    %v388 = vld [vmem:[#allocation6 + $0x478] sm:$0xff]
    %v389 = vld [vmem:[#allocation6 + $0x480] sm:$0xff]
    %v390 = vld [vmem:[#allocation6 + $0x488] sm:$0xff]
    %v391 = vld [vmem:[#allocation6 + $0x490] sm:$0xff]
    %v392 = vld [vmem:[#allocation6 + $0x498] sm:$0xff]
    %v393 = vld [vmem:[#allocation6 + $0x4a0] sm:$0xff]
    %v394 = vld [vmem:[#allocation6 + $0x4a8] sm:$0xff]
    %v395 = vld [vmem:[#allocation6 + $0x4b0] sm:$0xff]
    %v396 = vld [vmem:[#allocation6 + $0x4b8] sm:$0xff]
    %v397 = vld [vmem:[#allocation6 + $0x4c0] sm:$0xff]
    %v398 = vld [vmem:[#allocation6 + $0x4c8] sm:$0xff]
    %v399 = vld [vmem:[#allocation6 + $0x4d0] sm:$0xff]
    %v400 = vld [vmem:[#allocation6 + $0x4d8] sm:$0xff]
    %v401 = vld [vmem:[#allocation6 + $0x4e0] sm:$0xff]
    %v402 = vld [vmem:[#allocation6 + $0x4e8] sm:$0xff]
    %v403 = vld [vmem:[#allocation6 + $0x4f0] sm:$0xff]
    %v404 = vld [vmem:[#allocation6 + $0x4f8] sm:$0xff]
    %v405 = vld [vmem:[#allocation6 + $0x500] sm:$0xff]
    %v406 = vld [vmem:[#allocation6 + $0x508] sm:$0xff]
    %v407 = vld [vmem:[#allocation6 + $0x510] sm:$0xff]
    %v408 = vld [vmem:[#allocation6 + $0x518] sm:$0xff]
    %v409 = vld [vmem:[#allocation6 + $0x520] sm:$0xff]
    %v410 = vld [vmem:[#allocation6 + $0x528] sm:$0xff]
    %v411 = vld [vmem:[#allocation6 + $0x530] sm:$0xff]
    %v412 = vld [vmem:[#allocation6 + $0x538] sm:$0xff]
    %v413 = vld [vmem:[#allocation6 + $0x540] sm:$0xff]
    %v414 = vld [vmem:[#allocation6 + $0x548] sm:$0xff]
    %v415 = vld [vmem:[#allocation6 + $0x550] sm:$0xff]
    %v416 = vld [vmem:[#allocation6 + $0x558] sm:$0xff]
    %v417 = vld [vmem:[#allocation6 + $0x560] sm:$0xff]
    %v418 = vld [vmem:[#allocation6 + $0x568] sm:$0xff]
    %v419 = vld [vmem:[#allocation6 + $0x570] sm:$0xff]
    %v420 = vld [vmem:[#allocation6 + $0x578] sm:$0xff]
    %v421 = vld [vmem:[#allocation6 + $0x580] sm:$0xff]
    %v422 = vld [vmem:[#allocation6 + $0x588] sm:$0xff]
    %v423 = vld [vmem:[#allocation6 + $0x590] sm:$0xff]
    %v424 = vld [vmem:[#allocation6 + $0x598] sm:$0xff]
    %v425 = vld [vmem:[#allocation6 + $0x5a0] sm:$0xff]
    %v426 = vld [vmem:[#allocation6 + $0x5a8] sm:$0xff]
    %v427 = vld [vmem:[#allocation6 + $0x5b0] sm:$0xff]
    %v428 = vld [vmem:[#allocation6 + $0x5b8] sm:$0xff]
    %v429 = vld [vmem:[#allocation6 + $0x5c0] sm:$0xff]
    %v430 = vld [vmem:[#allocation6 + $0x5c8] sm:$0xff]
    %v431 = vld [vmem:[#allocation6 + $0x5d0] sm:$0xff]
    %v432 = vld [vmem:[#allocation6 + $0x5d8] sm:$0xff]
    %v433 = vld [vmem:[#allocation6 + $0x5e0] sm:$0xff]
    %v434 = vld [vmem:[#allocation6 + $0x5e8] sm:$0xff]
    %v435 = vld [vmem:[#allocation6 + $0x5f0] sm:$0xff]
    %v436 = vld [vmem:[#allocation6 + $0x5f8] sm:$0xff]
    %v437 = vld [vmem:[#allocation6 + $0x600] sm:$0xff]
    %v438 = vld [vmem:[#allocation6 + $0x608] sm:$0xff]
    %v439 = vld [vmem:[#allocation6 + $0x610] sm:$0xff]
    %v440 = vld [vmem:[#allocation6 + $0x618] sm:$0xff]
    %v441 = vld [vmem:[#allocation6 + $0x620] sm:$0xff]
    %v442 = vld [vmem:[#allocation6 + $0x628] sm:$0xff]
    %v443 = vld [vmem:[#allocation6 + $0x630] sm:$0xff]
    %v444 = vld [vmem:[#allocation6 + $0x638] sm:$0xff]
    %v445 = vld [vmem:[#allocation6 + $0x640] sm:$0xff]
    %v446 = vld [vmem:[#allocation6 + $0x648] sm:$0xff]
    %v447 = vld [vmem:[#allocation6 + $0x650] sm:$0xff]
    %v448 = vld [vmem:[#allocation6 + $0x658] sm:$0xff]
    %v449 = vld [vmem:[#allocation6 + $0x660] sm:$0xff]
    %v450 = vld [vmem:[#allocation6 + $0x668] sm:$0xff]
    %v451 = vld [vmem:[#allocation6 + $0x670] sm:$0xff]
    %v452 = vld [vmem:[#allocation6 + $0x678] sm:$0xff]
    %v453 = vld [vmem:[#allocation6 + $0x680] sm:$0xff]
    %v454 = vld [vmem:[#allocation6 + $0x688] sm:$0xff]
    %v455 = vld [vmem:[#allocation6 + $0x690] sm:$0xff]
    %v456 = vld [vmem:[#allocation6 + $0x698] sm:$0xff]
    %v457 = vld [vmem:[#allocation6 + $0x6a0] sm:$0xff]
    %v458 = vld [vmem:[#allocation6 + $0x6a8] sm:$0xff]
    %v459 = vld [vmem:[#allocation6 + $0x6b0] sm:$0xff]
    %v460 = vld [vmem:[#allocation6 + $0x6b8] sm:$0xff]
    %v461 = vld [vmem:[#allocation6 + $0x6c0] sm:$0xff]
    %v462 = vld [vmem:[#allocation6 + $0x6c8] sm:$0xff]
    %v463 = vld [vmem:[#allocation6 + $0x6d0] sm:$0xff]
    %v464 = vld [vmem:[#allocation6 + $0x6d8] sm:$0xff]
    %v465 = vld [vmem:[#allocation6 + $0x6e0] sm:$0xff]
    %v466 = vld [vmem:[#allocation6 + $0x6e8] sm:$0xff]
    %v467 = vld [vmem:[#allocation6 + $0x6f0] sm:$0xff]
    %v468 = vld [vmem:[#allocation6 + $0x6f8] sm:$0xff]
    %v469 = vld [vmem:[#allocation6 + $0x700] sm:$0xff]
    %v470 = vld [vmem:[#allocation6 + $0x708] sm:$0xff]
    %v471 = vld [vmem:[#allocation6 + $0x710] sm:$0xff]
    %v472 = vld [vmem:[#allocation6 + $0x718] sm:$0xff]
    %v473 = vld [vmem:[#allocation6 + $0x720] sm:$0xff]
    %v474 = vld [vmem:[#allocation6 + $0x728] sm:$0xff]
    %v475 = vld [vmem:[#allocation6 + $0x730] sm:$0xff]
    %v476 = vld [vmem:[#allocation6 + $0x738] sm:$0xff]
    %v477 = vld [vmem:[#allocation6 + $0x740] sm:$0xff]
    %v478 = vld [vmem:[#allocation6 + $0x748] sm:$0xff]
    %v479 = vld [vmem:[#allocation6 + $0x750] sm:$0xff]
    %v480 = vld [vmem:[#allocation6 + $0x758] sm:$0xff]
    %v481 = vld [vmem:[#allocation6 + $0x760] sm:$0xff]
    %v482 = vld [vmem:[#allocation6 + $0x768] sm:$0xff]
    %v483 = vld [vmem:[#allocation6 + $0x770] sm:$0xff]
    %v484 = vld [vmem:[#allocation6 + $0x778] sm:$0xff]
    %v485 = vld [vmem:[#allocation6 + $0x780] sm:$0xff]
    %v486 = vld [vmem:[#allocation6 + $0x788] sm:$0xff]
    %v487 = vld [vmem:[#allocation6 + $0x790] sm:$0xff]
    %v488 = vld [vmem:[#allocation6 + $0x798] sm:$0xff]
    %v489 = vld [vmem:[#allocation6 + $0x7a0] sm:$0xff]
    %v490 = vld [vmem:[#allocation6 + $0x7a8] sm:$0xff]
    %v491 = vld [vmem:[#allocation6 + $0x7b0] sm:$0xff]
    %v492 = vld [vmem:[#allocation6 + $0x7b8] sm:$0xff]
    %v493 = vld [vmem:[#allocation6 + $0x7c0] sm:$0xff]
    %v494 = vld [vmem:[#allocation6 + $0x7c8] sm:$0xff]
    %v495 = vld [vmem:[#allocation6 + $0x7d0] sm:$0xff]
    %v496 = vld [vmem:[#allocation6 + $0x7d8] sm:$0xff]
    %v497 = vld [vmem:[#allocation6 + $0x7e0] sm:$0xff]
    %v498 = vld [vmem:[#allocation6 + $0x7e8] sm:$0xff]
    %v499 = vld [vmem:[#allocation6 + $0x7f0] sm:$0xff]
    %v500 = vld [vmem:[#allocation6 + $0x7f8] sm:$0xff]
    %v501 = vld [vmem:[#allocation6 + $0x800] sm:$0xff]
    %v502 = vld [vmem:[#allocation6 + $0x808] sm:$0xff]
    %v503 = vld [vmem:[#allocation6 + $0x810] sm:$0xff]
    %v504 = vld [vmem:[#allocation6 + $0x818] sm:$0xff]
    %v505 = vld [vmem:[#allocation6 + $0x820] sm:$0xff]
    %v506 = vld [vmem:[#allocation6 + $0x828] sm:$0xff]
    %v507 = vld [vmem:[#allocation6 + $0x830] sm:$0xff]
    %v508 = vld [vmem:[#allocation6 + $0x838] sm:$0xff]
    %v509 = vld [vmem:[#allocation6 + $0x840] sm:$0xff]
    %v510 = vld [vmem:[#allocation6 + $0x848] sm:$0xff]
    %v511 = vld [vmem:[#allocation6 + $0x850] sm:$0xff]
    %v512 = vld [vmem:[#allocation6 + $0x858] sm:$0xff]
    %v513 = vld [vmem:[#allocation6 + $0x860] sm:$0xff]
    %v514 = vld [vmem:[#allocation6 + $0x868] sm:$0xff]
    %v515 = vld [vmem:[#allocation6 + $0x870] sm:$0xff]
    %v516 = vld [vmem:[#allocation6 + $0x878] sm:$0xff]
    %v517 = vld [vmem:[#allocation6 + $0x880] sm:$0xff]
    %v518 = vld [vmem:[#allocation6 + $0x888] sm:$0xff]
    %v519 = vld [vmem:[#allocation6 + $0x890] sm:$0xff]
    %v520 = vld [vmem:[#allocation6 + $0x898] sm:$0xff]
    %v521 = vld [vmem:[#allocation6 + $0x8a0] sm:$0xff]
    %v522 = vld [vmem:[#allocation6 + $0x8a8] sm:$0xff]
    %v523 = vld [vmem:[#allocation6 + $0x8b0] sm:$0xff]
    %v524 = vld [vmem:[#allocation6 + $0x8b8] sm:$0xff]
    %v525 = vld [vmem:[#allocation6 + $0x8c0] sm:$0xff]
    %v526 = vld [vmem:[#allocation6 + $0x8c8] sm:$0xff]
    %v527 = vld [vmem:[#allocation6 + $0x8d0] sm:$0xff]
    %v528 = vld [vmem:[#allocation6 + $0x8d8] sm:$0xff]
    %v529 = vld [vmem:[#allocation6 + $0x8e0] sm:$0xff]
    %v530 = vld [vmem:[#allocation6 + $0x8e8] sm:$0xff]
    %v531 = vld [vmem:[#allocation6 + $0x8f0] sm:$0xff]
    %v532 = vld [vmem:[#allocation6 + $0x8f8] sm:$0xff]
    %v533 = vld [vmem:[#allocation6 + $0x900] sm:$0xff]
    %v534 = vld [vmem:[#allocation6 + $0x908] sm:$0xff]
    %v535 = vld [vmem:[#allocation6 + $0x910] sm:$0xff]
    %v536 = vld [vmem:[#allocation6 + $0x918] sm:$0xff]
    %v537 = vld [vmem:[#allocation6 + $0x920] sm:$0xff]
    %v538 = vld [vmem:[#allocation6 + $0x928] sm:$0xff]
    %v539 = vld [vmem:[#allocation6 + $0x930] sm:$0xff]
    %v540 = vld [vmem:[#allocation6 + $0x938] sm:$0xff]
    %v541 = vld [vmem:[#allocation6 + $0x940] sm:$0xff]
    %v542 = vld [vmem:[#allocation6 + $0x948] sm:$0xff]
    %v543 = vld [vmem:[#allocation6 + $0x950] sm:$0xff]
    %v544 = vld [vmem:[#allocation6 + $0x958] sm:$0xff]
    %v545 = vld [vmem:[#allocation6 + $0x960] sm:$0xff]
    %v546 = vld [vmem:[#allocation6 + $0x968] sm:$0xff]
    %v547 = vld [vmem:[#allocation6 + $0x970] sm:$0xff]
    %v548 = vld [vmem:[#allocation6 + $0x978] sm:$0xff]
    %v549 = vld [vmem:[#allocation6 + $0x980] sm:$0xff]
    %v550 = vld [vmem:[#allocation6 + $0x988] sm:$0xff]
    %v551 = vld [vmem:[#allocation6 + $0x990] sm:$0xff]
    %v552 = vld [vmem:[#allocation6 + $0x998] sm:$0xff]
    %v553 = vld [vmem:[#allocation6 + $0x9a0] sm:$0xff]
    %v554 = vld [vmem:[#allocation6 + $0x9a8] sm:$0xff]
    %v555 = vld [vmem:[#allocation6 + $0x9b0] sm:$0xff]
    %v556 = vld [vmem:[#allocation6 + $0x9b8] sm:$0xff]
    %v557 = vld [vmem:[#allocation6 + $0x9c0] sm:$0xff]
    %v558 = vld [vmem:[#allocation6 + $0x9c8] sm:$0xff]
    %v559 = vld [vmem:[#allocation6 + $0x9d0] sm:$0xff]
    %v560 = vld [vmem:[#allocation6 + $0x9d8] sm:$0xff]
    %v561 = vld [vmem:[#allocation6 + $0x9e0] sm:$0xff]
    %v562 = vld [vmem:[#allocation6 + $0x9e8] sm:$0xff]
    %v563 = vld [vmem:[#allocation6 + $0x9f0] sm:$0xff]
    %v564 = vld [vmem:[#allocation6 + $0x9f8] sm:$0xff]
    %v565 = vld [vmem:[#allocation6 + $0xa00] sm:$0xff]
    %v566 = vld [vmem:[#allocation6 + $0xa08] sm:$0xff]
    %v567 = vld [vmem:[#allocation6 + $0xa10] sm:$0xff]
    %v568 = vld [vmem:[#allocation6 + $0xa18] sm:$0xff]
    %v569 = vld [vmem:[#allocation6 + $0xa20] sm:$0xff]
    %v570 = vld [vmem:[#allocation6 + $0xa28] sm:$0xff]
    %v571 = vld [vmem:[#allocation6 + $0xa30] sm:$0xff]
    %v572 = vld [vmem:[#allocation6 + $0xa38] sm:$0xff]
    %v573 = vld [vmem:[#allocation6 + $0xa40] sm:$0xff]
    %v574 = vld [vmem:[#allocation6 + $0xa48] sm:$0xff]
    %v575 = vld [vmem:[#allocation6 + $0xa50] sm:$0xff]
    %v576 = vld [vmem:[#allocation6 + $0xa58] sm:$0xff]
    %v577 = vld [vmem:[#allocation6 + $0xa60] sm:$0xff]
    %v578 = vld [vmem:[#allocation6 + $0xa68] sm:$0xff]
    %v579 = vld [vmem:[#allocation6 + $0xa70] sm:$0xff]
    %v580 = vld [vmem:[#allocation6 + $0xa78] sm:$0xff]
    %v581 = vld [vmem:[#allocation6 + $0xa80] sm:$0xff]
    %v582 = vld [vmem:[#allocation6 + $0xa88] sm:$0xff]
    %v583 = vld [vmem:[#allocation6 + $0xa90] sm:$0xff]
    %v584 = vld [vmem:[#allocation6 + $0xa98] sm:$0xff]
    %v585 = vld [vmem:[#allocation6 + $0xaa0] sm:$0xff]
    %v586 = vld [vmem:[#allocation6 + $0xaa8] sm:$0xff]
    %v587 = vld [vmem:[#allocation6 + $0xab0] sm:$0xff]
    %v588 = vld [vmem:[#allocation6 + $0xab8] sm:$0xff]
    %v589 = vld [vmem:[#allocation6 + $0xac0] sm:$0xff]
    %v590 = vld [vmem:[#allocation6 + $0xac8] sm:$0xff]
    %v591 = vld [vmem:[#allocation6 + $0xad0] sm:$0xff]
    %v592 = vld [vmem:[#allocation6 + $0xad8] sm:$0xff]
    %v593 = vld [vmem:[#allocation6 + $0xae0] sm:$0xff]
    %v594 = vld [vmem:[#allocation6 + $0xae8] sm:$0xff]
    %v595 = vld [vmem:[#allocation6 + $0xaf0] sm:$0xff]
    %v596 = vld [vmem:[#allocation6 + $0xaf8] sm:$0xff]
    %v597 = vld [vmem:[#allocation6 + $0xb00] sm:$0xff]
    %v598 = vld [vmem:[#allocation6 + $0xb08] sm:$0xff]
    %v599 = vld [vmem:[#allocation6 + $0xb10] sm:$0xff]
    %v600 = vld [vmem:[#allocation6 + $0xb18] sm:$0xff]
    %v601 = vld [vmem:[#allocation6 + $0xb20] sm:$0xff]
    %v602 = vld [vmem:[#allocation6 + $0xb28] sm:$0xff]
    %v603 = vld [vmem:[#allocation6 + $0xb30] sm:$0xff]
    %v604 = vld [vmem:[#allocation6 + $0xb38] sm:$0xff]
    %v605 = vld [vmem:[#allocation6 + $0xb40] sm:$0xff]
    %v606 = vld [vmem:[#allocation6 + $0xb48] sm:$0xff]
    %v607 = vld [vmem:[#allocation6 + $0xb50] sm:$0xff]
    %v608 = vld [vmem:[#allocation6 + $0xb58] sm:$0xff]
    %v609 = vld [vmem:[#allocation6 + $0xb60] sm:$0xff]
    %v610 = vld [vmem:[#allocation6 + $0xb68] sm:$0xff]
    %v611 = vld [vmem:[#allocation6 + $0xb70] sm:$0xff]
    %v612 = vld [vmem:[#allocation6 + $0xb78] sm:$0xff]
    %v613 = vld [vmem:[#allocation6 + $0xb80] sm:$0xff]
    %v614 = vld [vmem:[#allocation6 + $0xb88] sm:$0xff]
    %v615 = vld [vmem:[#allocation6 + $0xb90] sm:$0xff]
    %v616 = vld [vmem:[#allocation6 + $0xb98] sm:$0xff]
    %v617 = vld [vmem:[#allocation6 + $0xba0] sm:$0xff]
    %v618 = vld [vmem:[#allocation6 + $0xba8] sm:$0xff]
    %v619 = vld [vmem:[#allocation6 + $0xbb0] sm:$0xff]
    %v620 = vld [vmem:[#allocation6 + $0xbb8] sm:$0xff]
    %v621 = vld [vmem:[#allocation6 + $0xbc0] sm:$0xff]
    %v622 = vld [vmem:[#allocation6 + $0xbc8] sm:$0xff]
    %v623 = vld [vmem:[#allocation6 + $0xbd0] sm:$0xff]
    %v624 = vld [vmem:[#allocation6 + $0xbd8] sm:$0xff]
    %v625 = vld [vmem:[#allocation6 + $0xbe0] sm:$0xff]
    %v626 = vld [vmem:[#allocation6 + $0xbe8] sm:$0xff]
    %v627 = vld [vmem:[#allocation6 + $0xbf0] sm:$0xff]
    %v628 = vld [vmem:[#allocation6 + $0xbf8] sm:$0xff]
    %v629 = vld [vmem:[#allocation6 + $0xc00] sm:$0xff]
    %v630 = vld [vmem:[#allocation6 + $0xc08] sm:$0xff]
    %v631 = vld [vmem:[#allocation6 + $0xc10] sm:$0xff]
    %v632 = vld [vmem:[#allocation6 + $0xc18] sm:$0xff]
    %v633 = vld [vmem:[#allocation6 + $0xc20] sm:$0xff]
    %v634 = vld [vmem:[#allocation6 + $0xc28] sm:$0xff]
    %v635 = vld [vmem:[#allocation6 + $0xc30] sm:$0xff]
    %v636 = vld [vmem:[#allocation6 + $0xc38] sm:$0xff]
    %v637 = vld [vmem:[#allocation6 + $0xc40] sm:$0xff]
    %v638 = vld [vmem:[#allocation6 + $0xc48] sm:$0xff]
    %v639 = vld [vmem:[#allocation6 + $0xc50] sm:$0xff]
    %v640 = vld [vmem:[#allocation6 + $0xc58] sm:$0xff]
    %v641 = vld [vmem:[#allocation6 + $0xc60] sm:$0xff]
    %v642 = vld [vmem:[#allocation6 + $0xc68] sm:$0xff]
    %v643 = vld [vmem:[#allocation6 + $0xc70] sm:$0xff]
    %v644 = vld [vmem:[#allocation6 + $0xc78] sm:$0xff]
    %v645 = vld [vmem:[#allocation6 + $0xc80] sm:$0xff]
    %v646 = vld [vmem:[#allocation6 + $0xc88] sm:$0xff]
    %v647 = vld [vmem:[#allocation6 + $0xc90] sm:$0xff]
    %v648 = vld [vmem:[#allocation6 + $0xc98] sm:$0xff]
    %v649 = vld [vmem:[#allocation6 + $0xca0] sm:$0xff]
    %v650 = vld [vmem:[#allocation6 + $0xca8] sm:$0xff]
    %v651 = vld [vmem:[#allocation6 + $0xcb0] sm:$0xff]
    %v652 = vld [vmem:[#allocation6 + $0xcb8] sm:$0xff]
    %v653 = vld [vmem:[#allocation6 + $0xcc0] sm:$0xff]
    %v654 = vld [vmem:[#allocation6 + $0xcc8] sm:$0xff]
    %v655 = vld [vmem:[#allocation6 + $0xcd0] sm:$0xff]
    %v656 = vld [vmem:[#allocation6 + $0xcd8] sm:$0xff]
    %v657 = vld [vmem:[#allocation6 + $0xce0] sm:$0xff]
    %v658 = vld [vmem:[#allocation6 + $0xce8] sm:$0xff]
    %v659 = vld [vmem:[#allocation6 + $0xcf0] sm:$0xff]
    %v660 = vld [vmem:[#allocation6 + $0xcf8] sm:$0xff]
    %v661 = vld [vmem:[#allocation6 + $0xd00] sm:$0xff]
    %v662 = vld [vmem:[#allocation6 + $0xd08] sm:$0xff]
    %v663 = vld [vmem:[#allocation6 + $0xd10] sm:$0xff]
    %v664 = vld [vmem:[#allocation6 + $0xd18] sm:$0xff]
    %v665 = vld [vmem:[#allocation6 + $0xd20] sm:$0xff]
    %v666 = vld [vmem:[#allocation6 + $0xd28] sm:$0xff]
    %v667 = vld [vmem:[#allocation6 + $0xd30] sm:$0xff]
    %v668 = vld [vmem:[#allocation6 + $0xd38] sm:$0xff]
    %v669 = vld [vmem:[#allocation6 + $0xd40] sm:$0xff]
    %v670 = vld [vmem:[#allocation6 + $0xd48] sm:$0xff]
    %v671 = vld [vmem:[#allocation6 + $0xd50] sm:$0xff]
    %v672 = vld [vmem:[#allocation6 + $0xd58] sm:$0xff]
    %v673 = vld [vmem:[#allocation6 + $0xd60] sm:$0xff]
    %v674 = vld [vmem:[#allocation6 + $0xd68] sm:$0xff]
    %v675 = vld [vmem:[#allocation6 + $0xd70] sm:$0xff]
    %v676 = vld [vmem:[#allocation6 + $0xd78] sm:$0xff]
    %v677 = vld [vmem:[#allocation6 + $0xd80] sm:$0xff]
    %v678 = vld [vmem:[#allocation6 + $0xd88] sm:$0xff]
    %v679 = vld [vmem:[#allocation6 + $0xd90] sm:$0xff]
    %v680 = vld [vmem:[#allocation6 + $0xd98] sm:$0xff]
    %v681 = vld [vmem:[#allocation6 + $0xda0] sm:$0xff]
    %v682 = vld [vmem:[#allocation6 + $0xda8] sm:$0xff]
    %v683 = vld [vmem:[#allocation6 + $0xdb0] sm:$0xff]
    %v684 = vld [vmem:[#allocation6 + $0xdb8] sm:$0xff]
    %v685 = vld [vmem:[#allocation6 + $0xdc0] sm:$0xff]
    %v686 = vld [vmem:[#allocation6 + $0xdc8] sm:$0xff]
    %v687 = vld [vmem:[#allocation6 + $0xdd0] sm:$0xff]
    %v688 = vld [vmem:[#allocation6 + $0xdd8] sm:$0xff]
    %v689 = vld [vmem:[#allocation6 + $0xde0] sm:$0xff]
    %v690 = vld [vmem:[#allocation6 + $0xde8] sm:$0xff]
    %v691 = vld [vmem:[#allocation6 + $0xdf0] sm:$0xff]
    %v692 = vld [vmem:[#allocation6 + $0xdf8] sm:$0xff]
    %v693 = vld [vmem:[#allocation6 + $0xe00] sm:$0xff]
    %v694 = vld [vmem:[#allocation6 + $0xe08] sm:$0xff]
    %v695 = vld [vmem:[#allocation6 + $0xe10] sm:$0xff]
    %v696 = vld [vmem:[#allocation6 + $0xe18] sm:$0xff]
    %v697 = vld [vmem:[#allocation6 + $0xe20] sm:$0xff]
    %v698 = vld [vmem:[#allocation6 + $0xe28] sm:$0xff]
    %v699 = vld [vmem:[#allocation6 + $0xe30] sm:$0xff]
    %v700 = vld [vmem:[#allocation6 + $0xe38] sm:$0xff]
    %v701 = vld [vmem:[#allocation6 + $0xe40] sm:$0xff]
    %v702 = vld [vmem:[#allocation6 + $0xe48] sm:$0xff]
    %v703 = vld [vmem:[#allocation6 + $0xe50] sm:$0xff]
    %v704 = vld [vmem:[#allocation6 + $0xe58] sm:$0xff]
    %v705 = vld [vmem:[#allocation6 + $0xe60] sm:$0xff]
    %v706 = vld [vmem:[#allocation6 + $0xe68] sm:$0xff]
    %v707 = vld [vmem:[#allocation6 + $0xe70] sm:$0xff]
    %v708 = vld [vmem:[#allocation6 + $0xe78] sm:$0xff]
    %v709 = vld [vmem:[#allocation6 + $0xe80] sm:$0xff]
    %v710 = vld [vmem:[#allocation6 + $0xe88] sm:$0xff]
    %v711 = vld [vmem:[#allocation6 + $0xe90] sm:$0xff]
    %v712 = vld [vmem:[#allocation6 + $0xe98] sm:$0xff]
    %v713 = vld [vmem:[#allocation6 + $0xea0] sm:$0xff]
    %v714 = vld [vmem:[#allocation6 + $0xea8] sm:$0xff]
    %v715 = vld [vmem:[#allocation6 + $0xeb0] sm:$0xff]
    %v716 = vld [vmem:[#allocation6 + $0xeb8] sm:$0xff]
    %v717 = vld [vmem:[#allocation6 + $0xec0] sm:$0xff]
    %v718 = vld [vmem:[#allocation6 + $0xec8] sm:$0xff]
    %v719 = vld [vmem:[#allocation6 + $0xed0] sm:$0xff]
    %v720 = vld [vmem:[#allocation6 + $0xed8] sm:$0xff]
    %v721 = vld [vmem:[#allocation6 + $0xee0] sm:$0xff]
    %v722 = vld [vmem:[#allocation6 + $0xee8] sm:$0xff]
    %v723 = vld [vmem:[#allocation6 + $0xef0] sm:$0xff]
    %v724 = vld [vmem:[#allocation6 + $0xef8] sm:$0xff]
    %v725 = vld [vmem:[#allocation6 + $0xf00] sm:$0xff]
    %v726 = vld [vmem:[#allocation6 + $0xf08] sm:$0xff]
    %v727 = vld [vmem:[#allocation6 + $0xf10] sm:$0xff]
    %v728 = vld [vmem:[#allocation6 + $0xf18] sm:$0xff]
    %v729 = vld [vmem:[#allocation6 + $0xf20] sm:$0xff]
    %v730 = vld [vmem:[#allocation6 + $0xf28] sm:$0xff]
    %v731 = vld [vmem:[#allocation6 + $0xf30] sm:$0xff]
    %v732 = vld [vmem:[#allocation6 + $0xf38] sm:$0xff]
    %v733 = vld [vmem:[#allocation6 + $0xf40] sm:$0xff]
    %v734 = vld [vmem:[#allocation6 + $0xf48] sm:$0xff]
    %v735 = vld [vmem:[#allocation6 + $0xf50] sm:$0xff]
    %v736 = vld [vmem:[#allocation6 + $0xf58] sm:$0xff]
    %v737 = vld [vmem:[#allocation6 + $0xf60] sm:$0xff]
    %v738 = vld [vmem:[#allocation6 + $0xf68] sm:$0xff]
    %v739 = vld [vmem:[#allocation6 + $0xf70] sm:$0xff]
    %v740 = vld [vmem:[#allocation6 + $0xf78] sm:$0xff]
    %v741 = vld [vmem:[#allocation6 + $0xf80] sm:$0xff]
    %v742 = vld [vmem:[#allocation6 + $0xf88] sm:$0xff]
    %v743 = vld [vmem:[#allocation6 + $0xf90] sm:$0xff]
    %v744 = vld [vmem:[#allocation6 + $0xf98] sm:$0xff]
    %v745 = vld [vmem:[#allocation6 + $0xfa0] sm:$0xff]
    %v746 = vld [vmem:[#allocation6 + $0xfa8] sm:$0xff]
    %v747 = vld [vmem:[#allocation6 + $0xfb0] sm:$0xff]
    %v748 = vld [vmem:[#allocation6 + $0xfb8] sm:$0xff]
    %v749 = vld [vmem:[#allocation6 + $0xfc0] sm:$0xff]
    %v750 = vld [vmem:[#allocation6 + $0xfc8] sm:$0xff]
    %v751 = vld [vmem:[#allocation6 + $0xfd0] sm:$0xff]
    %v752 = vld [vmem:[#allocation6 + $0xfd8] sm:$0xff]
    %v753 = vld [vmem:[#allocation6 + $0xfe0] sm:$0xff]
    %v754 = vld [vmem:[#allocation6 + $0xfe8] sm:$0xff]
    %v755 = vld [vmem:[#allocation6 + $0xff0] sm:$0xff]
    %v756 = vld [vmem:[#allocation6 + $0xff8] sm:$0xff]
    %v757 = vld [vmem:[#allocation6 + $0x1000] sm:$0xff]
    %v758 = vld [vmem:[#allocation6 + $0x1008] sm:$0xff]
    %v759 = vld [vmem:[#allocation6 + $0x1010] sm:$0xff]
    %v760 = vld [vmem:[#allocation6 + $0x1018] sm:$0xff]
    %v761 = vld [vmem:[#allocation6 + $0x1020] sm:$0xff]
    %v762 = vld [vmem:[#allocation6 + $0x1028] sm:$0xff]
    %v763 = vld [vmem:[#allocation6 + $0x1030] sm:$0xff]
    %v764 = vld [vmem:[#allocation6 + $0x1038] sm:$0xff]
    %v765 = vld [vmem:[#allocation6 + $0x1040] sm:$0xff]
    %v766 = vld [vmem:[#allocation6 + $0x1048] sm:$0xff]
    %v767 = vld [vmem:[#allocation6 + $0x1050] sm:$0xff]
    %v768 = vld [vmem:[#allocation6 + $0x1058] sm:$0xff]
    %v769 = vld [vmem:[#allocation6 + $0x1060] sm:$0xff]
    %v770 = vld [vmem:[#allocation6 + $0x1068] sm:$0xff]
    %v771 = vld [vmem:[#allocation6 + $0x1070] sm:$0xff]
    %v772 = vld [vmem:[#allocation6 + $0x1078] sm:$0xff]
    %v773 = vld [vmem:[#allocation6 + $0x1080] sm:$0xff]
    %v774 = vld [vmem:[#allocation6 + $0x1088] sm:$0xff]
    %v775 = vld [vmem:[#allocation6 + $0x1090] sm:$0xff]
    %v776 = vld [vmem:[#allocation6 + $0x1098] sm:$0xff]
    %v777 = vld [vmem:[#allocation6 + $0x10a0] sm:$0xff]
    %v778 = vld [vmem:[#allocation6 + $0x10a8] sm:$0xff]
    %v779 = vld [vmem:[#allocation6 + $0x10b0] sm:$0xff]
    %v780 = vld [vmem:[#allocation6 + $0x10b8] sm:$0xff]
    %v781 = vld [vmem:[#allocation6 + $0x10c0] sm:$0xff]
    %v782 = vld [vmem:[#allocation6 + $0x10c8] sm:$0xff]
    %v783 = vld [vmem:[#allocation6 + $0x10d0] sm:$0xff]
    %v784 = vld [vmem:[#allocation6 + $0x10d8] sm:$0xff]
    %v785 = vld [vmem:[#allocation6 + $0x10e0] sm:$0xff]
    %v786 = vld [vmem:[#allocation6 + $0x10e8] sm:$0xff]
    %v787 = vld [vmem:[#allocation6 + $0x10f0] sm:$0xff]
    %v788 = vld [vmem:[#allocation6 + $0x10f8] sm:$0xff]
    %v789 = vld [vmem:[#allocation6 + $0x1100] sm:$0xff]
    %v790 = vld [vmem:[#allocation6 + $0x1108] sm:$0xff]
    %v791 = vld [vmem:[#allocation6 + $0x1110] sm:$0xff]
    %v792 = vld [vmem:[#allocation6 + $0x1118] sm:$0xff]
    %v793 = vld [vmem:[#allocation6 + $0x1120] sm:$0xff]
    %v794 = vld [vmem:[#allocation6 + $0x1128] sm:$0xff]
    %v795 = vld [vmem:[#allocation6 + $0x1130] sm:$0xff]
    %v796 = vld [vmem:[#allocation6 + $0x1138] sm:$0xff]
    %v797 = vld [vmem:[#allocation6 + $0x1140] sm:$0xff]
    %v798 = vld [vmem:[#allocation6 + $0x1148] sm:$0xff]
    %v799 = vld [vmem:[#allocation6 + $0x1150] sm:$0xff]
    %v800 = vld [vmem:[#allocation6 + $0x1158] sm:$0xff]
    %v801 = vld [vmem:[#allocation6 + $0x1160] sm:$0xff]
    %v802 = vld [vmem:[#allocation6 + $0x1168] sm:$0xff]
    %v803 = vld [vmem:[#allocation6 + $0x1170] sm:$0xff]
    %v804 = vld [vmem:[#allocation6 + $0x1178] sm:$0xff]
    %v805 = vld [vmem:[#allocation6 + $0x1180] sm:$0xff]
    %v806 = vld [vmem:[#allocation6 + $0x1188] sm:$0xff]
    %v807 = vld [vmem:[#allocation6 + $0x1190] sm:$0xff]
    %v808 = vld [vmem:[#allocation6 + $0x1198] sm:$0xff]
    %v809 = vld [vmem:[#allocation6 + $0x11a0] sm:$0xff]
    %v810 = vld [vmem:[#allocation6 + $0x11a8] sm:$0xff]
    %v811 = vld [vmem:[#allocation6 + $0x11b0] sm:$0xff]
    %v812 = vld [vmem:[#allocation6 + $0x11b8] sm:$0xff]
    %v813 = vld [vmem:[#allocation6 + $0x11c0] sm:$0xff]
    %v814 = vld [vmem:[#allocation6 + $0x11c8] sm:$0xff]
    %v815 = vld [vmem:[#allocation6 + $0x11d0] sm:$0xff]
    %v816 = vld [vmem:[#allocation6 + $0x11d8] sm:$0xff]
    %v817 = vld [vmem:[#allocation6 + $0x11e0] sm:$0xff]
    %v818 = vld [vmem:[#allocation6 + $0x11e8] sm:$0xff]
    %v819 = vld [vmem:[#allocation6 + $0x11f0] sm:$0xff]
    %v820 = vld [vmem:[#allocation6 + $0x11f8] sm:$0xff]
    %v821 = vld [vmem:[#allocation6 + $0x1200] sm:$0xff]
    %v822 = vld [vmem:[#allocation6 + $0x1208] sm:$0xff]
    %v823 = vld [vmem:[#allocation6 + $0x1210] sm:$0xff]
    %v824 = vld [vmem:[#allocation6 + $0x1218] sm:$0xff]
    %v825 = vld [vmem:[#allocation6 + $0x1220] sm:$0xff]
    %v826 = vld [vmem:[#allocation6 + $0x1228] sm:$0xff]
    %v827 = vld [vmem:[#allocation6 + $0x1230] sm:$0xff]
    %v828 = vld [vmem:[#allocation6 + $0x1238] sm:$0xff]
    %v829 = vld [vmem:[#allocation6 + $0x1240] sm:$0xff]
    %v830 = vld [vmem:[#allocation6 + $0x1248] sm:$0xff]
    %v831 = vld [vmem:[#allocation6 + $0x1250] sm:$0xff]
    %v832 = vld [vmem:[#allocation6 + $0x1258] sm:$0xff]
    %v833 = vld [vmem:[#allocation6 + $0x1260] sm:$0xff]
    %v834 = vld [vmem:[#allocation6 + $0x1268] sm:$0xff]
    %v835 = vld [vmem:[#allocation6 + $0x1270] sm:$0xff]
    %v836 = vld [vmem:[#allocation6 + $0x1278] sm:$0xff]
    %v837 = vld [vmem:[#allocation6 + $0x1280] sm:$0xff]
    %v838 = vld [vmem:[#allocation6 + $0x1288] sm:$0xff]
    %v839 = vld [vmem:[#allocation6 + $0x1290] sm:$0xff]
    %v840 = vld [vmem:[#allocation6 + $0x1298] sm:$0xff]
    %v841 = vld [vmem:[#allocation6 + $0x12a0] sm:$0xff]
    %v842 = vld [vmem:[#allocation6 + $0x12a8] sm:$0xff]
    %v843 = vld [vmem:[#allocation6 + $0x12b0] sm:$0xff]
    %v844 = vld [vmem:[#allocation6 + $0x12b8] sm:$0xff]
    %v845 = vld [vmem:[#allocation6 + $0x12c0] sm:$0xff]
    %v846 = vld [vmem:[#allocation6 + $0x12c8] sm:$0xff]
    %v847 = vld [vmem:[#allocation6 + $0x12d0] sm:$0xff]
    %v848 = vld [vmem:[#allocation6 + $0x12d8] sm:$0xff]
    %v849 = vld [vmem:[#allocation6 + $0x12e0] sm:$0xff]
    %v850 = vld [vmem:[#allocation6 + $0x12e8] sm:$0xff]
    %v851 = vld [vmem:[#allocation6 + $0x12f0] sm:$0xff]
    %v852 = vld [vmem:[#allocation6 + $0x12f8] sm:$0xff]
    %v853 = vld [vmem:[#allocation6 + $0x1300] sm:$0xff]
    %v854 = vld [vmem:[#allocation6 + $0x1308] sm:$0xff]
    %v855 = vld [vmem:[#allocation6 + $0x1310] sm:$0xff]
    %v856 = vld [vmem:[#allocation6 + $0x1318] sm:$0xff]
    %v857 = vld [vmem:[#allocation6 + $0x1320] sm:$0xff]
    %v858 = vld [vmem:[#allocation6 + $0x1328] sm:$0xff]
    %v859 = vld [vmem:[#allocation6 + $0x1330] sm:$0xff]
    %v860 = vld [vmem:[#allocation6 + $0x1338] sm:$0xff]
    %v861 = vld [vmem:[#allocation6 + $0x1340] sm:$0xff]
    %v862 = vld [vmem:[#allocation6 + $0x1348] sm:$0xff]
    %v863 = vld [vmem:[#allocation6 + $0x1350] sm:$0xff]
    %v864 = vld [vmem:[#allocation6 + $0x1358] sm:$0xff]
    %v865 = vld [vmem:[#allocation6 + $0x1360] sm:$0xff]
    %v866 = vld [vmem:[#allocation6 + $0x1368] sm:$0xff]
    %v867 = vld [vmem:[#allocation6 + $0x1370] sm:$0xff]
    %v868 = vld [vmem:[#allocation6 + $0x1378] sm:$0xff]
    %v869 = vld [vmem:[#allocation6 + $0x1380] sm:$0xff]
    %v870 = vld [vmem:[#allocation6 + $0x1388] sm:$0xff]
    %v871 = vld [vmem:[#allocation6 + $0x1390] sm:$0xff]
    %v872 = vld [vmem:[#allocation6 + $0x1398] sm:$0xff]
    %v873 = vld [vmem:[#allocation6 + $0x13a0] sm:$0xff]
    %v874 = vld [vmem:[#allocation6 + $0x13a8] sm:$0xff]
    %v875 = vld [vmem:[#allocation6 + $0x13b0] sm:$0xff]
    %v876 = vld [vmem:[#allocation6 + $0x13b8] sm:$0xff]
    %v877 = vld [vmem:[#allocation6 + $0x13c0] sm:$0xff]
    %v878 = vld [vmem:[#allocation6 + $0x13c8] sm:$0xff]
    %v879 = vld [vmem:[#allocation6 + $0x13d0] sm:$0xff]
    %v880 = vld [vmem:[#allocation6 + $0x13d8] sm:$0xff]
    %v881 = vld [vmem:[#allocation6 + $0x13e0] sm:$0xff]
    %v882 = vld [vmem:[#allocation6 + $0x13e8] sm:$0xff]
    %v883 = vld [vmem:[#allocation6 + $0x13f0] sm:$0xff]
    %v884 = vld [vmem:[#allocation6 + $0x13f8] sm:$0xff]
    %v885 = vld [vmem:[#allocation6 + $0x1400] sm:$0xff]
    %v886 = vld [vmem:[#allocation6 + $0x1408] sm:$0xff]
    %v887 = vld [vmem:[#allocation6 + $0x1410] sm:$0xff]
    %v888 = vld [vmem:[#allocation6 + $0x1418] sm:$0xff]
    %v889 = vld [vmem:[#allocation6 + $0x1420] sm:$0xff]
    %v890 = vld [vmem:[#allocation6 + $0x1428] sm:$0xff]
    %v891 = vld [vmem:[#allocation6 + $0x1430] sm:$0xff]
    %v892 = vld [vmem:[#allocation6 + $0x1438] sm:$0xff]
    %v893 = vld [vmem:[#allocation6 + $0x1440] sm:$0xff]
    %v894 = vld [vmem:[#allocation6 + $0x1448] sm:$0xff]
    %v895 = vld [vmem:[#allocation6 + $0x1450] sm:$0xff]
    %v896 = vld [vmem:[#allocation6 + $0x1458] sm:$0xff]
    %v897 = vld [vmem:[#allocation6 + $0x1460] sm:$0xff]
    %v898 = vld [vmem:[#allocation6 + $0x1468] sm:$0xff]
    %v899 = vld [vmem:[#allocation6 + $0x1470] sm:$0xff]
    %v900 = vld [vmem:[#allocation6 + $0x1478] sm:$0xff]
    %v901 = vld [vmem:[#allocation6 + $0x1480] sm:$0xff]
    %v902 = vld [vmem:[#allocation6 + $0x1488] sm:$0xff]
    %v903 = vld [vmem:[#allocation6 + $0x1490] sm:$0xff]
    %v904 = vld [vmem:[#allocation6 + $0x1498] sm:$0xff]
    %v905 = vld [vmem:[#allocation6 + $0x14a0] sm:$0xff]
    %v906 = vld [vmem:[#allocation6 + $0x14a8] sm:$0xff]
    %v907 = vld [vmem:[#allocation6 + $0x14b0] sm:$0xff]
    %v908 = vld [vmem:[#allocation6 + $0x14b8] sm:$0xff]
    %v909 = vld [vmem:[#allocation6 + $0x14c0] sm:$0xff]
    %v910 = vld [vmem:[#allocation6 + $0x14c8] sm:$0xff]
    %v911 = vld [vmem:[#allocation6 + $0x14d0] sm:$0xff]
    %v912 = vld [vmem:[#allocation6 + $0x14d8] sm:$0xff]
    %v913 = vld [vmem:[#allocation6 + $0x14e0] sm:$0xff]
    %v914 = vld [vmem:[#allocation6 + $0x14e8] sm:$0xff]
    %v915 = vld [vmem:[#allocation6 + $0x14f0] sm:$0xff]
    %v916 = vld [vmem:[#allocation6 + $0x14f8] sm:$0xff]
    %v917 = vld [vmem:[#allocation6 + $0x1500] sm:$0xff]
    %v918 = vld [vmem:[#allocation6 + $0x1508] sm:$0xff]
    %v919 = vld [vmem:[#allocation6 + $0x1510] sm:$0xff]
    %v920 = vld [vmem:[#allocation6 + $0x1518] sm:$0xff]
    %v921 = vld [vmem:[#allocation6 + $0x1520] sm:$0xff]
    %v922 = vld [vmem:[#allocation6 + $0x1528] sm:$0xff]
    %v923 = vld [vmem:[#allocation6 + $0x1530] sm:$0xff]
    %v924 = vld [vmem:[#allocation6 + $0x1538] sm:$0xff]
    %v925 = vld [vmem:[#allocation6 + $0x1540] sm:$0xff]
    %v926 = vld [vmem:[#allocation6 + $0x1548] sm:$0xff]
    %v927 = vld [vmem:[#allocation6 + $0x1550] sm:$0xff]
    %v928 = vld [vmem:[#allocation6 + $0x1558] sm:$0xff]
    %v929 = vld [vmem:[#allocation6 + $0x1560] sm:$0xff]
    %v930 = vld [vmem:[#allocation6 + $0x1568] sm:$0xff]
    %v931 = vld [vmem:[#allocation6 + $0x1570] sm:$0xff]
    %v932 = vld [vmem:[#allocation6 + $0x1578] sm:$0xff]
    %v933 = vld [vmem:[#allocation6 + $0x1580] sm:$0xff]
    %v934 = vld [vmem:[#allocation6 + $0x1588] sm:$0xff]
    %v935 = vld [vmem:[#allocation6 + $0x1590] sm:$0xff]
    %v936 = vld [vmem:[#allocation6 + $0x1598] sm:$0xff]
    %v937 = vld [vmem:[#allocation6 + $0x15a0] sm:$0xff]
    %v938 = vld [vmem:[#allocation6 + $0x15a8] sm:$0xff]
    %v939 = vld [vmem:[#allocation6 + $0x15b0] sm:$0xff]
    %v940 = vld [vmem:[#allocation6 + $0x15b8] sm:$0xff]
    %v941 = vld [vmem:[#allocation6 + $0x15c0] sm:$0xff]
    %v942 = vld [vmem:[#allocation6 + $0x15c8] sm:$0xff]
    %v943 = vld [vmem:[#allocation6 + $0x15d0] sm:$0xff]
    %v944 = vld [vmem:[#allocation6 + $0x15d8] sm:$0xff]
    %v945 = vld [vmem:[#allocation6 + $0x15e0] sm:$0xff]
    %v946 = vld [vmem:[#allocation6 + $0x15e8] sm:$0xff]
    %v947 = vld [vmem:[#allocation6 + $0x15f0] sm:$0xff]
    %v948 = vld [vmem:[#allocation6 + $0x15f8] sm:$0xff]
    %v949 = vld [vmem:[#allocation6 + $0x1600] sm:$0xff]
    %v950 = vld [vmem:[#allocation6 + $0x1608] sm:$0xff]
    %v951 = vld [vmem:[#allocation6 + $0x1610] sm:$0xff]
    %v952 = vld [vmem:[#allocation6 + $0x1618] sm:$0xff]
    %v953 = vld [vmem:[#allocation6 + $0x1620] sm:$0xff]
    %v954 = vld [vmem:[#allocation6 + $0x1628] sm:$0xff]
    %v955 = vld [vmem:[#allocation6 + $0x1630] sm:$0xff]
    %v956 = vld [vmem:[#allocation6 + $0x1638] sm:$0xff]
    %v957 = vld [vmem:[#allocation6 + $0x1640] sm:$0xff]
    %v958 = vld [vmem:[#allocation6 + $0x1648] sm:$0xff]
    %v959 = vld [vmem:[#allocation6 + $0x1650] sm:$0xff]
    %v960 = vld [vmem:[#allocation6 + $0x1658] sm:$0xff]
    %v961 = vld [vmem:[#allocation6 + $0x1660] sm:$0xff]
    %v962 = vld [vmem:[#allocation6 + $0x1668] sm:$0xff]
    %v963 = vld [vmem:[#allocation6 + $0x1670] sm:$0xff]
    %v964 = vld [vmem:[#allocation6 + $0x1678] sm:$0xff]
    %v965 = vld [vmem:[#allocation6 + $0x1680] sm:$0xff]
    %v966 = vld [vmem:[#allocation6 + $0x1688] sm:$0xff]
    %v967 = vld [vmem:[#allocation6 + $0x1690] sm:$0xff]
    %v968 = vld [vmem:[#allocation6 + $0x1698] sm:$0xff]
    %v969 = vld [vmem:[#allocation6 + $0x16a0] sm:$0xff]
    %v970 = vld [vmem:[#allocation6 + $0x16a8] sm:$0xff]
    %v971 = vld [vmem:[#allocation6 + $0x16b0] sm:$0xff]
    %v972 = vld [vmem:[#allocation6 + $0x16b8] sm:$0xff]
    %v973 = vld [vmem:[#allocation6 + $0x16c0] sm:$0xff]
    %v974 = vld [vmem:[#allocation6 + $0x16c8] sm:$0xff]
    %v975 = vld [vmem:[#allocation6 + $0x16d0] sm:$0xff]
    %v976 = vld [vmem:[#allocation6 + $0x16d8] sm:$0xff]
    %v977 = vld [vmem:[#allocation6 + $0x16e0] sm:$0xff]
    %v978 = vld [vmem:[#allocation6 + $0x16e8] sm:$0xff]
    %v979 = vld [vmem:[#allocation6 + $0x16f0] sm:$0xff]
    %v980 = vld [vmem:[#allocation6 + $0x16f8] sm:$0xff]
    %v981 = vld [vmem:[#allocation6 + $0x1700] sm:$0xff]
    %v982 = vld [vmem:[#allocation6 + $0x1708] sm:$0xff]
    %v983 = vld [vmem:[#allocation6 + $0x1710] sm:$0xff]
    %v984 = vld [vmem:[#allocation6 + $0x1718] sm:$0xff]
    %v985 = vld [vmem:[#allocation6 + $0x1720] sm:$0xff]
    %v986 = vld [vmem:[#allocation6 + $0x1728] sm:$0xff]
    %v987 = vld [vmem:[#allocation6 + $0x1730] sm:$0xff]
    %v988 = vld [vmem:[#allocation6 + $0x1738] sm:$0xff]
    %v989 = vld [vmem:[#allocation6 + $0x1740] sm:$0xff]
    %v990 = vld [vmem:[#allocation6 + $0x1748] sm:$0xff]
    %v991 = vld [vmem:[#allocation6 + $0x1750] sm:$0xff]
    %v992 = vld [vmem:[#allocation6 + $0x1758] sm:$0xff]
    %v993 = vld [vmem:[#allocation6 + $0x1760] sm:$0xff]
    %v994 = vld [vmem:[#allocation6 + $0x1768] sm:$0xff]
    %v995 = vld [vmem:[#allocation6 + $0x1770] sm:$0xff]
    %v996 = vld [vmem:[#allocation6 + $0x1778] sm:$0xff]
    %v997 = vld [vmem:[#allocation6 + $0x1780] sm:$0xff]
    %v998 = vld [vmem:[#allocation6 + $0x1788] sm:$0xff]
    %v999 = vld [vmem:[#allocation6 + $0x1790] sm:$0xff]
    %v1000 = vld [vmem:[#allocation6 + $0x1798] sm:$0xff]
    %v1001 = vld [vmem:[#allocation6 + $0x17a0] sm:$0xff]
    %v1002 = vld [vmem:[#allocation6 + $0x17a8] sm:$0xff]
    %v1003 = vld [vmem:[#allocation6 + $0x17b0] sm:$0xff]
    %v1004 = vld [vmem:[#allocation6 + $0x17b8] sm:$0xff]
    %v1005 = vld [vmem:[#allocation6 + $0x17c0] sm:$0xff]
    %v1006 = vld [vmem:[#allocation6 + $0x17c8] sm:$0xff]
    %v1007 = vld [vmem:[#allocation6 + $0x17d0] sm:$0xff]
    %v1008 = vld [vmem:[#allocation6 + $0x17d8] sm:$0xff]
    %v1009 = vld [vmem:[#allocation6 + $0x17e0] sm:$0xff]
    %v1010 = vld [vmem:[#allocation6 + $0x17e8] sm:$0xff]
    %v1011 = vld [vmem:[#allocation6 + $0x17f0] sm:$0xff]
    %v1012 = vld [vmem:[#allocation6 + $0x17f8] sm:$0xff]
    %v1013 = vld [vmem:[#allocation6 + $0x1800] sm:$0xff]
    %v1014 = vld [vmem:[#allocation6 + $0x1808] sm:$0xff]
    %v1015 = vld [vmem:[#allocation6 + $0x1810] sm:$0xff]
    %v1016 = vld [vmem:[#allocation6 + $0x1818] sm:$0xff]
    %v1017 = vld [vmem:[#allocation6 + $0x1820] sm:$0xff]
    %v1018 = vld [vmem:[#allocation6 + $0x1828] sm:$0xff]
    %v1019 = vld [vmem:[#allocation6 + $0x1830] sm:$0xff]
    %v1020 = vld [vmem:[#allocation6 + $0x1838] sm:$0xff]
    %v1021 = vld [vmem:[#allocation6 + $0x1840] sm:$0xff]
    %v1022 = vld [vmem:[#allocation6 + $0x1848] sm:$0xff]
    %v1023 = vld [vmem:[#allocation6 + $0x1850] sm:$0xff]
    %v1024 = vld [vmem:[#allocation6 + $0x1858] sm:$0xff]
    %v1025 = vld [vmem:[#allocation6 + $0x1860] sm:$0xff]
    %v1026 = vld [vmem:[#allocation6 + $0x1868] sm:$0xff]
    %v1027 = vld [vmem:[#allocation6 + $0x1870] sm:$0xff]
    %v1028 = vld [vmem:[#allocation6 + $0x1878] sm:$0xff]
    %v1029 = vld [vmem:[#allocation6 + $0x1880] sm:$0xff]
    %v1030 = vld [vmem:[#allocation6 + $0x1888] sm:$0xff]
    %v1031 = vld [vmem:[#allocation6 + $0x1890] sm:$0xff]
    %v1032 = vld [vmem:[#allocation6 + $0x1898] sm:$0xff]
    %v1033 = vld [vmem:[#allocation6 + $0x18a0] sm:$0xff]
    %v1034 = vld [vmem:[#allocation6 + $0x18a8] sm:$0xff]
    %v1035 = vld [vmem:[#allocation6 + $0x18b0] sm:$0xff]
    %v1036 = vld [vmem:[#allocation6 + $0x18b8] sm:$0xff]
    %v1037 = vld [vmem:[#allocation6 + $0x18c0] sm:$0xff]
    %v1038 = vld [vmem:[#allocation6 + $0x18c8] sm:$0xff]
    %v1039 = vld [vmem:[#allocation6 + $0x18d0] sm:$0xff]
    %v1040 = vld [vmem:[#allocation6 + $0x18d8] sm:$0xff]
    %v1041 = vld [vmem:[#allocation6 + $0x18e0] sm:$0xff]
    %v1042 = vld [vmem:[#allocation6 + $0x18e8] sm:$0xff]
    %v1043 = vld [vmem:[#allocation6 + $0x18f0] sm:$0xff]
    %v1044 = vld [vmem:[#allocation6 + $0x18f8] sm:$0xff]
    %v1045 = vld [vmem:[#allocation6 + $0x1900] sm:$0xff]
    %v1046 = vld [vmem:[#allocation6 + $0x1908] sm:$0xff]
    %v1047 = vld [vmem:[#allocation6 + $0x1910] sm:$0xff]
    %v1048 = vld [vmem:[#allocation6 + $0x1918] sm:$0xff]
    %v1049 = vld [vmem:[#allocation6 + $0x1920] sm:$0xff]
    %v1050 = vld [vmem:[#allocation6 + $0x1928] sm:$0xff]
    %v1051 = vld [vmem:[#allocation6 + $0x1930] sm:$0xff]
    %v1052 = vld [vmem:[#allocation6 + $0x1938] sm:$0xff]
    %v1053 = vld [vmem:[#allocation6 + $0x1940] sm:$0xff]
    %v1054 = vld [vmem:[#allocation6 + $0x1948] sm:$0xff]
    %v1055 = vld [vmem:[#allocation6 + $0x1950] sm:$0xff]
    %v1056 = vld [vmem:[#allocation6 + $0x1958] sm:$0xff]
    %v1057 = vld [vmem:[#allocation6 + $0x1960] sm:$0xff]
    %v1058 = vld [vmem:[#allocation6 + $0x1968] sm:$0xff]
    %v1059 = vld [vmem:[#allocation6 + $0x1970] sm:$0xff]
    %v1060 = vld [vmem:[#allocation6 + $0x1978] sm:$0xff]
    %v1061 = vld [vmem:[#allocation6 + $0x1980] sm:$0xff]
    %v1062 = vld [vmem:[#allocation6 + $0x1988] sm:$0xff]
    %v1063 = vld [vmem:[#allocation6 + $0x1990] sm:$0xff]
    %v1064 = vld [vmem:[#allocation6 + $0x1998] sm:$0xff]
    %v1065 = vld [vmem:[#allocation6 + $0x19a0] sm:$0xff]
    %v1066 = vld [vmem:[#allocation6 + $0x19a8] sm:$0xff]
    %v1067 = vld [vmem:[#allocation6 + $0x19b0] sm:$0xff]
    %v1068 = vld [vmem:[#allocation6 + $0x19b8] sm:$0xff]
    %v1069 = vld [vmem:[#allocation6 + $0x19c0] sm:$0xff]
    %v1070 = vld [vmem:[#allocation6 + $0x19c8] sm:$0xff]
    %v1071 = vld [vmem:[#allocation6 + $0x19d0] sm:$0xff]
    %v1072 = vld [vmem:[#allocation6 + $0x19d8] sm:$0xff]
    %v1073 = vld [vmem:[#allocation6 + $0x19e0] sm:$0xff]
    %v1074 = vld [vmem:[#allocation6 + $0x19e8] sm:$0xff]
    %v1075 = vld [vmem:[#allocation6 + $0x19f0] sm:$0xff]
    %v1076 = vld [vmem:[#allocation6 + $0x19f8] sm:$0xff]
    %v1077 = vld [vmem:[#allocation6 + $0x1a00] sm:$0xff]
    %v1078 = vld [vmem:[#allocation6 + $0x1a08] sm:$0xff]
    %v1079 = vld [vmem:[#allocation6 + $0x1a10] sm:$0xff]
    %v1080 = vld [vmem:[#allocation6 + $0x1a18] sm:$0xff]
    %v1081 = vld [vmem:[#allocation6 + $0x1a20] sm:$0xff]
    %v1082 = vld [vmem:[#allocation6 + $0x1a28] sm:$0xff]
    %v1083 = vld [vmem:[#allocation6 + $0x1a30] sm:$0xff]
    %v1084 = vld [vmem:[#allocation6 + $0x1a38] sm:$0xff]
    %v1085 = vld [vmem:[#allocation6 + $0x1a40] sm:$0xff]
    %v1086 = vld [vmem:[#allocation6 + $0x1a48] sm:$0xff]
    %v1087 = vld [vmem:[#allocation6 + $0x1a50] sm:$0xff]
    %v1088 = vld [vmem:[#allocation6 + $0x1a58] sm:$0xff]
    %v1089 = vld [vmem:[#allocation6 + $0x1a60] sm:$0xff]
    %v1090 = vld [vmem:[#allocation6 + $0x1a68] sm:$0xff]
    %v1091 = vld [vmem:[#allocation6 + $0x1a70] sm:$0xff]
    %v1092 = vld [vmem:[#allocation6 + $0x1a78] sm:$0xff]
    %v1093 = vld [vmem:[#allocation6 + $0x1a80] sm:$0xff]
    %v1094 = vld [vmem:[#allocation6 + $0x1a88] sm:$0xff]
    %v1095 = vld [vmem:[#allocation6 + $0x1a90] sm:$0xff]
    %v1096 = vld [vmem:[#allocation6 + $0x1a98] sm:$0xff]
    %v1097 = vld [vmem:[#allocation6 + $0x1aa0] sm:$0xff]
    %v1098 = vld [vmem:[#allocation6 + $0x1aa8] sm:$0xff]
    %v1099 = vld [vmem:[#allocation6 + $0x1ab0] sm:$0xff]
    %v1100 = vld [vmem:[#allocation6 + $0x1ab8] sm:$0xff]
    %v1101 = vld [vmem:[#allocation6 + $0x1ac0] sm:$0xff]
    %v1102 = vld [vmem:[#allocation6 + $0x1ac8] sm:$0xff]
    %v1103 = vld [vmem:[#allocation6 + $0x1ad0] sm:$0xff]
    %v1104 = vld [vmem:[#allocation6 + $0x1ad8] sm:$0xff]
    %v1105 = vld [vmem:[#allocation6 + $0x1ae0] sm:$0xff]
    %v1106 = vld [vmem:[#allocation6 + $0x1ae8] sm:$0xff]
    %v1107 = vld [vmem:[#allocation6 + $0x1af0] sm:$0xff]
    %v1108 = vld [vmem:[#allocation6 + $0x1af8] sm:$0xff]
    %v1109 = vld [vmem:[#allocation6 + $0x1b00] sm:$0xff]
    %v1110 = vld [vmem:[#allocation6 + $0x1b08] sm:$0xff]
    %v1111 = vld [vmem:[#allocation6 + $0x1b10] sm:$0xff]
    %v1112 = vld [vmem:[#allocation6 + $0x1b18] sm:$0xff]
    %v1113 = vld [vmem:[#allocation6 + $0x1b20] sm:$0xff]
    %v1114 = vld [vmem:[#allocation6 + $0x1b28] sm:$0xff]
    %v1115 = vld [vmem:[#allocation6 + $0x1b30] sm:$0xff]
    %v1116 = vld [vmem:[#allocation6 + $0x1b38] sm:$0xff]
    %v1117 = vld [vmem:[#allocation6 + $0x1b40] sm:$0xff]
    %v1118 = vld [vmem:[#allocation6 + $0x1b48] sm:$0xff]
    %v1119 = vld [vmem:[#allocation6 + $0x1b50] sm:$0xff]
    %v1120 = vld [vmem:[#allocation6 + $0x1b58] sm:$0xff]
    %v1121 = vld [vmem:[#allocation6 + $0x1b60] sm:$0xff]
    %v1122 = vld [vmem:[#allocation6 + $0x1b68] sm:$0xff]
    %v1123 = vld [vmem:[#allocation6 + $0x1b70] sm:$0xff]
    %v1124 = vld [vmem:[#allocation6 + $0x1b78] sm:$0xff]
    %v1125 = vld [vmem:[#allocation6 + $0x1b80] sm:$0xff]
    %v1126 = vld [vmem:[#allocation6 + $0x1b88] sm:$0xff]
    %v1127 = vld [vmem:[#allocation6 + $0x1b90] sm:$0xff]
    %v1128 = vld [vmem:[#allocation6 + $0x1b98] sm:$0xff]
    %v1129 = vld [vmem:[#allocation6 + $0x1ba0] sm:$0xff]
    %v1130 = vld [vmem:[#allocation6 + $0x1ba8] sm:$0xff]
    %v1131 = vld [vmem:[#allocation6 + $0x1bb0] sm:$0xff]
    %v1132 = vld [vmem:[#allocation6 + $0x1bb8] sm:$0xff]
    %v1133 = vld [vmem:[#allocation6 + $0x1bc0] sm:$0xff]
    %v1134 = vld [vmem:[#allocation6 + $0x1bc8] sm:$0xff]
    %v1135 = vld [vmem:[#allocation6 + $0x1bd0] sm:$0xff]
    %v1136 = vld [vmem:[#allocation6 + $0x1bd8] sm:$0xff]
    %v1137 = vld [vmem:[#allocation6 + $0x1be0] sm:$0xff]
    %v1138 = vld [vmem:[#allocation6 + $0x1be8] sm:$0xff]
    %v1139 = vld [vmem:[#allocation6 + $0x1bf0] sm:$0xff]
    %v1140 = vld [vmem:[#allocation6 + $0x1bf8] sm:$0xff]
    %v1141 = vld [vmem:[#allocation6 + $0x1c00] sm:$0xff]
    %v1142 = vld [vmem:[#allocation6 + $0x1c08] sm:$0xff]
    %v1143 = vld [vmem:[#allocation6 + $0x1c10] sm:$0xff]
    %v1144 = vld [vmem:[#allocation6 + $0x1c18] sm:$0xff]
    %v1145 = vld [vmem:[#allocation6 + $0x1c20] sm:$0xff]
    %v1146 = vld [vmem:[#allocation6 + $0x1c28] sm:$0xff]
    %v1147 = vld [vmem:[#allocation6 + $0x1c30] sm:$0xff]
    %v1148 = vld [vmem:[#allocation6 + $0x1c38] sm:$0xff]
    %v1149 = vld [vmem:[#allocation6 + $0x1c40] sm:$0xff]
    %v1150 = vld [vmem:[#allocation6 + $0x1c48] sm:$0xff]
    %v1151 = vld [vmem:[#allocation6 + $0x1c50] sm:$0xff]
    %v1152 = vld [vmem:[#allocation6 + $0x1c58] sm:$0xff]
    %v1153 = vld [vmem:[#allocation6 + $0x1c60] sm:$0xff]
    %v1154 = vld [vmem:[#allocation6 + $0x1c68] sm:$0xff]
    %v1155 = vld [vmem:[#allocation6 + $0x1c70] sm:$0xff]
    %v1156 = vld [vmem:[#allocation6 + $0x1c78] sm:$0xff]
    %v1157 = vld [vmem:[#allocation6 + $0x1c80] sm:$0xff]
    %v1158 = vld [vmem:[#allocation6 + $0x1c88] sm:$0xff]
    %v1159 = vld [vmem:[#allocation6 + $0x1c90] sm:$0xff]
    %v1160 = vld [vmem:[#allocation6 + $0x1c98] sm:$0xff]
    %v1161 = vld [vmem:[#allocation6 + $0x1ca0] sm:$0xff]
    %v1162 = vld [vmem:[#allocation6 + $0x1ca8] sm:$0xff]
    %v1163 = vld [vmem:[#allocation6 + $0x1cb0] sm:$0xff]
    %v1164 = vld [vmem:[#allocation6 + $0x1cb8] sm:$0xff]
    %v1165 = vld [vmem:[#allocation6 + $0x1cc0] sm:$0xff]
    %v1166 = vld [vmem:[#allocation6 + $0x1cc8] sm:$0xff]
    %v1167 = vld [vmem:[#allocation6 + $0x1cd0] sm:$0xff]
    %v1168 = vld [vmem:[#allocation6 + $0x1cd8] sm:$0xff]
    %v1169 = vld [vmem:[#allocation6 + $0x1ce0] sm:$0xff]
    %v1170 = vld [vmem:[#allocation6 + $0x1ce8] sm:$0xff]
    %v1171 = vld [vmem:[#allocation6 + $0x1cf0] sm:$0xff]
    %v1172 = vld [vmem:[#allocation6 + $0x1cf8] sm:$0xff]
    %v1173 = vld [vmem:[#allocation6 + $0x1d00] sm:$0xff]
    %v1174 = vld [vmem:[#allocation6 + $0x1d08] sm:$0xff]
    %v1175 = vld [vmem:[#allocation6 + $0x1d10] sm:$0xff]
    %v1176 = vld [vmem:[#allocation6 + $0x1d18] sm:$0xff]
    %v1177 = vld [vmem:[#allocation6 + $0x1d20] sm:$0xff]
    %v1178 = vld [vmem:[#allocation6 + $0x1d28] sm:$0xff]
    %v1179 = vld [vmem:[#allocation6 + $0x1d30] sm:$0xff]
    %v1180 = vld [vmem:[#allocation6 + $0x1d38] sm:$0xff]
    %v1181 = vld [vmem:[#allocation6 + $0x1d40] sm:$0xff]
    %v1182 = vld [vmem:[#allocation6 + $0x1d48] sm:$0xff]
    %v1183 = vld [vmem:[#allocation6 + $0x1d50] sm:$0xff]
    %v1184 = vld [vmem:[#allocation6 + $0x1d58] sm:$0xff]
    %v1185 = vld [vmem:[#allocation6 + $0x1d60] sm:$0xff]
    %v1186 = vld [vmem:[#allocation6 + $0x1d68] sm:$0xff]
    %v1187 = vld [vmem:[#allocation6 + $0x1d70] sm:$0xff]
    %v1188 = vld [vmem:[#allocation6 + $0x1d78] sm:$0xff]
    %v1189 = vld [vmem:[#allocation6 + $0x1d80] sm:$0xff]
    %v1190 = vld [vmem:[#allocation6 + $0x1d88] sm:$0xff]
    %v1191 = vld [vmem:[#allocation6 + $0x1d90] sm:$0xff]
    %v1192 = vld [vmem:[#allocation6 + $0x1d98] sm:$0xff]
    %v1193 = vld [vmem:[#allocation6 + $0x1da0] sm:$0xff]
    %v1194 = vld [vmem:[#allocation6 + $0x1da8] sm:$0xff]
    %v1195 = vld [vmem:[#allocation6 + $0x1db0] sm:$0xff]
    %v1196 = vld [vmem:[#allocation6 + $0x1db8] sm:$0xff]
    %v1197 = vld [vmem:[#allocation6 + $0x1dc0] sm:$0xff]
    %v1198 = vld [vmem:[#allocation6 + $0x1dc8] sm:$0xff]
    %v1199 = vld [vmem:[#allocation6 + $0x1dd0] sm:$0xff]
    %v1200 = vld [vmem:[#allocation6 + $0x1dd8] sm:$0xff]
    %v1201 = vld [vmem:[#allocation6 + $0x1de0] sm:$0xff]
    %v1202 = vld [vmem:[#allocation6 + $0x1de8] sm:$0xff]
    %v1203 = vld [vmem:[#allocation6 + $0x1df0] sm:$0xff]
    %v1204 = vld [vmem:[#allocation6 + $0x1df8] sm:$0xff]
    %v1205 = vld [vmem:[#allocation6 + $0x1e00] sm:$0xff]
    %v1206 = vld [vmem:[#allocation6 + $0x1e08] sm:$0xff]
    %v1207 = vld [vmem:[#allocation6 + $0x1e10] sm:$0xff]
    %v1208 = vld [vmem:[#allocation6 + $0x1e18] sm:$0xff]
    %v1209 = vld [vmem:[#allocation6 + $0x1e20] sm:$0xff]
    %v1210 = vld [vmem:[#allocation6 + $0x1e28] sm:$0xff]
    %v1211 = vld [vmem:[#allocation6 + $0x1e30] sm:$0xff]
    %v1212 = vld [vmem:[#allocation6 + $0x1e38] sm:$0xff]
    %v1213 = vld [vmem:[#allocation6 + $0x1e40] sm:$0xff]
    %v1214 = vld [vmem:[#allocation6 + $0x1e48] sm:$0xff]
    %v1215 = vld [vmem:[#allocation6 + $0x1e50] sm:$0xff]
    %v1216 = vld [vmem:[#allocation6 + $0x1e58] sm:$0xff]
    %v1217 = vld [vmem:[#allocation6 + $0x1e60] sm:$0xff]
    %v1218 = vld [vmem:[#allocation6 + $0x1e68] sm:$0xff]
    %v1219 = vld [vmem:[#allocation6 + $0x1e70] sm:$0xff]
    %v1220 = vld [vmem:[#allocation6 + $0x1e78] sm:$0xff]
    %v1221 = vld [vmem:[#allocation6 + $0x1e80] sm:$0xff]
    %v1222 = vld [vmem:[#allocation6 + $0x1e88] sm:$0xff]
    %v1223 = vld [vmem:[#allocation6 + $0x1e90] sm:$0xff]
    %v1224 = vld [vmem:[#allocation6 + $0x1e98] sm:$0xff]
    %v1225 = vld [vmem:[#allocation6 + $0x1ea0] sm:$0xff]
    %v1226 = vld [vmem:[#allocation6 + $0x1ea8] sm:$0xff]
    %v1227 = vld [vmem:[#allocation6 + $0x1eb0] sm:$0xff]
    %v1228 = vld [vmem:[#allocation6 + $0x1eb8] sm:$0xff]
    %v1229 = vld [vmem:[#allocation6 + $0x1ec0] sm:$0xff]
    %v1230 = vld [vmem:[#allocation6 + $0x1ec8] sm:$0xff]
    %v1231 = vld [vmem:[#allocation6 + $0x1ed0] sm:$0xff]
    %v1232 = vld [vmem:[#allocation6 + $0x1ed8] sm:$0xff]
    %v1233 = vld [vmem:[#allocation6 + $0x1ee0] sm:$0xff]
    %v1234 = vld [vmem:[#allocation6 + $0x1ee8] sm:$0xff]
    %v1235 = vld [vmem:[#allocation6 + $0x1ef0] sm:$0xff]
    %v1236 = vld [vmem:[#allocation6 + $0x1ef8] sm:$0xff]
    %v1237 = vld [vmem:[#allocation6 + $0x1f00] sm:$0xff]
    %v1238 = vld [vmem:[#allocation6 + $0x1f08] sm:$0xff]
    %v1239 = vld [vmem:[#allocation6 + $0x1f10] sm:$0xff]
    %v1240 = vld [vmem:[#allocation6 + $0x1f18] sm:$0xff]
    %v1241 = vld [vmem:[#allocation6 + $0x1f20] sm:$0xff]
    %v1242 = vld [vmem:[#allocation6 + $0x1f28] sm:$0xff]
    %v1243 = vld [vmem:[#allocation6 + $0x1f30] sm:$0xff]
    %v1244 = vld [vmem:[#allocation6 + $0x1f38] sm:$0xff]
    %v1245 = vld [vmem:[#allocation6 + $0x1f40] sm:$0xff]
    %v1246 = vld [vmem:[#allocation6 + $0x1f48] sm:$0xff]
    %v1247 = vld [vmem:[#allocation6 + $0x1f50] sm:$0xff]
    %v1248 = vld [vmem:[#allocation6 + $0x1f58] sm:$0xff]
    %v1249 = vld [vmem:[#allocation6 + $0x1f60] sm:$0xff]
    %v1250 = vld [vmem:[#allocation6 + $0x1f68] sm:$0xff]
    %v1251 = vld [vmem:[#allocation6 + $0x1f70] sm:$0xff]
    %v1252 = vld [vmem:[#allocation6 + $0x1f78] sm:$0xff]
    %v1253 = vld [vmem:[#allocation6 + $0x1f80] sm:$0xff]
    %v1254 = vld [vmem:[#allocation6 + $0x1f88] sm:$0xff]
    %v1255 = vld [vmem:[#allocation6 + $0x1f90] sm:$0xff]
    %v1256 = vld [vmem:[#allocation6 + $0x1f98] sm:$0xff]
    %v1257 = vld [vmem:[#allocation6 + $0x1fa0] sm:$0xff]
    %v1258 = vld [vmem:[#allocation6 + $0x1fa8] sm:$0xff]
    %v1259 = vld [vmem:[#allocation6 + $0x1fb0] sm:$0xff]
    %v1260 = vld [vmem:[#allocation6 + $0x1fb8] sm:$0xff]
    %v1261 = vld [vmem:[#allocation6 + $0x1fc0] sm:$0xff]
    %v1262 = vld [vmem:[#allocation6 + $0x1fc8] sm:$0xff]
    %v1263 = vld [vmem:[#allocation6 + $0x1fd0] sm:$0xff]
    %v1264 = vld [vmem:[#allocation6 + $0x1fd8] sm:$0xff]
    %v1265 = vld [vmem:[#allocation6 + $0x1fe0] sm:$0xff]
    %v1266 = vld [vmem:[#allocation6 + $0x1fe8] sm:$0xff]
    %v1267 = vld [vmem:[#allocation6 + $0x1ff0] sm:$0xff]
    %v1268 = vld [vmem:[#allocation6 + $0x1ff8] sm:$0xff]
    %v1277 = vunpack.c.l.b16 %v237
    %v1278 = vunpack.c.h.b16 %v237
    %v1279 = vunpack.c.l.b16 %v238
    %v1280 = vunpack.c.h.b16 %v238
    %v1281 = vunpack.c.l.b16 %v239
    %v1282 = vunpack.c.h.b16 %v239
    %v1283 = vunpack.c.l.b16 %v240
    %v1284 = vunpack.c.h.b16 %v240
    %v1285 = vunpack.c.l.b16 %v241
    %v1286 = vunpack.c.h.b16 %v241
    %v1287 = vunpack.c.l.b16 %v242
    %v1288 = vunpack.c.h.b16 %v242
    %v1289 = vunpack.c.l.b16 %v243
    %v1290 = vunpack.c.h.b16 %v243
    %v1291 = vunpack.c.l.b16 %v244
    %v1292 = vunpack.c.h.b16 %v244
    %v1293 = vpack.c.b16 %v1285, %v1277
    %v1294 = vpack.c.b16 %v1286, %v1278
    %v1295 = vpack.c.b16 %v1287, %v1279
    %v1296 = vpack.c.b16 %v1288, %v1280
    %v1297 = vpack.c.b16 %v1289, %v1281
    %v1298 = vpack.c.b16 %v1290, %v1282
    %v1299 = vpack.c.b16 %v1291, %v1283
    %v1300 = vpack.c.b16 %v1292, %v1284
    %v2333 = vunpack.c.l.b16 %v245
    %v2334 = vunpack.c.h.b16 %v245
    %v2335 = vunpack.c.l.b16 %v246
    %v2336 = vunpack.c.h.b16 %v246
    %v2337 = vunpack.c.l.b16 %v247
    %v2338 = vunpack.c.h.b16 %v247
    %v2339 = vunpack.c.l.b16 %v248
    %v2340 = vunpack.c.h.b16 %v248
    %v2341 = vunpack.c.l.b16 %v249
    %v2342 = vunpack.c.h.b16 %v249
    %v2343 = vunpack.c.l.b16 %v250
    %v2344 = vunpack.c.h.b16 %v250
    %v2345 = vunpack.c.l.b16 %v251
    %v2346 = vunpack.c.h.b16 %v251
    %v2347 = vunpack.c.l.b16 %v252
    %v2348 = vunpack.c.h.b16 %v252
    %v2349 = vunpack.c.l.b16 %v253
    %v2350 = vunpack.c.h.b16 %v253
    %v2351 = vunpack.c.l.b16 %v254
    %v2352 = vunpack.c.h.b16 %v254
    %v2353 = vunpack.c.l.b16 %v255
    %v2354 = vunpack.c.h.b16 %v255
    %v2355 = vunpack.c.l.b16 %v256
    %v2356 = vunpack.c.h.b16 %v256
    %v2357 = vunpack.c.l.b16 %v257
    %v2358 = vunpack.c.h.b16 %v257
    %v2359 = vunpack.c.l.b16 %v258
    %v2360 = vunpack.c.h.b16 %v258
    %v2361 = vunpack.c.l.b16 %v259
    %v2362 = vunpack.c.h.b16 %v259
    %v2363 = vunpack.c.l.b16 %v260
    %v2364 = vunpack.c.h.b16 %v260
    %v2365 = vunpack.c.l.b16 %v261
    %v2366 = vunpack.c.h.b16 %v261
    %v2367 = vunpack.c.l.b16 %v262
    %v2368 = vunpack.c.h.b16 %v262
    %v2369 = vunpack.c.l.b16 %v263
    %v2370 = vunpack.c.h.b16 %v263
    %v2371 = vunpack.c.l.b16 %v264
    %v2372 = vunpack.c.h.b16 %v264
    %v2373 = vunpack.c.l.b16 %v265
    %v2374 = vunpack.c.h.b16 %v265
    %v2375 = vunpack.c.l.b16 %v266
    %v2376 = vunpack.c.h.b16 %v266
    %v2377 = vunpack.c.l.b16 %v267
    %v2378 = vunpack.c.h.b16 %v267
    %v2379 = vunpack.c.l.b16 %v268
    %v2380 = vunpack.c.h.b16 %v268
    %v2381 = vunpack.c.l.b16 %v269
    %v2382 = vunpack.c.h.b16 %v269
    %v2383 = vunpack.c.l.b16 %v270
    %v2384 = vunpack.c.h.b16 %v270
    %v2385 = vunpack.c.l.b16 %v271
    %v2386 = vunpack.c.h.b16 %v271
    %v2387 = vunpack.c.l.b16 %v272
    %v2388 = vunpack.c.h.b16 %v272
    %v2389 = vunpack.c.l.b16 %v273
    %v2390 = vunpack.c.h.b16 %v273
    %v2391 = vunpack.c.l.b16 %v274
    %v2392 = vunpack.c.h.b16 %v274
    %v2393 = vunpack.c.l.b16 %v275
    %v2394 = vunpack.c.h.b16 %v275
    %v2395 = vunpack.c.l.b16 %v276
    %v2396 = vunpack.c.h.b16 %v276
    %v2397 = vunpack.c.l.b16 %v277
    %v2398 = vunpack.c.h.b16 %v277
    %v2399 = vunpack.c.l.b16 %v278
    %v2400 = vunpack.c.h.b16 %v278
    %v2401 = vunpack.c.l.b16 %v279
    %v2402 = vunpack.c.h.b16 %v279
    %v2403 = vunpack.c.l.b16 %v280
    %v2404 = vunpack.c.h.b16 %v280
    %v2405 = vunpack.c.l.b16 %v281
    %v2406 = vunpack.c.h.b16 %v281
    %v2407 = vunpack.c.l.b16 %v282
    %v2408 = vunpack.c.h.b16 %v282
    %v2409 = vunpack.c.l.b16 %v283
    %v2410 = vunpack.c.h.b16 %v283
    %v2411 = vunpack.c.l.b16 %v284
    %v2412 = vunpack.c.h.b16 %v284
    %v2413 = vunpack.c.l.b16 %v285
    %v2414 = vunpack.c.h.b16 %v285
    %v2415 = vunpack.c.l.b16 %v286
    %v2416 = vunpack.c.h.b16 %v286
    %v2417 = vunpack.c.l.b16 %v287
    %v2418 = vunpack.c.h.b16 %v287
    %v2419 = vunpack.c.l.b16 %v288
    %v2420 = vunpack.c.h.b16 %v288
    %v2421 = vunpack.c.l.b16 %v289
    %v2422 = vunpack.c.h.b16 %v289
    %v2423 = vunpack.c.l.b16 %v290
    %v2424 = vunpack.c.h.b16 %v290
    %v2425 = vunpack.c.l.b16 %v291
    %v2426 = vunpack.c.h.b16 %v291
    %v2427 = vunpack.c.l.b16 %v292
    %v2428 = vunpack.c.h.b16 %v292
    %v2429 = vunpack.c.l.b16 %v293
    %v2430 = vunpack.c.h.b16 %v293
    %v2431 = vunpack.c.l.b16 %v294
    %v2432 = vunpack.c.h.b16 %v294
    %v2433 = vunpack.c.l.b16 %v295
    %v2434 = vunpack.c.h.b16 %v295
    %v2435 = vunpack.c.l.b16 %v296
    %v2436 = vunpack.c.h.b16 %v296
    %v2437 = vunpack.c.l.b16 %v297
    %v2438 = vunpack.c.h.b16 %v297
    %v2439 = vunpack.c.l.b16 %v298
    %v2440 = vunpack.c.h.b16 %v298
    %v2441 = vunpack.c.l.b16 %v299
    %v2442 = vunpack.c.h.b16 %v299
    %v2443 = vunpack.c.l.b16 %v300
    %v2444 = vunpack.c.h.b16 %v300
    %v2445 = vunpack.c.l.b16 %v301
    %v2446 = vunpack.c.h.b16 %v301
    %v2447 = vunpack.c.l.b16 %v302
    %v2448 = vunpack.c.h.b16 %v302
    %v2449 = vunpack.c.l.b16 %v303
    %v2450 = vunpack.c.h.b16 %v303
    %v2451 = vunpack.c.l.b16 %v304
    %v2452 = vunpack.c.h.b16 %v304
    %v2453 = vunpack.c.l.b16 %v305
    %v2454 = vunpack.c.h.b16 %v305
    %v2455 = vunpack.c.l.b16 %v306
    %v2456 = vunpack.c.h.b16 %v306
    %v2457 = vunpack.c.l.b16 %v307
    %v2458 = vunpack.c.h.b16 %v307
    %v2459 = vunpack.c.l.b16 %v308
    %v2460 = vunpack.c.h.b16 %v308
    %v2461 = vunpack.c.l.b16 %v309
    %v2462 = vunpack.c.h.b16 %v309
    %v2463 = vunpack.c.l.b16 %v310
    %v2464 = vunpack.c.h.b16 %v310
    %v2465 = vunpack.c.l.b16 %v311
    %v2466 = vunpack.c.h.b16 %v311
    %v2467 = vunpack.c.l.b16 %v312
    %v2468 = vunpack.c.h.b16 %v312
    %v2469 = vunpack.c.l.b16 %v313
    %v2470 = vunpack.c.h.b16 %v313
    %v2471 = vunpack.c.l.b16 %v314
    %v2472 = vunpack.c.h.b16 %v314
    %v2473 = vunpack.c.l.b16 %v315
    %v2474 = vunpack.c.h.b16 %v315
    %v2475 = vunpack.c.l.b16 %v316
    %v2476 = vunpack.c.h.b16 %v316
    %v2477 = vunpack.c.l.b16 %v317
    %v2478 = vunpack.c.h.b16 %v317
    %v2479 = vunpack.c.l.b16 %v318
    %v2480 = vunpack.c.h.b16 %v318
    %v2481 = vunpack.c.l.b16 %v319
    %v2482 = vunpack.c.h.b16 %v319
    %v2483 = vunpack.c.l.b16 %v320
    %v2484 = vunpack.c.h.b16 %v320
    %v2485 = vunpack.c.l.b16 %v321
    %v2486 = vunpack.c.h.b16 %v321
    %v2487 = vunpack.c.l.b16 %v322
    %v2488 = vunpack.c.h.b16 %v322
    %v2489 = vunpack.c.l.b16 %v323
    %v2490 = vunpack.c.h.b16 %v323
    %v2491 = vunpack.c.l.b16 %v324
    %v2492 = vunpack.c.h.b16 %v324
    %v2493 = vunpack.c.l.b16 %v325
    %v2494 = vunpack.c.h.b16 %v325
    %v2495 = vunpack.c.l.b16 %v326
    %v2496 = vunpack.c.h.b16 %v326
    %v2497 = vunpack.c.l.b16 %v327
    %v2498 = vunpack.c.h.b16 %v327
    %v2499 = vunpack.c.l.b16 %v328
    %v2500 = vunpack.c.h.b16 %v328
    %v2501 = vunpack.c.l.b16 %v329
    %v2502 = vunpack.c.h.b16 %v329
    %v2503 = vunpack.c.l.b16 %v330
    %v2504 = vunpack.c.h.b16 %v330
    %v2505 = vunpack.c.l.b16 %v331
    %v2506 = vunpack.c.h.b16 %v331
    %v2507 = vunpack.c.l.b16 %v332
    %v2508 = vunpack.c.h.b16 %v332
    %v2509 = vunpack.c.l.b16 %v333
    %v2510 = vunpack.c.h.b16 %v333
    %v2511 = vunpack.c.l.b16 %v334
    %v2512 = vunpack.c.h.b16 %v334
    %v2513 = vunpack.c.l.b16 %v335
    %v2514 = vunpack.c.h.b16 %v335
    %v2515 = vunpack.c.l.b16 %v336
    %v2516 = vunpack.c.h.b16 %v336
    %v2517 = vunpack.c.l.b16 %v337
    %v2518 = vunpack.c.h.b16 %v337
    %v2519 = vunpack.c.l.b16 %v338
    %v2520 = vunpack.c.h.b16 %v338
    %v2521 = vunpack.c.l.b16 %v339
    %v2522 = vunpack.c.h.b16 %v339
    %v2523 = vunpack.c.l.b16 %v340
    %v2524 = vunpack.c.h.b16 %v340
    %v2525 = vunpack.c.l.b16 %v341
    %v2526 = vunpack.c.h.b16 %v341
    %v2527 = vunpack.c.l.b16 %v342
    %v2528 = vunpack.c.h.b16 %v342
    %v2529 = vunpack.c.l.b16 %v343
    %v2530 = vunpack.c.h.b16 %v343
    %v2531 = vunpack.c.l.b16 %v344
    %v2532 = vunpack.c.h.b16 %v344
    %v2533 = vunpack.c.l.b16 %v345
    %v2534 = vunpack.c.h.b16 %v345
    %v2535 = vunpack.c.l.b16 %v346
    %v2536 = vunpack.c.h.b16 %v346
    %v2537 = vunpack.c.l.b16 %v347
    %v2538 = vunpack.c.h.b16 %v347
    %v2539 = vunpack.c.l.b16 %v348
    %v2540 = vunpack.c.h.b16 %v348
    %v2541 = vunpack.c.l.b16 %v349
    %v2542 = vunpack.c.h.b16 %v349
    %v2543 = vunpack.c.l.b16 %v350
    %v2544 = vunpack.c.h.b16 %v350
    %v2545 = vunpack.c.l.b16 %v351
    %v2546 = vunpack.c.h.b16 %v351
    %v2547 = vunpack.c.l.b16 %v352
    %v2548 = vunpack.c.h.b16 %v352
    %v2549 = vunpack.c.l.b16 %v353
    %v2550 = vunpack.c.h.b16 %v353
    %v2551 = vunpack.c.l.b16 %v354
    %v2552 = vunpack.c.h.b16 %v354
    %v2553 = vunpack.c.l.b16 %v355
    %v2554 = vunpack.c.h.b16 %v355
    %v2555 = vunpack.c.l.b16 %v356
    %v2556 = vunpack.c.h.b16 %v356
    %v2557 = vunpack.c.l.b16 %v357
    %v2558 = vunpack.c.h.b16 %v357
    %v2559 = vunpack.c.l.b16 %v358
    %v2560 = vunpack.c.h.b16 %v358
    %v2561 = vunpack.c.l.b16 %v359
    %v2562 = vunpack.c.h.b16 %v359
    %v2563 = vunpack.c.l.b16 %v360
    %v2564 = vunpack.c.h.b16 %v360
    %v2565 = vunpack.c.l.b16 %v361
    %v2566 = vunpack.c.h.b16 %v361
    %v2567 = vunpack.c.l.b16 %v362
    %v2568 = vunpack.c.h.b16 %v362
    %v2569 = vunpack.c.l.b16 %v363
    %v2570 = vunpack.c.h.b16 %v363
    %v2571 = vunpack.c.l.b16 %v364
    %v2572 = vunpack.c.h.b16 %v364
    %v2573 = vunpack.c.l.b16 %v365
    %v2574 = vunpack.c.h.b16 %v365
    %v2575 = vunpack.c.l.b16 %v366
    %v2576 = vunpack.c.h.b16 %v366
    %v2577 = vunpack.c.l.b16 %v367
    %v2578 = vunpack.c.h.b16 %v367
    %v2579 = vunpack.c.l.b16 %v368
    %v2580 = vunpack.c.h.b16 %v368
    %v2581 = vunpack.c.l.b16 %v369
    %v2582 = vunpack.c.h.b16 %v369
    %v2583 = vunpack.c.l.b16 %v370
    %v2584 = vunpack.c.h.b16 %v370
    %v2585 = vunpack.c.l.b16 %v371
    %v2586 = vunpack.c.h.b16 %v371
    %v2587 = vunpack.c.l.b16 %v372
    %v2588 = vunpack.c.h.b16 %v372
    %v2589 = vunpack.c.l.b16 %v373
    %v2590 = vunpack.c.h.b16 %v373
    %v2591 = vunpack.c.l.b16 %v374
    %v2592 = vunpack.c.h.b16 %v374
    %v2593 = vunpack.c.l.b16 %v375
    %v2594 = vunpack.c.h.b16 %v375
    %v2595 = vunpack.c.l.b16 %v376
    %v2596 = vunpack.c.h.b16 %v376
    %v2597 = vunpack.c.l.b16 %v377
    %v2598 = vunpack.c.h.b16 %v377
    %v2599 = vunpack.c.l.b16 %v378
    %v2600 = vunpack.c.h.b16 %v378
    %v2601 = vunpack.c.l.b16 %v379
    %v2602 = vunpack.c.h.b16 %v379
    %v2603 = vunpack.c.l.b16 %v380
    %v2604 = vunpack.c.h.b16 %v380
    %v2605 = vunpack.c.l.b16 %v381
    %v2606 = vunpack.c.h.b16 %v381
    %v2607 = vunpack.c.l.b16 %v382
    %v2608 = vunpack.c.h.b16 %v382
    %v2609 = vunpack.c.l.b16 %v383
    %v2610 = vunpack.c.h.b16 %v383
    %v2611 = vunpack.c.l.b16 %v384
    %v2612 = vunpack.c.h.b16 %v384
    %v2613 = vunpack.c.l.b16 %v385
    %v2614 = vunpack.c.h.b16 %v385
    %v2615 = vunpack.c.l.b16 %v386
    %v2616 = vunpack.c.h.b16 %v386
    %v2617 = vunpack.c.l.b16 %v387
    %v2618 = vunpack.c.h.b16 %v387
    %v2619 = vunpack.c.l.b16 %v388
    %v2620 = vunpack.c.h.b16 %v388
    %v2621 = vunpack.c.l.b16 %v389
    %v2622 = vunpack.c.h.b16 %v389
    %v2623 = vunpack.c.l.b16 %v390
    %v2624 = vunpack.c.h.b16 %v390
    %v2625 = vunpack.c.l.b16 %v391
    %v2626 = vunpack.c.h.b16 %v391
    %v2627 = vunpack.c.l.b16 %v392
    %v2628 = vunpack.c.h.b16 %v392
    %v2629 = vunpack.c.l.b16 %v393
    %v2630 = vunpack.c.h.b16 %v393
    %v2631 = vunpack.c.l.b16 %v394
    %v2632 = vunpack.c.h.b16 %v394
    %v2633 = vunpack.c.l.b16 %v395
    %v2634 = vunpack.c.h.b16 %v395
    %v2635 = vunpack.c.l.b16 %v396
    %v2636 = vunpack.c.h.b16 %v396
    %v2637 = vunpack.c.l.b16 %v397
    %v2638 = vunpack.c.h.b16 %v397
    %v2639 = vunpack.c.l.b16 %v398
    %v2640 = vunpack.c.h.b16 %v398
    %v2641 = vunpack.c.l.b16 %v399
    %v2642 = vunpack.c.h.b16 %v399
    %v2643 = vunpack.c.l.b16 %v400
    %v2644 = vunpack.c.h.b16 %v400
    %v2645 = vunpack.c.l.b16 %v401
    %v2646 = vunpack.c.h.b16 %v401
    %v2647 = vunpack.c.l.b16 %v402
    %v2648 = vunpack.c.h.b16 %v402
    %v2649 = vunpack.c.l.b16 %v403
    %v2650 = vunpack.c.h.b16 %v403
    %v2651 = vunpack.c.l.b16 %v404
    %v2652 = vunpack.c.h.b16 %v404
    %v2653 = vunpack.c.l.b16 %v405
    %v2654 = vunpack.c.h.b16 %v405
    %v2655 = vunpack.c.l.b16 %v406
    %v2656 = vunpack.c.h.b16 %v406
    %v2657 = vunpack.c.l.b16 %v407
    %v2658 = vunpack.c.h.b16 %v407
    %v2659 = vunpack.c.l.b16 %v408
    %v2660 = vunpack.c.h.b16 %v408
    %v2661 = vunpack.c.l.b16 %v409
    %v2662 = vunpack.c.h.b16 %v409
    %v2663 = vunpack.c.l.b16 %v410
    %v2664 = vunpack.c.h.b16 %v410
    %v2665 = vunpack.c.l.b16 %v411
    %v2666 = vunpack.c.h.b16 %v411
    %v2667 = vunpack.c.l.b16 %v412
    %v2668 = vunpack.c.h.b16 %v412
    %v2669 = vunpack.c.l.b16 %v413
    %v2670 = vunpack.c.h.b16 %v413
    %v2671 = vunpack.c.l.b16 %v414
    %v2672 = vunpack.c.h.b16 %v414
    %v2673 = vunpack.c.l.b16 %v415
    %v2674 = vunpack.c.h.b16 %v415
    %v2675 = vunpack.c.l.b16 %v416
    %v2676 = vunpack.c.h.b16 %v416
    %v2677 = vunpack.c.l.b16 %v417
    %v2678 = vunpack.c.h.b16 %v417
    %v2679 = vunpack.c.l.b16 %v418
    %v2680 = vunpack.c.h.b16 %v418
    %v2681 = vunpack.c.l.b16 %v419
    %v2682 = vunpack.c.h.b16 %v419
    %v2683 = vunpack.c.l.b16 %v420
    %v2684 = vunpack.c.h.b16 %v420
    %v2685 = vunpack.c.l.b16 %v421
    %v2686 = vunpack.c.h.b16 %v421
    %v2687 = vunpack.c.l.b16 %v422
    %v2688 = vunpack.c.h.b16 %v422
    %v2689 = vunpack.c.l.b16 %v423
    %v2690 = vunpack.c.h.b16 %v423
    %v2691 = vunpack.c.l.b16 %v424
    %v2692 = vunpack.c.h.b16 %v424
    %v2693 = vunpack.c.l.b16 %v425
    %v2694 = vunpack.c.h.b16 %v425
    %v2695 = vunpack.c.l.b16 %v426
    %v2696 = vunpack.c.h.b16 %v426
    %v2697 = vunpack.c.l.b16 %v427
    %v2698 = vunpack.c.h.b16 %v427
    %v2699 = vunpack.c.l.b16 %v428
    %v2700 = vunpack.c.h.b16 %v428
    %v2701 = vunpack.c.l.b16 %v429
    %v2702 = vunpack.c.h.b16 %v429
    %v2703 = vunpack.c.l.b16 %v430
    %v2704 = vunpack.c.h.b16 %v430
    %v2705 = vunpack.c.l.b16 %v431
    %v2706 = vunpack.c.h.b16 %v431
    %v2707 = vunpack.c.l.b16 %v432
    %v2708 = vunpack.c.h.b16 %v432
    %v2709 = vunpack.c.l.b16 %v433
    %v2710 = vunpack.c.h.b16 %v433
    %v2711 = vunpack.c.l.b16 %v434
    %v2712 = vunpack.c.h.b16 %v434
    %v2713 = vunpack.c.l.b16 %v435
    %v2714 = vunpack.c.h.b16 %v435
    %v2715 = vunpack.c.l.b16 %v436
    %v2716 = vunpack.c.h.b16 %v436
    %v2717 = vunpack.c.l.b16 %v437
    %v2718 = vunpack.c.h.b16 %v437
    %v2719 = vunpack.c.l.b16 %v438
    %v2720 = vunpack.c.h.b16 %v438
    %v2721 = vunpack.c.l.b16 %v439
    %v2722 = vunpack.c.h.b16 %v439
    %v2723 = vunpack.c.l.b16 %v440
    %v2724 = vunpack.c.h.b16 %v440
    %v2725 = vunpack.c.l.b16 %v441
    %v2726 = vunpack.c.h.b16 %v441
    %v2727 = vunpack.c.l.b16 %v442
    %v2728 = vunpack.c.h.b16 %v442
    %v2729 = vunpack.c.l.b16 %v443
    %v2730 = vunpack.c.h.b16 %v443
    %v2731 = vunpack.c.l.b16 %v444
    %v2732 = vunpack.c.h.b16 %v444
    %v2733 = vunpack.c.l.b16 %v445
    %v2734 = vunpack.c.h.b16 %v445
    %v2735 = vunpack.c.l.b16 %v446
    %v2736 = vunpack.c.h.b16 %v446
    %v2737 = vunpack.c.l.b16 %v447
    %v2738 = vunpack.c.h.b16 %v447
    %v2739 = vunpack.c.l.b16 %v448
    %v2740 = vunpack.c.h.b16 %v448
    %v2741 = vunpack.c.l.b16 %v449
    %v2742 = vunpack.c.h.b16 %v449
    %v2743 = vunpack.c.l.b16 %v450
    %v2744 = vunpack.c.h.b16 %v450
    %v2745 = vunpack.c.l.b16 %v451
    %v2746 = vunpack.c.h.b16 %v451
    %v2747 = vunpack.c.l.b16 %v452
    %v2748 = vunpack.c.h.b16 %v452
    %v2749 = vunpack.c.l.b16 %v453
    %v2750 = vunpack.c.h.b16 %v453
    %v2751 = vunpack.c.l.b16 %v454
    %v2752 = vunpack.c.h.b16 %v454
    %v2753 = vunpack.c.l.b16 %v455
    %v2754 = vunpack.c.h.b16 %v455
    %v2755 = vunpack.c.l.b16 %v456
    %v2756 = vunpack.c.h.b16 %v456
    %v2757 = vunpack.c.l.b16 %v457
    %v2758 = vunpack.c.h.b16 %v457
    %v2759 = vunpack.c.l.b16 %v458
    %v2760 = vunpack.c.h.b16 %v458
    %v2761 = vunpack.c.l.b16 %v459
    %v2762 = vunpack.c.h.b16 %v459
    %v2763 = vunpack.c.l.b16 %v460
    %v2764 = vunpack.c.h.b16 %v460
    %v2765 = vunpack.c.l.b16 %v461
    %v2766 = vunpack.c.h.b16 %v461
    %v2767 = vunpack.c.l.b16 %v462
    %v2768 = vunpack.c.h.b16 %v462
    %v2769 = vunpack.c.l.b16 %v463
    %v2770 = vunpack.c.h.b16 %v463
    %v2771 = vunpack.c.l.b16 %v464
    %v2772 = vunpack.c.h.b16 %v464
    %v2773 = vunpack.c.l.b16 %v465
    %v2774 = vunpack.c.h.b16 %v465
    %v2775 = vunpack.c.l.b16 %v466
    %v2776 = vunpack.c.h.b16 %v466
    %v2777 = vunpack.c.l.b16 %v467
    %v2778 = vunpack.c.h.b16 %v467
    %v2779 = vunpack.c.l.b16 %v468
    %v2780 = vunpack.c.h.b16 %v468
    %v2781 = vunpack.c.l.b16 %v469
    %v2782 = vunpack.c.h.b16 %v469
    %v2783 = vunpack.c.l.b16 %v470
    %v2784 = vunpack.c.h.b16 %v470
    %v2785 = vunpack.c.l.b16 %v471
    %v2786 = vunpack.c.h.b16 %v471
    %v2787 = vunpack.c.l.b16 %v472
    %v2788 = vunpack.c.h.b16 %v472
    %v2789 = vunpack.c.l.b16 %v473
    %v2790 = vunpack.c.h.b16 %v473
    %v2791 = vunpack.c.l.b16 %v474
    %v2792 = vunpack.c.h.b16 %v474
    %v2793 = vunpack.c.l.b16 %v475
    %v2794 = vunpack.c.h.b16 %v475
    %v2795 = vunpack.c.l.b16 %v476
    %v2796 = vunpack.c.h.b16 %v476
    %v2797 = vunpack.c.l.b16 %v477
    %v2798 = vunpack.c.h.b16 %v477
    %v2799 = vunpack.c.l.b16 %v478
    %v2800 = vunpack.c.h.b16 %v478
    %v2801 = vunpack.c.l.b16 %v479
    %v2802 = vunpack.c.h.b16 %v479
    %v2803 = vunpack.c.l.b16 %v480
    %v2804 = vunpack.c.h.b16 %v480
    %v2805 = vunpack.c.l.b16 %v481
    %v2806 = vunpack.c.h.b16 %v481
    %v2807 = vunpack.c.l.b16 %v482
    %v2808 = vunpack.c.h.b16 %v482
    %v2809 = vunpack.c.l.b16 %v483
    %v2810 = vunpack.c.h.b16 %v483
    %v2811 = vunpack.c.l.b16 %v484
    %v2812 = vunpack.c.h.b16 %v484
    %v2813 = vunpack.c.l.b16 %v485
    %v2814 = vunpack.c.h.b16 %v485
    %v2815 = vunpack.c.l.b16 %v486
    %v2816 = vunpack.c.h.b16 %v486
    %v2817 = vunpack.c.l.b16 %v487
    %v2818 = vunpack.c.h.b16 %v487
    %v2819 = vunpack.c.l.b16 %v488
    %v2820 = vunpack.c.h.b16 %v488
    %v2821 = vunpack.c.l.b16 %v489
    %v2822 = vunpack.c.h.b16 %v489
    %v2823 = vunpack.c.l.b16 %v490
    %v2824 = vunpack.c.h.b16 %v490
    %v2825 = vunpack.c.l.b16 %v491
    %v2826 = vunpack.c.h.b16 %v491
    %v2827 = vunpack.c.l.b16 %v492
    %v2828 = vunpack.c.h.b16 %v492
    %v2829 = vunpack.c.l.b16 %v493
    %v2830 = vunpack.c.h.b16 %v493
    %v2831 = vunpack.c.l.b16 %v494
    %v2832 = vunpack.c.h.b16 %v494
    %v2833 = vunpack.c.l.b16 %v495
    %v2834 = vunpack.c.h.b16 %v495
    %v2835 = vunpack.c.l.b16 %v496
    %v2836 = vunpack.c.h.b16 %v496
    %v2837 = vunpack.c.l.b16 %v497
    %v2838 = vunpack.c.h.b16 %v497
    %v2839 = vunpack.c.l.b16 %v498
    %v2840 = vunpack.c.h.b16 %v498
    %v2841 = vunpack.c.l.b16 %v499
    %v2842 = vunpack.c.h.b16 %v499
    %v2843 = vunpack.c.l.b16 %v500
    %v2844 = vunpack.c.h.b16 %v500
    %v2845 = vunpack.c.l.b16 %v501
    %v2846 = vunpack.c.h.b16 %v501
    %v2847 = vunpack.c.l.b16 %v502
    %v2848 = vunpack.c.h.b16 %v502
    %v2849 = vunpack.c.l.b16 %v503
    %v2850 = vunpack.c.h.b16 %v503
    %v2851 = vunpack.c.l.b16 %v504
    %v2852 = vunpack.c.h.b16 %v504
    %v2853 = vunpack.c.l.b16 %v505
    %v2854 = vunpack.c.h.b16 %v505
    %v2855 = vunpack.c.l.b16 %v506
    %v2856 = vunpack.c.h.b16 %v506
    %v2857 = vunpack.c.l.b16 %v507
    %v2858 = vunpack.c.h.b16 %v507
    %v2859 = vunpack.c.l.b16 %v508
    %v2860 = vunpack.c.h.b16 %v508
    %v2861 = vunpack.c.l.b16 %v509
    %v2862 = vunpack.c.h.b16 %v509
    %v2863 = vunpack.c.l.b16 %v510
    %v2864 = vunpack.c.h.b16 %v510
    %v2865 = vunpack.c.l.b16 %v511
    %v2866 = vunpack.c.h.b16 %v511
    %v2867 = vunpack.c.l.b16 %v512
    %v2868 = vunpack.c.h.b16 %v512
    %v2869 = vunpack.c.l.b16 %v513
    %v2870 = vunpack.c.h.b16 %v513
    %v2871 = vunpack.c.l.b16 %v514
    %v2872 = vunpack.c.h.b16 %v514
    %v2873 = vunpack.c.l.b16 %v515
    %v2874 = vunpack.c.h.b16 %v515
    %v2875 = vunpack.c.l.b16 %v516
    %v2876 = vunpack.c.h.b16 %v516
    %v2877 = vunpack.c.l.b16 %v517
    %v2878 = vunpack.c.h.b16 %v517
    %v2879 = vunpack.c.l.b16 %v518
    %v2880 = vunpack.c.h.b16 %v518
    %v2881 = vunpack.c.l.b16 %v519
    %v2882 = vunpack.c.h.b16 %v519
    %v2883 = vunpack.c.l.b16 %v520
    %v2884 = vunpack.c.h.b16 %v520
    %v2885 = vunpack.c.l.b16 %v521
    %v2886 = vunpack.c.h.b16 %v521
    %v2887 = vunpack.c.l.b16 %v522
    %v2888 = vunpack.c.h.b16 %v522
    %v2889 = vunpack.c.l.b16 %v523
    %v2890 = vunpack.c.h.b16 %v523
    %v2891 = vunpack.c.l.b16 %v524
    %v2892 = vunpack.c.h.b16 %v524
    %v2893 = vunpack.c.l.b16 %v525
    %v2894 = vunpack.c.h.b16 %v525
    %v2895 = vunpack.c.l.b16 %v526
    %v2896 = vunpack.c.h.b16 %v526
    %v2897 = vunpack.c.l.b16 %v527
    %v2898 = vunpack.c.h.b16 %v527
    %v2899 = vunpack.c.l.b16 %v528
    %v2900 = vunpack.c.h.b16 %v528
    %v2901 = vunpack.c.l.b16 %v529
    %v2902 = vunpack.c.h.b16 %v529
    %v2903 = vunpack.c.l.b16 %v530
    %v2904 = vunpack.c.h.b16 %v530
    %v2905 = vunpack.c.l.b16 %v531
    %v2906 = vunpack.c.h.b16 %v531
    %v2907 = vunpack.c.l.b16 %v532
    %v2908 = vunpack.c.h.b16 %v532
    %v2909 = vunpack.c.l.b16 %v533
    %v2910 = vunpack.c.h.b16 %v533
    %v2911 = vunpack.c.l.b16 %v534
    %v2912 = vunpack.c.h.b16 %v534
    %v2913 = vunpack.c.l.b16 %v535
    %v2914 = vunpack.c.h.b16 %v535
    %v2915 = vunpack.c.l.b16 %v536
    %v2916 = vunpack.c.h.b16 %v536
    %v2917 = vunpack.c.l.b16 %v537
    %v2918 = vunpack.c.h.b16 %v537
    %v2919 = vunpack.c.l.b16 %v538
    %v2920 = vunpack.c.h.b16 %v538
    %v2921 = vunpack.c.l.b16 %v539
    %v2922 = vunpack.c.h.b16 %v539
    %v2923 = vunpack.c.l.b16 %v540
    %v2924 = vunpack.c.h.b16 %v540
    %v2925 = vunpack.c.l.b16 %v541
    %v2926 = vunpack.c.h.b16 %v541
    %v2927 = vunpack.c.l.b16 %v542
    %v2928 = vunpack.c.h.b16 %v542
    %v2929 = vunpack.c.l.b16 %v543
    %v2930 = vunpack.c.h.b16 %v543
    %v2931 = vunpack.c.l.b16 %v544
    %v2932 = vunpack.c.h.b16 %v544
    %v2933 = vunpack.c.l.b16 %v545
    %v2934 = vunpack.c.h.b16 %v545
    %v2935 = vunpack.c.l.b16 %v546
    %v2936 = vunpack.c.h.b16 %v546
    %v2937 = vunpack.c.l.b16 %v547
    %v2938 = vunpack.c.h.b16 %v547
    %v2939 = vunpack.c.l.b16 %v548
    %v2940 = vunpack.c.h.b16 %v548
    %v2941 = vunpack.c.l.b16 %v549
    %v2942 = vunpack.c.h.b16 %v549
    %v2943 = vunpack.c.l.b16 %v550
    %v2944 = vunpack.c.h.b16 %v550
    %v2945 = vunpack.c.l.b16 %v551
    %v2946 = vunpack.c.h.b16 %v551
    %v2947 = vunpack.c.l.b16 %v552
    %v2948 = vunpack.c.h.b16 %v552
    %v2949 = vunpack.c.l.b16 %v553
    %v2950 = vunpack.c.h.b16 %v553
    %v2951 = vunpack.c.l.b16 %v554
    %v2952 = vunpack.c.h.b16 %v554
    %v2953 = vunpack.c.l.b16 %v555
    %v2954 = vunpack.c.h.b16 %v555
    %v2955 = vunpack.c.l.b16 %v556
    %v2956 = vunpack.c.h.b16 %v556
    %v2957 = vunpack.c.l.b16 %v557
    %v2958 = vunpack.c.h.b16 %v557
    %v2959 = vunpack.c.l.b16 %v558
    %v2960 = vunpack.c.h.b16 %v558
    %v2961 = vunpack.c.l.b16 %v559
    %v2962 = vunpack.c.h.b16 %v559
    %v2963 = vunpack.c.l.b16 %v560
    %v2964 = vunpack.c.h.b16 %v560
    %v2965 = vunpack.c.l.b16 %v561
    %v2966 = vunpack.c.h.b16 %v561
    %v2967 = vunpack.c.l.b16 %v562
    %v2968 = vunpack.c.h.b16 %v562
    %v2969 = vunpack.c.l.b16 %v563
    %v2970 = vunpack.c.h.b16 %v563
    %v2971 = vunpack.c.l.b16 %v564
    %v2972 = vunpack.c.h.b16 %v564
    %v2973 = vunpack.c.l.b16 %v565
    %v2974 = vunpack.c.h.b16 %v565
    %v2975 = vunpack.c.l.b16 %v566
    %v2976 = vunpack.c.h.b16 %v566
    %v2977 = vunpack.c.l.b16 %v567
    %v2978 = vunpack.c.h.b16 %v567
    %v2979 = vunpack.c.l.b16 %v568
    %v2980 = vunpack.c.h.b16 %v568
    %v2981 = vunpack.c.l.b16 %v569
    %v2982 = vunpack.c.h.b16 %v569
    %v2983 = vunpack.c.l.b16 %v570
    %v2984 = vunpack.c.h.b16 %v570
    %v2985 = vunpack.c.l.b16 %v571
    %v2986 = vunpack.c.h.b16 %v571
    %v2987 = vunpack.c.l.b16 %v572
    %v2988 = vunpack.c.h.b16 %v572
    %v2989 = vunpack.c.l.b16 %v573
    %v2990 = vunpack.c.h.b16 %v573
    %v2991 = vunpack.c.l.b16 %v574
    %v2992 = vunpack.c.h.b16 %v574
    %v2993 = vunpack.c.l.b16 %v575
    %v2994 = vunpack.c.h.b16 %v575
    %v2995 = vunpack.c.l.b16 %v576
    %v2996 = vunpack.c.h.b16 %v576
    %v2997 = vunpack.c.l.b16 %v577
    %v2998 = vunpack.c.h.b16 %v577
    %v2999 = vunpack.c.l.b16 %v578
    %v3000 = vunpack.c.h.b16 %v578
    %v3001 = vunpack.c.l.b16 %v579
    %v3002 = vunpack.c.h.b16 %v579
    %v3003 = vunpack.c.l.b16 %v580
    %v3004 = vunpack.c.h.b16 %v580
    %v3005 = vunpack.c.l.b16 %v581
    %v3006 = vunpack.c.h.b16 %v581
    %v3007 = vunpack.c.l.b16 %v582
    %v3008 = vunpack.c.h.b16 %v582
    %v3009 = vunpack.c.l.b16 %v583
    %v3010 = vunpack.c.h.b16 %v583
    %v3011 = vunpack.c.l.b16 %v584
    %v3012 = vunpack.c.h.b16 %v584
    %v3013 = vunpack.c.l.b16 %v585
    %v3014 = vunpack.c.h.b16 %v585
    %v3015 = vunpack.c.l.b16 %v586
    %v3016 = vunpack.c.h.b16 %v586
    %v3017 = vunpack.c.l.b16 %v587
    %v3018 = vunpack.c.h.b16 %v587
    %v3019 = vunpack.c.l.b16 %v588
    %v3020 = vunpack.c.h.b16 %v588
    %v3021 = vunpack.c.l.b16 %v589
    %v3022 = vunpack.c.h.b16 %v589
    %v3023 = vunpack.c.l.b16 %v590
    %v3024 = vunpack.c.h.b16 %v590
    %v3025 = vunpack.c.l.b16 %v591
    %v3026 = vunpack.c.h.b16 %v591
    %v3027 = vunpack.c.l.b16 %v592
    %v3028 = vunpack.c.h.b16 %v592
    %v3029 = vunpack.c.l.b16 %v593
    %v3030 = vunpack.c.h.b16 %v593
    %v3031 = vunpack.c.l.b16 %v594
    %v3032 = vunpack.c.h.b16 %v594
    %v3033 = vunpack.c.l.b16 %v595
    %v3034 = vunpack.c.h.b16 %v595
    %v3035 = vunpack.c.l.b16 %v596
    %v3036 = vunpack.c.h.b16 %v596
    %v3037 = vunpack.c.l.b16 %v597
    %v3038 = vunpack.c.h.b16 %v597
    %v3039 = vunpack.c.l.b16 %v598
    %v3040 = vunpack.c.h.b16 %v598
    %v3041 = vunpack.c.l.b16 %v599
    %v3042 = vunpack.c.h.b16 %v599
    %v3043 = vunpack.c.l.b16 %v600
    %v3044 = vunpack.c.h.b16 %v600
    %v3045 = vunpack.c.l.b16 %v601
    %v3046 = vunpack.c.h.b16 %v601
    %v3047 = vunpack.c.l.b16 %v602
    %v3048 = vunpack.c.h.b16 %v602
    %v3049 = vunpack.c.l.b16 %v603
    %v3050 = vunpack.c.h.b16 %v603
    %v3051 = vunpack.c.l.b16 %v604
    %v3052 = vunpack.c.h.b16 %v604
    %v3053 = vunpack.c.l.b16 %v605
    %v3054 = vunpack.c.h.b16 %v605
    %v3055 = vunpack.c.l.b16 %v606
    %v3056 = vunpack.c.h.b16 %v606
    %v3057 = vunpack.c.l.b16 %v607
    %v3058 = vunpack.c.h.b16 %v607
    %v3059 = vunpack.c.l.b16 %v608
    %v3060 = vunpack.c.h.b16 %v608
    %v3061 = vunpack.c.l.b16 %v609
    %v3062 = vunpack.c.h.b16 %v609
    %v3063 = vunpack.c.l.b16 %v610
    %v3064 = vunpack.c.h.b16 %v610
    %v3065 = vunpack.c.l.b16 %v611
    %v3066 = vunpack.c.h.b16 %v611
    %v3067 = vunpack.c.l.b16 %v612
    %v3068 = vunpack.c.h.b16 %v612
    %v3069 = vunpack.c.l.b16 %v613
    %v3070 = vunpack.c.h.b16 %v613
    %v3071 = vunpack.c.l.b16 %v614
    %v3072 = vunpack.c.h.b16 %v614
    %v3073 = vunpack.c.l.b16 %v615
    %v3074 = vunpack.c.h.b16 %v615
    %v3075 = vunpack.c.l.b16 %v616
    %v3076 = vunpack.c.h.b16 %v616
    %v3077 = vunpack.c.l.b16 %v617
    %v3078 = vunpack.c.h.b16 %v617
    %v3079 = vunpack.c.l.b16 %v618
    %v3080 = vunpack.c.h.b16 %v618
    %v3081 = vunpack.c.l.b16 %v619
    %v3082 = vunpack.c.h.b16 %v619
    %v3083 = vunpack.c.l.b16 %v620
    %v3084 = vunpack.c.h.b16 %v620
    %v3085 = vunpack.c.l.b16 %v621
    %v3086 = vunpack.c.h.b16 %v621
    %v3087 = vunpack.c.l.b16 %v622
    %v3088 = vunpack.c.h.b16 %v622
    %v3089 = vunpack.c.l.b16 %v623
    %v3090 = vunpack.c.h.b16 %v623
    %v3091 = vunpack.c.l.b16 %v624
    %v3092 = vunpack.c.h.b16 %v624
    %v3093 = vunpack.c.l.b16 %v625
    %v3094 = vunpack.c.h.b16 %v625
    %v3095 = vunpack.c.l.b16 %v626
    %v3096 = vunpack.c.h.b16 %v626
    %v3097 = vunpack.c.l.b16 %v627
    %v3098 = vunpack.c.h.b16 %v627
    %v3099 = vunpack.c.l.b16 %v628
    %v3100 = vunpack.c.h.b16 %v628
    %v3101 = vunpack.c.l.b16 %v629
    %v3102 = vunpack.c.h.b16 %v629
    %v3103 = vunpack.c.l.b16 %v630
    %v3104 = vunpack.c.h.b16 %v630
    %v3105 = vunpack.c.l.b16 %v631
    %v3106 = vunpack.c.h.b16 %v631
    %v3107 = vunpack.c.l.b16 %v632
    %v3108 = vunpack.c.h.b16 %v632
    %v3109 = vunpack.c.l.b16 %v633
    %v3110 = vunpack.c.h.b16 %v633
    %v3111 = vunpack.c.l.b16 %v634
    %v3112 = vunpack.c.h.b16 %v634
    %v3113 = vunpack.c.l.b16 %v635
    %v3114 = vunpack.c.h.b16 %v635
    %v3115 = vunpack.c.l.b16 %v636
    %v3116 = vunpack.c.h.b16 %v636
    %v3117 = vunpack.c.l.b16 %v637
    %v3118 = vunpack.c.h.b16 %v637
    %v3119 = vunpack.c.l.b16 %v638
    %v3120 = vunpack.c.h.b16 %v638
    %v3121 = vunpack.c.l.b16 %v639
    %v3122 = vunpack.c.h.b16 %v639
    %v3123 = vunpack.c.l.b16 %v640
    %v3124 = vunpack.c.h.b16 %v640
    %v3125 = vunpack.c.l.b16 %v641
    %v3126 = vunpack.c.h.b16 %v641
    %v3127 = vunpack.c.l.b16 %v642
    %v3128 = vunpack.c.h.b16 %v642
    %v3129 = vunpack.c.l.b16 %v643
    %v3130 = vunpack.c.h.b16 %v643
    %v3131 = vunpack.c.l.b16 %v644
    %v3132 = vunpack.c.h.b16 %v644
    %v3133 = vunpack.c.l.b16 %v645
    %v3134 = vunpack.c.h.b16 %v645
    %v3135 = vunpack.c.l.b16 %v646
    %v3136 = vunpack.c.h.b16 %v646
    %v3137 = vunpack.c.l.b16 %v647
    %v3138 = vunpack.c.h.b16 %v647
    %v3139 = vunpack.c.l.b16 %v648
    %v3140 = vunpack.c.h.b16 %v648
    %v3141 = vunpack.c.l.b16 %v649
    %v3142 = vunpack.c.h.b16 %v649
    %v3143 = vunpack.c.l.b16 %v650
    %v3144 = vunpack.c.h.b16 %v650
    %v3145 = vunpack.c.l.b16 %v651
    %v3146 = vunpack.c.h.b16 %v651
    %v3147 = vunpack.c.l.b16 %v652
    %v3148 = vunpack.c.h.b16 %v652
    %v3149 = vunpack.c.l.b16 %v653
    %v3150 = vunpack.c.h.b16 %v653
    %v3151 = vunpack.c.l.b16 %v654
    %v3152 = vunpack.c.h.b16 %v654
    %v3153 = vunpack.c.l.b16 %v655
    %v3154 = vunpack.c.h.b16 %v655
    %v3155 = vunpack.c.l.b16 %v656
    %v3156 = vunpack.c.h.b16 %v656
    %v3157 = vunpack.c.l.b16 %v657
    %v3158 = vunpack.c.h.b16 %v657
    %v3159 = vunpack.c.l.b16 %v658
    %v3160 = vunpack.c.h.b16 %v658
    %v3161 = vunpack.c.l.b16 %v659
    %v3162 = vunpack.c.h.b16 %v659
    %v3163 = vunpack.c.l.b16 %v660
    %v3164 = vunpack.c.h.b16 %v660
    %v3165 = vunpack.c.l.b16 %v661
    %v3166 = vunpack.c.h.b16 %v661
    %v3167 = vunpack.c.l.b16 %v662
    %v3168 = vunpack.c.h.b16 %v662
    %v3169 = vunpack.c.l.b16 %v663
    %v3170 = vunpack.c.h.b16 %v663
    %v3171 = vunpack.c.l.b16 %v664
    %v3172 = vunpack.c.h.b16 %v664
    %v3173 = vunpack.c.l.b16 %v665
    %v3174 = vunpack.c.h.b16 %v665
    %v3175 = vunpack.c.l.b16 %v666
    %v3176 = vunpack.c.h.b16 %v666
    %v3177 = vunpack.c.l.b16 %v667
    %v3178 = vunpack.c.h.b16 %v667
    %v3179 = vunpack.c.l.b16 %v668
    %v3180 = vunpack.c.h.b16 %v668
    %v3181 = vunpack.c.l.b16 %v669
    %v3182 = vunpack.c.h.b16 %v669
    %v3183 = vunpack.c.l.b16 %v670
    %v3184 = vunpack.c.h.b16 %v670
    %v3185 = vunpack.c.l.b16 %v671
    %v3186 = vunpack.c.h.b16 %v671
    %v3187 = vunpack.c.l.b16 %v672
    %v3188 = vunpack.c.h.b16 %v672
    %v3189 = vunpack.c.l.b16 %v673
    %v3190 = vunpack.c.h.b16 %v673
    %v3191 = vunpack.c.l.b16 %v674
    %v3192 = vunpack.c.h.b16 %v674
    %v3193 = vunpack.c.l.b16 %v675
    %v3194 = vunpack.c.h.b16 %v675
    %v3195 = vunpack.c.l.b16 %v676
    %v3196 = vunpack.c.h.b16 %v676
    %v3197 = vunpack.c.l.b16 %v677
    %v3198 = vunpack.c.h.b16 %v677
    %v3199 = vunpack.c.l.b16 %v678
    %v3200 = vunpack.c.h.b16 %v678
    %v3201 = vunpack.c.l.b16 %v679
    %v3202 = vunpack.c.h.b16 %v679
    %v3203 = vunpack.c.l.b16 %v680
    %v3204 = vunpack.c.h.b16 %v680
    %v3205 = vunpack.c.l.b16 %v681
    %v3206 = vunpack.c.h.b16 %v681
    %v3207 = vunpack.c.l.b16 %v682
    %v3208 = vunpack.c.h.b16 %v682
    %v3209 = vunpack.c.l.b16 %v683
    %v3210 = vunpack.c.h.b16 %v683
    %v3211 = vunpack.c.l.b16 %v684
    %v3212 = vunpack.c.h.b16 %v684
    %v3213 = vunpack.c.l.b16 %v685
    %v3214 = vunpack.c.h.b16 %v685
    %v3215 = vunpack.c.l.b16 %v686
    %v3216 = vunpack.c.h.b16 %v686
    %v3217 = vunpack.c.l.b16 %v687
    %v3218 = vunpack.c.h.b16 %v687
    %v3219 = vunpack.c.l.b16 %v688
    %v3220 = vunpack.c.h.b16 %v688
    %v3221 = vunpack.c.l.b16 %v689
    %v3222 = vunpack.c.h.b16 %v689
    %v3223 = vunpack.c.l.b16 %v690
    %v3224 = vunpack.c.h.b16 %v690
    %v3225 = vunpack.c.l.b16 %v691
    %v3226 = vunpack.c.h.b16 %v691
    %v3227 = vunpack.c.l.b16 %v692
    %v3228 = vunpack.c.h.b16 %v692
    %v3229 = vunpack.c.l.b16 %v693
    %v3230 = vunpack.c.h.b16 %v693
    %v3231 = vunpack.c.l.b16 %v694
    %v3232 = vunpack.c.h.b16 %v694
    %v3233 = vunpack.c.l.b16 %v695
    %v3234 = vunpack.c.h.b16 %v695
    %v3235 = vunpack.c.l.b16 %v696
    %v3236 = vunpack.c.h.b16 %v696
    %v3237 = vunpack.c.l.b16 %v697
    %v3238 = vunpack.c.h.b16 %v697
    %v3239 = vunpack.c.l.b16 %v698
    %v3240 = vunpack.c.h.b16 %v698
    %v3241 = vunpack.c.l.b16 %v699
    %v3242 = vunpack.c.h.b16 %v699
    %v3243 = vunpack.c.l.b16 %v700
    %v3244 = vunpack.c.h.b16 %v700
    %v3245 = vunpack.c.l.b16 %v701
    %v3246 = vunpack.c.h.b16 %v701
    %v3247 = vunpack.c.l.b16 %v702
    %v3248 = vunpack.c.h.b16 %v702
    %v3249 = vunpack.c.l.b16 %v703
    %v3250 = vunpack.c.h.b16 %v703
    %v3251 = vunpack.c.l.b16 %v704
    %v3252 = vunpack.c.h.b16 %v704
    %v3253 = vunpack.c.l.b16 %v705
    %v3254 = vunpack.c.h.b16 %v705
    %v3255 = vunpack.c.l.b16 %v706
    %v3256 = vunpack.c.h.b16 %v706
    %v3257 = vunpack.c.l.b16 %v707
    %v3258 = vunpack.c.h.b16 %v707
    %v3259 = vunpack.c.l.b16 %v708
    %v3260 = vunpack.c.h.b16 %v708
    %v3261 = vunpack.c.l.b16 %v709
    %v3262 = vunpack.c.h.b16 %v709
    %v3263 = vunpack.c.l.b16 %v710
    %v3264 = vunpack.c.h.b16 %v710
    %v3265 = vunpack.c.l.b16 %v711
    %v3266 = vunpack.c.h.b16 %v711
    %v3267 = vunpack.c.l.b16 %v712
    %v3268 = vunpack.c.h.b16 %v712
    %v3269 = vunpack.c.l.b16 %v713
    %v3270 = vunpack.c.h.b16 %v713
    %v3271 = vunpack.c.l.b16 %v714
    %v3272 = vunpack.c.h.b16 %v714
    %v3273 = vunpack.c.l.b16 %v715
    %v3274 = vunpack.c.h.b16 %v715
    %v3275 = vunpack.c.l.b16 %v716
    %v3276 = vunpack.c.h.b16 %v716
    %v3277 = vunpack.c.l.b16 %v717
    %v3278 = vunpack.c.h.b16 %v717
    %v3279 = vunpack.c.l.b16 %v718
    %v3280 = vunpack.c.h.b16 %v718
    %v3281 = vunpack.c.l.b16 %v719
    %v3282 = vunpack.c.h.b16 %v719
    %v3283 = vunpack.c.l.b16 %v720
    %v3284 = vunpack.c.h.b16 %v720
    %v3285 = vunpack.c.l.b16 %v721
    %v3286 = vunpack.c.h.b16 %v721
    %v3287 = vunpack.c.l.b16 %v722
    %v3288 = vunpack.c.h.b16 %v722
    %v3289 = vunpack.c.l.b16 %v723
    %v3290 = vunpack.c.h.b16 %v723
    %v3291 = vunpack.c.l.b16 %v724
    %v3292 = vunpack.c.h.b16 %v724
    %v3293 = vunpack.c.l.b16 %v725
    %v3294 = vunpack.c.h.b16 %v725
    %v3295 = vunpack.c.l.b16 %v726
    %v3296 = vunpack.c.h.b16 %v726
    %v3297 = vunpack.c.l.b16 %v727
    %v3298 = vunpack.c.h.b16 %v727
    %v3299 = vunpack.c.l.b16 %v728
    %v3300 = vunpack.c.h.b16 %v728
    %v3301 = vunpack.c.l.b16 %v729
    %v3302 = vunpack.c.h.b16 %v729
    %v3303 = vunpack.c.l.b16 %v730
    %v3304 = vunpack.c.h.b16 %v730
    %v3305 = vunpack.c.l.b16 %v731
    %v3306 = vunpack.c.h.b16 %v731
    %v3307 = vunpack.c.l.b16 %v732
    %v3308 = vunpack.c.h.b16 %v732
    %v3309 = vunpack.c.l.b16 %v733
    %v3310 = vunpack.c.h.b16 %v733
    %v3311 = vunpack.c.l.b16 %v734
    %v3312 = vunpack.c.h.b16 %v734
    %v3313 = vunpack.c.l.b16 %v735
    %v3314 = vunpack.c.h.b16 %v735
    %v3315 = vunpack.c.l.b16 %v736
    %v3316 = vunpack.c.h.b16 %v736
    %v3317 = vunpack.c.l.b16 %v737
    %v3318 = vunpack.c.h.b16 %v737
    %v3319 = vunpack.c.l.b16 %v738
    %v3320 = vunpack.c.h.b16 %v738
    %v3321 = vunpack.c.l.b16 %v739
    %v3322 = vunpack.c.h.b16 %v739
    %v3323 = vunpack.c.l.b16 %v740
    %v3324 = vunpack.c.h.b16 %v740
    %v3325 = vunpack.c.l.b16 %v741
    %v3326 = vunpack.c.h.b16 %v741
    %v3327 = vunpack.c.l.b16 %v742
    %v3328 = vunpack.c.h.b16 %v742
    %v3329 = vunpack.c.l.b16 %v743
    %v3330 = vunpack.c.h.b16 %v743
    %v3331 = vunpack.c.l.b16 %v744
    %v3332 = vunpack.c.h.b16 %v744
    %v3333 = vunpack.c.l.b16 %v745
    %v3334 = vunpack.c.h.b16 %v745
    %v3335 = vunpack.c.l.b16 %v746
    %v3336 = vunpack.c.h.b16 %v746
    %v3337 = vunpack.c.l.b16 %v747
    %v3338 = vunpack.c.h.b16 %v747
    %v3339 = vunpack.c.l.b16 %v748
    %v3340 = vunpack.c.h.b16 %v748
    %v3341 = vunpack.c.l.b16 %v749
    %v3342 = vunpack.c.h.b16 %v749
    %v3343 = vunpack.c.l.b16 %v750
    %v3344 = vunpack.c.h.b16 %v750
    %v3345 = vunpack.c.l.b16 %v751
    %v3346 = vunpack.c.h.b16 %v751
    %v3347 = vunpack.c.l.b16 %v752
    %v3348 = vunpack.c.h.b16 %v752
    %v3349 = vunpack.c.l.b16 %v753
    %v3350 = vunpack.c.h.b16 %v753
    %v3351 = vunpack.c.l.b16 %v754
    %v3352 = vunpack.c.h.b16 %v754
    %v3353 = vunpack.c.l.b16 %v755
    %v3354 = vunpack.c.h.b16 %v755
    %v3355 = vunpack.c.l.b16 %v756
    %v3356 = vunpack.c.h.b16 %v756
    %v3357 = vunpack.c.l.b16 %v757
    %v3358 = vunpack.c.h.b16 %v757
    %v3359 = vunpack.c.l.b16 %v758
    %v3360 = vunpack.c.h.b16 %v758
    %v3361 = vunpack.c.l.b16 %v759
    %v3362 = vunpack.c.h.b16 %v759
    %v3363 = vunpack.c.l.b16 %v760
    %v3364 = vunpack.c.h.b16 %v760
    %v3365 = vunpack.c.l.b16 %v761
    %v3366 = vunpack.c.h.b16 %v761
    %v3367 = vunpack.c.l.b16 %v762
    %v3368 = vunpack.c.h.b16 %v762
    %v3369 = vunpack.c.l.b16 %v763
    %v3370 = vunpack.c.h.b16 %v763
    %v3371 = vunpack.c.l.b16 %v764
    %v3372 = vunpack.c.h.b16 %v764
    %v3373 = vunpack.c.l.b16 %v765
    %v3374 = vunpack.c.h.b16 %v765
    %v3375 = vunpack.c.l.b16 %v766
    %v3376 = vunpack.c.h.b16 %v766
    %v3377 = vunpack.c.l.b16 %v767
    %v3378 = vunpack.c.h.b16 %v767
    %v3379 = vunpack.c.l.b16 %v768
    %v3380 = vunpack.c.h.b16 %v768
    %v3381 = vunpack.c.l.b16 %v769
    %v3382 = vunpack.c.h.b16 %v769
    %v3383 = vunpack.c.l.b16 %v770
    %v3384 = vunpack.c.h.b16 %v770
    %v3385 = vunpack.c.l.b16 %v771
    %v3386 = vunpack.c.h.b16 %v771
    %v3387 = vunpack.c.l.b16 %v772
    %v3388 = vunpack.c.h.b16 %v772
    %v3389 = vunpack.c.l.b16 %v773
    %v3390 = vunpack.c.h.b16 %v773
    %v3391 = vunpack.c.l.b16 %v774
    %v3392 = vunpack.c.h.b16 %v774
    %v3393 = vunpack.c.l.b16 %v775
    %v3394 = vunpack.c.h.b16 %v775
    %v3395 = vunpack.c.l.b16 %v776
    %v3396 = vunpack.c.h.b16 %v776
    %v3397 = vunpack.c.l.b16 %v777
    %v3398 = vunpack.c.h.b16 %v777
    %v3399 = vunpack.c.l.b16 %v778
    %v3400 = vunpack.c.h.b16 %v778
    %v3401 = vunpack.c.l.b16 %v779
    %v3402 = vunpack.c.h.b16 %v779
    %v3403 = vunpack.c.l.b16 %v780
    %v3404 = vunpack.c.h.b16 %v780
    %v3405 = vunpack.c.l.b16 %v781
    %v3406 = vunpack.c.h.b16 %v781
    %v3407 = vunpack.c.l.b16 %v782
    %v3408 = vunpack.c.h.b16 %v782
    %v3409 = vunpack.c.l.b16 %v783
    %v3410 = vunpack.c.h.b16 %v783
    %v3411 = vunpack.c.l.b16 %v784
    %v3412 = vunpack.c.h.b16 %v784
    %v3413 = vunpack.c.l.b16 %v785
    %v3414 = vunpack.c.h.b16 %v785
    %v3415 = vunpack.c.l.b16 %v786
    %v3416 = vunpack.c.h.b16 %v786
    %v3417 = vunpack.c.l.b16 %v787
    %v3418 = vunpack.c.h.b16 %v787
    %v3419 = vunpack.c.l.b16 %v788
    %v3420 = vunpack.c.h.b16 %v788
    %v3421 = vunpack.c.l.b16 %v789
    %v3422 = vunpack.c.h.b16 %v789
    %v3423 = vunpack.c.l.b16 %v790
    %v3424 = vunpack.c.h.b16 %v790
    %v3425 = vunpack.c.l.b16 %v791
    %v3426 = vunpack.c.h.b16 %v791
    %v3427 = vunpack.c.l.b16 %v792
    %v3428 = vunpack.c.h.b16 %v792
    %v3429 = vunpack.c.l.b16 %v793
    %v3430 = vunpack.c.h.b16 %v793
    %v3431 = vunpack.c.l.b16 %v794
    %v3432 = vunpack.c.h.b16 %v794
    %v3433 = vunpack.c.l.b16 %v795
    %v3434 = vunpack.c.h.b16 %v795
    %v3435 = vunpack.c.l.b16 %v796
    %v3436 = vunpack.c.h.b16 %v796
    %v3437 = vunpack.c.l.b16 %v797
    %v3438 = vunpack.c.h.b16 %v797
    %v3439 = vunpack.c.l.b16 %v798
    %v3440 = vunpack.c.h.b16 %v798
    %v3441 = vunpack.c.l.b16 %v799
    %v3442 = vunpack.c.h.b16 %v799
    %v3443 = vunpack.c.l.b16 %v800
    %v3444 = vunpack.c.h.b16 %v800
    %v3445 = vunpack.c.l.b16 %v801
    %v3446 = vunpack.c.h.b16 %v801
    %v3447 = vunpack.c.l.b16 %v802
    %v3448 = vunpack.c.h.b16 %v802
    %v3449 = vunpack.c.l.b16 %v803
    %v3450 = vunpack.c.h.b16 %v803
    %v3451 = vunpack.c.l.b16 %v804
    %v3452 = vunpack.c.h.b16 %v804
    %v3453 = vunpack.c.l.b16 %v805
    %v3454 = vunpack.c.h.b16 %v805
    %v3455 = vunpack.c.l.b16 %v806
    %v3456 = vunpack.c.h.b16 %v806
    %v3457 = vunpack.c.l.b16 %v807
    %v3458 = vunpack.c.h.b16 %v807
    %v3459 = vunpack.c.l.b16 %v808
    %v3460 = vunpack.c.h.b16 %v808
    %v3461 = vunpack.c.l.b16 %v809
    %v3462 = vunpack.c.h.b16 %v809
    %v3463 = vunpack.c.l.b16 %v810
    %v3464 = vunpack.c.h.b16 %v810
    %v3465 = vunpack.c.l.b16 %v811
    %v3466 = vunpack.c.h.b16 %v811
    %v3467 = vunpack.c.l.b16 %v812
    %v3468 = vunpack.c.h.b16 %v812
    %v3469 = vunpack.c.l.b16 %v813
    %v3470 = vunpack.c.h.b16 %v813
    %v3471 = vunpack.c.l.b16 %v814
    %v3472 = vunpack.c.h.b16 %v814
    %v3473 = vunpack.c.l.b16 %v815
    %v3474 = vunpack.c.h.b16 %v815
    %v3475 = vunpack.c.l.b16 %v816
    %v3476 = vunpack.c.h.b16 %v816
    %v3477 = vunpack.c.l.b16 %v817
    %v3478 = vunpack.c.h.b16 %v817
    %v3479 = vunpack.c.l.b16 %v818
    %v3480 = vunpack.c.h.b16 %v818
    %v3481 = vunpack.c.l.b16 %v819
    %v3482 = vunpack.c.h.b16 %v819
    %v3483 = vunpack.c.l.b16 %v820
    %v3484 = vunpack.c.h.b16 %v820
    %v3485 = vunpack.c.l.b16 %v821
    %v3486 = vunpack.c.h.b16 %v821
    %v3487 = vunpack.c.l.b16 %v822
    %v3488 = vunpack.c.h.b16 %v822
    %v3489 = vunpack.c.l.b16 %v823
    %v3490 = vunpack.c.h.b16 %v823
    %v3491 = vunpack.c.l.b16 %v824
    %v3492 = vunpack.c.h.b16 %v824
    %v3493 = vunpack.c.l.b16 %v825
    %v3494 = vunpack.c.h.b16 %v825
    %v3495 = vunpack.c.l.b16 %v826
    %v3496 = vunpack.c.h.b16 %v826
    %v3497 = vunpack.c.l.b16 %v827
    %v3498 = vunpack.c.h.b16 %v827
    %v3499 = vunpack.c.l.b16 %v828
    %v3500 = vunpack.c.h.b16 %v828
    %v3501 = vunpack.c.l.b16 %v829
    %v3502 = vunpack.c.h.b16 %v829
    %v3503 = vunpack.c.l.b16 %v830
    %v3504 = vunpack.c.h.b16 %v830
    %v3505 = vunpack.c.l.b16 %v831
    %v3506 = vunpack.c.h.b16 %v831
    %v3507 = vunpack.c.l.b16 %v832
    %v3508 = vunpack.c.h.b16 %v832
    %v3509 = vunpack.c.l.b16 %v833
    %v3510 = vunpack.c.h.b16 %v833
    %v3511 = vunpack.c.l.b16 %v834
    %v3512 = vunpack.c.h.b16 %v834
    %v3513 = vunpack.c.l.b16 %v835
    %v3514 = vunpack.c.h.b16 %v835
    %v3515 = vunpack.c.l.b16 %v836
    %v3516 = vunpack.c.h.b16 %v836
    %v3517 = vunpack.c.l.b16 %v837
    %v3518 = vunpack.c.h.b16 %v837
    %v3519 = vunpack.c.l.b16 %v838
    %v3520 = vunpack.c.h.b16 %v838
    %v3521 = vunpack.c.l.b16 %v839
    %v3522 = vunpack.c.h.b16 %v839
    %v3523 = vunpack.c.l.b16 %v840
    %v3524 = vunpack.c.h.b16 %v840
    %v3525 = vunpack.c.l.b16 %v841
    %v3526 = vunpack.c.h.b16 %v841
    %v3527 = vunpack.c.l.b16 %v842
    %v3528 = vunpack.c.h.b16 %v842
    %v3529 = vunpack.c.l.b16 %v843
    %v3530 = vunpack.c.h.b16 %v843
    %v3531 = vunpack.c.l.b16 %v844
    %v3532 = vunpack.c.h.b16 %v844
    %v3533 = vunpack.c.l.b16 %v845
    %v3534 = vunpack.c.h.b16 %v845
    %v3535 = vunpack.c.l.b16 %v846
    %v3536 = vunpack.c.h.b16 %v846
    %v3537 = vunpack.c.l.b16 %v847
    %v3538 = vunpack.c.h.b16 %v847
    %v3539 = vunpack.c.l.b16 %v848
    %v3540 = vunpack.c.h.b16 %v848
    %v3541 = vunpack.c.l.b16 %v849
    %v3542 = vunpack.c.h.b16 %v849
    %v3543 = vunpack.c.l.b16 %v850
    %v3544 = vunpack.c.h.b16 %v850
    %v3545 = vunpack.c.l.b16 %v851
    %v3546 = vunpack.c.h.b16 %v851
    %v3547 = vunpack.c.l.b16 %v852
    %v3548 = vunpack.c.h.b16 %v852
    %v3549 = vunpack.c.l.b16 %v853
    %v3550 = vunpack.c.h.b16 %v853
    %v3551 = vunpack.c.l.b16 %v854
    %v3552 = vunpack.c.h.b16 %v854
    %v3553 = vunpack.c.l.b16 %v855
    %v3554 = vunpack.c.h.b16 %v855
    %v3555 = vunpack.c.l.b16 %v856
    %v3556 = vunpack.c.h.b16 %v856
    %v3557 = vunpack.c.l.b16 %v857
    %v3558 = vunpack.c.h.b16 %v857
    %v3559 = vunpack.c.l.b16 %v858
    %v3560 = vunpack.c.h.b16 %v858
    %v3561 = vunpack.c.l.b16 %v859
    %v3562 = vunpack.c.h.b16 %v859
    %v3563 = vunpack.c.l.b16 %v860
    %v3564 = vunpack.c.h.b16 %v860
    %v3565 = vunpack.c.l.b16 %v861
    %v3566 = vunpack.c.h.b16 %v861
    %v3567 = vunpack.c.l.b16 %v862
    %v3568 = vunpack.c.h.b16 %v862
    %v3569 = vunpack.c.l.b16 %v863
    %v3570 = vunpack.c.h.b16 %v863
    %v3571 = vunpack.c.l.b16 %v864
    %v3572 = vunpack.c.h.b16 %v864
    %v3573 = vunpack.c.l.b16 %v865
    %v3574 = vunpack.c.h.b16 %v865
    %v3575 = vunpack.c.l.b16 %v866
    %v3576 = vunpack.c.h.b16 %v866
    %v3577 = vunpack.c.l.b16 %v867
    %v3578 = vunpack.c.h.b16 %v867
    %v3579 = vunpack.c.l.b16 %v868
    %v3580 = vunpack.c.h.b16 %v868
    %v3581 = vunpack.c.l.b16 %v869
    %v3582 = vunpack.c.h.b16 %v869
    %v3583 = vunpack.c.l.b16 %v870
    %v3584 = vunpack.c.h.b16 %v870
    %v3585 = vunpack.c.l.b16 %v871
    %v3586 = vunpack.c.h.b16 %v871
    %v3587 = vunpack.c.l.b16 %v872
    %v3588 = vunpack.c.h.b16 %v872
    %v3589 = vunpack.c.l.b16 %v873
    %v3590 = vunpack.c.h.b16 %v873
    %v3591 = vunpack.c.l.b16 %v874
    %v3592 = vunpack.c.h.b16 %v874
    %v3593 = vunpack.c.l.b16 %v875
    %v3594 = vunpack.c.h.b16 %v875
    %v3595 = vunpack.c.l.b16 %v876
    %v3596 = vunpack.c.h.b16 %v876
    %v3597 = vunpack.c.l.b16 %v877
    %v3598 = vunpack.c.h.b16 %v877
    %v3599 = vunpack.c.l.b16 %v878
    %v3600 = vunpack.c.h.b16 %v878
    %v3601 = vunpack.c.l.b16 %v879
    %v3602 = vunpack.c.h.b16 %v879
    %v3603 = vunpack.c.l.b16 %v880
    %v3604 = vunpack.c.h.b16 %v880
    %v3605 = vunpack.c.l.b16 %v881
    %v3606 = vunpack.c.h.b16 %v881
    %v3607 = vunpack.c.l.b16 %v882
    %v3608 = vunpack.c.h.b16 %v882
    %v3609 = vunpack.c.l.b16 %v883
    %v3610 = vunpack.c.h.b16 %v883
    %v3611 = vunpack.c.l.b16 %v884
    %v3612 = vunpack.c.h.b16 %v884
    %v3613 = vunpack.c.l.b16 %v885
    %v3614 = vunpack.c.h.b16 %v885
    %v3615 = vunpack.c.l.b16 %v886
    %v3616 = vunpack.c.h.b16 %v886
    %v3617 = vunpack.c.l.b16 %v887
    %v3618 = vunpack.c.h.b16 %v887
    %v3619 = vunpack.c.l.b16 %v888
    %v3620 = vunpack.c.h.b16 %v888
    %v3621 = vunpack.c.l.b16 %v889
    %v3622 = vunpack.c.h.b16 %v889
    %v3623 = vunpack.c.l.b16 %v890
    %v3624 = vunpack.c.h.b16 %v890
    %v3625 = vunpack.c.l.b16 %v891
    %v3626 = vunpack.c.h.b16 %v891
    %v3627 = vunpack.c.l.b16 %v892
    %v3628 = vunpack.c.h.b16 %v892
    %v3629 = vunpack.c.l.b16 %v893
    %v3630 = vunpack.c.h.b16 %v893
    %v3631 = vunpack.c.l.b16 %v894
    %v3632 = vunpack.c.h.b16 %v894
    %v3633 = vunpack.c.l.b16 %v895
    %v3634 = vunpack.c.h.b16 %v895
    %v3635 = vunpack.c.l.b16 %v896
    %v3636 = vunpack.c.h.b16 %v896
    %v3637 = vunpack.c.l.b16 %v897
    %v3638 = vunpack.c.h.b16 %v897
    %v3639 = vunpack.c.l.b16 %v898
    %v3640 = vunpack.c.h.b16 %v898
    %v3641 = vunpack.c.l.b16 %v899
    %v3642 = vunpack.c.h.b16 %v899
    %v3643 = vunpack.c.l.b16 %v900
    %v3644 = vunpack.c.h.b16 %v900
    %v3645 = vunpack.c.l.b16 %v901
    %v3646 = vunpack.c.h.b16 %v901
    %v3647 = vunpack.c.l.b16 %v902
    %v3648 = vunpack.c.h.b16 %v902
    %v3649 = vunpack.c.l.b16 %v903
    %v3650 = vunpack.c.h.b16 %v903
    %v3651 = vunpack.c.l.b16 %v904
    %v3652 = vunpack.c.h.b16 %v904
    %v3653 = vunpack.c.l.b16 %v905
    %v3654 = vunpack.c.h.b16 %v905
    %v3655 = vunpack.c.l.b16 %v906
    %v3656 = vunpack.c.h.b16 %v906
    %v3657 = vunpack.c.l.b16 %v907
    %v3658 = vunpack.c.h.b16 %v907
    %v3659 = vunpack.c.l.b16 %v908
    %v3660 = vunpack.c.h.b16 %v908
    %v3661 = vunpack.c.l.b16 %v909
    %v3662 = vunpack.c.h.b16 %v909
    %v3663 = vunpack.c.l.b16 %v910
    %v3664 = vunpack.c.h.b16 %v910
    %v3665 = vunpack.c.l.b16 %v911
    %v3666 = vunpack.c.h.b16 %v911
    %v3667 = vunpack.c.l.b16 %v912
    %v3668 = vunpack.c.h.b16 %v912
    %v3669 = vunpack.c.l.b16 %v913
    %v3670 = vunpack.c.h.b16 %v913
    %v3671 = vunpack.c.l.b16 %v914
    %v3672 = vunpack.c.h.b16 %v914
    %v3673 = vunpack.c.l.b16 %v915
    %v3674 = vunpack.c.h.b16 %v915
    %v3675 = vunpack.c.l.b16 %v916
    %v3676 = vunpack.c.h.b16 %v916
    %v3677 = vunpack.c.l.b16 %v917
    %v3678 = vunpack.c.h.b16 %v917
    %v3679 = vunpack.c.l.b16 %v918
    %v3680 = vunpack.c.h.b16 %v918
    %v3681 = vunpack.c.l.b16 %v919
    %v3682 = vunpack.c.h.b16 %v919
    %v3683 = vunpack.c.l.b16 %v920
    %v3684 = vunpack.c.h.b16 %v920
    %v3685 = vunpack.c.l.b16 %v921
    %v3686 = vunpack.c.h.b16 %v921
    %v3687 = vunpack.c.l.b16 %v922
    %v3688 = vunpack.c.h.b16 %v922
    %v3689 = vunpack.c.l.b16 %v923
    %v3690 = vunpack.c.h.b16 %v923
    %v3691 = vunpack.c.l.b16 %v924
    %v3692 = vunpack.c.h.b16 %v924
    %v3693 = vunpack.c.l.b16 %v925
    %v3694 = vunpack.c.h.b16 %v925
    %v3695 = vunpack.c.l.b16 %v926
    %v3696 = vunpack.c.h.b16 %v926
    %v3697 = vunpack.c.l.b16 %v927
    %v3698 = vunpack.c.h.b16 %v927
    %v3699 = vunpack.c.l.b16 %v928
    %v3700 = vunpack.c.h.b16 %v928
    %v3701 = vunpack.c.l.b16 %v929
    %v3702 = vunpack.c.h.b16 %v929
    %v3703 = vunpack.c.l.b16 %v930
    %v3704 = vunpack.c.h.b16 %v930
    %v3705 = vunpack.c.l.b16 %v931
    %v3706 = vunpack.c.h.b16 %v931
    %v3707 = vunpack.c.l.b16 %v932
    %v3708 = vunpack.c.h.b16 %v932
    %v3709 = vunpack.c.l.b16 %v933
    %v3710 = vunpack.c.h.b16 %v933
    %v3711 = vunpack.c.l.b16 %v934
    %v3712 = vunpack.c.h.b16 %v934
    %v3713 = vunpack.c.l.b16 %v935
    %v3714 = vunpack.c.h.b16 %v935
    %v3715 = vunpack.c.l.b16 %v936
    %v3716 = vunpack.c.h.b16 %v936
    %v3717 = vunpack.c.l.b16 %v937
    %v3718 = vunpack.c.h.b16 %v937
    %v3719 = vunpack.c.l.b16 %v938
    %v3720 = vunpack.c.h.b16 %v938
    %v3721 = vunpack.c.l.b16 %v939
    %v3722 = vunpack.c.h.b16 %v939
    %v3723 = vunpack.c.l.b16 %v940
    %v3724 = vunpack.c.h.b16 %v940
    %v3725 = vunpack.c.l.b16 %v941
    %v3726 = vunpack.c.h.b16 %v941
    %v3727 = vunpack.c.l.b16 %v942
    %v3728 = vunpack.c.h.b16 %v942
    %v3729 = vunpack.c.l.b16 %v943
    %v3730 = vunpack.c.h.b16 %v943
    %v3731 = vunpack.c.l.b16 %v944
    %v3732 = vunpack.c.h.b16 %v944
    %v3733 = vunpack.c.l.b16 %v945
    %v3734 = vunpack.c.h.b16 %v945
    %v3735 = vunpack.c.l.b16 %v946
    %v3736 = vunpack.c.h.b16 %v946
    %v3737 = vunpack.c.l.b16 %v947
    %v3738 = vunpack.c.h.b16 %v947
    %v3739 = vunpack.c.l.b16 %v948
    %v3740 = vunpack.c.h.b16 %v948
    %v3741 = vunpack.c.l.b16 %v949
    %v3742 = vunpack.c.h.b16 %v949
    %v3743 = vunpack.c.l.b16 %v950
    %v3744 = vunpack.c.h.b16 %v950
    %v3745 = vunpack.c.l.b16 %v951
    %v3746 = vunpack.c.h.b16 %v951
    %v3747 = vunpack.c.l.b16 %v952
    %v3748 = vunpack.c.h.b16 %v952
    %v3749 = vunpack.c.l.b16 %v953
    %v3750 = vunpack.c.h.b16 %v953
    %v3751 = vunpack.c.l.b16 %v954
    %v3752 = vunpack.c.h.b16 %v954
    %v3753 = vunpack.c.l.b16 %v955
    %v3754 = vunpack.c.h.b16 %v955
    %v3755 = vunpack.c.l.b16 %v956
    %v3756 = vunpack.c.h.b16 %v956
    %v3757 = vunpack.c.l.b16 %v957
    %v3758 = vunpack.c.h.b16 %v957
    %v3759 = vunpack.c.l.b16 %v958
    %v3760 = vunpack.c.h.b16 %v958
    %v3761 = vunpack.c.l.b16 %v959
    %v3762 = vunpack.c.h.b16 %v959
    %v3763 = vunpack.c.l.b16 %v960
    %v3764 = vunpack.c.h.b16 %v960
    %v3765 = vunpack.c.l.b16 %v961
    %v3766 = vunpack.c.h.b16 %v961
    %v3767 = vunpack.c.l.b16 %v962
    %v3768 = vunpack.c.h.b16 %v962
    %v3769 = vunpack.c.l.b16 %v963
    %v3770 = vunpack.c.h.b16 %v963
    %v3771 = vunpack.c.l.b16 %v964
    %v3772 = vunpack.c.h.b16 %v964
    %v3773 = vunpack.c.l.b16 %v965
    %v3774 = vunpack.c.h.b16 %v965
    %v3775 = vunpack.c.l.b16 %v966
    %v3776 = vunpack.c.h.b16 %v966
    %v3777 = vunpack.c.l.b16 %v967
    %v3778 = vunpack.c.h.b16 %v967
    %v3779 = vunpack.c.l.b16 %v968
    %v3780 = vunpack.c.h.b16 %v968
    %v3781 = vunpack.c.l.b16 %v969
    %v3782 = vunpack.c.h.b16 %v969
    %v3783 = vunpack.c.l.b16 %v970
    %v3784 = vunpack.c.h.b16 %v970
    %v3785 = vunpack.c.l.b16 %v971
    %v3786 = vunpack.c.h.b16 %v971
    %v3787 = vunpack.c.l.b16 %v972
    %v3788 = vunpack.c.h.b16 %v972
    %v3789 = vunpack.c.l.b16 %v973
    %v3790 = vunpack.c.h.b16 %v973
    %v3791 = vunpack.c.l.b16 %v974
    %v3792 = vunpack.c.h.b16 %v974
    %v3793 = vunpack.c.l.b16 %v975
    %v3794 = vunpack.c.h.b16 %v975
    %v3795 = vunpack.c.l.b16 %v976
    %v3796 = vunpack.c.h.b16 %v976
    %v3797 = vunpack.c.l.b16 %v977
    %v3798 = vunpack.c.h.b16 %v977
    %v3799 = vunpack.c.l.b16 %v978
    %v3800 = vunpack.c.h.b16 %v978
    %v3801 = vunpack.c.l.b16 %v979
    %v3802 = vunpack.c.h.b16 %v979
    %v3803 = vunpack.c.l.b16 %v980
    %v3804 = vunpack.c.h.b16 %v980
    %v3805 = vunpack.c.l.b16 %v981
    %v3806 = vunpack.c.h.b16 %v981
    %v3807 = vunpack.c.l.b16 %v982
    %v3808 = vunpack.c.h.b16 %v982
    %v3809 = vunpack.c.l.b16 %v983
    %v3810 = vunpack.c.h.b16 %v983
    %v3811 = vunpack.c.l.b16 %v984
    %v3812 = vunpack.c.h.b16 %v984
    %v3813 = vunpack.c.l.b16 %v985
    %v3814 = vunpack.c.h.b16 %v985
    %v3815 = vunpack.c.l.b16 %v986
    %v3816 = vunpack.c.h.b16 %v986
    %v3817 = vunpack.c.l.b16 %v987
    %v3818 = vunpack.c.h.b16 %v987
    %v3819 = vunpack.c.l.b16 %v988
    %v3820 = vunpack.c.h.b16 %v988
    %v3821 = vunpack.c.l.b16 %v989
    %v3822 = vunpack.c.h.b16 %v989
    %v3823 = vunpack.c.l.b16 %v990
    %v3824 = vunpack.c.h.b16 %v990
    %v3825 = vunpack.c.l.b16 %v991
    %v3826 = vunpack.c.h.b16 %v991
    %v3827 = vunpack.c.l.b16 %v992
    %v3828 = vunpack.c.h.b16 %v992
    %v3829 = vunpack.c.l.b16 %v993
    %v3830 = vunpack.c.h.b16 %v993
    %v3831 = vunpack.c.l.b16 %v994
    %v3832 = vunpack.c.h.b16 %v994
    %v3833 = vunpack.c.l.b16 %v995
    %v3834 = vunpack.c.h.b16 %v995
    %v3835 = vunpack.c.l.b16 %v996
    %v3836 = vunpack.c.h.b16 %v996
    %v3837 = vunpack.c.l.b16 %v997
    %v3838 = vunpack.c.h.b16 %v997
    %v3839 = vunpack.c.l.b16 %v998
    %v3840 = vunpack.c.h.b16 %v998
    %v3841 = vunpack.c.l.b16 %v999
    %v3842 = vunpack.c.h.b16 %v999
    %v3843 = vunpack.c.l.b16 %v1000
    %v3844 = vunpack.c.h.b16 %v1000
    %v3845 = vunpack.c.l.b16 %v1001
    %v3846 = vunpack.c.h.b16 %v1001
    %v3847 = vunpack.c.l.b16 %v1002
    %v3848 = vunpack.c.h.b16 %v1002
    %v3849 = vunpack.c.l.b16 %v1003
    %v3850 = vunpack.c.h.b16 %v1003
    %v3851 = vunpack.c.l.b16 %v1004
    %v3852 = vunpack.c.h.b16 %v1004
    %v3853 = vunpack.c.l.b16 %v1005
    %v3854 = vunpack.c.h.b16 %v1005
    %v3855 = vunpack.c.l.b16 %v1006
    %v3856 = vunpack.c.h.b16 %v1006
    %v3857 = vunpack.c.l.b16 %v1007
    %v3858 = vunpack.c.h.b16 %v1007
    %v3859 = vunpack.c.l.b16 %v1008
    %v3860 = vunpack.c.h.b16 %v1008
    %v3861 = vunpack.c.l.b16 %v1009
    %v3862 = vunpack.c.h.b16 %v1009
    %v3863 = vunpack.c.l.b16 %v1010
    %v3864 = vunpack.c.h.b16 %v1010
    %v3865 = vunpack.c.l.b16 %v1011
    %v3866 = vunpack.c.h.b16 %v1011
    %v3867 = vunpack.c.l.b16 %v1012
    %v3868 = vunpack.c.h.b16 %v1012
    %v3869 = vunpack.c.l.b16 %v1013
    %v3870 = vunpack.c.h.b16 %v1013
    %v3871 = vunpack.c.l.b16 %v1014
    %v3872 = vunpack.c.h.b16 %v1014
    %v3873 = vunpack.c.l.b16 %v1015
    %v3874 = vunpack.c.h.b16 %v1015
    %v3875 = vunpack.c.l.b16 %v1016
    %v3876 = vunpack.c.h.b16 %v1016
    %v3877 = vunpack.c.l.b16 %v1017
    %v3878 = vunpack.c.h.b16 %v1017
    %v3879 = vunpack.c.l.b16 %v1018
    %v3880 = vunpack.c.h.b16 %v1018
    %v3881 = vunpack.c.l.b16 %v1019
    %v3882 = vunpack.c.h.b16 %v1019
    %v3883 = vunpack.c.l.b16 %v1020
    %v3884 = vunpack.c.h.b16 %v1020
    %v3885 = vunpack.c.l.b16 %v1021
    %v3886 = vunpack.c.h.b16 %v1021
    %v3887 = vunpack.c.l.b16 %v1022
    %v3888 = vunpack.c.h.b16 %v1022
    %v3889 = vunpack.c.l.b16 %v1023
    %v3890 = vunpack.c.h.b16 %v1023
    %v3891 = vunpack.c.l.b16 %v1024
    %v3892 = vunpack.c.h.b16 %v1024
    %v3893 = vunpack.c.l.b16 %v1025
    %v3894 = vunpack.c.h.b16 %v1025
    %v3895 = vunpack.c.l.b16 %v1026
    %v3896 = vunpack.c.h.b16 %v1026
    %v3897 = vunpack.c.l.b16 %v1027
    %v3898 = vunpack.c.h.b16 %v1027
    %v3899 = vunpack.c.l.b16 %v1028
    %v3900 = vunpack.c.h.b16 %v1028
    %v3901 = vunpack.c.l.b16 %v1029
    %v3902 = vunpack.c.h.b16 %v1029
    %v3903 = vunpack.c.l.b16 %v1030
    %v3904 = vunpack.c.h.b16 %v1030
    %v3905 = vunpack.c.l.b16 %v1031
    %v3906 = vunpack.c.h.b16 %v1031
    %v3907 = vunpack.c.l.b16 %v1032
    %v3908 = vunpack.c.h.b16 %v1032
    %v3909 = vunpack.c.l.b16 %v1033
    %v3910 = vunpack.c.h.b16 %v1033
    %v3911 = vunpack.c.l.b16 %v1034
    %v3912 = vunpack.c.h.b16 %v1034
    %v3913 = vunpack.c.l.b16 %v1035
    %v3914 = vunpack.c.h.b16 %v1035
    %v3915 = vunpack.c.l.b16 %v1036
    %v3916 = vunpack.c.h.b16 %v1036
    %v3917 = vunpack.c.l.b16 %v1037
    %v3918 = vunpack.c.h.b16 %v1037
    %v3919 = vunpack.c.l.b16 %v1038
    %v3920 = vunpack.c.h.b16 %v1038
    %v3921 = vunpack.c.l.b16 %v1039
    %v3922 = vunpack.c.h.b16 %v1039
    %v3923 = vunpack.c.l.b16 %v1040
    %v3924 = vunpack.c.h.b16 %v1040
    %v3925 = vunpack.c.l.b16 %v1041
    %v3926 = vunpack.c.h.b16 %v1041
    %v3927 = vunpack.c.l.b16 %v1042
    %v3928 = vunpack.c.h.b16 %v1042
    %v3929 = vunpack.c.l.b16 %v1043
    %v3930 = vunpack.c.h.b16 %v1043
    %v3931 = vunpack.c.l.b16 %v1044
    %v3932 = vunpack.c.h.b16 %v1044
    %v3933 = vunpack.c.l.b16 %v1045
    %v3934 = vunpack.c.h.b16 %v1045
    %v3935 = vunpack.c.l.b16 %v1046
    %v3936 = vunpack.c.h.b16 %v1046
    %v3937 = vunpack.c.l.b16 %v1047
    %v3938 = vunpack.c.h.b16 %v1047
    %v3939 = vunpack.c.l.b16 %v1048
    %v3940 = vunpack.c.h.b16 %v1048
    %v3941 = vunpack.c.l.b16 %v1049
    %v3942 = vunpack.c.h.b16 %v1049
    %v3943 = vunpack.c.l.b16 %v1050
    %v3944 = vunpack.c.h.b16 %v1050
    %v3945 = vunpack.c.l.b16 %v1051
    %v3946 = vunpack.c.h.b16 %v1051
    %v3947 = vunpack.c.l.b16 %v1052
    %v3948 = vunpack.c.h.b16 %v1052
    %v3949 = vunpack.c.l.b16 %v1053
    %v3950 = vunpack.c.h.b16 %v1053
    %v3951 = vunpack.c.l.b16 %v1054
    %v3952 = vunpack.c.h.b16 %v1054
    %v3953 = vunpack.c.l.b16 %v1055
    %v3954 = vunpack.c.h.b16 %v1055
    %v3955 = vunpack.c.l.b16 %v1056
    %v3956 = vunpack.c.h.b16 %v1056
    %v3957 = vunpack.c.l.b16 %v1057
    %v3958 = vunpack.c.h.b16 %v1057
    %v3959 = vunpack.c.l.b16 %v1058
    %v3960 = vunpack.c.h.b16 %v1058
    %v3961 = vunpack.c.l.b16 %v1059
    %v3962 = vunpack.c.h.b16 %v1059
    %v3963 = vunpack.c.l.b16 %v1060
    %v3964 = vunpack.c.h.b16 %v1060
    %v3965 = vunpack.c.l.b16 %v1061
    %v3966 = vunpack.c.h.b16 %v1061
    %v3967 = vunpack.c.l.b16 %v1062
    %v3968 = vunpack.c.h.b16 %v1062
    %v3969 = vunpack.c.l.b16 %v1063
    %v3970 = vunpack.c.h.b16 %v1063
    %v3971 = vunpack.c.l.b16 %v1064
    %v3972 = vunpack.c.h.b16 %v1064
    %v3973 = vunpack.c.l.b16 %v1065
    %v3974 = vunpack.c.h.b16 %v1065
    %v3975 = vunpack.c.l.b16 %v1066
    %v3976 = vunpack.c.h.b16 %v1066
    %v3977 = vunpack.c.l.b16 %v1067
    %v3978 = vunpack.c.h.b16 %v1067
    %v3979 = vunpack.c.l.b16 %v1068
    %v3980 = vunpack.c.h.b16 %v1068
    %v3981 = vunpack.c.l.b16 %v1069
    %v3982 = vunpack.c.h.b16 %v1069
    %v3983 = vunpack.c.l.b16 %v1070
    %v3984 = vunpack.c.h.b16 %v1070
    %v3985 = vunpack.c.l.b16 %v1071
    %v3986 = vunpack.c.h.b16 %v1071
    %v3987 = vunpack.c.l.b16 %v1072
    %v3988 = vunpack.c.h.b16 %v1072
    %v3989 = vunpack.c.l.b16 %v1073
    %v3990 = vunpack.c.h.b16 %v1073
    %v3991 = vunpack.c.l.b16 %v1074
    %v3992 = vunpack.c.h.b16 %v1074
    %v3993 = vunpack.c.l.b16 %v1075
    %v3994 = vunpack.c.h.b16 %v1075
    %v3995 = vunpack.c.l.b16 %v1076
    %v3996 = vunpack.c.h.b16 %v1076
    %v3997 = vunpack.c.l.b16 %v1077
    %v3998 = vunpack.c.h.b16 %v1077
    %v3999 = vunpack.c.l.b16 %v1078
    %v4000 = vunpack.c.h.b16 %v1078
    %v4001 = vunpack.c.l.b16 %v1079
    %v4002 = vunpack.c.h.b16 %v1079
    %v4003 = vunpack.c.l.b16 %v1080
    %v4004 = vunpack.c.h.b16 %v1080
    %v4005 = vunpack.c.l.b16 %v1081
    %v4006 = vunpack.c.h.b16 %v1081
    %v4007 = vunpack.c.l.b16 %v1082
    %v4008 = vunpack.c.h.b16 %v1082
    %v4009 = vunpack.c.l.b16 %v1083
    %v4010 = vunpack.c.h.b16 %v1083
    %v4011 = vunpack.c.l.b16 %v1084
    %v4012 = vunpack.c.h.b16 %v1084
    %v4013 = vunpack.c.l.b16 %v1085
    %v4014 = vunpack.c.h.b16 %v1085
    %v4015 = vunpack.c.l.b16 %v1086
    %v4016 = vunpack.c.h.b16 %v1086
    %v4017 = vunpack.c.l.b16 %v1087
    %v4018 = vunpack.c.h.b16 %v1087
    %v4019 = vunpack.c.l.b16 %v1088
    %v4020 = vunpack.c.h.b16 %v1088
    %v4021 = vunpack.c.l.b16 %v1089
    %v4022 = vunpack.c.h.b16 %v1089
    %v4023 = vunpack.c.l.b16 %v1090
    %v4024 = vunpack.c.h.b16 %v1090
    %v4025 = vunpack.c.l.b16 %v1091
    %v4026 = vunpack.c.h.b16 %v1091
    %v4027 = vunpack.c.l.b16 %v1092
    %v4028 = vunpack.c.h.b16 %v1092
    %v4029 = vunpack.c.l.b16 %v1093
    %v4030 = vunpack.c.h.b16 %v1093
    %v4031 = vunpack.c.l.b16 %v1094
    %v4032 = vunpack.c.h.b16 %v1094
    %v4033 = vunpack.c.l.b16 %v1095
    %v4034 = vunpack.c.h.b16 %v1095
    %v4035 = vunpack.c.l.b16 %v1096
    %v4036 = vunpack.c.h.b16 %v1096
    %v4037 = vunpack.c.l.b16 %v1097
    %v4038 = vunpack.c.h.b16 %v1097
    %v4039 = vunpack.c.l.b16 %v1098
    %v4040 = vunpack.c.h.b16 %v1098
    %v4041 = vunpack.c.l.b16 %v1099
    %v4042 = vunpack.c.h.b16 %v1099
    %v4043 = vunpack.c.l.b16 %v1100
    %v4044 = vunpack.c.h.b16 %v1100
    %v4045 = vunpack.c.l.b16 %v1101
    %v4046 = vunpack.c.h.b16 %v1101
    %v4047 = vunpack.c.l.b16 %v1102
    %v4048 = vunpack.c.h.b16 %v1102
    %v4049 = vunpack.c.l.b16 %v1103
    %v4050 = vunpack.c.h.b16 %v1103
    %v4051 = vunpack.c.l.b16 %v1104
    %v4052 = vunpack.c.h.b16 %v1104
    %v4053 = vunpack.c.l.b16 %v1105
    %v4054 = vunpack.c.h.b16 %v1105
    %v4055 = vunpack.c.l.b16 %v1106
    %v4056 = vunpack.c.h.b16 %v1106
    %v4057 = vunpack.c.l.b16 %v1107
    %v4058 = vunpack.c.h.b16 %v1107
    %v4059 = vunpack.c.l.b16 %v1108
    %v4060 = vunpack.c.h.b16 %v1108
    %v4061 = vunpack.c.l.b16 %v1109
    %v4062 = vunpack.c.h.b16 %v1109
    %v4063 = vunpack.c.l.b16 %v1110
    %v4064 = vunpack.c.h.b16 %v1110
    %v4065 = vunpack.c.l.b16 %v1111
    %v4066 = vunpack.c.h.b16 %v1111
    %v4067 = vunpack.c.l.b16 %v1112
    %v4068 = vunpack.c.h.b16 %v1112
    %v4069 = vunpack.c.l.b16 %v1113
    %v4070 = vunpack.c.h.b16 %v1113
    %v4071 = vunpack.c.l.b16 %v1114
    %v4072 = vunpack.c.h.b16 %v1114
    %v4073 = vunpack.c.l.b16 %v1115
    %v4074 = vunpack.c.h.b16 %v1115
    %v4075 = vunpack.c.l.b16 %v1116
    %v4076 = vunpack.c.h.b16 %v1116
    %v4077 = vunpack.c.l.b16 %v1117
    %v4078 = vunpack.c.h.b16 %v1117
    %v4079 = vunpack.c.l.b16 %v1118
    %v4080 = vunpack.c.h.b16 %v1118
    %v4081 = vunpack.c.l.b16 %v1119
    %v4082 = vunpack.c.h.b16 %v1119
    %v4083 = vunpack.c.l.b16 %v1120
    %v4084 = vunpack.c.h.b16 %v1120
    %v4085 = vunpack.c.l.b16 %v1121
    %v4086 = vunpack.c.h.b16 %v1121
    %v4087 = vunpack.c.l.b16 %v1122
    %v4088 = vunpack.c.h.b16 %v1122
    %v4089 = vunpack.c.l.b16 %v1123
    %v4090 = vunpack.c.h.b16 %v1123
    %v4091 = vunpack.c.l.b16 %v1124
    %v4092 = vunpack.c.h.b16 %v1124
    %v4093 = vunpack.c.l.b16 %v1125
    %v4094 = vunpack.c.h.b16 %v1125
    %v4095 = vunpack.c.l.b16 %v1126
    %v4096 = vunpack.c.h.b16 %v1126
    %v4097 = vunpack.c.l.b16 %v1127
    %v4098 = vunpack.c.h.b16 %v1127
    %v4099 = vunpack.c.l.b16 %v1128
    %v4100 = vunpack.c.h.b16 %v1128
    %v4101 = vunpack.c.l.b16 %v1129
    %v4102 = vunpack.c.h.b16 %v1129
    %v4103 = vunpack.c.l.b16 %v1130
    %v4104 = vunpack.c.h.b16 %v1130
    %v4105 = vunpack.c.l.b16 %v1131
    %v4106 = vunpack.c.h.b16 %v1131
    %v4107 = vunpack.c.l.b16 %v1132
    %v4108 = vunpack.c.h.b16 %v1132
    %v4109 = vunpack.c.l.b16 %v1133
    %v4110 = vunpack.c.h.b16 %v1133
    %v4111 = vunpack.c.l.b16 %v1134
    %v4112 = vunpack.c.h.b16 %v1134
    %v4113 = vunpack.c.l.b16 %v1135
    %v4114 = vunpack.c.h.b16 %v1135
    %v4115 = vunpack.c.l.b16 %v1136
    %v4116 = vunpack.c.h.b16 %v1136
    %v4117 = vunpack.c.l.b16 %v1137
    %v4118 = vunpack.c.h.b16 %v1137
    %v4119 = vunpack.c.l.b16 %v1138
    %v4120 = vunpack.c.h.b16 %v1138
    %v4121 = vunpack.c.l.b16 %v1139
    %v4122 = vunpack.c.h.b16 %v1139
    %v4123 = vunpack.c.l.b16 %v1140
    %v4124 = vunpack.c.h.b16 %v1140
    %v4125 = vunpack.c.l.b16 %v1141
    %v4126 = vunpack.c.h.b16 %v1141
    %v4127 = vunpack.c.l.b16 %v1142
    %v4128 = vunpack.c.h.b16 %v1142
    %v4129 = vunpack.c.l.b16 %v1143
    %v4130 = vunpack.c.h.b16 %v1143
    %v4131 = vunpack.c.l.b16 %v1144
    %v4132 = vunpack.c.h.b16 %v1144
    %v4133 = vunpack.c.l.b16 %v1145
    %v4134 = vunpack.c.h.b16 %v1145
    %v4135 = vunpack.c.l.b16 %v1146
    %v4136 = vunpack.c.h.b16 %v1146
    %v4137 = vunpack.c.l.b16 %v1147
    %v4138 = vunpack.c.h.b16 %v1147
    %v4139 = vunpack.c.l.b16 %v1148
    %v4140 = vunpack.c.h.b16 %v1148
    %v4141 = vunpack.c.l.b16 %v1149
    %v4142 = vunpack.c.h.b16 %v1149
    %v4143 = vunpack.c.l.b16 %v1150
    %v4144 = vunpack.c.h.b16 %v1150
    %v4145 = vunpack.c.l.b16 %v1151
    %v4146 = vunpack.c.h.b16 %v1151
    %v4147 = vunpack.c.l.b16 %v1152
    %v4148 = vunpack.c.h.b16 %v1152
    %v4149 = vunpack.c.l.b16 %v1153
    %v4150 = vunpack.c.h.b16 %v1153
    %v4151 = vunpack.c.l.b16 %v1154
    %v4152 = vunpack.c.h.b16 %v1154
    %v4153 = vunpack.c.l.b16 %v1155
    %v4154 = vunpack.c.h.b16 %v1155
    %v4155 = vunpack.c.l.b16 %v1156
    %v4156 = vunpack.c.h.b16 %v1156
    %v4157 = vunpack.c.l.b16 %v1157
    %v4158 = vunpack.c.h.b16 %v1157
    %v4159 = vunpack.c.l.b16 %v1158
    %v4160 = vunpack.c.h.b16 %v1158
    %v4161 = vunpack.c.l.b16 %v1159
    %v4162 = vunpack.c.h.b16 %v1159
    %v4163 = vunpack.c.l.b16 %v1160
    %v4164 = vunpack.c.h.b16 %v1160
    %v4165 = vunpack.c.l.b16 %v1161
    %v4166 = vunpack.c.h.b16 %v1161
    %v4167 = vunpack.c.l.b16 %v1162
    %v4168 = vunpack.c.h.b16 %v1162
    %v4169 = vunpack.c.l.b16 %v1163
    %v4170 = vunpack.c.h.b16 %v1163
    %v4171 = vunpack.c.l.b16 %v1164
    %v4172 = vunpack.c.h.b16 %v1164
    %v4173 = vunpack.c.l.b16 %v1165
    %v4174 = vunpack.c.h.b16 %v1165
    %v4175 = vunpack.c.l.b16 %v1166
    %v4176 = vunpack.c.h.b16 %v1166
    %v4177 = vunpack.c.l.b16 %v1167
    %v4178 = vunpack.c.h.b16 %v1167
    %v4179 = vunpack.c.l.b16 %v1168
    %v4180 = vunpack.c.h.b16 %v1168
    %v4181 = vunpack.c.l.b16 %v1169
    %v4182 = vunpack.c.h.b16 %v1169
    %v4183 = vunpack.c.l.b16 %v1170
    %v4184 = vunpack.c.h.b16 %v1170
    %v4185 = vunpack.c.l.b16 %v1171
    %v4186 = vunpack.c.h.b16 %v1171
    %v4187 = vunpack.c.l.b16 %v1172
    %v4188 = vunpack.c.h.b16 %v1172
    %v4189 = vunpack.c.l.b16 %v1173
    %v4190 = vunpack.c.h.b16 %v1173
    %v4191 = vunpack.c.l.b16 %v1174
    %v4192 = vunpack.c.h.b16 %v1174
    %v4193 = vunpack.c.l.b16 %v1175
    %v4194 = vunpack.c.h.b16 %v1175
    %v4195 = vunpack.c.l.b16 %v1176
    %v4196 = vunpack.c.h.b16 %v1176
    %v4197 = vunpack.c.l.b16 %v1177
    %v4198 = vunpack.c.h.b16 %v1177
    %v4199 = vunpack.c.l.b16 %v1178
    %v4200 = vunpack.c.h.b16 %v1178
    %v4201 = vunpack.c.l.b16 %v1179
    %v4202 = vunpack.c.h.b16 %v1179
    %v4203 = vunpack.c.l.b16 %v1180
    %v4204 = vunpack.c.h.b16 %v1180
    %v4205 = vunpack.c.l.b16 %v1181
    %v4206 = vunpack.c.h.b16 %v1181
    %v4207 = vunpack.c.l.b16 %v1182
    %v4208 = vunpack.c.h.b16 %v1182
    %v4209 = vunpack.c.l.b16 %v1183
    %v4210 = vunpack.c.h.b16 %v1183
    %v4211 = vunpack.c.l.b16 %v1184
    %v4212 = vunpack.c.h.b16 %v1184
    %v4213 = vunpack.c.l.b16 %v1185
    %v4214 = vunpack.c.h.b16 %v1185
    %v4215 = vunpack.c.l.b16 %v1186
    %v4216 = vunpack.c.h.b16 %v1186
    %v4217 = vunpack.c.l.b16 %v1187
    %v4218 = vunpack.c.h.b16 %v1187
    %v4219 = vunpack.c.l.b16 %v1188
    %v4220 = vunpack.c.h.b16 %v1188
    %v4221 = vunpack.c.l.b16 %v1189
    %v4222 = vunpack.c.h.b16 %v1189
    %v4223 = vunpack.c.l.b16 %v1190
    %v4224 = vunpack.c.h.b16 %v1190
    %v4225 = vunpack.c.l.b16 %v1191
    %v4226 = vunpack.c.h.b16 %v1191
    %v4227 = vunpack.c.l.b16 %v1192
    %v4228 = vunpack.c.h.b16 %v1192
    %v4229 = vunpack.c.l.b16 %v1193
    %v4230 = vunpack.c.h.b16 %v1193
    %v4231 = vunpack.c.l.b16 %v1194
    %v4232 = vunpack.c.h.b16 %v1194
    %v4233 = vunpack.c.l.b16 %v1195
    %v4234 = vunpack.c.h.b16 %v1195
    %v4235 = vunpack.c.l.b16 %v1196
    %v4236 = vunpack.c.h.b16 %v1196
    %v4237 = vunpack.c.l.b16 %v1197
    %v4238 = vunpack.c.h.b16 %v1197
    %v4239 = vunpack.c.l.b16 %v1198
    %v4240 = vunpack.c.h.b16 %v1198
    %v4241 = vunpack.c.l.b16 %v1199
    %v4242 = vunpack.c.h.b16 %v1199
    %v4243 = vunpack.c.l.b16 %v1200
    %v4244 = vunpack.c.h.b16 %v1200
    %v4245 = vunpack.c.l.b16 %v1201
    %v4246 = vunpack.c.h.b16 %v1201
    %v4247 = vunpack.c.l.b16 %v1202
    %v4248 = vunpack.c.h.b16 %v1202
    %v4249 = vunpack.c.l.b16 %v1203
    %v4250 = vunpack.c.h.b16 %v1203
    %v4251 = vunpack.c.l.b16 %v1204
    %v4252 = vunpack.c.h.b16 %v1204
    %v4253 = vunpack.c.l.b16 %v1205
    %v4254 = vunpack.c.h.b16 %v1205
    %v4255 = vunpack.c.l.b16 %v1206
    %v4256 = vunpack.c.h.b16 %v1206
    %v4257 = vunpack.c.l.b16 %v1207
    %v4258 = vunpack.c.h.b16 %v1207
    %v4259 = vunpack.c.l.b16 %v1208
    %v4260 = vunpack.c.h.b16 %v1208
    %v4261 = vunpack.c.l.b16 %v1209
    %v4262 = vunpack.c.h.b16 %v1209
    %v4263 = vunpack.c.l.b16 %v1210
    %v4264 = vunpack.c.h.b16 %v1210
    %v4265 = vunpack.c.l.b16 %v1211
    %v4266 = vunpack.c.h.b16 %v1211
    %v4267 = vunpack.c.l.b16 %v1212
    %v4268 = vunpack.c.h.b16 %v1212
    %v4269 = vunpack.c.l.b16 %v1213
    %v4270 = vunpack.c.h.b16 %v1213
    %v4271 = vunpack.c.l.b16 %v1214
    %v4272 = vunpack.c.h.b16 %v1214
    %v4273 = vunpack.c.l.b16 %v1215
    %v4274 = vunpack.c.h.b16 %v1215
    %v4275 = vunpack.c.l.b16 %v1216
    %v4276 = vunpack.c.h.b16 %v1216
    %v4277 = vunpack.c.l.b16 %v1217
    %v4278 = vunpack.c.h.b16 %v1217
    %v4279 = vunpack.c.l.b16 %v1218
    %v4280 = vunpack.c.h.b16 %v1218
    %v4281 = vunpack.c.l.b16 %v1219
    %v4282 = vunpack.c.h.b16 %v1219
    %v4283 = vunpack.c.l.b16 %v1220
    %v4284 = vunpack.c.h.b16 %v1220
    %v4285 = vunpack.c.l.b16 %v1221
    %v4286 = vunpack.c.h.b16 %v1221
    %v4287 = vunpack.c.l.b16 %v1222
    %v4288 = vunpack.c.h.b16 %v1222
    %v4289 = vunpack.c.l.b16 %v1223
    %v4290 = vunpack.c.h.b16 %v1223
    %v4291 = vunpack.c.l.b16 %v1224
    %v4292 = vunpack.c.h.b16 %v1224
    %v4293 = vunpack.c.l.b16 %v1225
    %v4294 = vunpack.c.h.b16 %v1225
    %v4295 = vunpack.c.l.b16 %v1226
    %v4296 = vunpack.c.h.b16 %v1226
    %v4297 = vunpack.c.l.b16 %v1227
    %v4298 = vunpack.c.h.b16 %v1227
    %v4299 = vunpack.c.l.b16 %v1228
    %v4300 = vunpack.c.h.b16 %v1228
    %v4301 = vunpack.c.l.b16 %v1229
    %v4302 = vunpack.c.h.b16 %v1229
    %v4303 = vunpack.c.l.b16 %v1230
    %v4304 = vunpack.c.h.b16 %v1230
    %v4305 = vunpack.c.l.b16 %v1231
    %v4306 = vunpack.c.h.b16 %v1231
    %v4307 = vunpack.c.l.b16 %v1232
    %v4308 = vunpack.c.h.b16 %v1232
    %v4309 = vunpack.c.l.b16 %v1233
    %v4310 = vunpack.c.h.b16 %v1233
    %v4311 = vunpack.c.l.b16 %v1234
    %v4312 = vunpack.c.h.b16 %v1234
    %v4313 = vunpack.c.l.b16 %v1235
    %v4314 = vunpack.c.h.b16 %v1235
    %v4315 = vunpack.c.l.b16 %v1236
    %v4316 = vunpack.c.h.b16 %v1236
    %v4317 = vunpack.c.l.b16 %v1237
    %v4318 = vunpack.c.h.b16 %v1237
    %v4319 = vunpack.c.l.b16 %v1238
    %v4320 = vunpack.c.h.b16 %v1238
    %v4321 = vunpack.c.l.b16 %v1239
    %v4322 = vunpack.c.h.b16 %v1239
    %v4323 = vunpack.c.l.b16 %v1240
    %v4324 = vunpack.c.h.b16 %v1240
    %v4325 = vunpack.c.l.b16 %v1241
    %v4326 = vunpack.c.h.b16 %v1241
    %v4327 = vunpack.c.l.b16 %v1242
    %v4328 = vunpack.c.h.b16 %v1242
    %v4329 = vunpack.c.l.b16 %v1243
    %v4330 = vunpack.c.h.b16 %v1243
    %v4331 = vunpack.c.l.b16 %v1244
    %v4332 = vunpack.c.h.b16 %v1244
    %v4333 = vunpack.c.l.b16 %v1245
    %v4334 = vunpack.c.h.b16 %v1245
    %v4335 = vunpack.c.l.b16 %v1246
    %v4336 = vunpack.c.h.b16 %v1246
    %v4337 = vunpack.c.l.b16 %v1247
    %v4338 = vunpack.c.h.b16 %v1247
    %v4339 = vunpack.c.l.b16 %v1248
    %v4340 = vunpack.c.h.b16 %v1248
    %v4341 = vunpack.c.l.b16 %v1249
    %v4342 = vunpack.c.h.b16 %v1249
    %v4343 = vunpack.c.l.b16 %v1250
    %v4344 = vunpack.c.h.b16 %v1250
    %v4345 = vunpack.c.l.b16 %v1251
    %v4346 = vunpack.c.h.b16 %v1251
    %v4347 = vunpack.c.l.b16 %v1252
    %v4348 = vunpack.c.h.b16 %v1252
    %v4349 = vunpack.c.l.b16 %v1253
    %v4350 = vunpack.c.h.b16 %v1253
    %v4351 = vunpack.c.l.b16 %v1254
    %v4352 = vunpack.c.h.b16 %v1254
    %v4353 = vunpack.c.l.b16 %v1255
    %v4354 = vunpack.c.h.b16 %v1255
    %v4355 = vunpack.c.l.b16 %v1256
    %v4356 = vunpack.c.h.b16 %v1256
    %v4357 = vunpack.c.l.b16 %v1257
    %v4358 = vunpack.c.h.b16 %v1257
    %v4359 = vunpack.c.l.b16 %v1258
    %v4360 = vunpack.c.h.b16 %v1258
    %v4361 = vunpack.c.l.b16 %v1259
    %v4362 = vunpack.c.h.b16 %v1259
    %v4363 = vunpack.c.l.b16 %v1260
    %v4364 = vunpack.c.h.b16 %v1260
    %v4365 = vunpack.c.l.b16 %v1261
    %v4366 = vunpack.c.h.b16 %v1261
    %v4367 = vunpack.c.l.b16 %v1262
    %v4368 = vunpack.c.h.b16 %v1262
    %v4369 = vunpack.c.l.b16 %v1263
    %v4370 = vunpack.c.h.b16 %v1263
    %v4371 = vunpack.c.l.b16 %v1264
    %v4372 = vunpack.c.h.b16 %v1264
    %v4373 = vunpack.c.l.b16 %v1265
    %v4374 = vunpack.c.h.b16 %v1265
    %v4375 = vunpack.c.l.b16 %v1266
    %v4376 = vunpack.c.h.b16 %v1266
    %v4377 = vunpack.c.l.b16 %v1267
    %v4378 = vunpack.c.h.b16 %v1267
    %v4379 = vunpack.c.l.b16 %v1268
    %v4380 = vunpack.c.h.b16 %v1268
    %v4381 = vpack.c.b16 %v2349, %v2333
    %v4382 = vpack.c.b16 %v2350, %v2334
    %v4383 = vpack.c.b16 %v2351, %v2335
    %v4384 = vpack.c.b16 %v2352, %v2336
    %v4385 = vpack.c.b16 %v2353, %v2337
    %v4386 = vpack.c.b16 %v2354, %v2338
    %v4387 = vpack.c.b16 %v2355, %v2339
    %v4388 = vpack.c.b16 %v2356, %v2340
    %v4389 = vpack.c.b16 %v2357, %v2341
    %v4390 = vpack.c.b16 %v2358, %v2342
    %v4391 = vpack.c.b16 %v2359, %v2343
    %v4392 = vpack.c.b16 %v2360, %v2344
    %v4393 = vpack.c.b16 %v2361, %v2345
    %v4394 = vpack.c.b16 %v2362, %v2346
    %v4395 = vpack.c.b16 %v2363, %v2347
    %v4396 = vpack.c.b16 %v2364, %v2348
    %v4397 = vpack.c.b16 %v2381, %v2365
    %v4398 = vpack.c.b16 %v2382, %v2366
    %v4399 = vpack.c.b16 %v2383, %v2367
    %v4400 = vpack.c.b16 %v2384, %v2368
    %v4401 = vpack.c.b16 %v2385, %v2369
    %v4402 = vpack.c.b16 %v2386, %v2370
    %v4403 = vpack.c.b16 %v2387, %v2371
    %v4404 = vpack.c.b16 %v2388, %v2372
    %v4405 = vpack.c.b16 %v2389, %v2373
    %v4406 = vpack.c.b16 %v2390, %v2374
    %v4407 = vpack.c.b16 %v2391, %v2375
    %v4408 = vpack.c.b16 %v2392, %v2376
    %v4409 = vpack.c.b16 %v2393, %v2377
    %v4410 = vpack.c.b16 %v2394, %v2378
    %v4411 = vpack.c.b16 %v2395, %v2379
    %v4412 = vpack.c.b16 %v2396, %v2380
    %v4413 = vpack.c.b16 %v2413, %v2397
    %v4414 = vpack.c.b16 %v2414, %v2398
    %v4415 = vpack.c.b16 %v2415, %v2399
    %v4416 = vpack.c.b16 %v2416, %v2400
    %v4417 = vpack.c.b16 %v2417, %v2401
    %v4418 = vpack.c.b16 %v2418, %v2402
    %v4419 = vpack.c.b16 %v2419, %v2403
    %v4420 = vpack.c.b16 %v2420, %v2404
    %v4421 = vpack.c.b16 %v2421, %v2405
    %v4422 = vpack.c.b16 %v2422, %v2406
    %v4423 = vpack.c.b16 %v2423, %v2407
    %v4424 = vpack.c.b16 %v2424, %v2408
    %v4425 = vpack.c.b16 %v2425, %v2409
    %v4426 = vpack.c.b16 %v2426, %v2410
    %v4427 = vpack.c.b16 %v2427, %v2411
    %v4428 = vpack.c.b16 %v2428, %v2412
    %v4429 = vpack.c.b16 %v2445, %v2429
    %v4430 = vpack.c.b16 %v2446, %v2430
    %v4431 = vpack.c.b16 %v2447, %v2431
    %v4432 = vpack.c.b16 %v2448, %v2432
    %v4433 = vpack.c.b16 %v2449, %v2433
    %v4434 = vpack.c.b16 %v2450, %v2434
    %v4435 = vpack.c.b16 %v2451, %v2435
    %v4436 = vpack.c.b16 %v2452, %v2436
    %v4437 = vpack.c.b16 %v2453, %v2437
    %v4438 = vpack.c.b16 %v2454, %v2438
    %v4439 = vpack.c.b16 %v2455, %v2439
    %v4440 = vpack.c.b16 %v2456, %v2440
    %v4441 = vpack.c.b16 %v2457, %v2441
    %v4442 = vpack.c.b16 %v2458, %v2442
    %v4443 = vpack.c.b16 %v2459, %v2443
    %v4444 = vpack.c.b16 %v2460, %v2444
    %v4445 = vpack.c.b16 %v2477, %v2461
    %v4446 = vpack.c.b16 %v2478, %v2462
    %v4447 = vpack.c.b16 %v2479, %v2463
    %v4448 = vpack.c.b16 %v2480, %v2464
    %v4449 = vpack.c.b16 %v2481, %v2465
    %v4450 = vpack.c.b16 %v2482, %v2466
    %v4451 = vpack.c.b16 %v2483, %v2467
    %v4452 = vpack.c.b16 %v2484, %v2468
    %v4453 = vpack.c.b16 %v2485, %v2469
    %v4454 = vpack.c.b16 %v2486, %v2470
    %v4455 = vpack.c.b16 %v2487, %v2471
    %v4456 = vpack.c.b16 %v2488, %v2472
    %v4457 = vpack.c.b16 %v2489, %v2473
    %v4458 = vpack.c.b16 %v2490, %v2474
    %v4459 = vpack.c.b16 %v2491, %v2475
    %v4460 = vpack.c.b16 %v2492, %v2476
    %v4461 = vpack.c.b16 %v2509, %v2493
    %v4462 = vpack.c.b16 %v2510, %v2494
    %v4463 = vpack.c.b16 %v2511, %v2495
    %v4464 = vpack.c.b16 %v2512, %v2496
    %v4465 = vpack.c.b16 %v2513, %v2497
    %v4466 = vpack.c.b16 %v2514, %v2498
    %v4467 = vpack.c.b16 %v2515, %v2499
    %v4468 = vpack.c.b16 %v2516, %v2500
    %v4469 = vpack.c.b16 %v2517, %v2501
    %v4470 = vpack.c.b16 %v2518, %v2502
    %v4471 = vpack.c.b16 %v2519, %v2503
    %v4472 = vpack.c.b16 %v2520, %v2504
    %v4473 = vpack.c.b16 %v2521, %v2505
    %v4474 = vpack.c.b16 %v2522, %v2506
    %v4475 = vpack.c.b16 %v2523, %v2507
    %v4476 = vpack.c.b16 %v2524, %v2508
    %v4477 = vpack.c.b16 %v2541, %v2525
    %v4478 = vpack.c.b16 %v2542, %v2526
    %v4479 = vpack.c.b16 %v2543, %v2527
    %v4480 = vpack.c.b16 %v2544, %v2528
    %v4481 = vpack.c.b16 %v2545, %v2529
    %v4482 = vpack.c.b16 %v2546, %v2530
    %v4483 = vpack.c.b16 %v2547, %v2531
    %v4484 = vpack.c.b16 %v2548, %v2532
    %v4485 = vpack.c.b16 %v2549, %v2533
    %v4486 = vpack.c.b16 %v2550, %v2534
    %v4487 = vpack.c.b16 %v2551, %v2535
    %v4488 = vpack.c.b16 %v2552, %v2536
    %v4489 = vpack.c.b16 %v2553, %v2537
    %v4490 = vpack.c.b16 %v2554, %v2538
    %v4491 = vpack.c.b16 %v2555, %v2539
    %v4492 = vpack.c.b16 %v2556, %v2540
    %v4493 = vpack.c.b16 %v2573, %v2557
    %v4494 = vpack.c.b16 %v2574, %v2558
    %v4495 = vpack.c.b16 %v2575, %v2559
    %v4496 = vpack.c.b16 %v2576, %v2560
    %v4497 = vpack.c.b16 %v2577, %v2561
    %v4498 = vpack.c.b16 %v2578, %v2562
    %v4499 = vpack.c.b16 %v2579, %v2563
    %v4500 = vpack.c.b16 %v2580, %v2564
    %v4501 = vpack.c.b16 %v2581, %v2565
    %v4502 = vpack.c.b16 %v2582, %v2566
    %v4503 = vpack.c.b16 %v2583, %v2567
    %v4504 = vpack.c.b16 %v2584, %v2568
    %v4505 = vpack.c.b16 %v2585, %v2569
    %v4506 = vpack.c.b16 %v2586, %v2570
    %v4507 = vpack.c.b16 %v2587, %v2571
    %v4508 = vpack.c.b16 %v2588, %v2572
    %v4509 = vpack.c.b16 %v2605, %v2589
    %v4510 = vpack.c.b16 %v2606, %v2590
    %v4511 = vpack.c.b16 %v2607, %v2591
    %v4512 = vpack.c.b16 %v2608, %v2592
    %v4513 = vpack.c.b16 %v2609, %v2593
    %v4514 = vpack.c.b16 %v2610, %v2594
    %v4515 = vpack.c.b16 %v2611, %v2595
    %v4516 = vpack.c.b16 %v2612, %v2596
    %v4517 = vpack.c.b16 %v2613, %v2597
    %v4518 = vpack.c.b16 %v2614, %v2598
    %v4519 = vpack.c.b16 %v2615, %v2599
    %v4520 = vpack.c.b16 %v2616, %v2600
    %v4521 = vpack.c.b16 %v2617, %v2601
    %v4522 = vpack.c.b16 %v2618, %v2602
    %v4523 = vpack.c.b16 %v2619, %v2603
    %v4524 = vpack.c.b16 %v2620, %v2604
    %v4525 = vpack.c.b16 %v2637, %v2621
    %v4526 = vpack.c.b16 %v2638, %v2622
    %v4527 = vpack.c.b16 %v2639, %v2623
    %v4528 = vpack.c.b16 %v2640, %v2624
    %v4529 = vpack.c.b16 %v2641, %v2625
    %v4530 = vpack.c.b16 %v2642, %v2626
    %v4531 = vpack.c.b16 %v2643, %v2627
    %v4532 = vpack.c.b16 %v2644, %v2628
    %v4533 = vpack.c.b16 %v2645, %v2629
    %v4534 = vpack.c.b16 %v2646, %v2630
    %v4535 = vpack.c.b16 %v2647, %v2631
    %v4536 = vpack.c.b16 %v2648, %v2632
    %v4537 = vpack.c.b16 %v2649, %v2633
    %v4538 = vpack.c.b16 %v2650, %v2634
    %v4539 = vpack.c.b16 %v2651, %v2635
    %v4540 = vpack.c.b16 %v2652, %v2636
    %v4541 = vpack.c.b16 %v2669, %v2653
    %v4542 = vpack.c.b16 %v2670, %v2654
    %v4543 = vpack.c.b16 %v2671, %v2655
    %v4544 = vpack.c.b16 %v2672, %v2656
    %v4545 = vpack.c.b16 %v2673, %v2657
    %v4546 = vpack.c.b16 %v2674, %v2658
    %v4547 = vpack.c.b16 %v2675, %v2659
    %v4548 = vpack.c.b16 %v2676, %v2660
    %v4549 = vpack.c.b16 %v2677, %v2661
    %v4550 = vpack.c.b16 %v2678, %v2662
    %v4551 = vpack.c.b16 %v2679, %v2663
    %v4552 = vpack.c.b16 %v2680, %v2664
    %v4553 = vpack.c.b16 %v2681, %v2665
    %v4554 = vpack.c.b16 %v2682, %v2666
    %v4555 = vpack.c.b16 %v2683, %v2667
    %v4556 = vpack.c.b16 %v2684, %v2668
    %v4557 = vpack.c.b16 %v2701, %v2685
    %v4558 = vpack.c.b16 %v2702, %v2686
    %v4559 = vpack.c.b16 %v2703, %v2687
    %v4560 = vpack.c.b16 %v2704, %v2688
    %v4561 = vpack.c.b16 %v2705, %v2689
    %v4562 = vpack.c.b16 %v2706, %v2690
    %v4563 = vpack.c.b16 %v2707, %v2691
    %v4564 = vpack.c.b16 %v2708, %v2692
    %v4565 = vpack.c.b16 %v2709, %v2693
    %v4566 = vpack.c.b16 %v2710, %v2694
    %v4567 = vpack.c.b16 %v2711, %v2695
    %v4568 = vpack.c.b16 %v2712, %v2696
    %v4569 = vpack.c.b16 %v2713, %v2697
    %v4570 = vpack.c.b16 %v2714, %v2698
    %v4571 = vpack.c.b16 %v2715, %v2699
    %v4572 = vpack.c.b16 %v2716, %v2700
    %v4573 = vpack.c.b16 %v2733, %v2717
    %v4574 = vpack.c.b16 %v2734, %v2718
    %v4575 = vpack.c.b16 %v2735, %v2719
    %v4576 = vpack.c.b16 %v2736, %v2720
    %v4577 = vpack.c.b16 %v2737, %v2721
    %v4578 = vpack.c.b16 %v2738, %v2722
    %v4579 = vpack.c.b16 %v2739, %v2723
    %v4580 = vpack.c.b16 %v2740, %v2724
    %v4581 = vpack.c.b16 %v2741, %v2725
    %v4582 = vpack.c.b16 %v2742, %v2726
    %v4583 = vpack.c.b16 %v2743, %v2727
    %v4584 = vpack.c.b16 %v2744, %v2728
    %v4585 = vpack.c.b16 %v2745, %v2729
    %v4586 = vpack.c.b16 %v2746, %v2730
    %v4587 = vpack.c.b16 %v2747, %v2731
    %v4588 = vpack.c.b16 %v2748, %v2732
    %v4589 = vpack.c.b16 %v2765, %v2749
    %v4590 = vpack.c.b16 %v2766, %v2750
    %v4591 = vpack.c.b16 %v2767, %v2751
    %v4592 = vpack.c.b16 %v2768, %v2752
    %v4593 = vpack.c.b16 %v2769, %v2753
    %v4594 = vpack.c.b16 %v2770, %v2754
    %v4595 = vpack.c.b16 %v2771, %v2755
    %v4596 = vpack.c.b16 %v2772, %v2756
    %v4597 = vpack.c.b16 %v2773, %v2757
    %v4598 = vpack.c.b16 %v2774, %v2758
    %v4599 = vpack.c.b16 %v2775, %v2759
    %v4600 = vpack.c.b16 %v2776, %v2760
    %v4601 = vpack.c.b16 %v2777, %v2761
    %v4602 = vpack.c.b16 %v2778, %v2762
    %v4603 = vpack.c.b16 %v2779, %v2763
    %v4604 = vpack.c.b16 %v2780, %v2764
    %v4605 = vpack.c.b16 %v2797, %v2781
    %v4606 = vpack.c.b16 %v2798, %v2782
    %v4607 = vpack.c.b16 %v2799, %v2783
    %v4608 = vpack.c.b16 %v2800, %v2784
    %v4609 = vpack.c.b16 %v2801, %v2785
    %v4610 = vpack.c.b16 %v2802, %v2786
    %v4611 = vpack.c.b16 %v2803, %v2787
    %v4612 = vpack.c.b16 %v2804, %v2788
    %v4613 = vpack.c.b16 %v2805, %v2789
    %v4614 = vpack.c.b16 %v2806, %v2790
    %v4615 = vpack.c.b16 %v2807, %v2791
    %v4616 = vpack.c.b16 %v2808, %v2792
    %v4617 = vpack.c.b16 %v2809, %v2793
    %v4618 = vpack.c.b16 %v2810, %v2794
    %v4619 = vpack.c.b16 %v2811, %v2795
    %v4620 = vpack.c.b16 %v2812, %v2796
    %v4621 = vpack.c.b16 %v2829, %v2813
    %v4622 = vpack.c.b16 %v2830, %v2814
    %v4623 = vpack.c.b16 %v2831, %v2815
    %v4624 = vpack.c.b16 %v2832, %v2816
    %v4625 = vpack.c.b16 %v2833, %v2817
    %v4626 = vpack.c.b16 %v2834, %v2818
    %v4627 = vpack.c.b16 %v2835, %v2819
    %v4628 = vpack.c.b16 %v2836, %v2820
    %v4629 = vpack.c.b16 %v2837, %v2821
    %v4630 = vpack.c.b16 %v2838, %v2822
    %v4631 = vpack.c.b16 %v2839, %v2823
    %v4632 = vpack.c.b16 %v2840, %v2824
    %v4633 = vpack.c.b16 %v2841, %v2825
    %v4634 = vpack.c.b16 %v2842, %v2826
    %v4635 = vpack.c.b16 %v2843, %v2827
    %v4636 = vpack.c.b16 %v2844, %v2828
    %v4637 = vpack.c.b16 %v2861, %v2845
    %v4638 = vpack.c.b16 %v2862, %v2846
    %v4639 = vpack.c.b16 %v2863, %v2847
    %v4640 = vpack.c.b16 %v2864, %v2848
    %v4641 = vpack.c.b16 %v2865, %v2849
    %v4642 = vpack.c.b16 %v2866, %v2850
    %v4643 = vpack.c.b16 %v2867, %v2851
    %v4644 = vpack.c.b16 %v2868, %v2852
    %v4645 = vpack.c.b16 %v2869, %v2853
    %v4646 = vpack.c.b16 %v2870, %v2854
    %v4647 = vpack.c.b16 %v2871, %v2855
    %v4648 = vpack.c.b16 %v2872, %v2856
    %v4649 = vpack.c.b16 %v2873, %v2857
    %v4650 = vpack.c.b16 %v2874, %v2858
    %v4651 = vpack.c.b16 %v2875, %v2859
    %v4652 = vpack.c.b16 %v2876, %v2860
    %v4653 = vpack.c.b16 %v2893, %v2877
    %v4654 = vpack.c.b16 %v2894, %v2878
    %v4655 = vpack.c.b16 %v2895, %v2879
    %v4656 = vpack.c.b16 %v2896, %v2880
    %v4657 = vpack.c.b16 %v2897, %v2881
    %v4658 = vpack.c.b16 %v2898, %v2882
    %v4659 = vpack.c.b16 %v2899, %v2883
    %v4660 = vpack.c.b16 %v2900, %v2884
    %v4661 = vpack.c.b16 %v2901, %v2885
    %v4662 = vpack.c.b16 %v2902, %v2886
    %v4663 = vpack.c.b16 %v2903, %v2887
    %v4664 = vpack.c.b16 %v2904, %v2888
    %v4665 = vpack.c.b16 %v2905, %v2889
    %v4666 = vpack.c.b16 %v2906, %v2890
    %v4667 = vpack.c.b16 %v2907, %v2891
    %v4668 = vpack.c.b16 %v2908, %v2892
    %v4669 = vpack.c.b16 %v2925, %v2909
    %v4670 = vpack.c.b16 %v2926, %v2910
    %v4671 = vpack.c.b16 %v2927, %v2911
    %v4672 = vpack.c.b16 %v2928, %v2912
    %v4673 = vpack.c.b16 %v2929, %v2913
    %v4674 = vpack.c.b16 %v2930, %v2914
    %v4675 = vpack.c.b16 %v2931, %v2915
    %v4676 = vpack.c.b16 %v2932, %v2916
    %v4677 = vpack.c.b16 %v2933, %v2917
    %v4678 = vpack.c.b16 %v2934, %v2918
    %v4679 = vpack.c.b16 %v2935, %v2919
    %v4680 = vpack.c.b16 %v2936, %v2920
    %v4681 = vpack.c.b16 %v2937, %v2921
    %v4682 = vpack.c.b16 %v2938, %v2922
    %v4683 = vpack.c.b16 %v2939, %v2923
    %v4684 = vpack.c.b16 %v2940, %v2924
    %v4685 = vpack.c.b16 %v2957, %v2941
    %v4686 = vpack.c.b16 %v2958, %v2942
    %v4687 = vpack.c.b16 %v2959, %v2943
    %v4688 = vpack.c.b16 %v2960, %v2944
    %v4689 = vpack.c.b16 %v2961, %v2945
    %v4690 = vpack.c.b16 %v2962, %v2946
    %v4691 = vpack.c.b16 %v2963, %v2947
    %v4692 = vpack.c.b16 %v2964, %v2948
    %v4693 = vpack.c.b16 %v2965, %v2949
    %v4694 = vpack.c.b16 %v2966, %v2950
    %v4695 = vpack.c.b16 %v2967, %v2951
    %v4696 = vpack.c.b16 %v2968, %v2952
    %v4697 = vpack.c.b16 %v2969, %v2953
    %v4698 = vpack.c.b16 %v2970, %v2954
    %v4699 = vpack.c.b16 %v2971, %v2955
    %v4700 = vpack.c.b16 %v2972, %v2956
    %v4701 = vpack.c.b16 %v2989, %v2973
    %v4702 = vpack.c.b16 %v2990, %v2974
    %v4703 = vpack.c.b16 %v2991, %v2975
    %v4704 = vpack.c.b16 %v2992, %v2976
    %v4705 = vpack.c.b16 %v2993, %v2977
    %v4706 = vpack.c.b16 %v2994, %v2978
    %v4707 = vpack.c.b16 %v2995, %v2979
    %v4708 = vpack.c.b16 %v2996, %v2980
    %v4709 = vpack.c.b16 %v2997, %v2981
    %v4710 = vpack.c.b16 %v2998, %v2982
    %v4711 = vpack.c.b16 %v2999, %v2983
    %v4712 = vpack.c.b16 %v3000, %v2984
    %v4713 = vpack.c.b16 %v3001, %v2985
    %v4714 = vpack.c.b16 %v3002, %v2986
    %v4715 = vpack.c.b16 %v3003, %v2987
    %v4716 = vpack.c.b16 %v3004, %v2988
    %v4717 = vpack.c.b16 %v3021, %v3005
    %v4718 = vpack.c.b16 %v3022, %v3006
    %v4719 = vpack.c.b16 %v3023, %v3007
    %v4720 = vpack.c.b16 %v3024, %v3008
    %v4721 = vpack.c.b16 %v3025, %v3009
    %v4722 = vpack.c.b16 %v3026, %v3010
    %v4723 = vpack.c.b16 %v3027, %v3011
    %v4724 = vpack.c.b16 %v3028, %v3012
    %v4725 = vpack.c.b16 %v3029, %v3013
    %v4726 = vpack.c.b16 %v3030, %v3014
    %v4727 = vpack.c.b16 %v3031, %v3015
    %v4728 = vpack.c.b16 %v3032, %v3016
    %v4729 = vpack.c.b16 %v3033, %v3017
    %v4730 = vpack.c.b16 %v3034, %v3018
    %v4731 = vpack.c.b16 %v3035, %v3019
    %v4732 = vpack.c.b16 %v3036, %v3020
    %v4733 = vpack.c.b16 %v3053, %v3037
    %v4734 = vpack.c.b16 %v3054, %v3038
    %v4735 = vpack.c.b16 %v3055, %v3039
    %v4736 = vpack.c.b16 %v3056, %v3040
    %v4737 = vpack.c.b16 %v3057, %v3041
    %v4738 = vpack.c.b16 %v3058, %v3042
    %v4739 = vpack.c.b16 %v3059, %v3043
    %v4740 = vpack.c.b16 %v3060, %v3044
    %v4741 = vpack.c.b16 %v3061, %v3045
    %v4742 = vpack.c.b16 %v3062, %v3046
    %v4743 = vpack.c.b16 %v3063, %v3047
    %v4744 = vpack.c.b16 %v3064, %v3048
    %v4745 = vpack.c.b16 %v3065, %v3049
    %v4746 = vpack.c.b16 %v3066, %v3050
    %v4747 = vpack.c.b16 %v3067, %v3051
    %v4748 = vpack.c.b16 %v3068, %v3052
    %v4749 = vpack.c.b16 %v3085, %v3069
    %v4750 = vpack.c.b16 %v3086, %v3070
    %v4751 = vpack.c.b16 %v3087, %v3071
    %v4752 = vpack.c.b16 %v3088, %v3072
    %v4753 = vpack.c.b16 %v3089, %v3073
    %v4754 = vpack.c.b16 %v3090, %v3074
    %v4755 = vpack.c.b16 %v3091, %v3075
    %v4756 = vpack.c.b16 %v3092, %v3076
    %v4757 = vpack.c.b16 %v3093, %v3077
    %v4758 = vpack.c.b16 %v3094, %v3078
    %v4759 = vpack.c.b16 %v3095, %v3079
    %v4760 = vpack.c.b16 %v3096, %v3080
    %v4761 = vpack.c.b16 %v3097, %v3081
    %v4762 = vpack.c.b16 %v3098, %v3082
    %v4763 = vpack.c.b16 %v3099, %v3083
    %v4764 = vpack.c.b16 %v3100, %v3084
    %v4765 = vpack.c.b16 %v3117, %v3101
    %v4766 = vpack.c.b16 %v3118, %v3102
    %v4767 = vpack.c.b16 %v3119, %v3103
    %v4768 = vpack.c.b16 %v3120, %v3104
    %v4769 = vpack.c.b16 %v3121, %v3105
    %v4770 = vpack.c.b16 %v3122, %v3106
    %v4771 = vpack.c.b16 %v3123, %v3107
    %v4772 = vpack.c.b16 %v3124, %v3108
    %v4773 = vpack.c.b16 %v3125, %v3109
    %v4774 = vpack.c.b16 %v3126, %v3110
    %v4775 = vpack.c.b16 %v3127, %v3111
    %v4776 = vpack.c.b16 %v3128, %v3112
    %v4777 = vpack.c.b16 %v3129, %v3113
    %v4778 = vpack.c.b16 %v3130, %v3114
    %v4779 = vpack.c.b16 %v3131, %v3115
    %v4780 = vpack.c.b16 %v3132, %v3116
    %v4781 = vpack.c.b16 %v3149, %v3133
    %v4782 = vpack.c.b16 %v3150, %v3134
    %v4783 = vpack.c.b16 %v3151, %v3135
    %v4784 = vpack.c.b16 %v3152, %v3136
    %v4785 = vpack.c.b16 %v3153, %v3137
    %v4786 = vpack.c.b16 %v3154, %v3138
    %v4787 = vpack.c.b16 %v3155, %v3139
    %v4788 = vpack.c.b16 %v3156, %v3140
    %v4789 = vpack.c.b16 %v3157, %v3141
    %v4790 = vpack.c.b16 %v3158, %v3142
    %v4791 = vpack.c.b16 %v3159, %v3143
    %v4792 = vpack.c.b16 %v3160, %v3144
    %v4793 = vpack.c.b16 %v3161, %v3145
    %v4794 = vpack.c.b16 %v3162, %v3146
    %v4795 = vpack.c.b16 %v3163, %v3147
    %v4796 = vpack.c.b16 %v3164, %v3148
    %v4797 = vpack.c.b16 %v3181, %v3165
    %v4798 = vpack.c.b16 %v3182, %v3166
    %v4799 = vpack.c.b16 %v3183, %v3167
    %v4800 = vpack.c.b16 %v3184, %v3168
    %v4801 = vpack.c.b16 %v3185, %v3169
    %v4802 = vpack.c.b16 %v3186, %v3170
    %v4803 = vpack.c.b16 %v3187, %v3171
    %v4804 = vpack.c.b16 %v3188, %v3172
    %v4805 = vpack.c.b16 %v3189, %v3173
    %v4806 = vpack.c.b16 %v3190, %v3174
    %v4807 = vpack.c.b16 %v3191, %v3175
    %v4808 = vpack.c.b16 %v3192, %v3176
    %v4809 = vpack.c.b16 %v3193, %v3177
    %v4810 = vpack.c.b16 %v3194, %v3178
    %v4811 = vpack.c.b16 %v3195, %v3179
    %v4812 = vpack.c.b16 %v3196, %v3180
    %v4813 = vpack.c.b16 %v3213, %v3197
    %v4814 = vpack.c.b16 %v3214, %v3198
    %v4815 = vpack.c.b16 %v3215, %v3199
    %v4816 = vpack.c.b16 %v3216, %v3200
    %v4817 = vpack.c.b16 %v3217, %v3201
    %v4818 = vpack.c.b16 %v3218, %v3202
    %v4819 = vpack.c.b16 %v3219, %v3203
    %v4820 = vpack.c.b16 %v3220, %v3204
    %v4821 = vpack.c.b16 %v3221, %v3205
    %v4822 = vpack.c.b16 %v3222, %v3206
    %v4823 = vpack.c.b16 %v3223, %v3207
    %v4824 = vpack.c.b16 %v3224, %v3208
    %v4825 = vpack.c.b16 %v3225, %v3209
    %v4826 = vpack.c.b16 %v3226, %v3210
    %v4827 = vpack.c.b16 %v3227, %v3211
    %v4828 = vpack.c.b16 %v3228, %v3212
    %v4829 = vpack.c.b16 %v3245, %v3229
    %v4830 = vpack.c.b16 %v3246, %v3230
    %v4831 = vpack.c.b16 %v3247, %v3231
    %v4832 = vpack.c.b16 %v3248, %v3232
    %v4833 = vpack.c.b16 %v3249, %v3233
    %v4834 = vpack.c.b16 %v3250, %v3234
    %v4835 = vpack.c.b16 %v3251, %v3235
    %v4836 = vpack.c.b16 %v3252, %v3236
    %v4837 = vpack.c.b16 %v3253, %v3237
    %v4838 = vpack.c.b16 %v3254, %v3238
    %v4839 = vpack.c.b16 %v3255, %v3239
    %v4840 = vpack.c.b16 %v3256, %v3240
    %v4841 = vpack.c.b16 %v3257, %v3241
    %v4842 = vpack.c.b16 %v3258, %v3242
    %v4843 = vpack.c.b16 %v3259, %v3243
    %v4844 = vpack.c.b16 %v3260, %v3244
    %v4845 = vpack.c.b16 %v3277, %v3261
    %v4846 = vpack.c.b16 %v3278, %v3262
    %v4847 = vpack.c.b16 %v3279, %v3263
    %v4848 = vpack.c.b16 %v3280, %v3264
    %v4849 = vpack.c.b16 %v3281, %v3265
    %v4850 = vpack.c.b16 %v3282, %v3266
    %v4851 = vpack.c.b16 %v3283, %v3267
    %v4852 = vpack.c.b16 %v3284, %v3268
    %v4853 = vpack.c.b16 %v3285, %v3269
    %v4854 = vpack.c.b16 %v3286, %v3270
    %v4855 = vpack.c.b16 %v3287, %v3271
    %v4856 = vpack.c.b16 %v3288, %v3272
    %v4857 = vpack.c.b16 %v3289, %v3273
    %v4858 = vpack.c.b16 %v3290, %v3274
    %v4859 = vpack.c.b16 %v3291, %v3275
    %v4860 = vpack.c.b16 %v3292, %v3276
    %v4861 = vpack.c.b16 %v3309, %v3293
    %v4862 = vpack.c.b16 %v3310, %v3294
    %v4863 = vpack.c.b16 %v3311, %v3295
    %v4864 = vpack.c.b16 %v3312, %v3296
    %v4865 = vpack.c.b16 %v3313, %v3297
    %v4866 = vpack.c.b16 %v3314, %v3298
    %v4867 = vpack.c.b16 %v3315, %v3299
    %v4868 = vpack.c.b16 %v3316, %v3300
    %v4869 = vpack.c.b16 %v3317, %v3301
    %v4870 = vpack.c.b16 %v3318, %v3302
    %v4871 = vpack.c.b16 %v3319, %v3303
    %v4872 = vpack.c.b16 %v3320, %v3304
    %v4873 = vpack.c.b16 %v3321, %v3305
    %v4874 = vpack.c.b16 %v3322, %v3306
    %v4875 = vpack.c.b16 %v3323, %v3307
    %v4876 = vpack.c.b16 %v3324, %v3308
    %v4877 = vpack.c.b16 %v3341, %v3325
    %v4878 = vpack.c.b16 %v3342, %v3326
    %v4879 = vpack.c.b16 %v3343, %v3327
    %v4880 = vpack.c.b16 %v3344, %v3328
    %v4881 = vpack.c.b16 %v3345, %v3329
    %v4882 = vpack.c.b16 %v3346, %v3330
    %v4883 = vpack.c.b16 %v3347, %v3331
    %v4884 = vpack.c.b16 %v3348, %v3332
    %v4885 = vpack.c.b16 %v3349, %v3333
    %v4886 = vpack.c.b16 %v3350, %v3334
    %v4887 = vpack.c.b16 %v3351, %v3335
    %v4888 = vpack.c.b16 %v3352, %v3336
    %v4889 = vpack.c.b16 %v3353, %v3337
    %v4890 = vpack.c.b16 %v3354, %v3338
    %v4891 = vpack.c.b16 %v3355, %v3339
    %v4892 = vpack.c.b16 %v3356, %v3340
    %v4893 = vpack.c.b16 %v3373, %v3357
    %v4894 = vpack.c.b16 %v3374, %v3358
    %v4895 = vpack.c.b16 %v3375, %v3359
    %v4896 = vpack.c.b16 %v3376, %v3360
    %v4897 = vpack.c.b16 %v3377, %v3361
    %v4898 = vpack.c.b16 %v3378, %v3362
    %v4899 = vpack.c.b16 %v3379, %v3363
    %v4900 = vpack.c.b16 %v3380, %v3364
    %v4901 = vpack.c.b16 %v3381, %v3365
    %v4902 = vpack.c.b16 %v3382, %v3366
    %v4903 = vpack.c.b16 %v3383, %v3367
    %v4904 = vpack.c.b16 %v3384, %v3368
    %v4905 = vpack.c.b16 %v3385, %v3369
    %v4906 = vpack.c.b16 %v3386, %v3370
    %v4907 = vpack.c.b16 %v3387, %v3371
    %v4908 = vpack.c.b16 %v3388, %v3372
    %v4909 = vpack.c.b16 %v3405, %v3389
    %v4910 = vpack.c.b16 %v3406, %v3390
    %v4911 = vpack.c.b16 %v3407, %v3391
    %v4912 = vpack.c.b16 %v3408, %v3392
    %v4913 = vpack.c.b16 %v3409, %v3393
    %v4914 = vpack.c.b16 %v3410, %v3394
    %v4915 = vpack.c.b16 %v3411, %v3395
    %v4916 = vpack.c.b16 %v3412, %v3396
    %v4917 = vpack.c.b16 %v3413, %v3397
    %v4918 = vpack.c.b16 %v3414, %v3398
    %v4919 = vpack.c.b16 %v3415, %v3399
    %v4920 = vpack.c.b16 %v3416, %v3400
    %v4921 = vpack.c.b16 %v3417, %v3401
    %v4922 = vpack.c.b16 %v3418, %v3402
    %v4923 = vpack.c.b16 %v3419, %v3403
    %v4924 = vpack.c.b16 %v3420, %v3404
    %v4925 = vpack.c.b16 %v3437, %v3421
    %v4926 = vpack.c.b16 %v3438, %v3422
    %v4927 = vpack.c.b16 %v3439, %v3423
    %v4928 = vpack.c.b16 %v3440, %v3424
    %v4929 = vpack.c.b16 %v3441, %v3425
    %v4930 = vpack.c.b16 %v3442, %v3426
    %v4931 = vpack.c.b16 %v3443, %v3427
    %v4932 = vpack.c.b16 %v3444, %v3428
    %v4933 = vpack.c.b16 %v3445, %v3429
    %v4934 = vpack.c.b16 %v3446, %v3430
    %v4935 = vpack.c.b16 %v3447, %v3431
    %v4936 = vpack.c.b16 %v3448, %v3432
    %v4937 = vpack.c.b16 %v3449, %v3433
    %v4938 = vpack.c.b16 %v3450, %v3434
    %v4939 = vpack.c.b16 %v3451, %v3435
    %v4940 = vpack.c.b16 %v3452, %v3436
    %v4941 = vpack.c.b16 %v3469, %v3453
    %v4942 = vpack.c.b16 %v3470, %v3454
    %v4943 = vpack.c.b16 %v3471, %v3455
    %v4944 = vpack.c.b16 %v3472, %v3456
    %v4945 = vpack.c.b16 %v3473, %v3457
    %v4946 = vpack.c.b16 %v3474, %v3458
    %v4947 = vpack.c.b16 %v3475, %v3459
    %v4948 = vpack.c.b16 %v3476, %v3460
    %v4949 = vpack.c.b16 %v3477, %v3461
    %v4950 = vpack.c.b16 %v3478, %v3462
    %v4951 = vpack.c.b16 %v3479, %v3463
    %v4952 = vpack.c.b16 %v3480, %v3464
    %v4953 = vpack.c.b16 %v3481, %v3465
    %v4954 = vpack.c.b16 %v3482, %v3466
    %v4955 = vpack.c.b16 %v3483, %v3467
    %v4956 = vpack.c.b16 %v3484, %v3468
    %v4957 = vpack.c.b16 %v3501, %v3485
    %v4958 = vpack.c.b16 %v3502, %v3486
    %v4959 = vpack.c.b16 %v3503, %v3487
    %v4960 = vpack.c.b16 %v3504, %v3488
    %v4961 = vpack.c.b16 %v3505, %v3489
    %v4962 = vpack.c.b16 %v3506, %v3490
    %v4963 = vpack.c.b16 %v3507, %v3491
    %v4964 = vpack.c.b16 %v3508, %v3492
    %v4965 = vpack.c.b16 %v3509, %v3493
    %v4966 = vpack.c.b16 %v3510, %v3494
    %v4967 = vpack.c.b16 %v3511, %v3495
    %v4968 = vpack.c.b16 %v3512, %v3496
    %v4969 = vpack.c.b16 %v3513, %v3497
    %v4970 = vpack.c.b16 %v3514, %v3498
    %v4971 = vpack.c.b16 %v3515, %v3499
    %v4972 = vpack.c.b16 %v3516, %v3500
    %v4973 = vpack.c.b16 %v3533, %v3517
    %v4974 = vpack.c.b16 %v3534, %v3518
    %v4975 = vpack.c.b16 %v3535, %v3519
    %v4976 = vpack.c.b16 %v3536, %v3520
    %v4977 = vpack.c.b16 %v3537, %v3521
    %v4978 = vpack.c.b16 %v3538, %v3522
    %v4979 = vpack.c.b16 %v3539, %v3523
    %v4980 = vpack.c.b16 %v3540, %v3524
    %v4981 = vpack.c.b16 %v3541, %v3525
    %v4982 = vpack.c.b16 %v3542, %v3526
    %v4983 = vpack.c.b16 %v3543, %v3527
    %v4984 = vpack.c.b16 %v3544, %v3528
    %v4985 = vpack.c.b16 %v3545, %v3529
    %v4986 = vpack.c.b16 %v3546, %v3530
    %v4987 = vpack.c.b16 %v3547, %v3531
    %v4988 = vpack.c.b16 %v3548, %v3532
    %v4989 = vpack.c.b16 %v3565, %v3549
    %v4990 = vpack.c.b16 %v3566, %v3550
    %v4991 = vpack.c.b16 %v3567, %v3551
    %v4992 = vpack.c.b16 %v3568, %v3552
    %v4993 = vpack.c.b16 %v3569, %v3553
    %v4994 = vpack.c.b16 %v3570, %v3554
    %v4995 = vpack.c.b16 %v3571, %v3555
    %v4996 = vpack.c.b16 %v3572, %v3556
    %v4997 = vpack.c.b16 %v3573, %v3557
    %v4998 = vpack.c.b16 %v3574, %v3558
    %v4999 = vpack.c.b16 %v3575, %v3559
    %v5000 = vpack.c.b16 %v3576, %v3560
    %v5001 = vpack.c.b16 %v3577, %v3561
    %v5002 = vpack.c.b16 %v3578, %v3562
    %v5003 = vpack.c.b16 %v3579, %v3563
    %v5004 = vpack.c.b16 %v3580, %v3564
    %v5005 = vpack.c.b16 %v3597, %v3581
    %v5006 = vpack.c.b16 %v3598, %v3582
    %v5007 = vpack.c.b16 %v3599, %v3583
    %v5008 = vpack.c.b16 %v3600, %v3584
    %v5009 = vpack.c.b16 %v3601, %v3585
    %v5010 = vpack.c.b16 %v3602, %v3586
    %v5011 = vpack.c.b16 %v3603, %v3587
    %v5012 = vpack.c.b16 %v3604, %v3588
    %v5013 = vpack.c.b16 %v3605, %v3589
    %v5014 = vpack.c.b16 %v3606, %v3590
    %v5015 = vpack.c.b16 %v3607, %v3591
    %v5016 = vpack.c.b16 %v3608, %v3592
    %v5017 = vpack.c.b16 %v3609, %v3593
    %v5018 = vpack.c.b16 %v3610, %v3594
    %v5019 = vpack.c.b16 %v3611, %v3595
    %v5020 = vpack.c.b16 %v3612, %v3596
    %v5021 = vpack.c.b16 %v3629, %v3613
    %v5022 = vpack.c.b16 %v3630, %v3614
    %v5023 = vpack.c.b16 %v3631, %v3615
    %v5024 = vpack.c.b16 %v3632, %v3616
    %v5025 = vpack.c.b16 %v3633, %v3617
    %v5026 = vpack.c.b16 %v3634, %v3618
    %v5027 = vpack.c.b16 %v3635, %v3619
    %v5028 = vpack.c.b16 %v3636, %v3620
    %v5029 = vpack.c.b16 %v3637, %v3621
    %v5030 = vpack.c.b16 %v3638, %v3622
    %v5031 = vpack.c.b16 %v3639, %v3623
    %v5032 = vpack.c.b16 %v3640, %v3624
    %v5033 = vpack.c.b16 %v3641, %v3625
    %v5034 = vpack.c.b16 %v3642, %v3626
    %v5035 = vpack.c.b16 %v3643, %v3627
    %v5036 = vpack.c.b16 %v3644, %v3628
    %v5037 = vpack.c.b16 %v3661, %v3645
    %v5038 = vpack.c.b16 %v3662, %v3646
    %v5039 = vpack.c.b16 %v3663, %v3647
    %v5040 = vpack.c.b16 %v3664, %v3648
    %v5041 = vpack.c.b16 %v3665, %v3649
    %v5042 = vpack.c.b16 %v3666, %v3650
    %v5043 = vpack.c.b16 %v3667, %v3651
    %v5044 = vpack.c.b16 %v3668, %v3652
    %v5045 = vpack.c.b16 %v3669, %v3653
    %v5046 = vpack.c.b16 %v3670, %v3654
    %v5047 = vpack.c.b16 %v3671, %v3655
    %v5048 = vpack.c.b16 %v3672, %v3656
    %v5049 = vpack.c.b16 %v3673, %v3657
    %v5050 = vpack.c.b16 %v3674, %v3658
    %v5051 = vpack.c.b16 %v3675, %v3659
    %v5052 = vpack.c.b16 %v3676, %v3660
    %v5053 = vpack.c.b16 %v3693, %v3677
    %v5054 = vpack.c.b16 %v3694, %v3678
    %v5055 = vpack.c.b16 %v3695, %v3679
    %v5056 = vpack.c.b16 %v3696, %v3680
    %v5057 = vpack.c.b16 %v3697, %v3681
    %v5058 = vpack.c.b16 %v3698, %v3682
    %v5059 = vpack.c.b16 %v3699, %v3683
    %v5060 = vpack.c.b16 %v3700, %v3684
    %v5061 = vpack.c.b16 %v3701, %v3685
    %v5062 = vpack.c.b16 %v3702, %v3686
    %v5063 = vpack.c.b16 %v3703, %v3687
    %v5064 = vpack.c.b16 %v3704, %v3688
    %v5065 = vpack.c.b16 %v3705, %v3689
    %v5066 = vpack.c.b16 %v3706, %v3690
    %v5067 = vpack.c.b16 %v3707, %v3691
    %v5068 = vpack.c.b16 %v3708, %v3692
    %v5069 = vpack.c.b16 %v3725, %v3709
    %v5070 = vpack.c.b16 %v3726, %v3710
    %v5071 = vpack.c.b16 %v3727, %v3711
    %v5072 = vpack.c.b16 %v3728, %v3712
    %v5073 = vpack.c.b16 %v3729, %v3713
    %v5074 = vpack.c.b16 %v3730, %v3714
    %v5075 = vpack.c.b16 %v3731, %v3715
    %v5076 = vpack.c.b16 %v3732, %v3716
    %v5077 = vpack.c.b16 %v3733, %v3717
    %v5078 = vpack.c.b16 %v3734, %v3718
    %v5079 = vpack.c.b16 %v3735, %v3719
    %v5080 = vpack.c.b16 %v3736, %v3720
    %v5081 = vpack.c.b16 %v3737, %v3721
    %v5082 = vpack.c.b16 %v3738, %v3722
    %v5083 = vpack.c.b16 %v3739, %v3723
    %v5084 = vpack.c.b16 %v3740, %v3724
    %v5085 = vpack.c.b16 %v3757, %v3741
    %v5086 = vpack.c.b16 %v3758, %v3742
    %v5087 = vpack.c.b16 %v3759, %v3743
    %v5088 = vpack.c.b16 %v3760, %v3744
    %v5089 = vpack.c.b16 %v3761, %v3745
    %v5090 = vpack.c.b16 %v3762, %v3746
    %v5091 = vpack.c.b16 %v3763, %v3747
    %v5092 = vpack.c.b16 %v3764, %v3748
    %v5093 = vpack.c.b16 %v3765, %v3749
    %v5094 = vpack.c.b16 %v3766, %v3750
    %v5095 = vpack.c.b16 %v3767, %v3751
    %v5096 = vpack.c.b16 %v3768, %v3752
    %v5097 = vpack.c.b16 %v3769, %v3753
    %v5098 = vpack.c.b16 %v3770, %v3754
    %v5099 = vpack.c.b16 %v3771, %v3755
    %v5100 = vpack.c.b16 %v3772, %v3756
    %v5101 = vpack.c.b16 %v3789, %v3773
    %v5102 = vpack.c.b16 %v3790, %v3774
    %v5103 = vpack.c.b16 %v3791, %v3775
    %v5104 = vpack.c.b16 %v3792, %v3776
    %v5105 = vpack.c.b16 %v3793, %v3777
    %v5106 = vpack.c.b16 %v3794, %v3778
    %v5107 = vpack.c.b16 %v3795, %v3779
    %v5108 = vpack.c.b16 %v3796, %v3780
    %v5109 = vpack.c.b16 %v3797, %v3781
    %v5110 = vpack.c.b16 %v3798, %v3782
    %v5111 = vpack.c.b16 %v3799, %v3783
    %v5112 = vpack.c.b16 %v3800, %v3784
    %v5113 = vpack.c.b16 %v3801, %v3785
    %v5114 = vpack.c.b16 %v3802, %v3786
    %v5115 = vpack.c.b16 %v3803, %v3787
    %v5116 = vpack.c.b16 %v3804, %v3788
    %v5117 = vpack.c.b16 %v3821, %v3805
    %v5118 = vpack.c.b16 %v3822, %v3806
    %v5119 = vpack.c.b16 %v3823, %v3807
    %v5120 = vpack.c.b16 %v3824, %v3808
    %v5121 = vpack.c.b16 %v3825, %v3809
    %v5122 = vpack.c.b16 %v3826, %v3810
    %v5123 = vpack.c.b16 %v3827, %v3811
    %v5124 = vpack.c.b16 %v3828, %v3812
    %v5125 = vpack.c.b16 %v3829, %v3813
    %v5126 = vpack.c.b16 %v3830, %v3814
    %v5127 = vpack.c.b16 %v3831, %v3815
    %v5128 = vpack.c.b16 %v3832, %v3816
    %v5129 = vpack.c.b16 %v3833, %v3817
    %v5130 = vpack.c.b16 %v3834, %v3818
    %v5131 = vpack.c.b16 %v3835, %v3819
    %v5132 = vpack.c.b16 %v3836, %v3820
    %v5133 = vpack.c.b16 %v3853, %v3837
    %v5134 = vpack.c.b16 %v3854, %v3838
    %v5135 = vpack.c.b16 %v3855, %v3839
    %v5136 = vpack.c.b16 %v3856, %v3840
    %v5137 = vpack.c.b16 %v3857, %v3841
    %v5138 = vpack.c.b16 %v3858, %v3842
    %v5139 = vpack.c.b16 %v3859, %v3843
    %v5140 = vpack.c.b16 %v3860, %v3844
    %v5141 = vpack.c.b16 %v3861, %v3845
    %v5142 = vpack.c.b16 %v3862, %v3846
    %v5143 = vpack.c.b16 %v3863, %v3847
    %v5144 = vpack.c.b16 %v3864, %v3848
    %v5145 = vpack.c.b16 %v3865, %v3849
    %v5146 = vpack.c.b16 %v3866, %v3850
    %v5147 = vpack.c.b16 %v3867, %v3851
    %v5148 = vpack.c.b16 %v3868, %v3852
    %v5149 = vpack.c.b16 %v3885, %v3869
    %v5150 = vpack.c.b16 %v3886, %v3870
    %v5151 = vpack.c.b16 %v3887, %v3871
    %v5152 = vpack.c.b16 %v3888, %v3872
    %v5153 = vpack.c.b16 %v3889, %v3873
    %v5154 = vpack.c.b16 %v3890, %v3874
    %v5155 = vpack.c.b16 %v3891, %v3875
    %v5156 = vpack.c.b16 %v3892, %v3876
    %v5157 = vpack.c.b16 %v3893, %v3877
    %v5158 = vpack.c.b16 %v3894, %v3878
    %v5159 = vpack.c.b16 %v3895, %v3879
    %v5160 = vpack.c.b16 %v3896, %v3880
    %v5161 = vpack.c.b16 %v3897, %v3881
    %v5162 = vpack.c.b16 %v3898, %v3882
    %v5163 = vpack.c.b16 %v3899, %v3883
    %v5164 = vpack.c.b16 %v3900, %v3884
    %v5165 = vpack.c.b16 %v3917, %v3901
    %v5166 = vpack.c.b16 %v3918, %v3902
    %v5167 = vpack.c.b16 %v3919, %v3903
    %v5168 = vpack.c.b16 %v3920, %v3904
    %v5169 = vpack.c.b16 %v3921, %v3905
    %v5170 = vpack.c.b16 %v3922, %v3906
    %v5171 = vpack.c.b16 %v3923, %v3907
    %v5172 = vpack.c.b16 %v3924, %v3908
    %v5173 = vpack.c.b16 %v3925, %v3909
    %v5174 = vpack.c.b16 %v3926, %v3910
    %v5175 = vpack.c.b16 %v3927, %v3911
    %v5176 = vpack.c.b16 %v3928, %v3912
    %v5177 = vpack.c.b16 %v3929, %v3913
    %v5178 = vpack.c.b16 %v3930, %v3914
    %v5179 = vpack.c.b16 %v3931, %v3915
    %v5180 = vpack.c.b16 %v3932, %v3916
    %v5181 = vpack.c.b16 %v3949, %v3933
    %v5182 = vpack.c.b16 %v3950, %v3934
    %v5183 = vpack.c.b16 %v3951, %v3935
    %v5184 = vpack.c.b16 %v3952, %v3936
    %v5185 = vpack.c.b16 %v3953, %v3937
    %v5186 = vpack.c.b16 %v3954, %v3938
    %v5187 = vpack.c.b16 %v3955, %v3939
    %v5188 = vpack.c.b16 %v3956, %v3940
    %v5189 = vpack.c.b16 %v3957, %v3941
    %v5190 = vpack.c.b16 %v3958, %v3942
    %v5191 = vpack.c.b16 %v3959, %v3943
    %v5192 = vpack.c.b16 %v3960, %v3944
    %v5193 = vpack.c.b16 %v3961, %v3945
    %v5194 = vpack.c.b16 %v3962, %v3946
    %v5195 = vpack.c.b16 %v3963, %v3947
    %v5196 = vpack.c.b16 %v3964, %v3948
    %v5197 = vpack.c.b16 %v3981, %v3965
    %v5198 = vpack.c.b16 %v3982, %v3966
    %v5199 = vpack.c.b16 %v3983, %v3967
    %v5200 = vpack.c.b16 %v3984, %v3968
    %v5201 = vpack.c.b16 %v3985, %v3969
    %v5202 = vpack.c.b16 %v3986, %v3970
    %v5203 = vpack.c.b16 %v3987, %v3971
    %v5204 = vpack.c.b16 %v3988, %v3972
    %v5205 = vpack.c.b16 %v3989, %v3973
    %v5206 = vpack.c.b16 %v3990, %v3974
    %v5207 = vpack.c.b16 %v3991, %v3975
    %v5208 = vpack.c.b16 %v3992, %v3976
    %v5209 = vpack.c.b16 %v3993, %v3977
    %v5210 = vpack.c.b16 %v3994, %v3978
    %v5211 = vpack.c.b16 %v3995, %v3979
    %v5212 = vpack.c.b16 %v3996, %v3980
    %v5213 = vpack.c.b16 %v4013, %v3997
    %v5214 = vpack.c.b16 %v4014, %v3998
    %v5215 = vpack.c.b16 %v4015, %v3999
    %v5216 = vpack.c.b16 %v4016, %v4000
    %v5217 = vpack.c.b16 %v4017, %v4001
    %v5218 = vpack.c.b16 %v4018, %v4002
    %v5219 = vpack.c.b16 %v4019, %v4003
    %v5220 = vpack.c.b16 %v4020, %v4004
    %v5221 = vpack.c.b16 %v4021, %v4005
    %v5222 = vpack.c.b16 %v4022, %v4006
    %v5223 = vpack.c.b16 %v4023, %v4007
    %v5224 = vpack.c.b16 %v4024, %v4008
    %v5225 = vpack.c.b16 %v4025, %v4009
    %v5226 = vpack.c.b16 %v4026, %v4010
    %v5227 = vpack.c.b16 %v4027, %v4011
    %v5228 = vpack.c.b16 %v4028, %v4012
    %v5229 = vpack.c.b16 %v4045, %v4029
    %v5230 = vpack.c.b16 %v4046, %v4030
    %v5231 = vpack.c.b16 %v4047, %v4031
    %v5232 = vpack.c.b16 %v4048, %v4032
    %v5233 = vpack.c.b16 %v4049, %v4033
    %v5234 = vpack.c.b16 %v4050, %v4034
    %v5235 = vpack.c.b16 %v4051, %v4035
    %v5236 = vpack.c.b16 %v4052, %v4036
    %v5237 = vpack.c.b16 %v4053, %v4037
    %v5238 = vpack.c.b16 %v4054, %v4038
    %v5239 = vpack.c.b16 %v4055, %v4039
    %v5240 = vpack.c.b16 %v4056, %v4040
    %v5241 = vpack.c.b16 %v4057, %v4041
    %v5242 = vpack.c.b16 %v4058, %v4042
    %v5243 = vpack.c.b16 %v4059, %v4043
    %v5244 = vpack.c.b16 %v4060, %v4044
    %v5245 = vpack.c.b16 %v4077, %v4061
    %v5246 = vpack.c.b16 %v4078, %v4062
    %v5247 = vpack.c.b16 %v4079, %v4063
    %v5248 = vpack.c.b16 %v4080, %v4064
    %v5249 = vpack.c.b16 %v4081, %v4065
    %v5250 = vpack.c.b16 %v4082, %v4066
    %v5251 = vpack.c.b16 %v4083, %v4067
    %v5252 = vpack.c.b16 %v4084, %v4068
    %v5253 = vpack.c.b16 %v4085, %v4069
    %v5254 = vpack.c.b16 %v4086, %v4070
    %v5255 = vpack.c.b16 %v4087, %v4071
    %v5256 = vpack.c.b16 %v4088, %v4072
    %v5257 = vpack.c.b16 %v4089, %v4073
    %v5258 = vpack.c.b16 %v4090, %v4074
    %v5259 = vpack.c.b16 %v4091, %v4075
    %v5260 = vpack.c.b16 %v4092, %v4076
    %v5261 = vpack.c.b16 %v4109, %v4093
    %v5262 = vpack.c.b16 %v4110, %v4094
    %v5263 = vpack.c.b16 %v4111, %v4095
    %v5264 = vpack.c.b16 %v4112, %v4096
    %v5265 = vpack.c.b16 %v4113, %v4097
    %v5266 = vpack.c.b16 %v4114, %v4098
    %v5267 = vpack.c.b16 %v4115, %v4099
    %v5268 = vpack.c.b16 %v4116, %v4100
    %v5269 = vpack.c.b16 %v4117, %v4101
    %v5270 = vpack.c.b16 %v4118, %v4102
    %v5271 = vpack.c.b16 %v4119, %v4103
    %v5272 = vpack.c.b16 %v4120, %v4104
    %v5273 = vpack.c.b16 %v4121, %v4105
    %v5274 = vpack.c.b16 %v4122, %v4106
    %v5275 = vpack.c.b16 %v4123, %v4107
    %v5276 = vpack.c.b16 %v4124, %v4108
    %v5277 = vpack.c.b16 %v4141, %v4125
    %v5278 = vpack.c.b16 %v4142, %v4126
    %v5279 = vpack.c.b16 %v4143, %v4127
    %v5280 = vpack.c.b16 %v4144, %v4128
    %v5281 = vpack.c.b16 %v4145, %v4129
    %v5282 = vpack.c.b16 %v4146, %v4130
    %v5283 = vpack.c.b16 %v4147, %v4131
    %v5284 = vpack.c.b16 %v4148, %v4132
    %v5285 = vpack.c.b16 %v4149, %v4133
    %v5286 = vpack.c.b16 %v4150, %v4134
    %v5287 = vpack.c.b16 %v4151, %v4135
    %v5288 = vpack.c.b16 %v4152, %v4136
    %v5289 = vpack.c.b16 %v4153, %v4137
    %v5290 = vpack.c.b16 %v4154, %v4138
    %v5291 = vpack.c.b16 %v4155, %v4139
    %v5292 = vpack.c.b16 %v4156, %v4140
    %v5293 = vpack.c.b16 %v4173, %v4157
    %v5294 = vpack.c.b16 %v4174, %v4158
    %v5295 = vpack.c.b16 %v4175, %v4159
    %v5296 = vpack.c.b16 %v4176, %v4160
    %v5297 = vpack.c.b16 %v4177, %v4161
    %v5298 = vpack.c.b16 %v4178, %v4162
    %v5299 = vpack.c.b16 %v4179, %v4163
    %v5300 = vpack.c.b16 %v4180, %v4164
    %v5301 = vpack.c.b16 %v4181, %v4165
    %v5302 = vpack.c.b16 %v4182, %v4166
    %v5303 = vpack.c.b16 %v4183, %v4167
    %v5304 = vpack.c.b16 %v4184, %v4168
    %v5305 = vpack.c.b16 %v4185, %v4169
    %v5306 = vpack.c.b16 %v4186, %v4170
    %v5307 = vpack.c.b16 %v4187, %v4171
    %v5308 = vpack.c.b16 %v4188, %v4172
    %v5309 = vpack.c.b16 %v4205, %v4189
    %v5310 = vpack.c.b16 %v4206, %v4190
    %v5311 = vpack.c.b16 %v4207, %v4191
    %v5312 = vpack.c.b16 %v4208, %v4192
    %v5313 = vpack.c.b16 %v4209, %v4193
    %v5314 = vpack.c.b16 %v4210, %v4194
    %v5315 = vpack.c.b16 %v4211, %v4195
    %v5316 = vpack.c.b16 %v4212, %v4196
    %v5317 = vpack.c.b16 %v4213, %v4197
    %v5318 = vpack.c.b16 %v4214, %v4198
    %v5319 = vpack.c.b16 %v4215, %v4199
    %v5320 = vpack.c.b16 %v4216, %v4200
    %v5321 = vpack.c.b16 %v4217, %v4201
    %v5322 = vpack.c.b16 %v4218, %v4202
    %v5323 = vpack.c.b16 %v4219, %v4203
    %v5324 = vpack.c.b16 %v4220, %v4204
    %v5325 = vpack.c.b16 %v4237, %v4221
    %v5326 = vpack.c.b16 %v4238, %v4222
    %v5327 = vpack.c.b16 %v4239, %v4223
    %v5328 = vpack.c.b16 %v4240, %v4224
    %v5329 = vpack.c.b16 %v4241, %v4225
    %v5330 = vpack.c.b16 %v4242, %v4226
    %v5331 = vpack.c.b16 %v4243, %v4227
    %v5332 = vpack.c.b16 %v4244, %v4228
    %v5333 = vpack.c.b16 %v4245, %v4229
    %v5334 = vpack.c.b16 %v4246, %v4230
    %v5335 = vpack.c.b16 %v4247, %v4231
    %v5336 = vpack.c.b16 %v4248, %v4232
    %v5337 = vpack.c.b16 %v4249, %v4233
    %v5338 = vpack.c.b16 %v4250, %v4234
    %v5339 = vpack.c.b16 %v4251, %v4235
    %v5340 = vpack.c.b16 %v4252, %v4236
    %v5341 = vpack.c.b16 %v4269, %v4253
    %v5342 = vpack.c.b16 %v4270, %v4254
    %v5343 = vpack.c.b16 %v4271, %v4255
    %v5344 = vpack.c.b16 %v4272, %v4256
    %v5345 = vpack.c.b16 %v4273, %v4257
    %v5346 = vpack.c.b16 %v4274, %v4258
    %v5347 = vpack.c.b16 %v4275, %v4259
    %v5348 = vpack.c.b16 %v4276, %v4260
    %v5349 = vpack.c.b16 %v4277, %v4261
    %v5350 = vpack.c.b16 %v4278, %v4262
    %v5351 = vpack.c.b16 %v4279, %v4263
    %v5352 = vpack.c.b16 %v4280, %v4264
    %v5353 = vpack.c.b16 %v4281, %v4265
    %v5354 = vpack.c.b16 %v4282, %v4266
    %v5355 = vpack.c.b16 %v4283, %v4267
    %v5356 = vpack.c.b16 %v4284, %v4268
    %v5357 = vpack.c.b16 %v4301, %v4285
    %v5358 = vpack.c.b16 %v4302, %v4286
    %v5359 = vpack.c.b16 %v4303, %v4287
    %v5360 = vpack.c.b16 %v4304, %v4288
    %v5361 = vpack.c.b16 %v4305, %v4289
    %v5362 = vpack.c.b16 %v4306, %v4290
    %v5363 = vpack.c.b16 %v4307, %v4291
    %v5364 = vpack.c.b16 %v4308, %v4292
    %v5365 = vpack.c.b16 %v4309, %v4293
    %v5366 = vpack.c.b16 %v4310, %v4294
    %v5367 = vpack.c.b16 %v4311, %v4295
    %v5368 = vpack.c.b16 %v4312, %v4296
    %v5369 = vpack.c.b16 %v4313, %v4297
    %v5370 = vpack.c.b16 %v4314, %v4298
    %v5371 = vpack.c.b16 %v4315, %v4299
    %v5372 = vpack.c.b16 %v4316, %v4300
    %v5373 = vpack.c.b16 %v4333, %v4317
    %v5374 = vpack.c.b16 %v4334, %v4318
    %v5375 = vpack.c.b16 %v4335, %v4319
    %v5376 = vpack.c.b16 %v4336, %v4320
    %v5377 = vpack.c.b16 %v4337, %v4321
    %v5378 = vpack.c.b16 %v4338, %v4322
    %v5379 = vpack.c.b16 %v4339, %v4323
    %v5380 = vpack.c.b16 %v4340, %v4324
    %v5381 = vpack.c.b16 %v4341, %v4325
    %v5382 = vpack.c.b16 %v4342, %v4326
    %v5383 = vpack.c.b16 %v4343, %v4327
    %v5384 = vpack.c.b16 %v4344, %v4328
    %v5385 = vpack.c.b16 %v4345, %v4329
    %v5386 = vpack.c.b16 %v4346, %v4330
    %v5387 = vpack.c.b16 %v4347, %v4331
    %v5388 = vpack.c.b16 %v4348, %v4332
    %v5389 = vpack.c.b16 %v4365, %v4349
    %v5390 = vpack.c.b16 %v4366, %v4350
    %v5391 = vpack.c.b16 %v4367, %v4351
    %v5392 = vpack.c.b16 %v4368, %v4352
    %v5393 = vpack.c.b16 %v4369, %v4353
    %v5394 = vpack.c.b16 %v4370, %v4354
    %v5395 = vpack.c.b16 %v4371, %v4355
    %v5396 = vpack.c.b16 %v4372, %v4356
    %v5397 = vpack.c.b16 %v4373, %v4357
    %v5398 = vpack.c.b16 %v4374, %v4358
    %v5399 = vpack.c.b16 %v4375, %v4359
    %v5400 = vpack.c.b16 %v4376, %v4360
    %v5401 = vpack.c.b16 %v4377, %v4361
    %v5402 = vpack.c.b16 %v4378, %v4362
    %v5403 = vpack.c.b16 %v4379, %v4363
    %v5404 = vpack.c.b16 %v4380, %v4364
    %6429 = vmatpush.bf16.msra.mxu0 %v4493
    %6430 = vmatpush.bf16.msra.mxu0 %v4477
    %6431 = vmatpush.bf16.msra.mxu0 %v4461
    %6432 = vmatpush.bf16.msra.mxu0 %v4445
    %6433 = vmatpush.bf16.msra.mxu0 %v4429
    %6434 = vmatpush.bf16.msra.mxu0 %v4413
    %6435 = vmatpush.bf16.msra.mxu0 %v4397
    %6436 = vmatpush.bf16.msra.mxu0 %v4381
    %6437 = vmatmul.bf16.gmra.mxu0 %v1293
    %v6438 = vpop.f32.mrf.mxu0
    %v6439 = vadd.f32 0.0, %v6438
    %v6440 = vpop.f32.mrf.mxu0
    %v6441 = vadd.f32 0.0, %v6440
    %6442 = vdwg.mxu0
    %6443 = vmatpush.bf16.msra.mxu0 %v4621
    %6444 = vmatpush.bf16.msra.mxu0 %v4605
    %6445 = vmatpush.bf16.msra.mxu0 %v4589
    %6446 = vmatpush.bf16.msra.mxu0 %v4573
    %6447 = vmatpush.bf16.msra.mxu0 %v4557
    %6448 = vmatpush.bf16.msra.mxu0 %v4541
    %6449 = vmatpush.bf16.msra.mxu0 %v4525
    %6450 = vmatpush.bf16.msra.mxu0 %v4509
    %6451 = vmatmul.bf16.gmra.mxu0 %v1294
    %v6452 = vpop.f32.mrf.mxu0
    %v6453 = vadd.f32 %v6439, %v6452
    %v6454 = vpop.f32.mrf.mxu0
    %v6455 = vadd.f32 %v6441, %v6454
    %6456 = vdwg.mxu0
    %6457 = vmatpush.bf16.msra.mxu0 %v4749
    %6458 = vmatpush.bf16.msra.mxu0 %v4733
    %6459 = vmatpush.bf16.msra.mxu0 %v4717
    %6460 = vmatpush.bf16.msra.mxu0 %v4701
    %6461 = vmatpush.bf16.msra.mxu0 %v4685
    %6462 = vmatpush.bf16.msra.mxu0 %v4669
    %6463 = vmatpush.bf16.msra.mxu0 %v4653
    %6464 = vmatpush.bf16.msra.mxu0 %v4637
    %6465 = vmatmul.bf16.gmra.mxu0 %v1295
    %v6466 = vpop.f32.mrf.mxu0
    %v6467 = vadd.f32 %v6453, %v6466
    %v6468 = vpop.f32.mrf.mxu0
    %v6469 = vadd.f32 %v6455, %v6468
    %6470 = vdwg.mxu0
    %6471 = vmatpush.bf16.msra.mxu0 %v4877
    %6472 = vmatpush.bf16.msra.mxu0 %v4861
    %6473 = vmatpush.bf16.msra.mxu0 %v4845
    %6474 = vmatpush.bf16.msra.mxu0 %v4829
    %6475 = vmatpush.bf16.msra.mxu0 %v4813
    %6476 = vmatpush.bf16.msra.mxu0 %v4797
    %6477 = vmatpush.bf16.msra.mxu0 %v4781
    %6478 = vmatpush.bf16.msra.mxu0 %v4765
    %6479 = vmatmul.bf16.gmra.mxu0 %v1296
    %v6480 = vpop.f32.mrf.mxu0
    %v6481 = vadd.f32 %v6467, %v6480
    %v6482 = vpop.f32.mrf.mxu0
    %v6483 = vadd.f32 %v6469, %v6482
    %6484 = vdwg.mxu0
    %6485 = vmatpush.bf16.msra.mxu0 %v5005
    %6486 = vmatpush.bf16.msra.mxu0 %v4989
    %6487 = vmatpush.bf16.msra.mxu0 %v4973
    %6488 = vmatpush.bf16.msra.mxu0 %v4957
    %6489 = vmatpush.bf16.msra.mxu0 %v4941
    %6490 = vmatpush.bf16.msra.mxu0 %v4925
    %6491 = vmatpush.bf16.msra.mxu0 %v4909
    %6492 = vmatpush.bf16.msra.mxu0 %v4893
    %6493 = vmatmul.bf16.gmra.mxu0 %v1297
    %v6494 = vpop.f32.mrf.mxu0
    %v6495 = vadd.f32 %v6481, %v6494
    %v6496 = vpop.f32.mrf.mxu0
    %v6497 = vadd.f32 %v6483, %v6496
    %6498 = vdwg.mxu0
    %6499 = vmatpush.bf16.msra.mxu0 %v5133
    %6500 = vmatpush.bf16.msra.mxu0 %v5117
    %6501 = vmatpush.bf16.msra.mxu0 %v5101
    %6502 = vmatpush.bf16.msra.mxu0 %v5085
    %6503 = vmatpush.bf16.msra.mxu0 %v5069
    %6504 = vmatpush.bf16.msra.mxu0 %v5053
    %6505 = vmatpush.bf16.msra.mxu0 %v5037
    %6506 = vmatpush.bf16.msra.mxu0 %v5021
    %6507 = vmatmul.bf16.gmra.mxu0 %v1298
    %v6508 = vpop.f32.mrf.mxu0
    %v6509 = vadd.f32 %v6495, %v6508
    %v6510 = vpop.f32.mrf.mxu0
    %v6511 = vadd.f32 %v6497, %v6510
    %6512 = vdwg.mxu0
    %6513 = vmatpush.bf16.msra.mxu0 %v5261
    %6514 = vmatpush.bf16.msra.mxu0 %v5245
    %6515 = vmatpush.bf16.msra.mxu0 %v5229
    %6516 = vmatpush.bf16.msra.mxu0 %v5213
    %6517 = vmatpush.bf16.msra.mxu0 %v5197
    %6518 = vmatpush.bf16.msra.mxu0 %v5181
    %6519 = vmatpush.bf16.msra.mxu0 %v5165
    %6520 = vmatpush.bf16.msra.mxu0 %v5149
    %6521 = vmatmul.bf16.gmra.mxu0 %v1299
    %v6522 = vpop.f32.mrf.mxu0
    %v6523 = vadd.f32 %v6509, %v6522
    %v6524 = vpop.f32.mrf.mxu0
    %v6525 = vadd.f32 %v6511, %v6524
    %6526 = vdwg.mxu0
    %6527 = vmatpush.bf16.msra.mxu0 %v5389
    %6528 = vmatpush.bf16.msra.mxu0 %v5373
    %6529 = vmatpush.bf16.msra.mxu0 %v5357
    %6530 = vmatpush.bf16.msra.mxu0 %v5341
    %6531 = vmatpush.bf16.msra.mxu0 %v5325
    %6532 = vmatpush.bf16.msra.mxu0 %v5309
    %6533 = vmatpush.bf16.msra.mxu0 %v5293
    %6534 = vmatpush.bf16.msra.mxu0 %v5277
    %6535 = vmatmul.bf16.gmra.mxu0 %v1300
    %v6536 = vpop.f32.mrf.mxu0
    %v6537 = vadd.f32 %v6523, %v6536
    %v6538 = vpop.f32.mrf.mxu0
    %v6539 = vadd.f32 %v6525, %v6538
    %6540 = vdwg.mxu0
    %6541 = vmatpush.bf16.msra.mxu0 %v4494
    %6542 = vmatpush.bf16.msra.mxu0 %v4478
    %6543 = vmatpush.bf16.msra.mxu0 %v4462
    %6544 = vmatpush.bf16.msra.mxu0 %v4446
    %6545 = vmatpush.bf16.msra.mxu0 %v4430
    %6546 = vmatpush.bf16.msra.mxu0 %v4414
    %6547 = vmatpush.bf16.msra.mxu0 %v4398
    %6548 = vmatpush.bf16.msra.mxu0 %v4382
    %6549 = vmatmul.bf16.gmra.mxu0 %v1293
    %v6550 = vpop.f32.mrf.mxu0
    %v6551 = vadd.f32 0.0, %v6550
    %v6552 = vpop.f32.mrf.mxu0
    %v6553 = vadd.f32 0.0, %v6552
    %6554 = vdwg.mxu0
    %6555 = vmatpush.bf16.msra.mxu0 %v4622
    %6556 = vmatpush.bf16.msra.mxu0 %v4606
    %6557 = vmatpush.bf16.msra.mxu0 %v4590
    %6558 = vmatpush.bf16.msra.mxu0 %v4574
    %6559 = vmatpush.bf16.msra.mxu0 %v4558
    %6560 = vmatpush.bf16.msra.mxu0 %v4542
    %6561 = vmatpush.bf16.msra.mxu0 %v4526
    %6562 = vmatpush.bf16.msra.mxu0 %v4510
    %6563 = vmatmul.bf16.gmra.mxu0 %v1294
    %v6564 = vpop.f32.mrf.mxu0
    %v6565 = vadd.f32 %v6551, %v6564
    %v6566 = vpop.f32.mrf.mxu0
    %v6567 = vadd.f32 %v6553, %v6566
    %6568 = vdwg.mxu0
    %6569 = vmatpush.bf16.msra.mxu0 %v4750
    %6570 = vmatpush.bf16.msra.mxu0 %v4734
    %6571 = vmatpush.bf16.msra.mxu0 %v4718
    %6572 = vmatpush.bf16.msra.mxu0 %v4702
    %6573 = vmatpush.bf16.msra.mxu0 %v4686
    %6574 = vmatpush.bf16.msra.mxu0 %v4670
    %6575 = vmatpush.bf16.msra.mxu0 %v4654
    %6576 = vmatpush.bf16.msra.mxu0 %v4638
    %6577 = vmatmul.bf16.gmra.mxu0 %v1295
    %v6578 = vpop.f32.mrf.mxu0
    %v6579 = vadd.f32 %v6565, %v6578
    %v6580 = vpop.f32.mrf.mxu0
    %v6581 = vadd.f32 %v6567, %v6580
    %6582 = vdwg.mxu0
    %6583 = vmatpush.bf16.msra.mxu0 %v4878
    %6584 = vmatpush.bf16.msra.mxu0 %v4862
    %6585 = vmatpush.bf16.msra.mxu0 %v4846
    %6586 = vmatpush.bf16.msra.mxu0 %v4830
    %6587 = vmatpush.bf16.msra.mxu0 %v4814
    %6588 = vmatpush.bf16.msra.mxu0 %v4798
    %6589 = vmatpush.bf16.msra.mxu0 %v4782
    %6590 = vmatpush.bf16.msra.mxu0 %v4766
    %6591 = vmatmul.bf16.gmra.mxu0 %v1296
    %v6592 = vpop.f32.mrf.mxu0
    %v6593 = vadd.f32 %v6579, %v6592
    %v6594 = vpop.f32.mrf.mxu0
    %v6595 = vadd.f32 %v6581, %v6594
    %6596 = vdwg.mxu0
    %6597 = vmatpush.bf16.msra.mxu0 %v5006
    %6598 = vmatpush.bf16.msra.mxu0 %v4990
    %6599 = vmatpush.bf16.msra.mxu0 %v4974
    %6600 = vmatpush.bf16.msra.mxu0 %v4958
    %6601 = vmatpush.bf16.msra.mxu0 %v4942
    %6602 = vmatpush.bf16.msra.mxu0 %v4926
    %6603 = vmatpush.bf16.msra.mxu0 %v4910
    %6604 = vmatpush.bf16.msra.mxu0 %v4894
    %6605 = vmatmul.bf16.gmra.mxu0 %v1297
    %v6606 = vpop.f32.mrf.mxu0
    %v6607 = vadd.f32 %v6593, %v6606
    %v6608 = vpop.f32.mrf.mxu0
    %v6609 = vadd.f32 %v6595, %v6608
    %6610 = vdwg.mxu0
    %6611 = vmatpush.bf16.msra.mxu0 %v5134
    %6612 = vmatpush.bf16.msra.mxu0 %v5118
    %6613 = vmatpush.bf16.msra.mxu0 %v5102
    %6614 = vmatpush.bf16.msra.mxu0 %v5086
    %6615 = vmatpush.bf16.msra.mxu0 %v5070
    %6616 = vmatpush.bf16.msra.mxu0 %v5054
    %6617 = vmatpush.bf16.msra.mxu0 %v5038
    %6618 = vmatpush.bf16.msra.mxu0 %v5022
    %6619 = vmatmul.bf16.gmra.mxu0 %v1298
    %v6620 = vpop.f32.mrf.mxu0
    %v6621 = vadd.f32 %v6607, %v6620
    %v6622 = vpop.f32.mrf.mxu0
    %v6623 = vadd.f32 %v6609, %v6622
    %6624 = vdwg.mxu0
    %6625 = vmatpush.bf16.msra.mxu0 %v5262
    %6626 = vmatpush.bf16.msra.mxu0 %v5246
    %6627 = vmatpush.bf16.msra.mxu0 %v5230
    %6628 = vmatpush.bf16.msra.mxu0 %v5214
    %6629 = vmatpush.bf16.msra.mxu0 %v5198
    %6630 = vmatpush.bf16.msra.mxu0 %v5182
    %6631 = vmatpush.bf16.msra.mxu0 %v5166
    %6632 = vmatpush.bf16.msra.mxu0 %v5150
    %6633 = vmatmul.bf16.gmra.mxu0 %v1299
    %v6634 = vpop.f32.mrf.mxu0
    %v6635 = vadd.f32 %v6621, %v6634
    %v6636 = vpop.f32.mrf.mxu0
    %v6637 = vadd.f32 %v6623, %v6636
    %6638 = vdwg.mxu0
    %6639 = vmatpush.bf16.msra.mxu0 %v5390
    %6640 = vmatpush.bf16.msra.mxu0 %v5374
    %6641 = vmatpush.bf16.msra.mxu0 %v5358
    %6642 = vmatpush.bf16.msra.mxu0 %v5342
    %6643 = vmatpush.bf16.msra.mxu0 %v5326
    %6644 = vmatpush.bf16.msra.mxu0 %v5310
    %6645 = vmatpush.bf16.msra.mxu0 %v5294
    %6646 = vmatpush.bf16.msra.mxu0 %v5278
    %6647 = vmatmul.bf16.gmra.mxu0 %v1300
    %v6648 = vpop.f32.mrf.mxu0
    %v6649 = vadd.f32 %v6635, %v6648
    %v6650 = vpop.f32.mrf.mxu0
    %v6651 = vadd.f32 %v6637, %v6650
    %6652 = vdwg.mxu0
    %6653 = vmatpush.bf16.msra.mxu0 %v4495
    %6654 = vmatpush.bf16.msra.mxu0 %v4479
    %6655 = vmatpush.bf16.msra.mxu0 %v4463
    %6656 = vmatpush.bf16.msra.mxu0 %v4447
    %6657 = vmatpush.bf16.msra.mxu0 %v4431
    %6658 = vmatpush.bf16.msra.mxu0 %v4415
    %6659 = vmatpush.bf16.msra.mxu0 %v4399
    %6660 = vmatpush.bf16.msra.mxu0 %v4383
    %6661 = vmatmul.bf16.gmra.mxu0 %v1293
    %v6662 = vpop.f32.mrf.mxu0
    %v6663 = vadd.f32 0.0, %v6662
    %v6664 = vpop.f32.mrf.mxu0
    %v6665 = vadd.f32 0.0, %v6664
    %6666 = vdwg.mxu0
    %6667 = vmatpush.bf16.msra.mxu0 %v4623
    %6668 = vmatpush.bf16.msra.mxu0 %v4607
    %6669 = vmatpush.bf16.msra.mxu0 %v4591
    %6670 = vmatpush.bf16.msra.mxu0 %v4575
    %6671 = vmatpush.bf16.msra.mxu0 %v4559
    %6672 = vmatpush.bf16.msra.mxu0 %v4543
    %6673 = vmatpush.bf16.msra.mxu0 %v4527
    %6674 = vmatpush.bf16.msra.mxu0 %v4511
    %6675 = vmatmul.bf16.gmra.mxu0 %v1294
    %v6676 = vpop.f32.mrf.mxu0
    %v6677 = vadd.f32 %v6663, %v6676
    %v6678 = vpop.f32.mrf.mxu0
    %v6679 = vadd.f32 %v6665, %v6678
    %6680 = vdwg.mxu0
    %6681 = vmatpush.bf16.msra.mxu0 %v4751
    %6682 = vmatpush.bf16.msra.mxu0 %v4735
    %6683 = vmatpush.bf16.msra.mxu0 %v4719
    %6684 = vmatpush.bf16.msra.mxu0 %v4703
    %6685 = vmatpush.bf16.msra.mxu0 %v4687
    %6686 = vmatpush.bf16.msra.mxu0 %v4671
    %6687 = vmatpush.bf16.msra.mxu0 %v4655
    %6688 = vmatpush.bf16.msra.mxu0 %v4639
    %6689 = vmatmul.bf16.gmra.mxu0 %v1295
    %v6690 = vpop.f32.mrf.mxu0
    %v6691 = vadd.f32 %v6677, %v6690
    %v6692 = vpop.f32.mrf.mxu0
    %v6693 = vadd.f32 %v6679, %v6692
    %6694 = vdwg.mxu0
    %6695 = vmatpush.bf16.msra.mxu0 %v4879
    %6696 = vmatpush.bf16.msra.mxu0 %v4863
    %6697 = vmatpush.bf16.msra.mxu0 %v4847
    %6698 = vmatpush.bf16.msra.mxu0 %v4831
    %6699 = vmatpush.bf16.msra.mxu0 %v4815
    %6700 = vmatpush.bf16.msra.mxu0 %v4799
    %6701 = vmatpush.bf16.msra.mxu0 %v4783
    %6702 = vmatpush.bf16.msra.mxu0 %v4767
    %6703 = vmatmul.bf16.gmra.mxu0 %v1296
    %v6704 = vpop.f32.mrf.mxu0
    %v6705 = vadd.f32 %v6691, %v6704
    %v6706 = vpop.f32.mrf.mxu0
    %v6707 = vadd.f32 %v6693, %v6706
    %6708 = vdwg.mxu0
    %6709 = vmatpush.bf16.msra.mxu0 %v5007
    %6710 = vmatpush.bf16.msra.mxu0 %v4991
    %6711 = vmatpush.bf16.msra.mxu0 %v4975
    %6712 = vmatpush.bf16.msra.mxu0 %v4959
    %6713 = vmatpush.bf16.msra.mxu0 %v4943
    %6714 = vmatpush.bf16.msra.mxu0 %v4927
    %6715 = vmatpush.bf16.msra.mxu0 %v4911
    %6716 = vmatpush.bf16.msra.mxu0 %v4895
    %6717 = vmatmul.bf16.gmra.mxu0 %v1297
    %v6718 = vpop.f32.mrf.mxu0
    %v6719 = vadd.f32 %v6705, %v6718
    %v6720 = vpop.f32.mrf.mxu0
    %v6721 = vadd.f32 %v6707, %v6720
    %6722 = vdwg.mxu0
    %6723 = vmatpush.bf16.msra.mxu0 %v5135
    %6724 = vmatpush.bf16.msra.mxu0 %v5119
    %6725 = vmatpush.bf16.msra.mxu0 %v5103
    %6726 = vmatpush.bf16.msra.mxu0 %v5087
    %6727 = vmatpush.bf16.msra.mxu0 %v5071
    %6728 = vmatpush.bf16.msra.mxu0 %v5055
    %6729 = vmatpush.bf16.msra.mxu0 %v5039
    %6730 = vmatpush.bf16.msra.mxu0 %v5023
    %6731 = vmatmul.bf16.gmra.mxu0 %v1298
    %v6732 = vpop.f32.mrf.mxu0
    %v6733 = vadd.f32 %v6719, %v6732
    %v6734 = vpop.f32.mrf.mxu0
    %v6735 = vadd.f32 %v6721, %v6734
    %6736 = vdwg.mxu0
    %6737 = vmatpush.bf16.msra.mxu0 %v5263
    %6738 = vmatpush.bf16.msra.mxu0 %v5247
    %6739 = vmatpush.bf16.msra.mxu0 %v5231
    %6740 = vmatpush.bf16.msra.mxu0 %v5215
    %6741 = vmatpush.bf16.msra.mxu0 %v5199
    %6742 = vmatpush.bf16.msra.mxu0 %v5183
    %6743 = vmatpush.bf16.msra.mxu0 %v5167
    %6744 = vmatpush.bf16.msra.mxu0 %v5151
    %6745 = vmatmul.bf16.gmra.mxu0 %v1299
    %v6746 = vpop.f32.mrf.mxu0
    %v6747 = vadd.f32 %v6733, %v6746
    %v6748 = vpop.f32.mrf.mxu0
    %v6749 = vadd.f32 %v6735, %v6748
    %6750 = vdwg.mxu0
    %6751 = vmatpush.bf16.msra.mxu0 %v5391
    %6752 = vmatpush.bf16.msra.mxu0 %v5375
    %6753 = vmatpush.bf16.msra.mxu0 %v5359
    %6754 = vmatpush.bf16.msra.mxu0 %v5343
    %6755 = vmatpush.bf16.msra.mxu0 %v5327
    %6756 = vmatpush.bf16.msra.mxu0 %v5311
    %6757 = vmatpush.bf16.msra.mxu0 %v5295
    %6758 = vmatpush.bf16.msra.mxu0 %v5279
    %6759 = vmatmul.bf16.gmra.mxu0 %v1300
    %v6760 = vpop.f32.mrf.mxu0
    %v6761 = vadd.f32 %v6747, %v6760
    %v6762 = vpop.f32.mrf.mxu0
    %v6763 = vadd.f32 %v6749, %v6762
    %6764 = vdwg.mxu0
    %6765 = vmatpush.bf16.msra.mxu0 %v4496
    %6766 = vmatpush.bf16.msra.mxu0 %v4480
    %6767 = vmatpush.bf16.msra.mxu0 %v4464
    %6768 = vmatpush.bf16.msra.mxu0 %v4448
    %6769 = vmatpush.bf16.msra.mxu0 %v4432
    %6770 = vmatpush.bf16.msra.mxu0 %v4416
    %6771 = vmatpush.bf16.msra.mxu0 %v4400
    %6772 = vmatpush.bf16.msra.mxu0 %v4384
    %6773 = vmatmul.bf16.gmra.mxu0 %v1293
    %v6774 = vpop.f32.mrf.mxu0
    %v6775 = vadd.f32 0.0, %v6774
    %v6776 = vpop.f32.mrf.mxu0
    %v6777 = vadd.f32 0.0, %v6776
    %6778 = vdwg.mxu0
    %6779 = vmatpush.bf16.msra.mxu0 %v4624
    %6780 = vmatpush.bf16.msra.mxu0 %v4608
    %6781 = vmatpush.bf16.msra.mxu0 %v4592
    %6782 = vmatpush.bf16.msra.mxu0 %v4576
    %6783 = vmatpush.bf16.msra.mxu0 %v4560
    %6784 = vmatpush.bf16.msra.mxu0 %v4544
    %6785 = vmatpush.bf16.msra.mxu0 %v4528
    %6786 = vmatpush.bf16.msra.mxu0 %v4512
    %6787 = vmatmul.bf16.gmra.mxu0 %v1294
    %v6788 = vpop.f32.mrf.mxu0
    %v6789 = vadd.f32 %v6775, %v6788
    %v6790 = vpop.f32.mrf.mxu0
    %v6791 = vadd.f32 %v6777, %v6790
    %6792 = vdwg.mxu0
    %6793 = vmatpush.bf16.msra.mxu0 %v4752
    %6794 = vmatpush.bf16.msra.mxu0 %v4736
    %6795 = vmatpush.bf16.msra.mxu0 %v4720
    %6796 = vmatpush.bf16.msra.mxu0 %v4704
    %6797 = vmatpush.bf16.msra.mxu0 %v4688
    %6798 = vmatpush.bf16.msra.mxu0 %v4672
    %6799 = vmatpush.bf16.msra.mxu0 %v4656
    %6800 = vmatpush.bf16.msra.mxu0 %v4640
    %6801 = vmatmul.bf16.gmra.mxu0 %v1295
    %v6802 = vpop.f32.mrf.mxu0
    %v6803 = vadd.f32 %v6789, %v6802
    %v6804 = vpop.f32.mrf.mxu0
    %v6805 = vadd.f32 %v6791, %v6804
    %6806 = vdwg.mxu0
    %6807 = vmatpush.bf16.msra.mxu0 %v4880
    %6808 = vmatpush.bf16.msra.mxu0 %v4864
    %6809 = vmatpush.bf16.msra.mxu0 %v4848
    %6810 = vmatpush.bf16.msra.mxu0 %v4832
    %6811 = vmatpush.bf16.msra.mxu0 %v4816
    %6812 = vmatpush.bf16.msra.mxu0 %v4800
    %6813 = vmatpush.bf16.msra.mxu0 %v4784
    %6814 = vmatpush.bf16.msra.mxu0 %v4768
    %6815 = vmatmul.bf16.gmra.mxu0 %v1296
    %v6816 = vpop.f32.mrf.mxu0
    %v6817 = vadd.f32 %v6803, %v6816
    %v6818 = vpop.f32.mrf.mxu0
    %v6819 = vadd.f32 %v6805, %v6818
    %6820 = vdwg.mxu0
    %6821 = vmatpush.bf16.msra.mxu0 %v5008
    %6822 = vmatpush.bf16.msra.mxu0 %v4992
    %6823 = vmatpush.bf16.msra.mxu0 %v4976
    %6824 = vmatpush.bf16.msra.mxu0 %v4960
    %6825 = vmatpush.bf16.msra.mxu0 %v4944
    %6826 = vmatpush.bf16.msra.mxu0 %v4928
    %6827 = vmatpush.bf16.msra.mxu0 %v4912
    %6828 = vmatpush.bf16.msra.mxu0 %v4896
    %6829 = vmatmul.bf16.gmra.mxu0 %v1297
    %v6830 = vpop.f32.mrf.mxu0
    %v6831 = vadd.f32 %v6817, %v6830
    %v6832 = vpop.f32.mrf.mxu0
    %v6833 = vadd.f32 %v6819, %v6832
    %6834 = vdwg.mxu0
    %6835 = vmatpush.bf16.msra.mxu0 %v5136
    %6836 = vmatpush.bf16.msra.mxu0 %v5120
    %6837 = vmatpush.bf16.msra.mxu0 %v5104
    %6838 = vmatpush.bf16.msra.mxu0 %v5088
    %6839 = vmatpush.bf16.msra.mxu0 %v5072
    %6840 = vmatpush.bf16.msra.mxu0 %v5056
    %6841 = vmatpush.bf16.msra.mxu0 %v5040
    %6842 = vmatpush.bf16.msra.mxu0 %v5024
    %6843 = vmatmul.bf16.gmra.mxu0 %v1298
    %v6844 = vpop.f32.mrf.mxu0
    %v6845 = vadd.f32 %v6831, %v6844
    %v6846 = vpop.f32.mrf.mxu0
    %v6847 = vadd.f32 %v6833, %v6846
    %6848 = vdwg.mxu0
    %6849 = vmatpush.bf16.msra.mxu0 %v5264
    %6850 = vmatpush.bf16.msra.mxu0 %v5248
    %6851 = vmatpush.bf16.msra.mxu0 %v5232
    %6852 = vmatpush.bf16.msra.mxu0 %v5216
    %6853 = vmatpush.bf16.msra.mxu0 %v5200
    %6854 = vmatpush.bf16.msra.mxu0 %v5184
    %6855 = vmatpush.bf16.msra.mxu0 %v5168
    %6856 = vmatpush.bf16.msra.mxu0 %v5152
    %6857 = vmatmul.bf16.gmra.mxu0 %v1299
    %v6858 = vpop.f32.mrf.mxu0
    %v6859 = vadd.f32 %v6845, %v6858
    %v6860 = vpop.f32.mrf.mxu0
    %v6861 = vadd.f32 %v6847, %v6860
    %6862 = vdwg.mxu0
    %6863 = vmatpush.bf16.msra.mxu0 %v5392
    %6864 = vmatpush.bf16.msra.mxu0 %v5376
    %6865 = vmatpush.bf16.msra.mxu0 %v5360
    %6866 = vmatpush.bf16.msra.mxu0 %v5344
    %6867 = vmatpush.bf16.msra.mxu0 %v5328
    %6868 = vmatpush.bf16.msra.mxu0 %v5312
    %6869 = vmatpush.bf16.msra.mxu0 %v5296
    %6870 = vmatpush.bf16.msra.mxu0 %v5280
    %6871 = vmatmul.bf16.gmra.mxu0 %v1300
    %v6872 = vpop.f32.mrf.mxu0
    %v6873 = vadd.f32 %v6859, %v6872
    %v6874 = vpop.f32.mrf.mxu0
    %v6875 = vadd.f32 %v6861, %v6874
    %6876 = vdwg.mxu0
    %6877 = vmatpush.bf16.msra.mxu0 %v4497
    %6878 = vmatpush.bf16.msra.mxu0 %v4481
    %6879 = vmatpush.bf16.msra.mxu0 %v4465
    %6880 = vmatpush.bf16.msra.mxu0 %v4449
    %6881 = vmatpush.bf16.msra.mxu0 %v4433
    %6882 = vmatpush.bf16.msra.mxu0 %v4417
    %6883 = vmatpush.bf16.msra.mxu0 %v4401
    %6884 = vmatpush.bf16.msra.mxu0 %v4385
    %6885 = vmatmul.bf16.gmra.mxu0 %v1293
    %v6886 = vpop.f32.mrf.mxu0
    %v6887 = vadd.f32 0.0, %v6886
    %v6888 = vpop.f32.mrf.mxu0
    %v6889 = vadd.f32 0.0, %v6888
    %6890 = vdwg.mxu0
    %6891 = vmatpush.bf16.msra.mxu0 %v4625
    %6892 = vmatpush.bf16.msra.mxu0 %v4609
    %6893 = vmatpush.bf16.msra.mxu0 %v4593
    %6894 = vmatpush.bf16.msra.mxu0 %v4577
    %6895 = vmatpush.bf16.msra.mxu0 %v4561
    %6896 = vmatpush.bf16.msra.mxu0 %v4545
    %6897 = vmatpush.bf16.msra.mxu0 %v4529
    %6898 = vmatpush.bf16.msra.mxu0 %v4513
    %6899 = vmatmul.bf16.gmra.mxu0 %v1294
    %v6900 = vpop.f32.mrf.mxu0
    %v6901 = vadd.f32 %v6887, %v6900
    %v6902 = vpop.f32.mrf.mxu0
    %v6903 = vadd.f32 %v6889, %v6902
    %6904 = vdwg.mxu0
    %6905 = vmatpush.bf16.msra.mxu0 %v4753
    %6906 = vmatpush.bf16.msra.mxu0 %v4737
    %6907 = vmatpush.bf16.msra.mxu0 %v4721
    %6908 = vmatpush.bf16.msra.mxu0 %v4705
    %6909 = vmatpush.bf16.msra.mxu0 %v4689
    %6910 = vmatpush.bf16.msra.mxu0 %v4673
    %6911 = vmatpush.bf16.msra.mxu0 %v4657
    %6912 = vmatpush.bf16.msra.mxu0 %v4641
    %6913 = vmatmul.bf16.gmra.mxu0 %v1295
    %v6914 = vpop.f32.mrf.mxu0
    %v6915 = vadd.f32 %v6901, %v6914
    %v6916 = vpop.f32.mrf.mxu0
    %v6917 = vadd.f32 %v6903, %v6916
    %6918 = vdwg.mxu0
    %6919 = vmatpush.bf16.msra.mxu0 %v4881
    %6920 = vmatpush.bf16.msra.mxu0 %v4865
    %6921 = vmatpush.bf16.msra.mxu0 %v4849
    %6922 = vmatpush.bf16.msra.mxu0 %v4833
    %6923 = vmatpush.bf16.msra.mxu0 %v4817
    %6924 = vmatpush.bf16.msra.mxu0 %v4801
    %6925 = vmatpush.bf16.msra.mxu0 %v4785
    %6926 = vmatpush.bf16.msra.mxu0 %v4769
    %6927 = vmatmul.bf16.gmra.mxu0 %v1296
    %v6928 = vpop.f32.mrf.mxu0
    %v6929 = vadd.f32 %v6915, %v6928
    %v6930 = vpop.f32.mrf.mxu0
    %v6931 = vadd.f32 %v6917, %v6930
    %6932 = vdwg.mxu0
    %6933 = vmatpush.bf16.msra.mxu0 %v5009
    %6934 = vmatpush.bf16.msra.mxu0 %v4993
    %6935 = vmatpush.bf16.msra.mxu0 %v4977
    %6936 = vmatpush.bf16.msra.mxu0 %v4961
    %6937 = vmatpush.bf16.msra.mxu0 %v4945
    %6938 = vmatpush.bf16.msra.mxu0 %v4929
    %6939 = vmatpush.bf16.msra.mxu0 %v4913
    %6940 = vmatpush.bf16.msra.mxu0 %v4897
    %6941 = vmatmul.bf16.gmra.mxu0 %v1297
    %v6942 = vpop.f32.mrf.mxu0
    %v6943 = vadd.f32 %v6929, %v6942
    %v6944 = vpop.f32.mrf.mxu0
    %v6945 = vadd.f32 %v6931, %v6944
    %6946 = vdwg.mxu0
    %6947 = vmatpush.bf16.msra.mxu0 %v5137
    %6948 = vmatpush.bf16.msra.mxu0 %v5121
    %6949 = vmatpush.bf16.msra.mxu0 %v5105
    %6950 = vmatpush.bf16.msra.mxu0 %v5089
    %6951 = vmatpush.bf16.msra.mxu0 %v5073
    %6952 = vmatpush.bf16.msra.mxu0 %v5057
    %6953 = vmatpush.bf16.msra.mxu0 %v5041
    %6954 = vmatpush.bf16.msra.mxu0 %v5025
    %6955 = vmatmul.bf16.gmra.mxu0 %v1298
    %v6956 = vpop.f32.mrf.mxu0
    %v6957 = vadd.f32 %v6943, %v6956
    %v6958 = vpop.f32.mrf.mxu0
    %v6959 = vadd.f32 %v6945, %v6958
    %6960 = vdwg.mxu0
    %6961 = vmatpush.bf16.msra.mxu0 %v5265
    %6962 = vmatpush.bf16.msra.mxu0 %v5249
    %6963 = vmatpush.bf16.msra.mxu0 %v5233
    %6964 = vmatpush.bf16.msra.mxu0 %v5217
    %6965 = vmatpush.bf16.msra.mxu0 %v5201
    %6966 = vmatpush.bf16.msra.mxu0 %v5185
    %6967 = vmatpush.bf16.msra.mxu0 %v5169
    %6968 = vmatpush.bf16.msra.mxu0 %v5153
    %6969 = vmatmul.bf16.gmra.mxu0 %v1299
    %v6970 = vpop.f32.mrf.mxu0
    %v6971 = vadd.f32 %v6957, %v6970
    %v6972 = vpop.f32.mrf.mxu0
    %v6973 = vadd.f32 %v6959, %v6972
    %6974 = vdwg.mxu0
    %6975 = vmatpush.bf16.msra.mxu0 %v5393
    %6976 = vmatpush.bf16.msra.mxu0 %v5377
    %6977 = vmatpush.bf16.msra.mxu0 %v5361
    %6978 = vmatpush.bf16.msra.mxu0 %v5345
    %6979 = vmatpush.bf16.msra.mxu0 %v5329
    %6980 = vmatpush.bf16.msra.mxu0 %v5313
    %6981 = vmatpush.bf16.msra.mxu0 %v5297
    %6982 = vmatpush.bf16.msra.mxu0 %v5281
    %6983 = vmatmul.bf16.gmra.mxu0 %v1300
    %v6984 = vpop.f32.mrf.mxu0
    %v6985 = vadd.f32 %v6971, %v6984
    %v6986 = vpop.f32.mrf.mxu0
    %v6987 = vadd.f32 %v6973, %v6986
    %6988 = vdwg.mxu0
    %6989 = vmatpush.bf16.msra.mxu0 %v4498
    %6990 = vmatpush.bf16.msra.mxu0 %v4482
    %6991 = vmatpush.bf16.msra.mxu0 %v4466
    %6992 = vmatpush.bf16.msra.mxu0 %v4450
    %6993 = vmatpush.bf16.msra.mxu0 %v4434
    %6994 = vmatpush.bf16.msra.mxu0 %v4418
    %6995 = vmatpush.bf16.msra.mxu0 %v4402
    %6996 = vmatpush.bf16.msra.mxu0 %v4386
    %6997 = vmatmul.bf16.gmra.mxu0 %v1293
    %v6998 = vpop.f32.mrf.mxu0
    %v6999 = vadd.f32 0.0, %v6998
    %v7000 = vpop.f32.mrf.mxu0
    %v7001 = vadd.f32 0.0, %v7000
    %7002 = vdwg.mxu0
    %7003 = vmatpush.bf16.msra.mxu0 %v4626
    %7004 = vmatpush.bf16.msra.mxu0 %v4610
    %7005 = vmatpush.bf16.msra.mxu0 %v4594
    %7006 = vmatpush.bf16.msra.mxu0 %v4578
    %7007 = vmatpush.bf16.msra.mxu0 %v4562
    %7008 = vmatpush.bf16.msra.mxu0 %v4546
    %7009 = vmatpush.bf16.msra.mxu0 %v4530
    %7010 = vmatpush.bf16.msra.mxu0 %v4514
    %7011 = vmatmul.bf16.gmra.mxu0 %v1294
    %v7012 = vpop.f32.mrf.mxu0
    %v7013 = vadd.f32 %v6999, %v7012
    %v7014 = vpop.f32.mrf.mxu0
    %v7015 = vadd.f32 %v7001, %v7014
    %7016 = vdwg.mxu0
    %7017 = vmatpush.bf16.msra.mxu0 %v4754
    %7018 = vmatpush.bf16.msra.mxu0 %v4738
    %7019 = vmatpush.bf16.msra.mxu0 %v4722
    %7020 = vmatpush.bf16.msra.mxu0 %v4706
    %7021 = vmatpush.bf16.msra.mxu0 %v4690
    %7022 = vmatpush.bf16.msra.mxu0 %v4674
    %7023 = vmatpush.bf16.msra.mxu0 %v4658
    %7024 = vmatpush.bf16.msra.mxu0 %v4642
    %7025 = vmatmul.bf16.gmra.mxu0 %v1295
    %v7026 = vpop.f32.mrf.mxu0
    %v7027 = vadd.f32 %v7013, %v7026
    %v7028 = vpop.f32.mrf.mxu0
    %v7029 = vadd.f32 %v7015, %v7028
    %7030 = vdwg.mxu0
    %7031 = vmatpush.bf16.msra.mxu0 %v4882
    %7032 = vmatpush.bf16.msra.mxu0 %v4866
    %7033 = vmatpush.bf16.msra.mxu0 %v4850
    %7034 = vmatpush.bf16.msra.mxu0 %v4834
    %7035 = vmatpush.bf16.msra.mxu0 %v4818
    %7036 = vmatpush.bf16.msra.mxu0 %v4802
    %7037 = vmatpush.bf16.msra.mxu0 %v4786
    %7038 = vmatpush.bf16.msra.mxu0 %v4770
    %7039 = vmatmul.bf16.gmra.mxu0 %v1296
    %v7040 = vpop.f32.mrf.mxu0
    %v7041 = vadd.f32 %v7027, %v7040
    %v7042 = vpop.f32.mrf.mxu0
    %v7043 = vadd.f32 %v7029, %v7042
    %7044 = vdwg.mxu0
    %7045 = vmatpush.bf16.msra.mxu0 %v5010
    %7046 = vmatpush.bf16.msra.mxu0 %v4994
    %7047 = vmatpush.bf16.msra.mxu0 %v4978
    %7048 = vmatpush.bf16.msra.mxu0 %v4962
    %7049 = vmatpush.bf16.msra.mxu0 %v4946
    %7050 = vmatpush.bf16.msra.mxu0 %v4930
    %7051 = vmatpush.bf16.msra.mxu0 %v4914
    %7052 = vmatpush.bf16.msra.mxu0 %v4898
    %7053 = vmatmul.bf16.gmra.mxu0 %v1297
    %v7054 = vpop.f32.mrf.mxu0
    %v7055 = vadd.f32 %v7041, %v7054
    %v7056 = vpop.f32.mrf.mxu0
    %v7057 = vadd.f32 %v7043, %v7056
    %7058 = vdwg.mxu0
    %7059 = vmatpush.bf16.msra.mxu0 %v5138
    %7060 = vmatpush.bf16.msra.mxu0 %v5122
    %7061 = vmatpush.bf16.msra.mxu0 %v5106
    %7062 = vmatpush.bf16.msra.mxu0 %v5090
    %7063 = vmatpush.bf16.msra.mxu0 %v5074
    %7064 = vmatpush.bf16.msra.mxu0 %v5058
    %7065 = vmatpush.bf16.msra.mxu0 %v5042
    %7066 = vmatpush.bf16.msra.mxu0 %v5026
    %7067 = vmatmul.bf16.gmra.mxu0 %v1298
    %v7068 = vpop.f32.mrf.mxu0
    %v7069 = vadd.f32 %v7055, %v7068
    %v7070 = vpop.f32.mrf.mxu0
    %v7071 = vadd.f32 %v7057, %v7070
    %7072 = vdwg.mxu0
    %7073 = vmatpush.bf16.msra.mxu0 %v5266
    %7074 = vmatpush.bf16.msra.mxu0 %v5250
    %7075 = vmatpush.bf16.msra.mxu0 %v5234
    %7076 = vmatpush.bf16.msra.mxu0 %v5218
    %7077 = vmatpush.bf16.msra.mxu0 %v5202
    %7078 = vmatpush.bf16.msra.mxu0 %v5186
    %7079 = vmatpush.bf16.msra.mxu0 %v5170
    %7080 = vmatpush.bf16.msra.mxu0 %v5154
    %7081 = vmatmul.bf16.gmra.mxu0 %v1299
    %v7082 = vpop.f32.mrf.mxu0
    %v7083 = vadd.f32 %v7069, %v7082
    %v7084 = vpop.f32.mrf.mxu0
    %v7085 = vadd.f32 %v7071, %v7084
    %7086 = vdwg.mxu0
    %7087 = vmatpush.bf16.msra.mxu0 %v5394
    %7088 = vmatpush.bf16.msra.mxu0 %v5378
    %7089 = vmatpush.bf16.msra.mxu0 %v5362
    %7090 = vmatpush.bf16.msra.mxu0 %v5346
    %7091 = vmatpush.bf16.msra.mxu0 %v5330
    %7092 = vmatpush.bf16.msra.mxu0 %v5314
    %7093 = vmatpush.bf16.msra.mxu0 %v5298
    %7094 = vmatpush.bf16.msra.mxu0 %v5282
    %7095 = vmatmul.bf16.gmra.mxu0 %v1300
    %v7096 = vpop.f32.mrf.mxu0
    %v7097 = vadd.f32 %v7083, %v7096
    %v7098 = vpop.f32.mrf.mxu0
    %v7099 = vadd.f32 %v7085, %v7098
    %7100 = vdwg.mxu0
    %7101 = vmatpush.bf16.msra.mxu0 %v4499
    %7102 = vmatpush.bf16.msra.mxu0 %v4483
    %7103 = vmatpush.bf16.msra.mxu0 %v4467
    %7104 = vmatpush.bf16.msra.mxu0 %v4451
    %7105 = vmatpush.bf16.msra.mxu0 %v4435
    %7106 = vmatpush.bf16.msra.mxu0 %v4419
    %7107 = vmatpush.bf16.msra.mxu0 %v4403
    %7108 = vmatpush.bf16.msra.mxu0 %v4387
    %7109 = vmatmul.bf16.gmra.mxu0 %v1293
    %v7110 = vpop.f32.mrf.mxu0
    %v7111 = vadd.f32 0.0, %v7110
    %v7112 = vpop.f32.mrf.mxu0
    %v7113 = vadd.f32 0.0, %v7112
    %7114 = vdwg.mxu0
    %7115 = vmatpush.bf16.msra.mxu0 %v4627
    %7116 = vmatpush.bf16.msra.mxu0 %v4611
    %7117 = vmatpush.bf16.msra.mxu0 %v4595
    %7118 = vmatpush.bf16.msra.mxu0 %v4579
    %7119 = vmatpush.bf16.msra.mxu0 %v4563
    %7120 = vmatpush.bf16.msra.mxu0 %v4547
    %7121 = vmatpush.bf16.msra.mxu0 %v4531
    %7122 = vmatpush.bf16.msra.mxu0 %v4515
    %7123 = vmatmul.bf16.gmra.mxu0 %v1294
    %v7124 = vpop.f32.mrf.mxu0
    %v7125 = vadd.f32 %v7111, %v7124
    %v7126 = vpop.f32.mrf.mxu0
    %v7127 = vadd.f32 %v7113, %v7126
    %7128 = vdwg.mxu0
    %7129 = vmatpush.bf16.msra.mxu0 %v4755
    %7130 = vmatpush.bf16.msra.mxu0 %v4739
    %7131 = vmatpush.bf16.msra.mxu0 %v4723
    %7132 = vmatpush.bf16.msra.mxu0 %v4707
    %7133 = vmatpush.bf16.msra.mxu0 %v4691
    %7134 = vmatpush.bf16.msra.mxu0 %v4675
    %7135 = vmatpush.bf16.msra.mxu0 %v4659
    %7136 = vmatpush.bf16.msra.mxu0 %v4643
    %7137 = vmatmul.bf16.gmra.mxu0 %v1295
    %v7138 = vpop.f32.mrf.mxu0
    %v7139 = vadd.f32 %v7125, %v7138
    %v7140 = vpop.f32.mrf.mxu0
    %v7141 = vadd.f32 %v7127, %v7140
    %7142 = vdwg.mxu0
    %7143 = vmatpush.bf16.msra.mxu0 %v4883
    %7144 = vmatpush.bf16.msra.mxu0 %v4867
    %7145 = vmatpush.bf16.msra.mxu0 %v4851
    %7146 = vmatpush.bf16.msra.mxu0 %v4835
    %7147 = vmatpush.bf16.msra.mxu0 %v4819
    %7148 = vmatpush.bf16.msra.mxu0 %v4803
    %7149 = vmatpush.bf16.msra.mxu0 %v4787
    %7150 = vmatpush.bf16.msra.mxu0 %v4771
    %7151 = vmatmul.bf16.gmra.mxu0 %v1296
    %v7152 = vpop.f32.mrf.mxu0
    %v7153 = vadd.f32 %v7139, %v7152
    %v7154 = vpop.f32.mrf.mxu0
    %v7155 = vadd.f32 %v7141, %v7154
    %7156 = vdwg.mxu0
    %7157 = vmatpush.bf16.msra.mxu0 %v5011
    %7158 = vmatpush.bf16.msra.mxu0 %v4995
    %7159 = vmatpush.bf16.msra.mxu0 %v4979
    %7160 = vmatpush.bf16.msra.mxu0 %v4963
    %7161 = vmatpush.bf16.msra.mxu0 %v4947
    %7162 = vmatpush.bf16.msra.mxu0 %v4931
    %7163 = vmatpush.bf16.msra.mxu0 %v4915
    %7164 = vmatpush.bf16.msra.mxu0 %v4899
    %7165 = vmatmul.bf16.gmra.mxu0 %v1297
    %v7166 = vpop.f32.mrf.mxu0
    %v7167 = vadd.f32 %v7153, %v7166
    %v7168 = vpop.f32.mrf.mxu0
    %v7169 = vadd.f32 %v7155, %v7168
    %7170 = vdwg.mxu0
    %7171 = vmatpush.bf16.msra.mxu0 %v5139
    %7172 = vmatpush.bf16.msra.mxu0 %v5123
    %7173 = vmatpush.bf16.msra.mxu0 %v5107
    %7174 = vmatpush.bf16.msra.mxu0 %v5091
    %7175 = vmatpush.bf16.msra.mxu0 %v5075
    %7176 = vmatpush.bf16.msra.mxu0 %v5059
    %7177 = vmatpush.bf16.msra.mxu0 %v5043
    %7178 = vmatpush.bf16.msra.mxu0 %v5027
    %7179 = vmatmul.bf16.gmra.mxu0 %v1298
    %v7180 = vpop.f32.mrf.mxu0
    %v7181 = vadd.f32 %v7167, %v7180
    %v7182 = vpop.f32.mrf.mxu0
    %v7183 = vadd.f32 %v7169, %v7182
    %7184 = vdwg.mxu0
    %7185 = vmatpush.bf16.msra.mxu0 %v5267
    %7186 = vmatpush.bf16.msra.mxu0 %v5251
    %7187 = vmatpush.bf16.msra.mxu0 %v5235
    %7188 = vmatpush.bf16.msra.mxu0 %v5219
    %7189 = vmatpush.bf16.msra.mxu0 %v5203
    %7190 = vmatpush.bf16.msra.mxu0 %v5187
    %7191 = vmatpush.bf16.msra.mxu0 %v5171
    %7192 = vmatpush.bf16.msra.mxu0 %v5155
    %7193 = vmatmul.bf16.gmra.mxu0 %v1299
    %v7194 = vpop.f32.mrf.mxu0
    %v7195 = vadd.f32 %v7181, %v7194
    %v7196 = vpop.f32.mrf.mxu0
    %v7197 = vadd.f32 %v7183, %v7196
    %7198 = vdwg.mxu0
    %7199 = vmatpush.bf16.msra.mxu0 %v5395
    %7200 = vmatpush.bf16.msra.mxu0 %v5379
    %7201 = vmatpush.bf16.msra.mxu0 %v5363
    %7202 = vmatpush.bf16.msra.mxu0 %v5347
    %7203 = vmatpush.bf16.msra.mxu0 %v5331
    %7204 = vmatpush.bf16.msra.mxu0 %v5315
    %7205 = vmatpush.bf16.msra.mxu0 %v5299
    %7206 = vmatpush.bf16.msra.mxu0 %v5283
    %7207 = vmatmul.bf16.gmra.mxu0 %v1300
    %v7208 = vpop.f32.mrf.mxu0
    %v7209 = vadd.f32 %v7195, %v7208
    %v7210 = vpop.f32.mrf.mxu0
    %v7211 = vadd.f32 %v7197, %v7210
    %7212 = vdwg.mxu0
    %7213 = vmatpush.bf16.msra.mxu0 %v4500
    %7214 = vmatpush.bf16.msra.mxu0 %v4484
    %7215 = vmatpush.bf16.msra.mxu0 %v4468
    %7216 = vmatpush.bf16.msra.mxu0 %v4452
    %7217 = vmatpush.bf16.msra.mxu0 %v4436
    %7218 = vmatpush.bf16.msra.mxu0 %v4420
    %7219 = vmatpush.bf16.msra.mxu0 %v4404
    %7220 = vmatpush.bf16.msra.mxu0 %v4388
    %7221 = vmatmul.bf16.gmra.mxu0 %v1293
    %v7222 = vpop.f32.mrf.mxu0
    %v7223 = vadd.f32 0.0, %v7222
    %v7224 = vpop.f32.mrf.mxu0
    %v7225 = vadd.f32 0.0, %v7224
    %7226 = vdwg.mxu0
    %7227 = vmatpush.bf16.msra.mxu0 %v4628
    %7228 = vmatpush.bf16.msra.mxu0 %v4612
    %7229 = vmatpush.bf16.msra.mxu0 %v4596
    %7230 = vmatpush.bf16.msra.mxu0 %v4580
    %7231 = vmatpush.bf16.msra.mxu0 %v4564
    %7232 = vmatpush.bf16.msra.mxu0 %v4548
    %7233 = vmatpush.bf16.msra.mxu0 %v4532
    %7234 = vmatpush.bf16.msra.mxu0 %v4516
    %7235 = vmatmul.bf16.gmra.mxu0 %v1294
    %v7236 = vpop.f32.mrf.mxu0
    %v7237 = vadd.f32 %v7223, %v7236
    %v7238 = vpop.f32.mrf.mxu0
    %v7239 = vadd.f32 %v7225, %v7238
    %7240 = vdwg.mxu0
    %7241 = vmatpush.bf16.msra.mxu0 %v4756
    %7242 = vmatpush.bf16.msra.mxu0 %v4740
    %7243 = vmatpush.bf16.msra.mxu0 %v4724
    %7244 = vmatpush.bf16.msra.mxu0 %v4708
    %7245 = vmatpush.bf16.msra.mxu0 %v4692
    %7246 = vmatpush.bf16.msra.mxu0 %v4676
    %7247 = vmatpush.bf16.msra.mxu0 %v4660
    %7248 = vmatpush.bf16.msra.mxu0 %v4644
    %7249 = vmatmul.bf16.gmra.mxu0 %v1295
    %v7250 = vpop.f32.mrf.mxu0
    %v7251 = vadd.f32 %v7237, %v7250
    %v7252 = vpop.f32.mrf.mxu0
    %v7253 = vadd.f32 %v7239, %v7252
    %7254 = vdwg.mxu0
    %7255 = vmatpush.bf16.msra.mxu0 %v4884
    %7256 = vmatpush.bf16.msra.mxu0 %v4868
    %7257 = vmatpush.bf16.msra.mxu0 %v4852
    %7258 = vmatpush.bf16.msra.mxu0 %v4836
    %7259 = vmatpush.bf16.msra.mxu0 %v4820
    %7260 = vmatpush.bf16.msra.mxu0 %v4804
    %7261 = vmatpush.bf16.msra.mxu0 %v4788
    %7262 = vmatpush.bf16.msra.mxu0 %v4772
    %7263 = vmatmul.bf16.gmra.mxu0 %v1296
    %v7264 = vpop.f32.mrf.mxu0
    %v7265 = vadd.f32 %v7251, %v7264
    %v7266 = vpop.f32.mrf.mxu0
    %v7267 = vadd.f32 %v7253, %v7266
    %7268 = vdwg.mxu0
    %7269 = vmatpush.bf16.msra.mxu0 %v5012
    %7270 = vmatpush.bf16.msra.mxu0 %v4996
    %7271 = vmatpush.bf16.msra.mxu0 %v4980
    %7272 = vmatpush.bf16.msra.mxu0 %v4964
    %7273 = vmatpush.bf16.msra.mxu0 %v4948
    %7274 = vmatpush.bf16.msra.mxu0 %v4932
    %7275 = vmatpush.bf16.msra.mxu0 %v4916
    %7276 = vmatpush.bf16.msra.mxu0 %v4900
    %7277 = vmatmul.bf16.gmra.mxu0 %v1297
    %v7278 = vpop.f32.mrf.mxu0
    %v7279 = vadd.f32 %v7265, %v7278
    %v7280 = vpop.f32.mrf.mxu0
    %v7281 = vadd.f32 %v7267, %v7280
    %7282 = vdwg.mxu0
    %7283 = vmatpush.bf16.msra.mxu0 %v5140
    %7284 = vmatpush.bf16.msra.mxu0 %v5124
    %7285 = vmatpush.bf16.msra.mxu0 %v5108
    %7286 = vmatpush.bf16.msra.mxu0 %v5092
    %7287 = vmatpush.bf16.msra.mxu0 %v5076
    %7288 = vmatpush.bf16.msra.mxu0 %v5060
    %7289 = vmatpush.bf16.msra.mxu0 %v5044
    %7290 = vmatpush.bf16.msra.mxu0 %v5028
    %7291 = vmatmul.bf16.gmra.mxu0 %v1298
    %v7292 = vpop.f32.mrf.mxu0
    %v7293 = vadd.f32 %v7279, %v7292
    %v7294 = vpop.f32.mrf.mxu0
    %v7295 = vadd.f32 %v7281, %v7294
    %7296 = vdwg.mxu0
    %7297 = vmatpush.bf16.msra.mxu0 %v5268
    %7298 = vmatpush.bf16.msra.mxu0 %v5252
    %7299 = vmatpush.bf16.msra.mxu0 %v5236
    %7300 = vmatpush.bf16.msra.mxu0 %v5220
    %7301 = vmatpush.bf16.msra.mxu0 %v5204
    %7302 = vmatpush.bf16.msra.mxu0 %v5188
    %7303 = vmatpush.bf16.msra.mxu0 %v5172
    %7304 = vmatpush.bf16.msra.mxu0 %v5156
    %7305 = vmatmul.bf16.gmra.mxu0 %v1299
    %v7306 = vpop.f32.mrf.mxu0
    %v7307 = vadd.f32 %v7293, %v7306
    %v7308 = vpop.f32.mrf.mxu0
    %v7309 = vadd.f32 %v7295, %v7308
    %7310 = vdwg.mxu0
    %7311 = vmatpush.bf16.msra.mxu0 %v5396
    %7312 = vmatpush.bf16.msra.mxu0 %v5380
    %7313 = vmatpush.bf16.msra.mxu0 %v5364
    %7314 = vmatpush.bf16.msra.mxu0 %v5348
    %7315 = vmatpush.bf16.msra.mxu0 %v5332
    %7316 = vmatpush.bf16.msra.mxu0 %v5316
    %7317 = vmatpush.bf16.msra.mxu0 %v5300
    %7318 = vmatpush.bf16.msra.mxu0 %v5284
    %7319 = vmatmul.bf16.gmra.mxu0 %v1300
    %v7320 = vpop.f32.mrf.mxu0
    %v7321 = vadd.f32 %v7307, %v7320
    %v7322 = vpop.f32.mrf.mxu0
    %v7323 = vadd.f32 %v7309, %v7322
    %7324 = vdwg.mxu0
    %7325 = vmatpush.bf16.msra.mxu0 %v4501
    %7326 = vmatpush.bf16.msra.mxu0 %v4485
    %7327 = vmatpush.bf16.msra.mxu0 %v4469
    %7328 = vmatpush.bf16.msra.mxu0 %v4453
    %7329 = vmatpush.bf16.msra.mxu0 %v4437
    %7330 = vmatpush.bf16.msra.mxu0 %v4421
    %7331 = vmatpush.bf16.msra.mxu0 %v4405
    %7332 = vmatpush.bf16.msra.mxu0 %v4389
    %7333 = vmatmul.bf16.gmra.mxu0 %v1293
    %v7334 = vpop.f32.mrf.mxu0
    %v7335 = vadd.f32 0.0, %v7334
    %v7336 = vpop.f32.mrf.mxu0
    %v7337 = vadd.f32 0.0, %v7336
    %7338 = vdwg.mxu0
    %7339 = vmatpush.bf16.msra.mxu0 %v4629
    %7340 = vmatpush.bf16.msra.mxu0 %v4613
    %7341 = vmatpush.bf16.msra.mxu0 %v4597
    %7342 = vmatpush.bf16.msra.mxu0 %v4581
    %7343 = vmatpush.bf16.msra.mxu0 %v4565
    %7344 = vmatpush.bf16.msra.mxu0 %v4549
    %7345 = vmatpush.bf16.msra.mxu0 %v4533
    %7346 = vmatpush.bf16.msra.mxu0 %v4517
    %7347 = vmatmul.bf16.gmra.mxu0 %v1294
    %v7348 = vpop.f32.mrf.mxu0
    %v7349 = vadd.f32 %v7335, %v7348
    %v7350 = vpop.f32.mrf.mxu0
    %v7351 = vadd.f32 %v7337, %v7350
    %7352 = vdwg.mxu0
    %7353 = vmatpush.bf16.msra.mxu0 %v4757
    %7354 = vmatpush.bf16.msra.mxu0 %v4741
    %7355 = vmatpush.bf16.msra.mxu0 %v4725
    %7356 = vmatpush.bf16.msra.mxu0 %v4709
    %7357 = vmatpush.bf16.msra.mxu0 %v4693
    %7358 = vmatpush.bf16.msra.mxu0 %v4677
    %7359 = vmatpush.bf16.msra.mxu0 %v4661
    %7360 = vmatpush.bf16.msra.mxu0 %v4645
    %7361 = vmatmul.bf16.gmra.mxu0 %v1295
    %v7362 = vpop.f32.mrf.mxu0
    %v7363 = vadd.f32 %v7349, %v7362
    %v7364 = vpop.f32.mrf.mxu0
    %v7365 = vadd.f32 %v7351, %v7364
    %7366 = vdwg.mxu0
    %7367 = vmatpush.bf16.msra.mxu0 %v4885
    %7368 = vmatpush.bf16.msra.mxu0 %v4869
    %7369 = vmatpush.bf16.msra.mxu0 %v4853
    %7370 = vmatpush.bf16.msra.mxu0 %v4837
    %7371 = vmatpush.bf16.msra.mxu0 %v4821
    %7372 = vmatpush.bf16.msra.mxu0 %v4805
    %7373 = vmatpush.bf16.msra.mxu0 %v4789
    %7374 = vmatpush.bf16.msra.mxu0 %v4773
    %7375 = vmatmul.bf16.gmra.mxu0 %v1296
    %v7376 = vpop.f32.mrf.mxu0
    %v7377 = vadd.f32 %v7363, %v7376
    %v7378 = vpop.f32.mrf.mxu0
    %v7379 = vadd.f32 %v7365, %v7378
    %7380 = vdwg.mxu0
    %7381 = vmatpush.bf16.msra.mxu0 %v5013
    %7382 = vmatpush.bf16.msra.mxu0 %v4997
    %7383 = vmatpush.bf16.msra.mxu0 %v4981
    %7384 = vmatpush.bf16.msra.mxu0 %v4965
    %7385 = vmatpush.bf16.msra.mxu0 %v4949
    %7386 = vmatpush.bf16.msra.mxu0 %v4933
    %7387 = vmatpush.bf16.msra.mxu0 %v4917
    %7388 = vmatpush.bf16.msra.mxu0 %v4901
    %7389 = vmatmul.bf16.gmra.mxu0 %v1297
    %v7390 = vpop.f32.mrf.mxu0
    %v7391 = vadd.f32 %v7377, %v7390
    %v7392 = vpop.f32.mrf.mxu0
    %v7393 = vadd.f32 %v7379, %v7392
    %7394 = vdwg.mxu0
    %7395 = vmatpush.bf16.msra.mxu0 %v5141
    %7396 = vmatpush.bf16.msra.mxu0 %v5125
    %7397 = vmatpush.bf16.msra.mxu0 %v5109
    %7398 = vmatpush.bf16.msra.mxu0 %v5093
    %7399 = vmatpush.bf16.msra.mxu0 %v5077
    %7400 = vmatpush.bf16.msra.mxu0 %v5061
    %7401 = vmatpush.bf16.msra.mxu0 %v5045
    %7402 = vmatpush.bf16.msra.mxu0 %v5029
    %7403 = vmatmul.bf16.gmra.mxu0 %v1298
    %v7404 = vpop.f32.mrf.mxu0
    %v7405 = vadd.f32 %v7391, %v7404
    %v7406 = vpop.f32.mrf.mxu0
    %v7407 = vadd.f32 %v7393, %v7406
    %7408 = vdwg.mxu0
    %7409 = vmatpush.bf16.msra.mxu0 %v5269
    %7410 = vmatpush.bf16.msra.mxu0 %v5253
    %7411 = vmatpush.bf16.msra.mxu0 %v5237
    %7412 = vmatpush.bf16.msra.mxu0 %v5221
    %7413 = vmatpush.bf16.msra.mxu0 %v5205
    %7414 = vmatpush.bf16.msra.mxu0 %v5189
    %7415 = vmatpush.bf16.msra.mxu0 %v5173
    %7416 = vmatpush.bf16.msra.mxu0 %v5157
    %7417 = vmatmul.bf16.gmra.mxu0 %v1299
    %v7418 = vpop.f32.mrf.mxu0
    %v7419 = vadd.f32 %v7405, %v7418
    %v7420 = vpop.f32.mrf.mxu0
    %v7421 = vadd.f32 %v7407, %v7420
    %7422 = vdwg.mxu0
    %7423 = vmatpush.bf16.msra.mxu0 %v5397
    %7424 = vmatpush.bf16.msra.mxu0 %v5381
    %7425 = vmatpush.bf16.msra.mxu0 %v5365
    %7426 = vmatpush.bf16.msra.mxu0 %v5349
    %7427 = vmatpush.bf16.msra.mxu0 %v5333
    %7428 = vmatpush.bf16.msra.mxu0 %v5317
    %7429 = vmatpush.bf16.msra.mxu0 %v5301
    %7430 = vmatpush.bf16.msra.mxu0 %v5285
    %7431 = vmatmul.bf16.gmra.mxu0 %v1300
    %v7432 = vpop.f32.mrf.mxu0
    %v7433 = vadd.f32 %v7419, %v7432
    %v7434 = vpop.f32.mrf.mxu0
    %v7435 = vadd.f32 %v7421, %v7434
    %7436 = vdwg.mxu0
    %7437 = vmatpush.bf16.msra.mxu0 %v4502
    %7438 = vmatpush.bf16.msra.mxu0 %v4486
    %7439 = vmatpush.bf16.msra.mxu0 %v4470
    %7440 = vmatpush.bf16.msra.mxu0 %v4454
    %7441 = vmatpush.bf16.msra.mxu0 %v4438
    %7442 = vmatpush.bf16.msra.mxu0 %v4422
    %7443 = vmatpush.bf16.msra.mxu0 %v4406
    %7444 = vmatpush.bf16.msra.mxu0 %v4390
    %7445 = vmatmul.bf16.gmra.mxu0 %v1293
    %v7446 = vpop.f32.mrf.mxu0
    %v7447 = vadd.f32 0.0, %v7446
    %v7448 = vpop.f32.mrf.mxu0
    %v7449 = vadd.f32 0.0, %v7448
    %7450 = vdwg.mxu0
    %7451 = vmatpush.bf16.msra.mxu0 %v4630
    %7452 = vmatpush.bf16.msra.mxu0 %v4614
    %7453 = vmatpush.bf16.msra.mxu0 %v4598
    %7454 = vmatpush.bf16.msra.mxu0 %v4582
    %7455 = vmatpush.bf16.msra.mxu0 %v4566
    %7456 = vmatpush.bf16.msra.mxu0 %v4550
    %7457 = vmatpush.bf16.msra.mxu0 %v4534
    %7458 = vmatpush.bf16.msra.mxu0 %v4518
    %7459 = vmatmul.bf16.gmra.mxu0 %v1294
    %v7460 = vpop.f32.mrf.mxu0
    %v7461 = vadd.f32 %v7447, %v7460
    %v7462 = vpop.f32.mrf.mxu0
    %v7463 = vadd.f32 %v7449, %v7462
    %7464 = vdwg.mxu0
    %7465 = vmatpush.bf16.msra.mxu0 %v4758
    %7466 = vmatpush.bf16.msra.mxu0 %v4742
    %7467 = vmatpush.bf16.msra.mxu0 %v4726
    %7468 = vmatpush.bf16.msra.mxu0 %v4710
    %7469 = vmatpush.bf16.msra.mxu0 %v4694
    %7470 = vmatpush.bf16.msra.mxu0 %v4678
    %7471 = vmatpush.bf16.msra.mxu0 %v4662
    %7472 = vmatpush.bf16.msra.mxu0 %v4646
    %7473 = vmatmul.bf16.gmra.mxu0 %v1295
    %v7474 = vpop.f32.mrf.mxu0
    %v7475 = vadd.f32 %v7461, %v7474
    %v7476 = vpop.f32.mrf.mxu0
    %v7477 = vadd.f32 %v7463, %v7476
    %7478 = vdwg.mxu0
    %7479 = vmatpush.bf16.msra.mxu0 %v4886
    %7480 = vmatpush.bf16.msra.mxu0 %v4870
    %7481 = vmatpush.bf16.msra.mxu0 %v4854
    %7482 = vmatpush.bf16.msra.mxu0 %v4838
    %7483 = vmatpush.bf16.msra.mxu0 %v4822
    %7484 = vmatpush.bf16.msra.mxu0 %v4806
    %7485 = vmatpush.bf16.msra.mxu0 %v4790
    %7486 = vmatpush.bf16.msra.mxu0 %v4774
    %7487 = vmatmul.bf16.gmra.mxu0 %v1296
    %v7488 = vpop.f32.mrf.mxu0
    %v7489 = vadd.f32 %v7475, %v7488
    %v7490 = vpop.f32.mrf.mxu0
    %v7491 = vadd.f32 %v7477, %v7490
    %7492 = vdwg.mxu0
    %7493 = vmatpush.bf16.msra.mxu0 %v5014
    %7494 = vmatpush.bf16.msra.mxu0 %v4998
    %7495 = vmatpush.bf16.msra.mxu0 %v4982
    %7496 = vmatpush.bf16.msra.mxu0 %v4966
    %7497 = vmatpush.bf16.msra.mxu0 %v4950
    %7498 = vmatpush.bf16.msra.mxu0 %v4934
    %7499 = vmatpush.bf16.msra.mxu0 %v4918
    %7500 = vmatpush.bf16.msra.mxu0 %v4902
    %7501 = vmatmul.bf16.gmra.mxu0 %v1297
    %v7502 = vpop.f32.mrf.mxu0
    %v7503 = vadd.f32 %v7489, %v7502
    %v7504 = vpop.f32.mrf.mxu0
    %v7505 = vadd.f32 %v7491, %v7504
    %7506 = vdwg.mxu0
    %7507 = vmatpush.bf16.msra.mxu0 %v5142
    %7508 = vmatpush.bf16.msra.mxu0 %v5126
    %7509 = vmatpush.bf16.msra.mxu0 %v5110
    %7510 = vmatpush.bf16.msra.mxu0 %v5094
    %7511 = vmatpush.bf16.msra.mxu0 %v5078
    %7512 = vmatpush.bf16.msra.mxu0 %v5062
    %7513 = vmatpush.bf16.msra.mxu0 %v5046
    %7514 = vmatpush.bf16.msra.mxu0 %v5030
    %7515 = vmatmul.bf16.gmra.mxu0 %v1298
    %v7516 = vpop.f32.mrf.mxu0
    %v7517 = vadd.f32 %v7503, %v7516
    %v7518 = vpop.f32.mrf.mxu0
    %v7519 = vadd.f32 %v7505, %v7518
    %7520 = vdwg.mxu0
    %7521 = vmatpush.bf16.msra.mxu0 %v5270
    %7522 = vmatpush.bf16.msra.mxu0 %v5254
    %7523 = vmatpush.bf16.msra.mxu0 %v5238
    %7524 = vmatpush.bf16.msra.mxu0 %v5222
    %7525 = vmatpush.bf16.msra.mxu0 %v5206
    %7526 = vmatpush.bf16.msra.mxu0 %v5190
    %7527 = vmatpush.bf16.msra.mxu0 %v5174
    %7528 = vmatpush.bf16.msra.mxu0 %v5158
    %7529 = vmatmul.bf16.gmra.mxu0 %v1299
    %v7530 = vpop.f32.mrf.mxu0
    %v7531 = vadd.f32 %v7517, %v7530
    %v7532 = vpop.f32.mrf.mxu0
    %v7533 = vadd.f32 %v7519, %v7532
    %7534 = vdwg.mxu0
    %7535 = vmatpush.bf16.msra.mxu0 %v5398
    %7536 = vmatpush.bf16.msra.mxu0 %v5382
    %7537 = vmatpush.bf16.msra.mxu0 %v5366
    %7538 = vmatpush.bf16.msra.mxu0 %v5350
    %7539 = vmatpush.bf16.msra.mxu0 %v5334
    %7540 = vmatpush.bf16.msra.mxu0 %v5318
    %7541 = vmatpush.bf16.msra.mxu0 %v5302
    %7542 = vmatpush.bf16.msra.mxu0 %v5286
    %7543 = vmatmul.bf16.gmra.mxu0 %v1300
    %v7544 = vpop.f32.mrf.mxu0
    %v7545 = vadd.f32 %v7531, %v7544
    %v7546 = vpop.f32.mrf.mxu0
    %v7547 = vadd.f32 %v7533, %v7546
    %7548 = vdwg.mxu0
    %7549 = vmatpush.bf16.msra.mxu0 %v4503
    %7550 = vmatpush.bf16.msra.mxu0 %v4487
    %7551 = vmatpush.bf16.msra.mxu0 %v4471
    %7552 = vmatpush.bf16.msra.mxu0 %v4455
    %7553 = vmatpush.bf16.msra.mxu0 %v4439
    %7554 = vmatpush.bf16.msra.mxu0 %v4423
    %7555 = vmatpush.bf16.msra.mxu0 %v4407
    %7556 = vmatpush.bf16.msra.mxu0 %v4391
    %7557 = vmatmul.bf16.gmra.mxu0 %v1293
    %v7558 = vpop.f32.mrf.mxu0
    %v7559 = vadd.f32 0.0, %v7558
    %v7560 = vpop.f32.mrf.mxu0
    %v7561 = vadd.f32 0.0, %v7560
    %7562 = vdwg.mxu0
    %7563 = vmatpush.bf16.msra.mxu0 %v4631
    %7564 = vmatpush.bf16.msra.mxu0 %v4615
    %7565 = vmatpush.bf16.msra.mxu0 %v4599
    %7566 = vmatpush.bf16.msra.mxu0 %v4583
    %7567 = vmatpush.bf16.msra.mxu0 %v4567
    %7568 = vmatpush.bf16.msra.mxu0 %v4551
    %7569 = vmatpush.bf16.msra.mxu0 %v4535
    %7570 = vmatpush.bf16.msra.mxu0 %v4519
    %7571 = vmatmul.bf16.gmra.mxu0 %v1294
    %v7572 = vpop.f32.mrf.mxu0
    %v7573 = vadd.f32 %v7559, %v7572
    %v7574 = vpop.f32.mrf.mxu0
    %v7575 = vadd.f32 %v7561, %v7574
    %7576 = vdwg.mxu0
    %7577 = vmatpush.bf16.msra.mxu0 %v4759
    %7578 = vmatpush.bf16.msra.mxu0 %v4743
    %7579 = vmatpush.bf16.msra.mxu0 %v4727
    %7580 = vmatpush.bf16.msra.mxu0 %v4711
    %7581 = vmatpush.bf16.msra.mxu0 %v4695
    %7582 = vmatpush.bf16.msra.mxu0 %v4679
    %7583 = vmatpush.bf16.msra.mxu0 %v4663
    %7584 = vmatpush.bf16.msra.mxu0 %v4647
    %7585 = vmatmul.bf16.gmra.mxu0 %v1295
    %v7586 = vpop.f32.mrf.mxu0
    %v7587 = vadd.f32 %v7573, %v7586
    %v7588 = vpop.f32.mrf.mxu0
    %v7589 = vadd.f32 %v7575, %v7588
    %7590 = vdwg.mxu0
    %7591 = vmatpush.bf16.msra.mxu0 %v4887
    %7592 = vmatpush.bf16.msra.mxu0 %v4871
    %7593 = vmatpush.bf16.msra.mxu0 %v4855
    %7594 = vmatpush.bf16.msra.mxu0 %v4839
    %7595 = vmatpush.bf16.msra.mxu0 %v4823
    %7596 = vmatpush.bf16.msra.mxu0 %v4807
    %7597 = vmatpush.bf16.msra.mxu0 %v4791
    %7598 = vmatpush.bf16.msra.mxu0 %v4775
    %7599 = vmatmul.bf16.gmra.mxu0 %v1296
    %v7600 = vpop.f32.mrf.mxu0
    %v7601 = vadd.f32 %v7587, %v7600
    %v7602 = vpop.f32.mrf.mxu0
    %v7603 = vadd.f32 %v7589, %v7602
    %7604 = vdwg.mxu0
    %7605 = vmatpush.bf16.msra.mxu0 %v5015
    %7606 = vmatpush.bf16.msra.mxu0 %v4999
    %7607 = vmatpush.bf16.msra.mxu0 %v4983
    %7608 = vmatpush.bf16.msra.mxu0 %v4967
    %7609 = vmatpush.bf16.msra.mxu0 %v4951
    %7610 = vmatpush.bf16.msra.mxu0 %v4935
    %7611 = vmatpush.bf16.msra.mxu0 %v4919
    %7612 = vmatpush.bf16.msra.mxu0 %v4903
    %7613 = vmatmul.bf16.gmra.mxu0 %v1297
    %v7614 = vpop.f32.mrf.mxu0
    %v7615 = vadd.f32 %v7601, %v7614
    %v7616 = vpop.f32.mrf.mxu0
    %v7617 = vadd.f32 %v7603, %v7616
    %7618 = vdwg.mxu0
    %7619 = vmatpush.bf16.msra.mxu0 %v5143
    %7620 = vmatpush.bf16.msra.mxu0 %v5127
    %7621 = vmatpush.bf16.msra.mxu0 %v5111
    %7622 = vmatpush.bf16.msra.mxu0 %v5095
    %7623 = vmatpush.bf16.msra.mxu0 %v5079
    %7624 = vmatpush.bf16.msra.mxu0 %v5063
    %7625 = vmatpush.bf16.msra.mxu0 %v5047
    %7626 = vmatpush.bf16.msra.mxu0 %v5031
    %7627 = vmatmul.bf16.gmra.mxu0 %v1298
    %v7628 = vpop.f32.mrf.mxu0
    %v7629 = vadd.f32 %v7615, %v7628
    %v7630 = vpop.f32.mrf.mxu0
    %v7631 = vadd.f32 %v7617, %v7630
    %7632 = vdwg.mxu0
    %7633 = vmatpush.bf16.msra.mxu0 %v5271
    %7634 = vmatpush.bf16.msra.mxu0 %v5255
    %7635 = vmatpush.bf16.msra.mxu0 %v5239
    %7636 = vmatpush.bf16.msra.mxu0 %v5223
    %7637 = vmatpush.bf16.msra.mxu0 %v5207
    %7638 = vmatpush.bf16.msra.mxu0 %v5191
    %7639 = vmatpush.bf16.msra.mxu0 %v5175
    %7640 = vmatpush.bf16.msra.mxu0 %v5159
    %7641 = vmatmul.bf16.gmra.mxu0 %v1299
    %v7642 = vpop.f32.mrf.mxu0
    %v7643 = vadd.f32 %v7629, %v7642
    %v7644 = vpop.f32.mrf.mxu0
    %v7645 = vadd.f32 %v7631, %v7644
    %7646 = vdwg.mxu0
    %7647 = vmatpush.bf16.msra.mxu0 %v5399
    %7648 = vmatpush.bf16.msra.mxu0 %v5383
    %7649 = vmatpush.bf16.msra.mxu0 %v5367
    %7650 = vmatpush.bf16.msra.mxu0 %v5351
    %7651 = vmatpush.bf16.msra.mxu0 %v5335
    %7652 = vmatpush.bf16.msra.mxu0 %v5319
    %7653 = vmatpush.bf16.msra.mxu0 %v5303
    %7654 = vmatpush.bf16.msra.mxu0 %v5287
    %7655 = vmatmul.bf16.gmra.mxu0 %v1300
    %v7656 = vpop.f32.mrf.mxu0
    %v7657 = vadd.f32 %v7643, %v7656
    %v7658 = vpop.f32.mrf.mxu0
    %v7659 = vadd.f32 %v7645, %v7658
    %7660 = vdwg.mxu0
    %7661 = vmatpush.bf16.msra.mxu0 %v4504
    %7662 = vmatpush.bf16.msra.mxu0 %v4488
    %7663 = vmatpush.bf16.msra.mxu0 %v4472
    %7664 = vmatpush.bf16.msra.mxu0 %v4456
    %7665 = vmatpush.bf16.msra.mxu0 %v4440
    %7666 = vmatpush.bf16.msra.mxu0 %v4424
    %7667 = vmatpush.bf16.msra.mxu0 %v4408
    %7668 = vmatpush.bf16.msra.mxu0 %v4392
    %7669 = vmatmul.bf16.gmra.mxu0 %v1293
    %v7670 = vpop.f32.mrf.mxu0
    %v7671 = vadd.f32 0.0, %v7670
    %v7672 = vpop.f32.mrf.mxu0
    %v7673 = vadd.f32 0.0, %v7672
    %7674 = vdwg.mxu0
    %7675 = vmatpush.bf16.msra.mxu0 %v4632
    %7676 = vmatpush.bf16.msra.mxu0 %v4616
    %7677 = vmatpush.bf16.msra.mxu0 %v4600
    %7678 = vmatpush.bf16.msra.mxu0 %v4584
    %7679 = vmatpush.bf16.msra.mxu0 %v4568
    %7680 = vmatpush.bf16.msra.mxu0 %v4552
    %7681 = vmatpush.bf16.msra.mxu0 %v4536
    %7682 = vmatpush.bf16.msra.mxu0 %v4520
    %7683 = vmatmul.bf16.gmra.mxu0 %v1294
    %v7684 = vpop.f32.mrf.mxu0
    %v7685 = vadd.f32 %v7671, %v7684
    %v7686 = vpop.f32.mrf.mxu0
    %v7687 = vadd.f32 %v7673, %v7686
    %7688 = vdwg.mxu0
    %7689 = vmatpush.bf16.msra.mxu0 %v4760
    %7690 = vmatpush.bf16.msra.mxu0 %v4744
    %7691 = vmatpush.bf16.msra.mxu0 %v4728
    %7692 = vmatpush.bf16.msra.mxu0 %v4712
    %7693 = vmatpush.bf16.msra.mxu0 %v4696
    %7694 = vmatpush.bf16.msra.mxu0 %v4680
    %7695 = vmatpush.bf16.msra.mxu0 %v4664
    %7696 = vmatpush.bf16.msra.mxu0 %v4648
    %7697 = vmatmul.bf16.gmra.mxu0 %v1295
    %v7698 = vpop.f32.mrf.mxu0
    %v7699 = vadd.f32 %v7685, %v7698
    %v7700 = vpop.f32.mrf.mxu0
    %v7701 = vadd.f32 %v7687, %v7700
    %7702 = vdwg.mxu0
    %7703 = vmatpush.bf16.msra.mxu0 %v4888
    %7704 = vmatpush.bf16.msra.mxu0 %v4872
    %7705 = vmatpush.bf16.msra.mxu0 %v4856
    %7706 = vmatpush.bf16.msra.mxu0 %v4840
    %7707 = vmatpush.bf16.msra.mxu0 %v4824
    %7708 = vmatpush.bf16.msra.mxu0 %v4808
    %7709 = vmatpush.bf16.msra.mxu0 %v4792
    %7710 = vmatpush.bf16.msra.mxu0 %v4776
    %7711 = vmatmul.bf16.gmra.mxu0 %v1296
    %v7712 = vpop.f32.mrf.mxu0
    %v7713 = vadd.f32 %v7699, %v7712
    %v7714 = vpop.f32.mrf.mxu0
    %v7715 = vadd.f32 %v7701, %v7714
    %7716 = vdwg.mxu0
    %7717 = vmatpush.bf16.msra.mxu0 %v5016
    %7718 = vmatpush.bf16.msra.mxu0 %v5000
    %7719 = vmatpush.bf16.msra.mxu0 %v4984
    %7720 = vmatpush.bf16.msra.mxu0 %v4968
    %7721 = vmatpush.bf16.msra.mxu0 %v4952
    %7722 = vmatpush.bf16.msra.mxu0 %v4936
    %7723 = vmatpush.bf16.msra.mxu0 %v4920
    %7724 = vmatpush.bf16.msra.mxu0 %v4904
    %7725 = vmatmul.bf16.gmra.mxu0 %v1297
    %v7726 = vpop.f32.mrf.mxu0
    %v7727 = vadd.f32 %v7713, %v7726
    %v7728 = vpop.f32.mrf.mxu0
    %v7729 = vadd.f32 %v7715, %v7728
    %7730 = vdwg.mxu0
    %7731 = vmatpush.bf16.msra.mxu0 %v5144
    %7732 = vmatpush.bf16.msra.mxu0 %v5128
    %7733 = vmatpush.bf16.msra.mxu0 %v5112
    %7734 = vmatpush.bf16.msra.mxu0 %v5096
    %7735 = vmatpush.bf16.msra.mxu0 %v5080
    %7736 = vmatpush.bf16.msra.mxu0 %v5064
    %7737 = vmatpush.bf16.msra.mxu0 %v5048
    %7738 = vmatpush.bf16.msra.mxu0 %v5032
    %7739 = vmatmul.bf16.gmra.mxu0 %v1298
    %v7740 = vpop.f32.mrf.mxu0
    %v7741 = vadd.f32 %v7727, %v7740
    %v7742 = vpop.f32.mrf.mxu0
    %v7743 = vadd.f32 %v7729, %v7742
    %7744 = vdwg.mxu0
    %7745 = vmatpush.bf16.msra.mxu0 %v5272
    %7746 = vmatpush.bf16.msra.mxu0 %v5256
    %7747 = vmatpush.bf16.msra.mxu0 %v5240
    %7748 = vmatpush.bf16.msra.mxu0 %v5224
    %7749 = vmatpush.bf16.msra.mxu0 %v5208
    %7750 = vmatpush.bf16.msra.mxu0 %v5192
    %7751 = vmatpush.bf16.msra.mxu0 %v5176
    %7752 = vmatpush.bf16.msra.mxu0 %v5160
    %7753 = vmatmul.bf16.gmra.mxu0 %v1299
    %v7754 = vpop.f32.mrf.mxu0
    %v7755 = vadd.f32 %v7741, %v7754
    %v7756 = vpop.f32.mrf.mxu0
    %v7757 = vadd.f32 %v7743, %v7756
    %7758 = vdwg.mxu0
    %7759 = vmatpush.bf16.msra.mxu0 %v5400
    %7760 = vmatpush.bf16.msra.mxu0 %v5384
    %7761 = vmatpush.bf16.msra.mxu0 %v5368
    %7762 = vmatpush.bf16.msra.mxu0 %v5352
    %7763 = vmatpush.bf16.msra.mxu0 %v5336
    %7764 = vmatpush.bf16.msra.mxu0 %v5320
    %7765 = vmatpush.bf16.msra.mxu0 %v5304
    %7766 = vmatpush.bf16.msra.mxu0 %v5288
    %7767 = vmatmul.bf16.gmra.mxu0 %v1300
    %v7768 = vpop.f32.mrf.mxu0
    %v7769 = vadd.f32 %v7755, %v7768
    %v7770 = vpop.f32.mrf.mxu0
    %v7771 = vadd.f32 %v7757, %v7770
    %7772 = vdwg.mxu0
    %7773 = vmatpush.bf16.msra.mxu0 %v4505
    %7774 = vmatpush.bf16.msra.mxu0 %v4489
    %7775 = vmatpush.bf16.msra.mxu0 %v4473
    %7776 = vmatpush.bf16.msra.mxu0 %v4457
    %7777 = vmatpush.bf16.msra.mxu0 %v4441
    %7778 = vmatpush.bf16.msra.mxu0 %v4425
    %7779 = vmatpush.bf16.msra.mxu0 %v4409
    %7780 = vmatpush.bf16.msra.mxu0 %v4393
    %7781 = vmatmul.bf16.gmra.mxu0 %v1293
    %v7782 = vpop.f32.mrf.mxu0
    %v7783 = vadd.f32 0.0, %v7782
    %v7784 = vpop.f32.mrf.mxu0
    %v7785 = vadd.f32 0.0, %v7784
    %7786 = vdwg.mxu0
    %7787 = vmatpush.bf16.msra.mxu0 %v4633
    %7788 = vmatpush.bf16.msra.mxu0 %v4617
    %7789 = vmatpush.bf16.msra.mxu0 %v4601
    %7790 = vmatpush.bf16.msra.mxu0 %v4585
    %7791 = vmatpush.bf16.msra.mxu0 %v4569
    %7792 = vmatpush.bf16.msra.mxu0 %v4553
    %7793 = vmatpush.bf16.msra.mxu0 %v4537
    %7794 = vmatpush.bf16.msra.mxu0 %v4521
    %7795 = vmatmul.bf16.gmra.mxu0 %v1294
    %v7796 = vpop.f32.mrf.mxu0
    %v7797 = vadd.f32 %v7783, %v7796
    %v7798 = vpop.f32.mrf.mxu0
    %v7799 = vadd.f32 %v7785, %v7798
    %7800 = vdwg.mxu0
    %7801 = vmatpush.bf16.msra.mxu0 %v4761
    %7802 = vmatpush.bf16.msra.mxu0 %v4745
    %7803 = vmatpush.bf16.msra.mxu0 %v4729
    %7804 = vmatpush.bf16.msra.mxu0 %v4713
    %7805 = vmatpush.bf16.msra.mxu0 %v4697
    %7806 = vmatpush.bf16.msra.mxu0 %v4681
    %7807 = vmatpush.bf16.msra.mxu0 %v4665
    %7808 = vmatpush.bf16.msra.mxu0 %v4649
    %7809 = vmatmul.bf16.gmra.mxu0 %v1295
    %v7810 = vpop.f32.mrf.mxu0
    %v7811 = vadd.f32 %v7797, %v7810
    %v7812 = vpop.f32.mrf.mxu0
    %v7813 = vadd.f32 %v7799, %v7812
    %7814 = vdwg.mxu0
    %7815 = vmatpush.bf16.msra.mxu0 %v4889
    %7816 = vmatpush.bf16.msra.mxu0 %v4873
    %7817 = vmatpush.bf16.msra.mxu0 %v4857
    %7818 = vmatpush.bf16.msra.mxu0 %v4841
    %7819 = vmatpush.bf16.msra.mxu0 %v4825
    %7820 = vmatpush.bf16.msra.mxu0 %v4809
    %7821 = vmatpush.bf16.msra.mxu0 %v4793
    %7822 = vmatpush.bf16.msra.mxu0 %v4777
    %7823 = vmatmul.bf16.gmra.mxu0 %v1296
    %v7824 = vpop.f32.mrf.mxu0
    %v7825 = vadd.f32 %v7811, %v7824
    %v7826 = vpop.f32.mrf.mxu0
    %v7827 = vadd.f32 %v7813, %v7826
    %7828 = vdwg.mxu0
    %7829 = vmatpush.bf16.msra.mxu0 %v5017
    %7830 = vmatpush.bf16.msra.mxu0 %v5001
    %7831 = vmatpush.bf16.msra.mxu0 %v4985
    %7832 = vmatpush.bf16.msra.mxu0 %v4969
    %7833 = vmatpush.bf16.msra.mxu0 %v4953
    %7834 = vmatpush.bf16.msra.mxu0 %v4937
    %7835 = vmatpush.bf16.msra.mxu0 %v4921
    %7836 = vmatpush.bf16.msra.mxu0 %v4905
    %7837 = vmatmul.bf16.gmra.mxu0 %v1297
    %v7838 = vpop.f32.mrf.mxu0
    %v7839 = vadd.f32 %v7825, %v7838
    %v7840 = vpop.f32.mrf.mxu0
    %v7841 = vadd.f32 %v7827, %v7840
    %7842 = vdwg.mxu0
    %7843 = vmatpush.bf16.msra.mxu0 %v5145
    %7844 = vmatpush.bf16.msra.mxu0 %v5129
    %7845 = vmatpush.bf16.msra.mxu0 %v5113
    %7846 = vmatpush.bf16.msra.mxu0 %v5097
    %7847 = vmatpush.bf16.msra.mxu0 %v5081
    %7848 = vmatpush.bf16.msra.mxu0 %v5065
    %7849 = vmatpush.bf16.msra.mxu0 %v5049
    %7850 = vmatpush.bf16.msra.mxu0 %v5033
    %7851 = vmatmul.bf16.gmra.mxu0 %v1298
    %v7852 = vpop.f32.mrf.mxu0
    %v7853 = vadd.f32 %v7839, %v7852
    %v7854 = vpop.f32.mrf.mxu0
    %v7855 = vadd.f32 %v7841, %v7854
    %7856 = vdwg.mxu0
    %7857 = vmatpush.bf16.msra.mxu0 %v5273
    %7858 = vmatpush.bf16.msra.mxu0 %v5257
    %7859 = vmatpush.bf16.msra.mxu0 %v5241
    %7860 = vmatpush.bf16.msra.mxu0 %v5225
    %7861 = vmatpush.bf16.msra.mxu0 %v5209
    %7862 = vmatpush.bf16.msra.mxu0 %v5193
    %7863 = vmatpush.bf16.msra.mxu0 %v5177
    %7864 = vmatpush.bf16.msra.mxu0 %v5161
    %7865 = vmatmul.bf16.gmra.mxu0 %v1299
    %v7866 = vpop.f32.mrf.mxu0
    %v7867 = vadd.f32 %v7853, %v7866
    %v7868 = vpop.f32.mrf.mxu0
    %v7869 = vadd.f32 %v7855, %v7868
    %7870 = vdwg.mxu0
    %7871 = vmatpush.bf16.msra.mxu0 %v5401
    %7872 = vmatpush.bf16.msra.mxu0 %v5385
    %7873 = vmatpush.bf16.msra.mxu0 %v5369
    %7874 = vmatpush.bf16.msra.mxu0 %v5353
    %7875 = vmatpush.bf16.msra.mxu0 %v5337
    %7876 = vmatpush.bf16.msra.mxu0 %v5321
    %7877 = vmatpush.bf16.msra.mxu0 %v5305
    %7878 = vmatpush.bf16.msra.mxu0 %v5289
    %7879 = vmatmul.bf16.gmra.mxu0 %v1300
    %v7880 = vpop.f32.mrf.mxu0
    %v7881 = vadd.f32 %v7867, %v7880
    %v7882 = vpop.f32.mrf.mxu0
    %v7883 = vadd.f32 %v7869, %v7882
    %7884 = vdwg.mxu0
    %7885 = vmatpush.bf16.msra.mxu0 %v4506
    %7886 = vmatpush.bf16.msra.mxu0 %v4490
    %7887 = vmatpush.bf16.msra.mxu0 %v4474
    %7888 = vmatpush.bf16.msra.mxu0 %v4458
    %7889 = vmatpush.bf16.msra.mxu0 %v4442
    %7890 = vmatpush.bf16.msra.mxu0 %v4426
    %7891 = vmatpush.bf16.msra.mxu0 %v4410
    %7892 = vmatpush.bf16.msra.mxu0 %v4394
    %7893 = vmatmul.bf16.gmra.mxu0 %v1293
    %v7894 = vpop.f32.mrf.mxu0
    %v7895 = vadd.f32 0.0, %v7894
    %v7896 = vpop.f32.mrf.mxu0
    %v7897 = vadd.f32 0.0, %v7896
    %7898 = vdwg.mxu0
    %7899 = vmatpush.bf16.msra.mxu0 %v4634
    %7900 = vmatpush.bf16.msra.mxu0 %v4618
    %7901 = vmatpush.bf16.msra.mxu0 %v4602
    %7902 = vmatpush.bf16.msra.mxu0 %v4586
    %7903 = vmatpush.bf16.msra.mxu0 %v4570
    %7904 = vmatpush.bf16.msra.mxu0 %v4554
    %7905 = vmatpush.bf16.msra.mxu0 %v4538
    %7906 = vmatpush.bf16.msra.mxu0 %v4522
    %7907 = vmatmul.bf16.gmra.mxu0 %v1294
    %v7908 = vpop.f32.mrf.mxu0
    %v7909 = vadd.f32 %v7895, %v7908
    %v7910 = vpop.f32.mrf.mxu0
    %v7911 = vadd.f32 %v7897, %v7910
    %7912 = vdwg.mxu0
    %7913 = vmatpush.bf16.msra.mxu0 %v4762
    %7914 = vmatpush.bf16.msra.mxu0 %v4746
    %7915 = vmatpush.bf16.msra.mxu0 %v4730
    %7916 = vmatpush.bf16.msra.mxu0 %v4714
    %7917 = vmatpush.bf16.msra.mxu0 %v4698
    %7918 = vmatpush.bf16.msra.mxu0 %v4682
    %7919 = vmatpush.bf16.msra.mxu0 %v4666
    %7920 = vmatpush.bf16.msra.mxu0 %v4650
    %7921 = vmatmul.bf16.gmra.mxu0 %v1295
    %v7922 = vpop.f32.mrf.mxu0
    %v7923 = vadd.f32 %v7909, %v7922
    %v7924 = vpop.f32.mrf.mxu0
    %v7925 = vadd.f32 %v7911, %v7924
    %7926 = vdwg.mxu0
    %7927 = vmatpush.bf16.msra.mxu0 %v4890
    %7928 = vmatpush.bf16.msra.mxu0 %v4874
    %7929 = vmatpush.bf16.msra.mxu0 %v4858
    %7930 = vmatpush.bf16.msra.mxu0 %v4842
    %7931 = vmatpush.bf16.msra.mxu0 %v4826
    %7932 = vmatpush.bf16.msra.mxu0 %v4810
    %7933 = vmatpush.bf16.msra.mxu0 %v4794
    %7934 = vmatpush.bf16.msra.mxu0 %v4778
    %7935 = vmatmul.bf16.gmra.mxu0 %v1296
    %v7936 = vpop.f32.mrf.mxu0
    %v7937 = vadd.f32 %v7923, %v7936
    %v7938 = vpop.f32.mrf.mxu0
    %v7939 = vadd.f32 %v7925, %v7938
    %7940 = vdwg.mxu0
    %7941 = vmatpush.bf16.msra.mxu0 %v5018
    %7942 = vmatpush.bf16.msra.mxu0 %v5002
    %7943 = vmatpush.bf16.msra.mxu0 %v4986
    %7944 = vmatpush.bf16.msra.mxu0 %v4970
    %7945 = vmatpush.bf16.msra.mxu0 %v4954
    %7946 = vmatpush.bf16.msra.mxu0 %v4938
    %7947 = vmatpush.bf16.msra.mxu0 %v4922
    %7948 = vmatpush.bf16.msra.mxu0 %v4906
    %7949 = vmatmul.bf16.gmra.mxu0 %v1297
    %v7950 = vpop.f32.mrf.mxu0
    %v7951 = vadd.f32 %v7937, %v7950
    %v7952 = vpop.f32.mrf.mxu0
    %v7953 = vadd.f32 %v7939, %v7952
    %7954 = vdwg.mxu0
    %7955 = vmatpush.bf16.msra.mxu0 %v5146
    %7956 = vmatpush.bf16.msra.mxu0 %v5130
    %7957 = vmatpush.bf16.msra.mxu0 %v5114
    %7958 = vmatpush.bf16.msra.mxu0 %v5098
    %7959 = vmatpush.bf16.msra.mxu0 %v5082
    %7960 = vmatpush.bf16.msra.mxu0 %v5066
    %7961 = vmatpush.bf16.msra.mxu0 %v5050
    %7962 = vmatpush.bf16.msra.mxu0 %v5034
    %7963 = vmatmul.bf16.gmra.mxu0 %v1298
    %v7964 = vpop.f32.mrf.mxu0
    %v7965 = vadd.f32 %v7951, %v7964
    %v7966 = vpop.f32.mrf.mxu0
    %v7967 = vadd.f32 %v7953, %v7966
    %7968 = vdwg.mxu0
    %7969 = vmatpush.bf16.msra.mxu0 %v5274
    %7970 = vmatpush.bf16.msra.mxu0 %v5258
    %7971 = vmatpush.bf16.msra.mxu0 %v5242
    %7972 = vmatpush.bf16.msra.mxu0 %v5226
    %7973 = vmatpush.bf16.msra.mxu0 %v5210
    %7974 = vmatpush.bf16.msra.mxu0 %v5194
    %7975 = vmatpush.bf16.msra.mxu0 %v5178
    %7976 = vmatpush.bf16.msra.mxu0 %v5162
    %7977 = vmatmul.bf16.gmra.mxu0 %v1299
    %v7978 = vpop.f32.mrf.mxu0
    %v7979 = vadd.f32 %v7965, %v7978
    %v7980 = vpop.f32.mrf.mxu0
    %v7981 = vadd.f32 %v7967, %v7980
    %7982 = vdwg.mxu0
    %7983 = vmatpush.bf16.msra.mxu0 %v5402
    %7984 = vmatpush.bf16.msra.mxu0 %v5386
    %7985 = vmatpush.bf16.msra.mxu0 %v5370
    %7986 = vmatpush.bf16.msra.mxu0 %v5354
    %7987 = vmatpush.bf16.msra.mxu0 %v5338
    %7988 = vmatpush.bf16.msra.mxu0 %v5322
    %7989 = vmatpush.bf16.msra.mxu0 %v5306
    %7990 = vmatpush.bf16.msra.mxu0 %v5290
    %7991 = vmatmul.bf16.gmra.mxu0 %v1300
    %v7992 = vpop.f32.mrf.mxu0
    %v7993 = vadd.f32 %v7979, %v7992
    %v7994 = vpop.f32.mrf.mxu0
    %v7995 = vadd.f32 %v7981, %v7994
    %7996 = vdwg.mxu0
    %7997 = vmatpush.bf16.msra.mxu0 %v4507
    %7998 = vmatpush.bf16.msra.mxu0 %v4491
    %7999 = vmatpush.bf16.msra.mxu0 %v4475
    %8000 = vmatpush.bf16.msra.mxu0 %v4459
    %8001 = vmatpush.bf16.msra.mxu0 %v4443
    %8002 = vmatpush.bf16.msra.mxu0 %v4427
    %8003 = vmatpush.bf16.msra.mxu0 %v4411
    %8004 = vmatpush.bf16.msra.mxu0 %v4395
    %8005 = vmatmul.bf16.gmra.mxu0 %v1293
    %v8006 = vpop.f32.mrf.mxu0
    %v8007 = vadd.f32 0.0, %v8006
    %v8008 = vpop.f32.mrf.mxu0
    %v8009 = vadd.f32 0.0, %v8008
    %8010 = vdwg.mxu0
    %8011 = vmatpush.bf16.msra.mxu0 %v4635
    %8012 = vmatpush.bf16.msra.mxu0 %v4619
    %8013 = vmatpush.bf16.msra.mxu0 %v4603
    %8014 = vmatpush.bf16.msra.mxu0 %v4587
    %8015 = vmatpush.bf16.msra.mxu0 %v4571
    %8016 = vmatpush.bf16.msra.mxu0 %v4555
    %8017 = vmatpush.bf16.msra.mxu0 %v4539
    %8018 = vmatpush.bf16.msra.mxu0 %v4523
    %8019 = vmatmul.bf16.gmra.mxu0 %v1294
    %v8020 = vpop.f32.mrf.mxu0
    %v8021 = vadd.f32 %v8007, %v8020
    %v8022 = vpop.f32.mrf.mxu0
    %v8023 = vadd.f32 %v8009, %v8022
    %8024 = vdwg.mxu0
    %8025 = vmatpush.bf16.msra.mxu0 %v4763
    %8026 = vmatpush.bf16.msra.mxu0 %v4747
    %8027 = vmatpush.bf16.msra.mxu0 %v4731
    %8028 = vmatpush.bf16.msra.mxu0 %v4715
    %8029 = vmatpush.bf16.msra.mxu0 %v4699
    %8030 = vmatpush.bf16.msra.mxu0 %v4683
    %8031 = vmatpush.bf16.msra.mxu0 %v4667
    %8032 = vmatpush.bf16.msra.mxu0 %v4651
    %8033 = vmatmul.bf16.gmra.mxu0 %v1295
    %v8034 = vpop.f32.mrf.mxu0
    %v8035 = vadd.f32 %v8021, %v8034
    %v8036 = vpop.f32.mrf.mxu0
    %v8037 = vadd.f32 %v8023, %v8036
    %8038 = vdwg.mxu0
    %8039 = vmatpush.bf16.msra.mxu0 %v4891
    %8040 = vmatpush.bf16.msra.mxu0 %v4875
    %8041 = vmatpush.bf16.msra.mxu0 %v4859
    %8042 = vmatpush.bf16.msra.mxu0 %v4843
    %8043 = vmatpush.bf16.msra.mxu0 %v4827
    %8044 = vmatpush.bf16.msra.mxu0 %v4811
    %8045 = vmatpush.bf16.msra.mxu0 %v4795
    %8046 = vmatpush.bf16.msra.mxu0 %v4779
    %8047 = vmatmul.bf16.gmra.mxu0 %v1296
    %v8048 = vpop.f32.mrf.mxu0
    %v8049 = vadd.f32 %v8035, %v8048
    %v8050 = vpop.f32.mrf.mxu0
    %v8051 = vadd.f32 %v8037, %v8050
    %8052 = vdwg.mxu0
    %8053 = vmatpush.bf16.msra.mxu0 %v5019
    %8054 = vmatpush.bf16.msra.mxu0 %v5003
    %8055 = vmatpush.bf16.msra.mxu0 %v4987
    %8056 = vmatpush.bf16.msra.mxu0 %v4971
    %8057 = vmatpush.bf16.msra.mxu0 %v4955
    %8058 = vmatpush.bf16.msra.mxu0 %v4939
    %8059 = vmatpush.bf16.msra.mxu0 %v4923
    %8060 = vmatpush.bf16.msra.mxu0 %v4907
    %8061 = vmatmul.bf16.gmra.mxu0 %v1297
    %v8062 = vpop.f32.mrf.mxu0
    %v8063 = vadd.f32 %v8049, %v8062
    %v8064 = vpop.f32.mrf.mxu0
    %v8065 = vadd.f32 %v8051, %v8064
    %8066 = vdwg.mxu0
    %8067 = vmatpush.bf16.msra.mxu0 %v5147
    %8068 = vmatpush.bf16.msra.mxu0 %v5131
    %8069 = vmatpush.bf16.msra.mxu0 %v5115
    %8070 = vmatpush.bf16.msra.mxu0 %v5099
    %8071 = vmatpush.bf16.msra.mxu0 %v5083
    %8072 = vmatpush.bf16.msra.mxu0 %v5067
    %8073 = vmatpush.bf16.msra.mxu0 %v5051
    %8074 = vmatpush.bf16.msra.mxu0 %v5035
    %8075 = vmatmul.bf16.gmra.mxu0 %v1298
    %v8076 = vpop.f32.mrf.mxu0
    %v8077 = vadd.f32 %v8063, %v8076
    %v8078 = vpop.f32.mrf.mxu0
    %v8079 = vadd.f32 %v8065, %v8078
    %8080 = vdwg.mxu0
    %8081 = vmatpush.bf16.msra.mxu0 %v5275
    %8082 = vmatpush.bf16.msra.mxu0 %v5259
    %8083 = vmatpush.bf16.msra.mxu0 %v5243
    %8084 = vmatpush.bf16.msra.mxu0 %v5227
    %8085 = vmatpush.bf16.msra.mxu0 %v5211
    %8086 = vmatpush.bf16.msra.mxu0 %v5195
    %8087 = vmatpush.bf16.msra.mxu0 %v5179
    %8088 = vmatpush.bf16.msra.mxu0 %v5163
    %8089 = vmatmul.bf16.gmra.mxu0 %v1299
    %v8090 = vpop.f32.mrf.mxu0
    %v8091 = vadd.f32 %v8077, %v8090
    %v8092 = vpop.f32.mrf.mxu0
    %v8093 = vadd.f32 %v8079, %v8092
    %8094 = vdwg.mxu0
    %8095 = vmatpush.bf16.msra.mxu0 %v5403
    %8096 = vmatpush.bf16.msra.mxu0 %v5387
    %8097 = vmatpush.bf16.msra.mxu0 %v5371
    %8098 = vmatpush.bf16.msra.mxu0 %v5355
    %8099 = vmatpush.bf16.msra.mxu0 %v5339
    %8100 = vmatpush.bf16.msra.mxu0 %v5323
    %8101 = vmatpush.bf16.msra.mxu0 %v5307
    %8102 = vmatpush.bf16.msra.mxu0 %v5291
    %8103 = vmatmul.bf16.gmra.mxu0 %v1300
    %v8104 = vpop.f32.mrf.mxu0
    %v8105 = vadd.f32 %v8091, %v8104
    %v8106 = vpop.f32.mrf.mxu0
    %v8107 = vadd.f32 %v8093, %v8106
    %8108 = vdwg.mxu0
    %8109 = vmatpush.bf16.msra.mxu0 %v4508
    %8110 = vmatpush.bf16.msra.mxu0 %v4492
    %8111 = vmatpush.bf16.msra.mxu0 %v4476
    %8112 = vmatpush.bf16.msra.mxu0 %v4460
    %8113 = vmatpush.bf16.msra.mxu0 %v4444
    %8114 = vmatpush.bf16.msra.mxu0 %v4428
    %8115 = vmatpush.bf16.msra.mxu0 %v4412
    %8116 = vmatpush.bf16.msra.mxu0 %v4396
    %8117 = vmatmul.bf16.gmra.mxu0 %v1293
    %v8118 = vpop.f32.mrf.mxu0
    %v8119 = vadd.f32 0.0, %v8118
    %v8120 = vpop.f32.mrf.mxu0
    %v8121 = vadd.f32 0.0, %v8120
    %8122 = vdwg.mxu0
    %8123 = vmatpush.bf16.msra.mxu0 %v4636
    %8124 = vmatpush.bf16.msra.mxu0 %v4620
    %8125 = vmatpush.bf16.msra.mxu0 %v4604
    %8126 = vmatpush.bf16.msra.mxu0 %v4588
    %8127 = vmatpush.bf16.msra.mxu0 %v4572
    %8128 = vmatpush.bf16.msra.mxu0 %v4556
    %8129 = vmatpush.bf16.msra.mxu0 %v4540
    %8130 = vmatpush.bf16.msra.mxu0 %v4524
    %8131 = vmatmul.bf16.gmra.mxu0 %v1294
    %v8132 = vpop.f32.mrf.mxu0
    %v8133 = vadd.f32 %v8119, %v8132
    %v8134 = vpop.f32.mrf.mxu0
    %v8135 = vadd.f32 %v8121, %v8134
    %8136 = vdwg.mxu0
    %8137 = vmatpush.bf16.msra.mxu0 %v4764
    %8138 = vmatpush.bf16.msra.mxu0 %v4748
    %8139 = vmatpush.bf16.msra.mxu0 %v4732
    %8140 = vmatpush.bf16.msra.mxu0 %v4716
    %8141 = vmatpush.bf16.msra.mxu0 %v4700
    %8142 = vmatpush.bf16.msra.mxu0 %v4684
    %8143 = vmatpush.bf16.msra.mxu0 %v4668
    %8144 = vmatpush.bf16.msra.mxu0 %v4652
    %8145 = vmatmul.bf16.gmra.mxu0 %v1295
    %v8146 = vpop.f32.mrf.mxu0
    %v8147 = vadd.f32 %v8133, %v8146
    %v8148 = vpop.f32.mrf.mxu0
    %v8149 = vadd.f32 %v8135, %v8148
    %8150 = vdwg.mxu0
    %8151 = vmatpush.bf16.msra.mxu0 %v4892
    %8152 = vmatpush.bf16.msra.mxu0 %v4876
    %8153 = vmatpush.bf16.msra.mxu0 %v4860
    %8154 = vmatpush.bf16.msra.mxu0 %v4844
    %8155 = vmatpush.bf16.msra.mxu0 %v4828
    %8156 = vmatpush.bf16.msra.mxu0 %v4812
    %8157 = vmatpush.bf16.msra.mxu0 %v4796
    %8158 = vmatpush.bf16.msra.mxu0 %v4780
    %8159 = vmatmul.bf16.gmra.mxu0 %v1296
    %v8160 = vpop.f32.mrf.mxu0
    %v8161 = vadd.f32 %v8147, %v8160
    %v8162 = vpop.f32.mrf.mxu0
    %v8163 = vadd.f32 %v8149, %v8162
    %8164 = vdwg.mxu0
    %8165 = vmatpush.bf16.msra.mxu0 %v5020
    %8166 = vmatpush.bf16.msra.mxu0 %v5004
    %8167 = vmatpush.bf16.msra.mxu0 %v4988
    %8168 = vmatpush.bf16.msra.mxu0 %v4972
    %8169 = vmatpush.bf16.msra.mxu0 %v4956
    %8170 = vmatpush.bf16.msra.mxu0 %v4940
    %8171 = vmatpush.bf16.msra.mxu0 %v4924
    %8172 = vmatpush.bf16.msra.mxu0 %v4908
    %8173 = vmatmul.bf16.gmra.mxu0 %v1297
    %v8174 = vpop.f32.mrf.mxu0
    %v8175 = vadd.f32 %v8161, %v8174
    %v8176 = vpop.f32.mrf.mxu0
    %v8177 = vadd.f32 %v8163, %v8176
    %8178 = vdwg.mxu0
    %8179 = vmatpush.bf16.msra.mxu0 %v5148
    %8180 = vmatpush.bf16.msra.mxu0 %v5132
    %8181 = vmatpush.bf16.msra.mxu0 %v5116
    %8182 = vmatpush.bf16.msra.mxu0 %v5100
    %8183 = vmatpush.bf16.msra.mxu0 %v5084
    %8184 = vmatpush.bf16.msra.mxu0 %v5068
    %8185 = vmatpush.bf16.msra.mxu0 %v5052
    %8186 = vmatpush.bf16.msra.mxu0 %v5036
    %8187 = vmatmul.bf16.gmra.mxu0 %v1298
    %v8188 = vpop.f32.mrf.mxu0
    %v8189 = vadd.f32 %v8175, %v8188
    %v8190 = vpop.f32.mrf.mxu0
    %v8191 = vadd.f32 %v8177, %v8190
    %8192 = vdwg.mxu0
    %8193 = vmatpush.bf16.msra.mxu0 %v5276
    %8194 = vmatpush.bf16.msra.mxu0 %v5260
    %8195 = vmatpush.bf16.msra.mxu0 %v5244
    %8196 = vmatpush.bf16.msra.mxu0 %v5228
    %8197 = vmatpush.bf16.msra.mxu0 %v5212
    %8198 = vmatpush.bf16.msra.mxu0 %v5196
    %8199 = vmatpush.bf16.msra.mxu0 %v5180
    %8200 = vmatpush.bf16.msra.mxu0 %v5164
    %8201 = vmatmul.bf16.gmra.mxu0 %v1299
    %v8202 = vpop.f32.mrf.mxu0
    %v8203 = vadd.f32 %v8189, %v8202
    %v8204 = vpop.f32.mrf.mxu0
    %v8205 = vadd.f32 %v8191, %v8204
    %8206 = vdwg.mxu0
    %8207 = vmatpush.bf16.msra.mxu0 %v5404
    %8208 = vmatpush.bf16.msra.mxu0 %v5388
    %8209 = vmatpush.bf16.msra.mxu0 %v5372
    %8210 = vmatpush.bf16.msra.mxu0 %v5356
    %8211 = vmatpush.bf16.msra.mxu0 %v5340
    %8212 = vmatpush.bf16.msra.mxu0 %v5324
    %8213 = vmatpush.bf16.msra.mxu0 %v5308
    %8214 = vmatpush.bf16.msra.mxu0 %v5292
    %8215 = vmatmul.bf16.gmra.mxu0 %v1300
    %v8216 = vpop.f32.mrf.mxu0
    %v8217 = vadd.f32 %v8203, %v8216
    %v8218 = vpop.f32.mrf.mxu0
    %v8219 = vadd.f32 %v8205, %v8218
    %8220 = vdwg.mxu0
    %v8221 = vadd.f32 %v205, %v6537
    %v8222 = vadd.f32 %v206, %v6649
    %v8223 = vadd.f32 %v207, %v6761
    %v8224 = vadd.f32 %v208, %v6873
    %v8225 = vadd.f32 %v209, %v6985
    %v8226 = vadd.f32 %v210, %v7097
    %v8227 = vadd.f32 %v211, %v7209
    %v8228 = vadd.f32 %v212, %v7321
    %v8229 = vadd.f32 %v213, %v7433
    %v8230 = vadd.f32 %v214, %v7545
    %v8231 = vadd.f32 %v215, %v7657
    %v8232 = vadd.f32 %v216, %v7769
    %v8233 = vadd.f32 %v217, %v7881
    %v8234 = vadd.f32 %v218, %v7993
    %v8235 = vadd.f32 %v219, %v8105
    %v8236 = vadd.f32 %v220, %v8217
    %v8237 = vadd.f32 %v221, %v6539
    %v8238 = vadd.f32 %v222, %v6651
    %v8239 = vadd.f32 %v223, %v6763
    %v8240 = vadd.f32 %v224, %v6875
    %v8241 = vadd.f32 %v225, %v6987
    %v8242 = vadd.f32 %v226, %v7099
    %v8243 = vadd.f32 %v227, %v7211
    %v8244 = vadd.f32 %v228, %v7323
    %v8245 = vadd.f32 %v229, %v7435
    %v8246 = vadd.f32 %v230, %v7547
    %v8247 = vadd.f32 %v231, %v7659
    %v8248 = vadd.f32 %v232, %v7771
    %v8249 = vadd.f32 %v233, %v7883
    %v8250 = vadd.f32 %v234, %v7995
    %v8251 = vadd.f32 %v235, %v8107
    %v8252 = vadd.f32 %v236, %v8219
    %8253 = vst [vmem:[#allocation2] sm:$0xff] %v8221
    %8254 = vst [vmem:[#allocation2 + $0x8] sm:$0xff] %v8222
    %8255 = vst [vmem:[#allocation2 + $0x10] sm:$0xff] %v8223
    %8256 = vst [vmem:[#allocation2 + $0x18] sm:$0xff] %v8224
    %8257 = vst [vmem:[#allocation2 + $0x20] sm:$0xff] %v8225
    %8258 = vst [vmem:[#allocation2 + $0x28] sm:$0xff] %v8226
    %8259 = vst [vmem:[#allocation2 + $0x30] sm:$0xff] %v8227
    %8260 = vst [vmem:[#allocation2 + $0x38] sm:$0xff] %v8228
    %8261 = vst [vmem:[#allocation2 + $0x40] sm:$0xff] %v8229
    %8262 = vst [vmem:[#allocation2 + $0x48] sm:$0xff] %v8230
    %8263 = vst [vmem:[#allocation2 + $0x50] sm:$0xff] %v8231
    %8264 = vst [vmem:[#allocation2 + $0x58] sm:$0xff] %v8232
    %8265 = vst [vmem:[#allocation2 + $0x60] sm:$0xff] %v8233
    %8266 = vst [vmem:[#allocation2 + $0x68] sm:$0xff] %v8234
    %8267 = vst [vmem:[#allocation2 + $0x70] sm:$0xff] %v8235
    %8268 = vst [vmem:[#allocation2 + $0x78] sm:$0xff] %v8236
    %8269 = vst [vmem:[#allocation2 + $0x80] sm:$0xff] %v8237
    %8270 = vst [vmem:[#allocation2 + $0x88] sm:$0xff] %v8238
    %8271 = vst [vmem:[#allocation2 + $0x90] sm:$0xff] %v8239
    %8272 = vst [vmem:[#allocation2 + $0x98] sm:$0xff] %v8240
    %8273 = vst [vmem:[#allocation2 + $0xa0] sm:$0xff] %v8241
    %8274 = vst [vmem:[#allocation2 + $0xa8] sm:$0xff] %v8242
    %8275 = vst [vmem:[#allocation2 + $0xb0] sm:$0xff] %v8243
    %8276 = vst [vmem:[#allocation2 + $0xb8] sm:$0xff] %v8244
    %8277 = vst [vmem:[#allocation2 + $0xc0] sm:$0xff] %v8245
    %8278 = vst [vmem:[#allocation2 + $0xc8] sm:$0xff] %v8246
    %8279 = vst [vmem:[#allocation2 + $0xd0] sm:$0xff] %v8247
    %8280 = vst [vmem:[#allocation2 + $0xd8] sm:$0xff] %v8248
    %8281 = vst [vmem:[#allocation2 + $0xe0] sm:$0xff] %v8249
    %8282 = vst [vmem:[#allocation2 + $0xe8] sm:$0xff] %v8250
    %8283 = vst [vmem:[#allocation2 + $0xf0] sm:$0xff] %v8251
    %8284 = vst [vmem:[#allocation2 + $0xf8] sm:$0xff] %v8252
    // Predicated region
    $region62: #{tpu_custom_call.1} parent=1 // pred_check
      %p8285 = pneg %p133
    $region63: #{tpu_custom_call.1} parent=1 // pred_check_branch
      %8287 = sbr.rel (%p8285) target = $region65
    $region64: #{tpu_custom_call.1} parent=1 // pred_region
      %v8288 = vld [vmem:[#allocation2] sm:$0xff]
      %v8289 = vld [vmem:[#allocation2 + $0x8] sm:$0xff]
      %v8290 = vld [vmem:[#allocation2 + $0x10] sm:$0xff]
      %v8291 = vld [vmem:[#allocation2 + $0x18] sm:$0xff]
      %v8292 = vld [vmem:[#allocation2 + $0x20] sm:$0xff]
      %v8293 = vld [vmem:[#allocation2 + $0x28] sm:$0xff]
      %v8294 = vld [vmem:[#allocation2 + $0x30] sm:$0xff]
      %v8295 = vld [vmem:[#allocation2 + $0x38] sm:$0xff]
      %v8296 = vld [vmem:[#allocation2 + $0x40] sm:$0xff]
      %v8297 = vld [vmem:[#allocation2 + $0x48] sm:$0xff]
      %v8298 = vld [vmem:[#allocation2 + $0x50] sm:$0xff]
      %v8299 = vld [vmem:[#allocation2 + $0x58] sm:$0xff]
      %v8300 = vld [vmem:[#allocation2 + $0x60] sm:$0xff]
      %v8301 = vld [vmem:[#allocation2 + $0x68] sm:$0xff]
      %v8302 = vld [vmem:[#allocation2 + $0x70] sm:$0xff]
      %v8303 = vld [vmem:[#allocation2 + $0x78] sm:$0xff]
      %v8304 = vld [vmem:[#allocation2 + $0x80] sm:$0xff]
      %v8305 = vld [vmem:[#allocation2 + $0x88] sm:$0xff]
      %v8306 = vld [vmem:[#allocation2 + $0x90] sm:$0xff]
      %v8307 = vld [vmem:[#allocation2 + $0x98] sm:$0xff]
      %v8308 = vld [vmem:[#allocation2 + $0xa0] sm:$0xff]
      %v8309 = vld [vmem:[#allocation2 + $0xa8] sm:$0xff]
      %v8310 = vld [vmem:[#allocation2 + $0xb0] sm:$0xff]
      %v8311 = vld [vmem:[#allocation2 + $0xb8] sm:$0xff]
      %v8312 = vld [vmem:[#allocation2 + $0xc0] sm:$0xff]
      %v8313 = vld [vmem:[#allocation2 + $0xc8] sm:$0xff]
      %v8314 = vld [vmem:[#allocation2 + $0xd0] sm:$0xff]
      %v8315 = vld [vmem:[#allocation2 + $0xd8] sm:$0xff]
      %v8316 = vld [vmem:[#allocation2 + $0xe0] sm:$0xff]
      %v8317 = vld [vmem:[#allocation2 + $0xe8] sm:$0xff]
      %v8318 = vld [vmem:[#allocation2 + $0xf0] sm:$0xff]
      %v8319 = vld [vmem:[#allocation2 + $0xf8] sm:$0xff]
      %v8320 = vpack.c.bf16 %v8304, %v8288
      %v8321 = vpack.c.bf16 %v8305, %v8289
      %v8322 = vpack.c.bf16 %v8306, %v8290
      %v8323 = vpack.c.bf16 %v8307, %v8291
      %v8324 = vpack.c.bf16 %v8308, %v8292
      %v8325 = vpack.c.bf16 %v8309, %v8293
      %v8326 = vpack.c.bf16 %v8310, %v8294
      %v8327 = vpack.c.bf16 %v8311, %v8295
      %v8328 = vpack.c.bf16 %v8312, %v8296
      %v8329 = vpack.c.bf16 %v8313, %v8297
      %v8330 = vpack.c.bf16 %v8314, %v8298
      %v8331 = vpack.c.bf16 %v8315, %v8299
      %v8332 = vpack.c.bf16 %v8316, %v8300
      %v8333 = vpack.c.bf16 %v8317, %v8301
      %v8334 = vpack.c.bf16 %v8318, %v8302
      %v8335 = vpack.c.bf16 %v8319, %v8303
      %v8336 = vld [vmem:[#allocation9] sm:$0xff]
      %v8337 = vld [vmem:[#allocation9 + $0x8] sm:$0xff]
      %v8338 = vld [vmem:[#allocation9 + $0x10] sm:$0xff]
      %v8339 = vld [vmem:[#allocation9 + $0x18] sm:$0xff]
      %v8340 = vld [vmem:[#allocation9 + $0x20] sm:$0xff]
      %v8341 = vld [vmem:[#allocation9 + $0x28] sm:$0xff]
      %v8342 = vld [vmem:[#allocation9 + $0x30] sm:$0xff]
      %v8343 = vld [vmem:[#allocation9 + $0x38] sm:$0xff]
      %v8344 = vld [vmem:[#allocation9 + $0x40] sm:$0xff]
      %v8345 = vld [vmem:[#allocation9 + $0x48] sm:$0xff]
      %v8346 = vld [vmem:[#allocation9 + $0x50] sm:$0xff]
      %v8347 = vld [vmem:[#allocation9 + $0x58] sm:$0xff]
      %v8348 = vld [vmem:[#allocation9 + $0x60] sm:$0xff]
      %v8349 = vld [vmem:[#allocation9 + $0x68] sm:$0xff]
      %v8350 = vld [vmem:[#allocation9 + $0x70] sm:$0xff]
      %v8351 = vld [vmem:[#allocation9 + $0x78] sm:$0xff]
      %v8352 = vld [vmem:[#allocation9 + $0x80] sm:$0xff]
      %v8353 = vld [vmem:[#allocation9 + $0x88] sm:$0xff]
      %v8354 = vld [vmem:[#allocation9 + $0x90] sm:$0xff]
      %v8355 = vld [vmem:[#allocation9 + $0x98] sm:$0xff]
      %v8356 = vld [vmem:[#allocation9 + $0xa0] sm:$0xff]
      %v8357 = vld [vmem:[#allocation9 + $0xa8] sm:$0xff]
      %v8358 = vld [vmem:[#allocation9 + $0xb0] sm:$0xff]
      %v8359 = vld [vmem:[#allocation9 + $0xb8] sm:$0xff]
      %v8360 = vld [vmem:[#allocation9 + $0xc0] sm:$0xff]
      %v8361 = vld [vmem:[#allocation9 + $0xc8] sm:$0xff]
      %v8362 = vld [vmem:[#allocation9 + $0xd0] sm:$0xff]
      %v8363 = vld [vmem:[#allocation9 + $0xd8] sm:$0xff]
      %v8364 = vld [vmem:[#allocation9 + $0xe0] sm:$0xff]
      %v8365 = vld [vmem:[#allocation9 + $0xe8] sm:$0xff]
      %v8366 = vld [vmem:[#allocation9 + $0xf0] sm:$0xff]
      %v8367 = vld [vmem:[#allocation9 + $0xf8] sm:$0xff]
      %v8368 = vld [vmem:[#allocation9 + $0x100] sm:$0xff]
      %v8369 = vld [vmem:[#allocation9 + $0x108] sm:$0xff]
      %v8370 = vld [vmem:[#allocation9 + $0x110] sm:$0xff]
      %v8371 = vld [vmem:[#allocation9 + $0x118] sm:$0xff]
      %v8372 = vld [vmem:[#allocation9 + $0x120] sm:$0xff]
      %v8373 = vld [vmem:[#allocation9 + $0x128] sm:$0xff]
      %v8374 = vld [vmem:[#allocation9 + $0x130] sm:$0xff]
      %v8375 = vld [vmem:[#allocation9 + $0x138] sm:$0xff]
      %v8376 = vld [vmem:[#allocation9 + $0x140] sm:$0xff]
      %v8377 = vld [vmem:[#allocation9 + $0x148] sm:$0xff]
      %v8378 = vld [vmem:[#allocation9 + $0x150] sm:$0xff]
      %v8379 = vld [vmem:[#allocation9 + $0x158] sm:$0xff]
      %v8380 = vld [vmem:[#allocation9 + $0x160] sm:$0xff]
      %v8381 = vld [vmem:[#allocation9 + $0x168] sm:$0xff]
      %v8382 = vld [vmem:[#allocation9 + $0x170] sm:$0xff]
      %v8383 = vld [vmem:[#allocation9 + $0x178] sm:$0xff]
      %v8384 = vld [vmem:[#allocation9 + $0x180] sm:$0xff]
      %v8385 = vld [vmem:[#allocation9 + $0x188] sm:$0xff]
      %v8386 = vld [vmem:[#allocation9 + $0x190] sm:$0xff]
      %v8387 = vld [vmem:[#allocation9 + $0x198] sm:$0xff]
      %v8388 = vld [vmem:[#allocation9 + $0x1a0] sm:$0xff]
      %v8389 = vld [vmem:[#allocation9 + $0x1a8] sm:$0xff]
      %v8390 = vld [vmem:[#allocation9 + $0x1b0] sm:$0xff]
      %v8391 = vld [vmem:[#allocation9 + $0x1b8] sm:$0xff]
      %v8392 = vld [vmem:[#allocation9 + $0x1c0] sm:$0xff]
      %v8393 = vld [vmem:[#allocation9 + $0x1c8] sm:$0xff]
      %v8394 = vld [vmem:[#allocation9 + $0x1d0] sm:$0xff]
      %v8395 = vld [vmem:[#allocation9 + $0x1d8] sm:$0xff]
      %v8396 = vld [vmem:[#allocation9 + $0x1e0] sm:$0xff]
      %v8397 = vld [vmem:[#allocation9 + $0x1e8] sm:$0xff]
      %v8398 = vld [vmem:[#allocation9 + $0x1f0] sm:$0xff]
      %v8399 = vld [vmem:[#allocation9 + $0x1f8] sm:$0xff]
      %v8400 = vld [vmem:[#allocation9 + $0x200] sm:$0xff]
      %v8401 = vld [vmem:[#allocation9 + $0x208] sm:$0xff]
      %v8402 = vld [vmem:[#allocation9 + $0x210] sm:$0xff]
      %v8403 = vld [vmem:[#allocation9 + $0x218] sm:$0xff]
      %v8404 = vld [vmem:[#allocation9 + $0x220] sm:$0xff]
      %v8405 = vld [vmem:[#allocation9 + $0x228] sm:$0xff]
      %v8406 = vld [vmem:[#allocation9 + $0x230] sm:$0xff]
      %v8407 = vld [vmem:[#allocation9 + $0x238] sm:$0xff]
      %v8408 = vld [vmem:[#allocation9 + $0x240] sm:$0xff]
      %v8409 = vld [vmem:[#allocation9 + $0x248] sm:$0xff]
      %v8410 = vld [vmem:[#allocation9 + $0x250] sm:$0xff]
      %v8411 = vld [vmem:[#allocation9 + $0x258] sm:$0xff]
      %v8412 = vld [vmem:[#allocation9 + $0x260] sm:$0xff]
      %v8413 = vld [vmem:[#allocation9 + $0x268] sm:$0xff]
      %v8414 = vld [vmem:[#allocation9 + $0x270] sm:$0xff]
      %v8415 = vld [vmem:[#allocation9 + $0x278] sm:$0xff]
      %v8416 = vld [vmem:[#allocation9 + $0x280] sm:$0xff]
      %v8417 = vld [vmem:[#allocation9 + $0x288] sm:$0xff]
      %v8418 = vld [vmem:[#allocation9 + $0x290] sm:$0xff]
      %v8419 = vld [vmem:[#allocation9 + $0x298] sm:$0xff]
      %v8420 = vld [vmem:[#allocation9 + $0x2a0] sm:$0xff]
      %v8421 = vld [vmem:[#allocation9 + $0x2a8] sm:$0xff]
      %v8422 = vld [vmem:[#allocation9 + $0x2b0] sm:$0xff]
      %v8423 = vld [vmem:[#allocation9 + $0x2b8] sm:$0xff]
      %v8424 = vld [vmem:[#allocation9 + $0x2c0] sm:$0xff]
      %v8425 = vld [vmem:[#allocation9 + $0x2c8] sm:$0xff]
      %v8426 = vld [vmem:[#allocation9 + $0x2d0] sm:$0xff]
      %v8427 = vld [vmem:[#allocation9 + $0x2d8] sm:$0xff]
      %v8428 = vld [vmem:[#allocation9 + $0x2e0] sm:$0xff]
      %v8429 = vld [vmem:[#allocation9 + $0x2e8] sm:$0xff]
      %v8430 = vld [vmem:[#allocation9 + $0x2f0] sm:$0xff]
      %v8431 = vld [vmem:[#allocation9 + $0x2f8] sm:$0xff]
      %v8432 = vld [vmem:[#allocation9 + $0x300] sm:$0xff]
      %v8433 = vld [vmem:[#allocation9 + $0x308] sm:$0xff]
      %v8434 = vld [vmem:[#allocation9 + $0x310] sm:$0xff]
      %v8435 = vld [vmem:[#allocation9 + $0x318] sm:$0xff]
      %v8436 = vld [vmem:[#allocation9 + $0x320] sm:$0xff]
      %v8437 = vld [vmem:[#allocation9 + $0x328] sm:$0xff]
      %v8438 = vld [vmem:[#allocation9 + $0x330] sm:$0xff]
      %v8439 = vld [vmem:[#allocation9 + $0x338] sm:$0xff]
      %v8440 = vld [vmem:[#allocation9 + $0x340] sm:$0xff]
      %v8441 = vld [vmem:[#allocation9 + $0x348] sm:$0xff]
      %v8442 = vld [vmem:[#allocation9 + $0x350] sm:$0xff]
      %v8443 = vld [vmem:[#allocation9 + $0x358] sm:$0xff]
      %v8444 = vld [vmem:[#allocation9 + $0x360] sm:$0xff]
      %v8445 = vld [vmem:[#allocation9 + $0x368] sm:$0xff]
      %v8446 = vld [vmem:[#allocation9 + $0x370] sm:$0xff]
      %v8447 = vld [vmem:[#allocation9 + $0x378] sm:$0xff]
      %v8448 = vld [vmem:[#allocation9 + $0x380] sm:$0xff]
      %v8449 = vld [vmem:[#allocation9 + $0x388] sm:$0xff]
      %v8450 = vld [vmem:[#allocation9 + $0x390] sm:$0xff]
      %v8451 = vld [vmem:[#allocation9 + $0x398] sm:$0xff]
      %v8452 = vld [vmem:[#allocation9 + $0x3a0] sm:$0xff]
      %v8453 = vld [vmem:[#allocation9 + $0x3a8] sm:$0xff]
      %v8454 = vld [vmem:[#allocation9 + $0x3b0] sm:$0xff]
      %v8455 = vld [vmem:[#allocation9 + $0x3b8] sm:$0xff]
      %v8456 = vld [vmem:[#allocation9 + $0x3c0] sm:$0xff]
      %v8457 = vld [vmem:[#allocation9 + $0x3c8] sm:$0xff]
      %v8458 = vld [vmem:[#allocation9 + $0x3d0] sm:$0xff]
      %v8459 = vld [vmem:[#allocation9 + $0x3d8] sm:$0xff]
      %v8460 = vld [vmem:[#allocation9 + $0x3e0] sm:$0xff]
      %v8461 = vld [vmem:[#allocation9 + $0x3e8] sm:$0xff]
      %v8462 = vld [vmem:[#allocation9 + $0x3f0] sm:$0xff]
      %v8463 = vld [vmem:[#allocation9 + $0x3f8] sm:$0xff]
      %v8464 = vld [vmem:[#allocation9 + $0x400] sm:$0xff]
      %v8465 = vld [vmem:[#allocation9 + $0x408] sm:$0xff]
      %v8466 = vld [vmem:[#allocation9 + $0x410] sm:$0xff]
      %v8467 = vld [vmem:[#allocation9 + $0x418] sm:$0xff]
      %v8468 = vld [vmem:[#allocation9 + $0x420] sm:$0xff]
      %v8469 = vld [vmem:[#allocation9 + $0x428] sm:$0xff]
      %v8470 = vld [vmem:[#allocation9 + $0x430] sm:$0xff]
      %v8471 = vld [vmem:[#allocation9 + $0x438] sm:$0xff]
      %v8472 = vld [vmem:[#allocation9 + $0x440] sm:$0xff]
      %v8473 = vld [vmem:[#allocation9 + $0x448] sm:$0xff]
      %v8474 = vld [vmem:[#allocation9 + $0x450] sm:$0xff]
      %v8475 = vld [vmem:[#allocation9 + $0x458] sm:$0xff]
      %v8476 = vld [vmem:[#allocation9 + $0x460] sm:$0xff]
      %v8477 = vld [vmem:[#allocation9 + $0x468] sm:$0xff]
      %v8478 = vld [vmem:[#allocation9 + $0x470] sm:$0xff]
      %v8479 = vld [vmem:[#allocation9 + $0x478] sm:$0xff]
      %v8480 = vld [vmem:[#allocation9 + $0x480] sm:$0xff]
      %v8481 = vld [vmem:[#allocation9 + $0x488] sm:$0xff]
      %v8482 = vld [vmem:[#allocation9 + $0x490] sm:$0xff]
      %v8483 = vld [vmem:[#allocation9 + $0x498] sm:$0xff]
      %v8484 = vld [vmem:[#allocation9 + $0x4a0] sm:$0xff]
      %v8485 = vld [vmem:[#allocation9 + $0x4a8] sm:$0xff]
      %v8486 = vld [vmem:[#allocation9 + $0x4b0] sm:$0xff]
      %v8487 = vld [vmem:[#allocation9 + $0x4b8] sm:$0xff]
      %v8488 = vld [vmem:[#allocation9 + $0x4c0] sm:$0xff]
      %v8489 = vld [vmem:[#allocation9 + $0x4c8] sm:$0xff]
      %v8490 = vld [vmem:[#allocation9 + $0x4d0] sm:$0xff]
      %v8491 = vld [vmem:[#allocation9 + $0x4d8] sm:$0xff]
      %v8492 = vld [vmem:[#allocation9 + $0x4e0] sm:$0xff]
      %v8493 = vld [vmem:[#allocation9 + $0x4e8] sm:$0xff]
      %v8494 = vld [vmem:[#allocation9 + $0x4f0] sm:$0xff]
      %v8495 = vld [vmem:[#allocation9 + $0x4f8] sm:$0xff]
      %v8496 = vld [vmem:[#allocation9 + $0x500] sm:$0xff]
      %v8497 = vld [vmem:[#allocation9 + $0x508] sm:$0xff]
      %v8498 = vld [vmem:[#allocation9 + $0x510] sm:$0xff]
      %v8499 = vld [vmem:[#allocation9 + $0x518] sm:$0xff]
      %v8500 = vld [vmem:[#allocation9 + $0x520] sm:$0xff]
      %v8501 = vld [vmem:[#allocation9 + $0x528] sm:$0xff]
      %v8502 = vld [vmem:[#allocation9 + $0x530] sm:$0xff]
      %v8503 = vld [vmem:[#allocation9 + $0x538] sm:$0xff]
      %v8504 = vld [vmem:[#allocation9 + $0x540] sm:$0xff]
      %v8505 = vld [vmem:[#allocation9 + $0x548] sm:$0xff]
      %v8506 = vld [vmem:[#allocation9 + $0x550] sm:$0xff]
      %v8507 = vld [vmem:[#allocation9 + $0x558] sm:$0xff]
      %v8508 = vld [vmem:[#allocation9 + $0x560] sm:$0xff]
      %v8509 = vld [vmem:[#allocation9 + $0x568] sm:$0xff]
      %v8510 = vld [vmem:[#allocation9 + $0x570] sm:$0xff]
      %v8511 = vld [vmem:[#allocation9 + $0x578] sm:$0xff]
      %v8512 = vld [vmem:[#allocation9 + $0x580] sm:$0xff]
      %v8513 = vld [vmem:[#allocation9 + $0x588] sm:$0xff]
      %v8514 = vld [vmem:[#allocation9 + $0x590] sm:$0xff]
      %v8515 = vld [vmem:[#allocation9 + $0x598] sm:$0xff]
      %v8516 = vld [vmem:[#allocation9 + $0x5a0] sm:$0xff]
      %v8517 = vld [vmem:[#allocation9 + $0x5a8] sm:$0xff]
      %v8518 = vld [vmem:[#allocation9 + $0x5b0] sm:$0xff]
      %v8519 = vld [vmem:[#allocation9 + $0x5b8] sm:$0xff]
      %v8520 = vld [vmem:[#allocation9 + $0x5c0] sm:$0xff]
      %v8521 = vld [vmem:[#allocation9 + $0x5c8] sm:$0xff]
      %v8522 = vld [vmem:[#allocation9 + $0x5d0] sm:$0xff]
      %v8523 = vld [vmem:[#allocation9 + $0x5d8] sm:$0xff]
      %v8524 = vld [vmem:[#allocation9 + $0x5e0] sm:$0xff]
      %v8525 = vld [vmem:[#allocation9 + $0x5e8] sm:$0xff]
      %v8526 = vld [vmem:[#allocation9 + $0x5f0] sm:$0xff]
      %v8527 = vld [vmem:[#allocation9 + $0x5f8] sm:$0xff]
      %v8528 = vld [vmem:[#allocation9 + $0x600] sm:$0xff]
      %v8529 = vld [vmem:[#allocation9 + $0x608] sm:$0xff]
      %v8530 = vld [vmem:[#allocation9 + $0x610] sm:$0xff]
      %v8531 = vld [vmem:[#allocation9 + $0x618] sm:$0xff]
      %v8532 = vld [vmem:[#allocation9 + $0x620] sm:$0xff]
      %v8533 = vld [vmem:[#allocation9 + $0x628] sm:$0xff]
      %v8534 = vld [vmem:[#allocation9 + $0x630] sm:$0xff]
      %v8535 = vld [vmem:[#allocation9 + $0x638] sm:$0xff]
      %v8536 = vld [vmem:[#allocation9 + $0x640] sm:$0xff]
      %v8537 = vld [vmem:[#allocation9 + $0x648] sm:$0xff]
      %v8538 = vld [vmem:[#allocation9 + $0x650] sm:$0xff]
      %v8539 = vld [vmem:[#allocation9 + $0x658] sm:$0xff]
      %v8540 = vld [vmem:[#allocation9 + $0x660] sm:$0xff]
      %v8541 = vld [vmem:[#allocation9 + $0x668] sm:$0xff]
      %v8542 = vld [vmem:[#allocation9 + $0x670] sm:$0xff]
      %v8543 = vld [vmem:[#allocation9 + $0x678] sm:$0xff]
      %v8544 = vld [vmem:[#allocation9 + $0x680] sm:$0xff]
      %v8545 = vld [vmem:[#allocation9 + $0x688] sm:$0xff]
      %v8546 = vld [vmem:[#allocation9 + $0x690] sm:$0xff]
      %v8547 = vld [vmem:[#allocation9 + $0x698] sm:$0xff]
      %v8548 = vld [vmem:[#allocation9 + $0x6a0] sm:$0xff]
      %v8549 = vld [vmem:[#allocation9 + $0x6a8] sm:$0xff]
      %v8550 = vld [vmem:[#allocation9 + $0x6b0] sm:$0xff]
      %v8551 = vld [vmem:[#allocation9 + $0x6b8] sm:$0xff]
      %v8552 = vld [vmem:[#allocation9 + $0x6c0] sm:$0xff]
      %v8553 = vld [vmem:[#allocation9 + $0x6c8] sm:$0xff]
      %v8554 = vld [vmem:[#allocation9 + $0x6d0] sm:$0xff]
      %v8555 = vld [vmem:[#allocation9 + $0x6d8] sm:$0xff]
      %v8556 = vld [vmem:[#allocation9 + $0x6e0] sm:$0xff]
      %v8557 = vld [vmem:[#allocation9 + $0x6e8] sm:$0xff]
      %v8558 = vld [vmem:[#allocation9 + $0x6f0] sm:$0xff]
      %v8559 = vld [vmem:[#allocation9 + $0x6f8] sm:$0xff]
      %v8560 = vld [vmem:[#allocation9 + $0x700] sm:$0xff]
      %v8561 = vld [vmem:[#allocation9 + $0x708] sm:$0xff]
      %v8562 = vld [vmem:[#allocation9 + $0x710] sm:$0xff]
      %v8563 = vld [vmem:[#allocation9 + $0x718] sm:$0xff]
      %v8564 = vld [vmem:[#allocation9 + $0x720] sm:$0xff]
      %v8565 = vld [vmem:[#allocation9 + $0x728] sm:$0xff]
      %v8566 = vld [vmem:[#allocation9 + $0x730] sm:$0xff]
      %v8567 = vld [vmem:[#allocation9 + $0x738] sm:$0xff]
      %v8568 = vld [vmem:[#allocation9 + $0x740] sm:$0xff]
      %v8569 = vld [vmem:[#allocation9 + $0x748] sm:$0xff]
      %v8570 = vld [vmem:[#allocation9 + $0x750] sm:$0xff]
      %v8571 = vld [vmem:[#allocation9 + $0x758] sm:$0xff]
      %v8572 = vld [vmem:[#allocation9 + $0x760] sm:$0xff]
      %v8573 = vld [vmem:[#allocation9 + $0x768] sm:$0xff]
      %v8574 = vld [vmem:[#allocation9 + $0x770] sm:$0xff]
      %v8575 = vld [vmem:[#allocation9 + $0x778] sm:$0xff]
      %v8576 = vld [vmem:[#allocation9 + $0x780] sm:$0xff]
      %v8577 = vld [vmem:[#allocation9 + $0x788] sm:$0xff]
      %v8578 = vld [vmem:[#allocation9 + $0x790] sm:$0xff]
      %v8579 = vld [vmem:[#allocation9 + $0x798] sm:$0xff]
      %v8580 = vld [vmem:[#allocation9 + $0x7a0] sm:$0xff]
      %v8581 = vld [vmem:[#allocation9 + $0x7a8] sm:$0xff]
      %v8582 = vld [vmem:[#allocation9 + $0x7b0] sm:$0xff]
      %v8583 = vld [vmem:[#allocation9 + $0x7b8] sm:$0xff]
      %v8584 = vld [vmem:[#allocation9 + $0x7c0] sm:$0xff]
      %v8585 = vld [vmem:[#allocation9 + $0x7c8] sm:$0xff]
      %v8586 = vld [vmem:[#allocation9 + $0x7d0] sm:$0xff]
      %v8587 = vld [vmem:[#allocation9 + $0x7d8] sm:$0xff]
      %v8588 = vld [vmem:[#allocation9 + $0x7e0] sm:$0xff]
      %v8589 = vld [vmem:[#allocation9 + $0x7e8] sm:$0xff]
      %v8590 = vld [vmem:[#allocation9 + $0x7f0] sm:$0xff]
      %v8591 = vld [vmem:[#allocation9 + $0x7f8] sm:$0xff]
      %v8592 = vld [vmem:[#allocation11] sm:$0x3]
      %v8594 = vperm.slane %v8592, 0
      %v8595 = vperm.slane %v8592, 1
      %v8854 = vunpack.c.l.b16 %v8336
      %v8855 = vunpack.c.h.b16 %v8336
      %v8856 = vunpack.c.l.b16 %v8337
      %v8857 = vunpack.c.h.b16 %v8337
      %v8858 = vunpack.c.l.b16 %v8338
      %v8859 = vunpack.c.h.b16 %v8338
      %v8860 = vunpack.c.l.b16 %v8339
      %v8861 = vunpack.c.h.b16 %v8339
      %v8862 = vunpack.c.l.b16 %v8340
      %v8863 = vunpack.c.h.b16 %v8340
      %v8864 = vunpack.c.l.b16 %v8341
      %v8865 = vunpack.c.h.b16 %v8341
      %v8866 = vunpack.c.l.b16 %v8342
      %v8867 = vunpack.c.h.b16 %v8342
      %v8868 = vunpack.c.l.b16 %v8343
      %v8869 = vunpack.c.h.b16 %v8343
      %v8870 = vunpack.c.l.b16 %v8344
      %v8871 = vunpack.c.h.b16 %v8344
      %v8872 = vunpack.c.l.b16 %v8345
      %v8873 = vunpack.c.h.b16 %v8345
      %v8874 = vunpack.c.l.b16 %v8346
      %v8875 = vunpack.c.h.b16 %v8346
      %v8876 = vunpack.c.l.b16 %v8347
      %v8877 = vunpack.c.h.b16 %v8347
      %v8878 = vunpack.c.l.b16 %v8348
      %v8879 = vunpack.c.h.b16 %v8348
      %v8880 = vunpack.c.l.b16 %v8349
      %v8881 = vunpack.c.h.b16 %v8349
      %v8882 = vunpack.c.l.b16 %v8350
      %v8883 = vunpack.c.h.b16 %v8350
      %v8884 = vunpack.c.l.b16 %v8351
      %v8885 = vunpack.c.h.b16 %v8351
      %v8886 = vunpack.c.l.b16 %v8352
      %v8887 = vunpack.c.h.b16 %v8352
      %v8888 = vunpack.c.l.b16 %v8353
      %v8889 = vunpack.c.h.b16 %v8353
      %v8890 = vunpack.c.l.b16 %v8354
      %v8891 = vunpack.c.h.b16 %v8354
      %v8892 = vunpack.c.l.b16 %v8355
      %v8893 = vunpack.c.h.b16 %v8355
      %v8894 = vunpack.c.l.b16 %v8356
      %v8895 = vunpack.c.h.b16 %v8356
      %v8896 = vunpack.c.l.b16 %v8357
      %v8897 = vunpack.c.h.b16 %v8357
      %v8898 = vunpack.c.l.b16 %v8358
      %v8899 = vunpack.c.h.b16 %v8358
      %v8900 = vunpack.c.l.b16 %v8359
      %v8901 = vunpack.c.h.b16 %v8359
      %v8902 = vunpack.c.l.b16 %v8360
      %v8903 = vunpack.c.h.b16 %v8360
      %v8904 = vunpack.c.l.b16 %v8361
      %v8905 = vunpack.c.h.b16 %v8361
      %v8906 = vunpack.c.l.b16 %v8362
      %v8907 = vunpack.c.h.b16 %v8362
      %v8908 = vunpack.c.l.b16 %v8363
      %v8909 = vunpack.c.h.b16 %v8363
      %v8910 = vunpack.c.l.b16 %v8364
      %v8911 = vunpack.c.h.b16 %v8364
      %v8912 = vunpack.c.l.b16 %v8365
      %v8913 = vunpack.c.h.b16 %v8365
      %v8914 = vunpack.c.l.b16 %v8366
      %v8915 = vunpack.c.h.b16 %v8366
      %v8916 = vunpack.c.l.b16 %v8367
      %v8917 = vunpack.c.h.b16 %v8367
      %v8918 = vunpack.c.l.b16 %v8368
      %v8919 = vunpack.c.h.b16 %v8368
      %v8920 = vunpack.c.l.b16 %v8369
      %v8921 = vunpack.c.h.b16 %v8369
      %v8922 = vunpack.c.l.b16 %v8370
      %v8923 = vunpack.c.h.b16 %v8370
      %v8924 = vunpack.c.l.b16 %v8371
      %v8925 = vunpack.c.h.b16 %v8371
      %v8926 = vunpack.c.l.b16 %v8372
      %v8927 = vunpack.c.h.b16 %v8372
      %v8928 = vunpack.c.l.b16 %v8373
      %v8929 = vunpack.c.h.b16 %v8373
      %v8930 = vunpack.c.l.b16 %v8374
      %v8931 = vunpack.c.h.b16 %v8374
      %v8932 = vunpack.c.l.b16 %v8375
      %v8933 = vunpack.c.h.b16 %v8375
      %v8934 = vunpack.c.l.b16 %v8376
      %v8935 = vunpack.c.h.b16 %v8376
      %v8936 = vunpack.c.l.b16 %v8377
      %v8937 = vunpack.c.h.b16 %v8377
      %v8938 = vunpack.c.l.b16 %v8378
      %v8939 = vunpack.c.h.b16 %v8378
      %v8940 = vunpack.c.l.b16 %v8379
      %v8941 = vunpack.c.h.b16 %v8379
      %v8942 = vunpack.c.l.b16 %v8380
      %v8943 = vunpack.c.h.b16 %v8380
      %v8944 = vunpack.c.l.b16 %v8381
      %v8945 = vunpack.c.h.b16 %v8381
      %v8946 = vunpack.c.l.b16 %v8382
      %v8947 = vunpack.c.h.b16 %v8382
      %v8948 = vunpack.c.l.b16 %v8383
      %v8949 = vunpack.c.h.b16 %v8383
      %v8950 = vunpack.c.l.b16 %v8384
      %v8951 = vunpack.c.h.b16 %v8384
      %v8952 = vunpack.c.l.b16 %v8385
      %v8953 = vunpack.c.h.b16 %v8385
      %v8954 = vunpack.c.l.b16 %v8386
      %v8955 = vunpack.c.h.b16 %v8386
      %v8956 = vunpack.c.l.b16 %v8387
      %v8957 = vunpack.c.h.b16 %v8387
      %v8958 = vunpack.c.l.b16 %v8388
      %v8959 = vunpack.c.h.b16 %v8388
      %v8960 = vunpack.c.l.b16 %v8389
      %v8961 = vunpack.c.h.b16 %v8389
      %v8962 = vunpack.c.l.b16 %v8390
      %v8963 = vunpack.c.h.b16 %v8390
      %v8964 = vunpack.c.l.b16 %v8391
      %v8965 = vunpack.c.h.b16 %v8391
      %v8966 = vunpack.c.l.b16 %v8392
      %v8967 = vunpack.c.h.b16 %v8392
      %v8968 = vunpack.c.l.b16 %v8393
      %v8969 = vunpack.c.h.b16 %v8393
      %v8970 = vunpack.c.l.b16 %v8394
      %v8971 = vunpack.c.h.b16 %v8394
      %v8972 = vunpack.c.l.b16 %v8395
      %v8973 = vunpack.c.h.b16 %v8395
      %v8974 = vunpack.c.l.b16 %v8396
      %v8975 = vunpack.c.h.b16 %v8396
      %v8976 = vunpack.c.l.b16 %v8397
      %v8977 = vunpack.c.h.b16 %v8397
      %v8978 = vunpack.c.l.b16 %v8398
      %v8979 = vunpack.c.h.b16 %v8398
      %v8980 = vunpack.c.l.b16 %v8399
      %v8981 = vunpack.c.h.b16 %v8399
      %v8982 = vunpack.c.l.b16 %v8400
      %v8983 = vunpack.c.h.b16 %v8400
      %v8984 = vunpack.c.l.b16 %v8401
      %v8985 = vunpack.c.h.b16 %v8401
      %v8986 = vunpack.c.l.b16 %v8402
      %v8987 = vunpack.c.h.b16 %v8402
      %v8988 = vunpack.c.l.b16 %v8403
      %v8989 = vunpack.c.h.b16 %v8403
      %v8990 = vunpack.c.l.b16 %v8404
      %v8991 = vunpack.c.h.b16 %v8404
      %v8992 = vunpack.c.l.b16 %v8405
      %v8993 = vunpack.c.h.b16 %v8405
      %v8994 = vunpack.c.l.b16 %v8406
      %v8995 = vunpack.c.h.b16 %v8406
      %v8996 = vunpack.c.l.b16 %v8407
      %v8997 = vunpack.c.h.b16 %v8407
      %v8998 = vunpack.c.l.b16 %v8408
      %v8999 = vunpack.c.h.b16 %v8408
      %v9000 = vunpack.c.l.b16 %v8409
      %v9001 = vunpack.c.h.b16 %v8409
      %v9002 = vunpack.c.l.b16 %v8410
      %v9003 = vunpack.c.h.b16 %v8410
      %v9004 = vunpack.c.l.b16 %v8411
      %v9005 = vunpack.c.h.b16 %v8411
      %v9006 = vunpack.c.l.b16 %v8412
      %v9007 = vunpack.c.h.b16 %v8412
      %v9008 = vunpack.c.l.b16 %v8413
      %v9009 = vunpack.c.h.b16 %v8413
      %v9010 = vunpack.c.l.b16 %v8414
      %v9011 = vunpack.c.h.b16 %v8414
      %v9012 = vunpack.c.l.b16 %v8415
      %v9013 = vunpack.c.h.b16 %v8415
      %v9014 = vunpack.c.l.b16 %v8416
      %v9015 = vunpack.c.h.b16 %v8416
      %v9016 = vunpack.c.l.b16 %v8417
      %v9017 = vunpack.c.h.b16 %v8417
      %v9018 = vunpack.c.l.b16 %v8418
      %v9019 = vunpack.c.h.b16 %v8418
      %v9020 = vunpack.c.l.b16 %v8419
      %v9021 = vunpack.c.h.b16 %v8419
      %v9022 = vunpack.c.l.b16 %v8420
      %v9023 = vunpack.c.h.b16 %v8420
      %v9024 = vunpack.c.l.b16 %v8421
      %v9025 = vunpack.c.h.b16 %v8421
      %v9026 = vunpack.c.l.b16 %v8422
      %v9027 = vunpack.c.h.b16 %v8422
      %v9028 = vunpack.c.l.b16 %v8423
      %v9029 = vunpack.c.h.b16 %v8423
      %v9030 = vunpack.c.l.b16 %v8424
      %v9031 = vunpack.c.h.b16 %v8424
      %v9032 = vunpack.c.l.b16 %v8425
      %v9033 = vunpack.c.h.b16 %v8425
      %v9034 = vunpack.c.l.b16 %v8426
      %v9035 = vunpack.c.h.b16 %v8426
      %v9036 = vunpack.c.l.b16 %v8427
      %v9037 = vunpack.c.h.b16 %v8427
      %v9038 = vunpack.c.l.b16 %v8428
      %v9039 = vunpack.c.h.b16 %v8428
      %v9040 = vunpack.c.l.b16 %v8429
      %v9041 = vunpack.c.h.b16 %v8429
      %v9042 = vunpack.c.l.b16 %v8430
      %v9043 = vunpack.c.h.b16 %v8430
      %v9044 = vunpack.c.l.b16 %v8431
      %v9045 = vunpack.c.h.b16 %v8431
      %v9046 = vunpack.c.l.b16 %v8432
      %v9047 = vunpack.c.h.b16 %v8432
      %v9048 = vunpack.c.l.b16 %v8433
      %v9049 = vunpack.c.h.b16 %v8433
      %v9050 = vunpack.c.l.b16 %v8434
      %v9051 = vunpack.c.h.b16 %v8434
      %v9052 = vunpack.c.l.b16 %v8435
      %v9053 = vunpack.c.h.b16 %v8435
      %v9054 = vunpack.c.l.b16 %v8436
      %v9055 = vunpack.c.h.b16 %v8436
      %v9056 = vunpack.c.l.b16 %v8437
      %v9057 = vunpack.c.h.b16 %v8437
      %v9058 = vunpack.c.l.b16 %v8438
      %v9059 = vunpack.c.h.b16 %v8438
      %v9060 = vunpack.c.l.b16 %v8439
      %v9061 = vunpack.c.h.b16 %v8439
      %v9062 = vunpack.c.l.b16 %v8440
      %v9063 = vunpack.c.h.b16 %v8440
      %v9064 = vunpack.c.l.b16 %v8441
      %v9065 = vunpack.c.h.b16 %v8441
      %v9066 = vunpack.c.l.b16 %v8442
      %v9067 = vunpack.c.h.b16 %v8442
      %v9068 = vunpack.c.l.b16 %v8443
      %v9069 = vunpack.c.h.b16 %v8443
      %v9070 = vunpack.c.l.b16 %v8444
      %v9071 = vunpack.c.h.b16 %v8444
      %v9072 = vunpack.c.l.b16 %v8445
      %v9073 = vunpack.c.h.b16 %v8445
      %v9074 = vunpack.c.l.b16 %v8446
      %v9075 = vunpack.c.h.b16 %v8446
      %v9076 = vunpack.c.l.b16 %v8447
      %v9077 = vunpack.c.h.b16 %v8447
      %v9078 = vunpack.c.l.b16 %v8448
      %v9079 = vunpack.c.h.b16 %v8448
      %v9080 = vunpack.c.l.b16 %v8449
      %v9081 = vunpack.c.h.b16 %v8449
      %v9082 = vunpack.c.l.b16 %v8450
      %v9083 = vunpack.c.h.b16 %v8450
      %v9084 = vunpack.c.l.b16 %v8451
      %v9085 = vunpack.c.h.b16 %v8451
      %v9086 = vunpack.c.l.b16 %v8452
      %v9087 = vunpack.c.h.b16 %v8452
      %v9088 = vunpack.c.l.b16 %v8453
      %v9089 = vunpack.c.h.b16 %v8453
      %v9090 = vunpack.c.l.b16 %v8454
      %v9091 = vunpack.c.h.b16 %v8454
      %v9092 = vunpack.c.l.b16 %v8455
      %v9093 = vunpack.c.h.b16 %v8455
      %v9094 = vunpack.c.l.b16 %v8456
      %v9095 = vunpack.c.h.b16 %v8456
      %v9096 = vunpack.c.l.b16 %v8457
      %v9097 = vunpack.c.h.b16 %v8457
      %v9098 = vunpack.c.l.b16 %v8458
      %v9099 = vunpack.c.h.b16 %v8458
      %v9100 = vunpack.c.l.b16 %v8459
      %v9101 = vunpack.c.h.b16 %v8459
      %v9102 = vunpack.c.l.b16 %v8460
      %v9103 = vunpack.c.h.b16 %v8460
      %v9104 = vunpack.c.l.b16 %v8461
      %v9105 = vunpack.c.h.b16 %v8461
      %v9106 = vunpack.c.l.b16 %v8462
      %v9107 = vunpack.c.h.b16 %v8462
      %v9108 = vunpack.c.l.b16 %v8463
      %v9109 = vunpack.c.h.b16 %v8463
      %v9110 = vunpack.c.l.b16 %v8464
      %v9111 = vunpack.c.h.b16 %v8464
      %v9112 = vunpack.c.l.b16 %v8465
      %v9113 = vunpack.c.h.b16 %v8465
      %v9114 = vunpack.c.l.b16 %v8466
      %v9115 = vunpack.c.h.b16 %v8466
      %v9116 = vunpack.c.l.b16 %v8467
      %v9117 = vunpack.c.h.b16 %v8467
      %v9118 = vunpack.c.l.b16 %v8468
      %v9119 = vunpack.c.h.b16 %v8468
      %v9120 = vunpack.c.l.b16 %v8469
      %v9121 = vunpack.c.h.b16 %v8469
      %v9122 = vunpack.c.l.b16 %v8470
      %v9123 = vunpack.c.h.b16 %v8470
      %v9124 = vunpack.c.l.b16 %v8471
      %v9125 = vunpack.c.h.b16 %v8471
      %v9126 = vunpack.c.l.b16 %v8472
      %v9127 = vunpack.c.h.b16 %v8472
      %v9128 = vunpack.c.l.b16 %v8473
      %v9129 = vunpack.c.h.b16 %v8473
      %v9130 = vunpack.c.l.b16 %v8474
      %v9131 = vunpack.c.h.b16 %v8474
      %v9132 = vunpack.c.l.b16 %v8475
      %v9133 = vunpack.c.h.b16 %v8475
      %v9134 = vunpack.c.l.b16 %v8476
      %v9135 = vunpack.c.h.b16 %v8476
      %v9136 = vunpack.c.l.b16 %v8477
      %v9137 = vunpack.c.h.b16 %v8477
      %v9138 = vunpack.c.l.b16 %v8478
      %v9139 = vunpack.c.h.b16 %v8478
      %v9140 = vunpack.c.l.b16 %v8479
      %v9141 = vunpack.c.h.b16 %v8479
      %v9142 = vunpack.c.l.b16 %v8480
      %v9143 = vunpack.c.h.b16 %v8480
      %v9144 = vunpack.c.l.b16 %v8481
      %v9145 = vunpack.c.h.b16 %v8481
      %v9146 = vunpack.c.l.b16 %v8482
      %v9147 = vunpack.c.h.b16 %v8482
      %v9148 = vunpack.c.l.b16 %v8483
      %v9149 = vunpack.c.h.b16 %v8483
      %v9150 = vunpack.c.l.b16 %v8484
      %v9151 = vunpack.c.h.b16 %v8484
      %v9152 = vunpack.c.l.b16 %v8485
      %v9153 = vunpack.c.h.b16 %v8485
      %v9154 = vunpack.c.l.b16 %v8486
      %v9155 = vunpack.c.h.b16 %v8486
      %v9156 = vunpack.c.l.b16 %v8487
      %v9157 = vunpack.c.h.b16 %v8487
      %v9158 = vunpack.c.l.b16 %v8488
      %v9159 = vunpack.c.h.b16 %v8488
      %v9160 = vunpack.c.l.b16 %v8489
      %v9161 = vunpack.c.h.b16 %v8489
      %v9162 = vunpack.c.l.b16 %v8490
      %v9163 = vunpack.c.h.b16 %v8490
      %v9164 = vunpack.c.l.b16 %v8491
      %v9165 = vunpack.c.h.b16 %v8491
      %v9166 = vunpack.c.l.b16 %v8492
      %v9167 = vunpack.c.h.b16 %v8492
      %v9168 = vunpack.c.l.b16 %v8493
      %v9169 = vunpack.c.h.b16 %v8493
      %v9170 = vunpack.c.l.b16 %v8494
      %v9171 = vunpack.c.h.b16 %v8494
      %v9172 = vunpack.c.l.b16 %v8495
      %v9173 = vunpack.c.h.b16 %v8495
      %v9174 = vunpack.c.l.b16 %v8496
      %v9175 = vunpack.c.h.b16 %v8496
      %v9176 = vunpack.c.l.b16 %v8497
      %v9177 = vunpack.c.h.b16 %v8497
      %v9178 = vunpack.c.l.b16 %v8498
      %v9179 = vunpack.c.h.b16 %v8498
      %v9180 = vunpack.c.l.b16 %v8499
      %v9181 = vunpack.c.h.b16 %v8499
      %v9182 = vunpack.c.l.b16 %v8500
      %v9183 = vunpack.c.h.b16 %v8500
      %v9184 = vunpack.c.l.b16 %v8501
      %v9185 = vunpack.c.h.b16 %v8501
      %v9186 = vunpack.c.l.b16 %v8502
      %v9187 = vunpack.c.h.b16 %v8502
      %v9188 = vunpack.c.l.b16 %v8503
      %v9189 = vunpack.c.h.b16 %v8503
      %v9190 = vunpack.c.l.b16 %v8504
      %v9191 = vunpack.c.h.b16 %v8504
      %v9192 = vunpack.c.l.b16 %v8505
      %v9193 = vunpack.c.h.b16 %v8505
      %v9194 = vunpack.c.l.b16 %v8506
      %v9195 = vunpack.c.h.b16 %v8506
      %v9196 = vunpack.c.l.b16 %v8507
      %v9197 = vunpack.c.h.b16 %v8507
      %v9198 = vunpack.c.l.b16 %v8508
      %v9199 = vunpack.c.h.b16 %v8508
      %v9200 = vunpack.c.l.b16 %v8509
      %v9201 = vunpack.c.h.b16 %v8509
      %v9202 = vunpack.c.l.b16 %v8510
      %v9203 = vunpack.c.h.b16 %v8510
      %v9204 = vunpack.c.l.b16 %v8511
      %v9205 = vunpack.c.h.b16 %v8511
      %v9206 = vunpack.c.l.b16 %v8512
      %v9207 = vunpack.c.h.b16 %v8512
      %v9208 = vunpack.c.l.b16 %v8513
      %v9209 = vunpack.c.h.b16 %v8513
      %v9210 = vunpack.c.l.b16 %v8514
      %v9211 = vunpack.c.h.b16 %v8514
      %v9212 = vunpack.c.l.b16 %v8515
      %v9213 = vunpack.c.h.b16 %v8515
      %v9214 = vunpack.c.l.b16 %v8516
      %v9215 = vunpack.c.h.b16 %v8516
      %v9216 = vunpack.c.l.b16 %v8517
      %v9217 = vunpack.c.h.b16 %v8517
      %v9218 = vunpack.c.l.b16 %v8518
      %v9219 = vunpack.c.h.b16 %v8518
      %v9220 = vunpack.c.l.b16 %v8519
      %v9221 = vunpack.c.h.b16 %v8519
      %v9222 = vunpack.c.l.b16 %v8520
      %v9223 = vunpack.c.h.b16 %v8520
      %v9224 = vunpack.c.l.b16 %v8521
      %v9225 = vunpack.c.h.b16 %v8521
      %v9226 = vunpack.c.l.b16 %v8522
      %v9227 = vunpack.c.h.b16 %v8522
      %v9228 = vunpack.c.l.b16 %v8523
      %v9229 = vunpack.c.h.b16 %v8523
      %v9230 = vunpack.c.l.b16 %v8524
      %v9231 = vunpack.c.h.b16 %v8524
      %v9232 = vunpack.c.l.b16 %v8525
      %v9233 = vunpack.c.h.b16 %v8525
      %v9234 = vunpack.c.l.b16 %v8526
      %v9235 = vunpack.c.h.b16 %v8526
      %v9236 = vunpack.c.l.b16 %v8527
      %v9237 = vunpack.c.h.b16 %v8527
      %v9238 = vunpack.c.l.b16 %v8528
      %v9239 = vunpack.c.h.b16 %v8528
      %v9240 = vunpack.c.l.b16 %v8529
      %v9241 = vunpack.c.h.b16 %v8529
      %v9242 = vunpack.c.l.b16 %v8530
      %v9243 = vunpack.c.h.b16 %v8530
      %v9244 = vunpack.c.l.b16 %v8531
      %v9245 = vunpack.c.h.b16 %v8531
      %v9246 = vunpack.c.l.b16 %v8532
      %v9247 = vunpack.c.h.b16 %v8532
      %v9248 = vunpack.c.l.b16 %v8533
      %v9249 = vunpack.c.h.b16 %v8533
      %v9250 = vunpack.c.l.b16 %v8534
      %v9251 = vunpack.c.h.b16 %v8534
      %v9252 = vunpack.c.l.b16 %v8535
      %v9253 = vunpack.c.h.b16 %v8535
      %v9254 = vunpack.c.l.b16 %v8536
      %v9255 = vunpack.c.h.b16 %v8536
      %v9256 = vunpack.c.l.b16 %v8537
      %v9257 = vunpack.c.h.b16 %v8537
      %v9258 = vunpack.c.l.b16 %v8538
      %v9259 = vunpack.c.h.b16 %v8538
      %v9260 = vunpack.c.l.b16 %v8539
      %v9261 = vunpack.c.h.b16 %v8539
      %v9262 = vunpack.c.l.b16 %v8540
      %v9263 = vunpack.c.h.b16 %v8540
      %v9264 = vunpack.c.l.b16 %v8541
      %v9265 = vunpack.c.h.b16 %v8541
      %v9266 = vunpack.c.l.b16 %v8542
      %v9267 = vunpack.c.h.b16 %v8542
      %v9268 = vunpack.c.l.b16 %v8543
      %v9269 = vunpack.c.h.b16 %v8543
      %v9270 = vunpack.c.l.b16 %v8544
      %v9271 = vunpack.c.h.b16 %v8544
      %v9272 = vunpack.c.l.b16 %v8545
      %v9273 = vunpack.c.h.b16 %v8545
      %v9274 = vunpack.c.l.b16 %v8546
      %v9275 = vunpack.c.h.b16 %v8546
      %v9276 = vunpack.c.l.b16 %v8547
      %v9277 = vunpack.c.h.b16 %v8547
      %v9278 = vunpack.c.l.b16 %v8548
      %v9279 = vunpack.c.h.b16 %v8548
      %v9280 = vunpack.c.l.b16 %v8549
      %v9281 = vunpack.c.h.b16 %v8549
      %v9282 = vunpack.c.l.b16 %v8550
      %v9283 = vunpack.c.h.b16 %v8550
      %v9284 = vunpack.c.l.b16 %v8551
      %v9285 = vunpack.c.h.b16 %v8551
      %v9286 = vunpack.c.l.b16 %v8552
      %v9287 = vunpack.c.h.b16 %v8552
      %v9288 = vunpack.c.l.b16 %v8553
      %v9289 = vunpack.c.h.b16 %v8553
      %v9290 = vunpack.c.l.b16 %v8554
      %v9291 = vunpack.c.h.b16 %v8554
      %v9292 = vunpack.c.l.b16 %v8555
      %v9293 = vunpack.c.h.b16 %v8555
      %v9294 = vunpack.c.l.b16 %v8556
      %v9295 = vunpack.c.h.b16 %v8556
      %v9296 = vunpack.c.l.b16 %v8557
      %v9297 = vunpack.c.h.b16 %v8557
      %v9298 = vunpack.c.l.b16 %v8558
      %v9299 = vunpack.c.h.b16 %v8558
      %v9300 = vunpack.c.l.b16 %v8559
      %v9301 = vunpack.c.h.b16 %v8559
      %v9302 = vunpack.c.l.b16 %v8560
      %v9303 = vunpack.c.h.b16 %v8560
      %v9304 = vunpack.c.l.b16 %v8561
      %v9305 = vunpack.c.h.b16 %v8561
      %v9306 = vunpack.c.l.b16 %v8562
      %v9307 = vunpack.c.h.b16 %v8562
      %v9308 = vunpack.c.l.b16 %v8563
      %v9309 = vunpack.c.h.b16 %v8563
      %v9310 = vunpack.c.l.b16 %v8564
      %v9311 = vunpack.c.h.b16 %v8564
      %v9312 = vunpack.c.l.b16 %v8565
      %v9313 = vunpack.c.h.b16 %v8565
      %v9314 = vunpack.c.l.b16 %v8566
      %v9315 = vunpack.c.h.b16 %v8566
      %v9316 = vunpack.c.l.b16 %v8567
      %v9317 = vunpack.c.h.b16 %v8567
      %v9318 = vunpack.c.l.b16 %v8568
      %v9319 = vunpack.c.h.b16 %v8568
      %v9320 = vunpack.c.l.b16 %v8569
      %v9321 = vunpack.c.h.b16 %v8569
      %v9322 = vunpack.c.l.b16 %v8570
      %v9323 = vunpack.c.h.b16 %v8570
      %v9324 = vunpack.c.l.b16 %v8571
      %v9325 = vunpack.c.h.b16 %v8571
      %v9326 = vunpack.c.l.b16 %v8572
      %v9327 = vunpack.c.h.b16 %v8572
      %v9328 = vunpack.c.l.b16 %v8573
      %v9329 = vunpack.c.h.b16 %v8573
      %v9330 = vunpack.c.l.b16 %v8574
      %v9331 = vunpack.c.h.b16 %v8574
      %v9332 = vunpack.c.l.b16 %v8575
      %v9333 = vunpack.c.h.b16 %v8575
      %v9334 = vunpack.c.l.b16 %v8576
      %v9335 = vunpack.c.h.b16 %v8576
      %v9336 = vunpack.c.l.b16 %v8577
      %v9337 = vunpack.c.h.b16 %v8577
      %v9338 = vunpack.c.l.b16 %v8578
      %v9339 = vunpack.c.h.b16 %v8578
      %v9340 = vunpack.c.l.b16 %v8579
      %v9341 = vunpack.c.h.b16 %v8579
      %v9342 = vunpack.c.l.b16 %v8580
      %v9343 = vunpack.c.h.b16 %v8580
      %v9344 = vunpack.c.l.b16 %v8581
      %v9345 = vunpack.c.h.b16 %v8581
      %v9346 = vunpack.c.l.b16 %v8582
      %v9347 = vunpack.c.h.b16 %v8582
      %v9348 = vunpack.c.l.b16 %v8583
      %v9349 = vunpack.c.h.b16 %v8583
      %v9350 = vunpack.c.l.b16 %v8584
      %v9351 = vunpack.c.h.b16 %v8584
      %v9352 = vunpack.c.l.b16 %v8585
      %v9353 = vunpack.c.h.b16 %v8585
      %v9354 = vunpack.c.l.b16 %v8586
      %v9355 = vunpack.c.h.b16 %v8586
      %v9356 = vunpack.c.l.b16 %v8587
      %v9357 = vunpack.c.h.b16 %v8587
      %v9358 = vunpack.c.l.b16 %v8588
      %v9359 = vunpack.c.h.b16 %v8588
      %v9360 = vunpack.c.l.b16 %v8589
      %v9361 = vunpack.c.h.b16 %v8589
      %v9362 = vunpack.c.l.b16 %v8590
      %v9363 = vunpack.c.h.b16 %v8590
      %v9364 = vunpack.c.l.b16 %v8591
      %v9365 = vunpack.c.h.b16 %v8591
      %v9366 = vpack.c.b16 %v8856, %v8854
      %v9367 = vpack.c.b16 %v8857, %v8855
      %v9368 = vpack.c.b16 %v8860, %v8858
      %v9369 = vpack.c.b16 %v8861, %v8859
      %v9370 = vpack.c.b16 %v8864, %v8862
      %v9371 = vpack.c.b16 %v8865, %v8863
      %v9372 = vpack.c.b16 %v8868, %v8866
      %v9373 = vpack.c.b16 %v8869, %v8867
      %v9374 = vpack.c.b16 %v8872, %v8870
      %v9375 = vpack.c.b16 %v8873, %v8871
      %v9376 = vpack.c.b16 %v8876, %v8874
      %v9377 = vpack.c.b16 %v8877, %v8875
      %v9378 = vpack.c.b16 %v8880, %v8878
      %v9379 = vpack.c.b16 %v8881, %v8879
      %v9380 = vpack.c.b16 %v8884, %v8882
      %v9381 = vpack.c.b16 %v8885, %v8883
      %v9382 = vpack.c.b16 %v8888, %v8886
      %v9383 = vpack.c.b16 %v8889, %v8887
      %v9384 = vpack.c.b16 %v8892, %v8890
      %v9385 = vpack.c.b16 %v8893, %v8891
      %v9386 = vpack.c.b16 %v8896, %v8894
      %v9387 = vpack.c.b16 %v8897, %v8895
      %v9388 = vpack.c.b16 %v8900, %v8898
      %v9389 = vpack.c.b16 %v8901, %v8899
      %v9390 = vpack.c.b16 %v8904, %v8902
      %v9391 = vpack.c.b16 %v8905, %v8903
      %v9392 = vpack.c.b16 %v8908, %v8906
      %v9393 = vpack.c.b16 %v8909, %v8907
      %v9394 = vpack.c.b16 %v8912, %v8910
      %v9395 = vpack.c.b16 %v8913, %v8911
      %v9396 = vpack.c.b16 %v8916, %v8914
      %v9397 = vpack.c.b16 %v8917, %v8915
      %v9398 = vpack.c.b16 %v8920, %v8918
      %v9399 = vpack.c.b16 %v8921, %v8919
      %v9400 = vpack.c.b16 %v8924, %v8922
      %v9401 = vpack.c.b16 %v8925, %v8923
      %v9402 = vpack.c.b16 %v8928, %v8926
      %v9403 = vpack.c.b16 %v8929, %v8927
      %v9404 = vpack.c.b16 %v8932, %v8930
      %v9405 = vpack.c.b16 %v8933, %v8931
      %v9406 = vpack.c.b16 %v8936, %v8934
      %v9407 = vpack.c.b16 %v8937, %v8935
      %v9408 = vpack.c.b16 %v8940, %v8938
      %v9409 = vpack.c.b16 %v8941, %v8939
      %v9410 = vpack.c.b16 %v8944, %v8942
      %v9411 = vpack.c.b16 %v8945, %v8943
      %v9412 = vpack.c.b16 %v8948, %v8946
      %v9413 = vpack.c.b16 %v8949, %v8947
      %v9414 = vpack.c.b16 %v8952, %v8950
      %v9415 = vpack.c.b16 %v8953, %v8951
      %v9416 = vpack.c.b16 %v8956, %v8954
      %v9417 = vpack.c.b16 %v8957, %v8955
      %v9418 = vpack.c.b16 %v8960, %v8958
      %v9419 = vpack.c.b16 %v8961, %v8959
      %v9420 = vpack.c.b16 %v8964, %v8962
      %v9421 = vpack.c.b16 %v8965, %v8963
      %v9422 = vpack.c.b16 %v8968, %v8966
      %v9423 = vpack.c.b16 %v8969, %v8967
      %v9424 = vpack.c.b16 %v8972, %v8970
      %v9425 = vpack.c.b16 %v8973, %v8971
      %v9426 = vpack.c.b16 %v8976, %v8974
      %v9427 = vpack.c.b16 %v8977, %v8975
      %v9428 = vpack.c.b16 %v8980, %v8978
      %v9429 = vpack.c.b16 %v8981, %v8979
      %v9430 = vpack.c.b16 %v8984, %v8982
      %v9431 = vpack.c.b16 %v8985, %v8983
      %v9432 = vpack.c.b16 %v8988, %v8986
      %v9433 = vpack.c.b16 %v8989, %v8987
      %v9434 = vpack.c.b16 %v8992, %v8990
      %v9435 = vpack.c.b16 %v8993, %v8991
      %v9436 = vpack.c.b16 %v8996, %v8994
      %v9437 = vpack.c.b16 %v8997, %v8995
      %v9438 = vpack.c.b16 %v9000, %v8998
      %v9439 = vpack.c.b16 %v9001, %v8999
      %v9440 = vpack.c.b16 %v9004, %v9002
      %v9441 = vpack.c.b16 %v9005, %v9003
      %v9442 = vpack.c.b16 %v9008, %v9006
      %v9443 = vpack.c.b16 %v9009, %v9007
      %v9444 = vpack.c.b16 %v9012, %v9010
      %v9445 = vpack.c.b16 %v9013, %v9011
      %v9446 = vpack.c.b16 %v9016, %v9014
      %v9447 = vpack.c.b16 %v9017, %v9015
      %v9448 = vpack.c.b16 %v9020, %v9018
      %v9449 = vpack.c.b16 %v9021, %v9019
      %v9450 = vpack.c.b16 %v9024, %v9022
      %v9451 = vpack.c.b16 %v9025, %v9023
      %v9452 = vpack.c.b16 %v9028, %v9026
      %v9453 = vpack.c.b16 %v9029, %v9027
      %v9454 = vpack.c.b16 %v9032, %v9030
      %v9455 = vpack.c.b16 %v9033, %v9031
      %v9456 = vpack.c.b16 %v9036, %v9034
      %v9457 = vpack.c.b16 %v9037, %v9035
      %v9458 = vpack.c.b16 %v9040, %v9038
      %v9459 = vpack.c.b16 %v9041, %v9039
      %v9460 = vpack.c.b16 %v9044, %v9042
      %v9461 = vpack.c.b16 %v9045, %v9043
      %v9462 = vpack.c.b16 %v9048, %v9046
      %v9463 = vpack.c.b16 %v9049, %v9047
      %v9464 = vpack.c.b16 %v9052, %v9050
      %v9465 = vpack.c.b16 %v9053, %v9051
      %v9466 = vpack.c.b16 %v9056, %v9054
      %v9467 = vpack.c.b16 %v9057, %v9055
      %v9468 = vpack.c.b16 %v9060, %v9058
      %v9469 = vpack.c.b16 %v9061, %v9059
      %v9470 = vpack.c.b16 %v9064, %v9062
      %v9471 = vpack.c.b16 %v9065, %v9063
      %v9472 = vpack.c.b16 %v9068, %v9066
      %v9473 = vpack.c.b16 %v9069, %v9067
      %v9474 = vpack.c.b16 %v9072, %v9070
      %v9475 = vpack.c.b16 %v9073, %v9071
      %v9476 = vpack.c.b16 %v9076, %v9074
      %v9477 = vpack.c.b16 %v9077, %v9075
      %v9478 = vpack.c.b16 %v9080, %v9078
      %v9479 = vpack.c.b16 %v9081, %v9079
      %v9480 = vpack.c.b16 %v9084, %v9082
      %v9481 = vpack.c.b16 %v9085, %v9083
      %v9482 = vpack.c.b16 %v9088, %v9086
      %v9483 = vpack.c.b16 %v9089, %v9087
      %v9484 = vpack.c.b16 %v9092, %v9090
      %v9485 = vpack.c.b16 %v9093, %v9091
      %v9486 = vpack.c.b16 %v9096, %v9094
      %v9487 = vpack.c.b16 %v9097, %v9095
      %v9488 = vpack.c.b16 %v9100, %v9098
      %v9489 = vpack.c.b16 %v9101, %v9099
      %v9490 = vpack.c.b16 %v9104, %v9102
      %v9491 = vpack.c.b16 %v9105, %v9103
      %v9492 = vpack.c.b16 %v9108, %v9106
      %v9493 = vpack.c.b16 %v9109, %v9107
      %v9494 = vpack.c.b16 %v9112, %v9110
      %v9495 = vpack.c.b16 %v9113, %v9111
      %v9496 = vpack.c.b16 %v9116, %v9114
      %v9497 = vpack.c.b16 %v9117, %v9115
      %v9498 = vpack.c.b16 %v9120, %v9118
      %v9499 = vpack.c.b16 %v9121, %v9119
      %v9500 = vpack.c.b16 %v9124, %v9122
      %v9501 = vpack.c.b16 %v9125, %v9123
      %v9502 = vpack.c.b16 %v9128, %v9126
      %v9503 = vpack.c.b16 %v9129, %v9127
      %v9504 = vpack.c.b16 %v9132, %v9130
      %v9505 = vpack.c.b16 %v9133, %v9131
      %v9506 = vpack.c.b16 %v9136, %v9134
      %v9507 = vpack.c.b16 %v9137, %v9135
      %v9508 = vpack.c.b16 %v9140, %v9138
      %v9509 = vpack.c.b16 %v9141, %v9139
      %v9510 = vpack.c.b16 %v9144, %v9142
      %v9511 = vpack.c.b16 %v9145, %v9143
      %v9512 = vpack.c.b16 %v9148, %v9146
      %v9513 = vpack.c.b16 %v9149, %v9147
      %v9514 = vpack.c.b16 %v9152, %v9150
      %v9515 = vpack.c.b16 %v9153, %v9151
      %v9516 = vpack.c.b16 %v9156, %v9154
      %v9517 = vpack.c.b16 %v9157, %v9155
      %v9518 = vpack.c.b16 %v9160, %v9158
      %v9519 = vpack.c.b16 %v9161, %v9159
      %v9520 = vpack.c.b16 %v9164, %v9162
      %v9521 = vpack.c.b16 %v9165, %v9163
      %v9522 = vpack.c.b16 %v9168, %v9166
      %v9523 = vpack.c.b16 %v9169, %v9167
      %v9524 = vpack.c.b16 %v9172, %v9170
      %v9525 = vpack.c.b16 %v9173, %v9171
      %v9526 = vpack.c.b16 %v9176, %v9174
      %v9527 = vpack.c.b16 %v9177, %v9175
      %v9528 = vpack.c.b16 %v9180, %v9178
      %v9529 = vpack.c.b16 %v9181, %v9179
      %v9530 = vpack.c.b16 %v9184, %v9182
      %v9531 = vpack.c.b16 %v9185, %v9183
      %v9532 = vpack.c.b16 %v9188, %v9186
      %v9533 = vpack.c.b16 %v9189, %v9187
      %v9534 = vpack.c.b16 %v9192, %v9190
      %v9535 = vpack.c.b16 %v9193, %v9191
      %v9536 = vpack.c.b16 %v9196, %v9194
      %v9537 = vpack.c.b16 %v9197, %v9195
      %v9538 = vpack.c.b16 %v9200, %v9198
      %v9539 = vpack.c.b16 %v9201, %v9199
      %v9540 = vpack.c.b16 %v9204, %v9202
      %v9541 = vpack.c.b16 %v9205, %v9203
      %v9542 = vpack.c.b16 %v9208, %v9206
      %v9543 = vpack.c.b16 %v9209, %v9207
      %v9544 = vpack.c.b16 %v9212, %v9210
      %v9545 = vpack.c.b16 %v9213, %v9211
      %v9546 = vpack.c.b16 %v9216, %v9214
      %v9547 = vpack.c.b16 %v9217, %v9215
      %v9548 = vpack.c.b16 %v9220, %v9218
      %v9549 = vpack.c.b16 %v9221, %v9219
      %v9550 = vpack.c.b16 %v9224, %v9222
      %v9551 = vpack.c.b16 %v9225, %v9223
      %v9552 = vpack.c.b16 %v9228, %v9226
      %v9553 = vpack.c.b16 %v9229, %v9227
      %v9554 = vpack.c.b16 %v9232, %v9230
      %v9555 = vpack.c.b16 %v9233, %v9231
      %v9556 = vpack.c.b16 %v9236, %v9234
      %v9557 = vpack.c.b16 %v9237, %v9235
      %v9558 = vpack.c.b16 %v9240, %v9238
      %v9559 = vpack.c.b16 %v9241, %v9239
      %v9560 = vpack.c.b16 %v9244, %v9242
      %v9561 = vpack.c.b16 %v9245, %v9243
      %v9562 = vpack.c.b16 %v9248, %v9246
      %v9563 = vpack.c.b16 %v9249, %v9247
      %v9564 = vpack.c.b16 %v9252, %v9250
      %v9565 = vpack.c.b16 %v9253, %v9251
      %v9566 = vpack.c.b16 %v9256, %v9254
      %v9567 = vpack.c.b16 %v9257, %v9255
      %v9568 = vpack.c.b16 %v9260, %v9258
      %v9569 = vpack.c.b16 %v9261, %v9259
      %v9570 = vpack.c.b16 %v9264, %v9262
      %v9571 = vpack.c.b16 %v9265, %v9263
      %v9572 = vpack.c.b16 %v9268, %v9266
      %v9573 = vpack.c.b16 %v9269, %v9267
      %v9574 = vpack.c.b16 %v9272, %v9270
      %v9575 = vpack.c.b16 %v9273, %v9271
      %v9576 = vpack.c.b16 %v9276, %v9274
      %v9577 = vpack.c.b16 %v9277, %v9275
      %v9578 = vpack.c.b16 %v9280, %v9278
      %v9579 = vpack.c.b16 %v9281, %v9279
      %v9580 = vpack.c.b16 %v9284, %v9282
      %v9581 = vpack.c.b16 %v9285, %v9283
      %v9582 = vpack.c.b16 %v9288, %v9286
      %v9583 = vpack.c.b16 %v9289, %v9287
      %v9584 = vpack.c.b16 %v9292, %v9290
      %v9585 = vpack.c.b16 %v9293, %v9291
      %v9586 = vpack.c.b16 %v9296, %v9294
      %v9587 = vpack.c.b16 %v9297, %v9295
      %v9588 = vpack.c.b16 %v9300, %v9298
      %v9589 = vpack.c.b16 %v9301, %v9299
      %v9590 = vpack.c.b16 %v9304, %v9302
      %v9591 = vpack.c.b16 %v9305, %v9303
      %v9592 = vpack.c.b16 %v9308, %v9306
      %v9593 = vpack.c.b16 %v9309, %v9307
      %v9594 = vpack.c.b16 %v9312, %v9310
      %v9595 = vpack.c.b16 %v9313, %v9311
      %v9596 = vpack.c.b16 %v9316, %v9314
      %v9597 = vpack.c.b16 %v9317, %v9315
      %v9598 = vpack.c.b16 %v9320, %v9318
      %v9599 = vpack.c.b16 %v9321, %v9319
      %v9600 = vpack.c.b16 %v9324, %v9322
      %v9601 = vpack.c.b16 %v9325, %v9323
      %v9602 = vpack.c.b16 %v9328, %v9326
      %v9603 = vpack.c.b16 %v9329, %v9327
      %v9604 = vpack.c.b16 %v9332, %v9330
      %v9605 = vpack.c.b16 %v9333, %v9331
      %v9606 = vpack.c.b16 %v9336, %v9334
      %v9607 = vpack.c.b16 %v9337, %v9335
      %v9608 = vpack.c.b16 %v9340, %v9338
      %v9609 = vpack.c.b16 %v9341, %v9339
      %v9610 = vpack.c.b16 %v9344, %v9342
      %v9611 = vpack.c.b16 %v9345, %v9343
      %v9612 = vpack.c.b16 %v9348, %v9346
      %v9613 = vpack.c.b16 %v9349, %v9347
      %v9614 = vpack.c.b16 %v9352, %v9350
      %v9615 = vpack.c.b16 %v9353, %v9351
      %v9616 = vpack.c.b16 %v9356, %v9354
      %v9617 = vpack.c.b16 %v9357, %v9355
      %v9618 = vpack.c.b16 %v9360, %v9358
      %v9619 = vpack.c.b16 %v9361, %v9359
      %v9620 = vpack.c.b16 %v9364, %v9362
      %v9621 = vpack.c.b16 %v9365, %v9363
      %9878 = vmatpush.bf16.msra.mxu0 %v9380
      %9879 = vmatpush.bf16.msra.mxu0 %v9378
      %9880 = vmatpush.bf16.msra.mxu0 %v9376
      %9881 = vmatpush.bf16.msra.mxu0 %v9374
      %9882 = vmatpush.bf16.msra.mxu0 %v9372
      %9883 = vmatpush.bf16.msra.mxu0 %v9370
      %9884 = vmatpush.bf16.msra.mxu0 %v9368
      %9885 = vmatpush.bf16.msra.mxu0 %v9366
      %9886 = vmatmul.bf16.gmra.mxu0 %v8320
      %v9887 = vpop.f32.mrf.mxu0
      %v9888 = vadd.f32 %v8594, %v9887
      %v9889 = vpop.f32.mrf.mxu0
      %v9890 = vadd.f32 %v8594, %v9889
      %9891 = vdwg.mxu0
      %9892 = vmatpush.bf16.msra.mxu0 %v9396
      %9893 = vmatpush.bf16.msra.mxu0 %v9394
      %9894 = vmatpush.bf16.msra.mxu0 %v9392
      %9895 = vmatpush.bf16.msra.mxu0 %v9390
      %9896 = vmatpush.bf16.msra.mxu0 %v9388
      %9897 = vmatpush.bf16.msra.mxu0 %v9386
      %9898 = vmatpush.bf16.msra.mxu0 %v9384
      %9899 = vmatpush.bf16.msra.mxu0 %v9382
      %9900 = vmatmul.bf16.gmra.mxu0 %v8321
      %v9901 = vpop.f32.mrf.mxu0
      %v9902 = vadd.f32 %v9888, %v9901
      %v9903 = vpop.f32.mrf.mxu0
      %v9904 = vadd.f32 %v9890, %v9903
      %9905 = vdwg.mxu0
      %9906 = vmatpush.bf16.msra.mxu0 %v9412
      %9907 = vmatpush.bf16.msra.mxu0 %v9410
      %9908 = vmatpush.bf16.msra.mxu0 %v9408
      %9909 = vmatpush.bf16.msra.mxu0 %v9406
      %9910 = vmatpush.bf16.msra.mxu0 %v9404
      %9911 = vmatpush.bf16.msra.mxu0 %v9402
      %9912 = vmatpush.bf16.msra.mxu0 %v9400
      %9913 = vmatpush.bf16.msra.mxu0 %v9398
      %9914 = vmatmul.bf16.gmra.mxu0 %v8322
      %v9915 = vpop.f32.mrf.mxu0
      %v9916 = vadd.f32 %v9902, %v9915
      %v9917 = vpop.f32.mrf.mxu0
      %v9918 = vadd.f32 %v9904, %v9917
      %9919 = vdwg.mxu0
      %9920 = vmatpush.bf16.msra.mxu0 %v9428
      %9921 = vmatpush.bf16.msra.mxu0 %v9426
      %9922 = vmatpush.bf16.msra.mxu0 %v9424
      %9923 = vmatpush.bf16.msra.mxu0 %v9422
      %9924 = vmatpush.bf16.msra.mxu0 %v9420
      %9925 = vmatpush.bf16.msra.mxu0 %v9418
      %9926 = vmatpush.bf16.msra.mxu0 %v9416
      %9927 = vmatpush.bf16.msra.mxu0 %v9414
      %9928 = vmatmul.bf16.gmra.mxu0 %v8323
      %v9929 = vpop.f32.mrf.mxu0
      %v9930 = vadd.f32 %v9916, %v9929
      %v9931 = vpop.f32.mrf.mxu0
      %v9932 = vadd.f32 %v9918, %v9931
      %9933 = vdwg.mxu0
      %9934 = vmatpush.bf16.msra.mxu0 %v9444
      %9935 = vmatpush.bf16.msra.mxu0 %v9442
      %9936 = vmatpush.bf16.msra.mxu0 %v9440
      %9937 = vmatpush.bf16.msra.mxu0 %v9438
      %9938 = vmatpush.bf16.msra.mxu0 %v9436
      %9939 = vmatpush.bf16.msra.mxu0 %v9434
      %9940 = vmatpush.bf16.msra.mxu0 %v9432
      %9941 = vmatpush.bf16.msra.mxu0 %v9430
      %9942 = vmatmul.bf16.gmra.mxu0 %v8324
      %v9943 = vpop.f32.mrf.mxu0
      %v9944 = vadd.f32 %v9930, %v9943
      %v9945 = vpop.f32.mrf.mxu0
      %v9946 = vadd.f32 %v9932, %v9945
      %9947 = vdwg.mxu0
      %9948 = vmatpush.bf16.msra.mxu0 %v9460
      %9949 = vmatpush.bf16.msra.mxu0 %v9458
      %9950 = vmatpush.bf16.msra.mxu0 %v9456
      %9951 = vmatpush.bf16.msra.mxu0 %v9454
      %9952 = vmatpush.bf16.msra.mxu0 %v9452
      %9953 = vmatpush.bf16.msra.mxu0 %v9450
      %9954 = vmatpush.bf16.msra.mxu0 %v9448
      %9955 = vmatpush.bf16.msra.mxu0 %v9446
      %9956 = vmatmul.bf16.gmra.mxu0 %v8325
      %v9957 = vpop.f32.mrf.mxu0
      %v9958 = vadd.f32 %v9944, %v9957
      %v9959 = vpop.f32.mrf.mxu0
      %v9960 = vadd.f32 %v9946, %v9959
      %9961 = vdwg.mxu0
      %9962 = vmatpush.bf16.msra.mxu0 %v9476
      %9963 = vmatpush.bf16.msra.mxu0 %v9474
      %9964 = vmatpush.bf16.msra.mxu0 %v9472
      %9965 = vmatpush.bf16.msra.mxu0 %v9470
      %9966 = vmatpush.bf16.msra.mxu0 %v9468
      %9967 = vmatpush.bf16.msra.mxu0 %v9466
      %9968 = vmatpush.bf16.msra.mxu0 %v9464
      %9969 = vmatpush.bf16.msra.mxu0 %v9462
      %9970 = vmatmul.bf16.gmra.mxu0 %v8326
      %v9971 = vpop.f32.mrf.mxu0
      %v9972 = vadd.f32 %v9958, %v9971
      %v9973 = vpop.f32.mrf.mxu0
      %v9974 = vadd.f32 %v9960, %v9973
      %9975 = vdwg.mxu0
      %9976 = vmatpush.bf16.msra.mxu0 %v9492
      %9977 = vmatpush.bf16.msra.mxu0 %v9490
      %9978 = vmatpush.bf16.msra.mxu0 %v9488
      %9979 = vmatpush.bf16.msra.mxu0 %v9486
      %9980 = vmatpush.bf16.msra.mxu0 %v9484
      %9981 = vmatpush.bf16.msra.mxu0 %v9482
      %9982 = vmatpush.bf16.msra.mxu0 %v9480
      %9983 = vmatpush.bf16.msra.mxu0 %v9478
      %9984 = vmatmul.bf16.gmra.mxu0 %v8327
      %v9985 = vpop.f32.mrf.mxu0
      %v9986 = vadd.f32 %v9972, %v9985
      %v9987 = vpop.f32.mrf.mxu0
      %v9988 = vadd.f32 %v9974, %v9987
      %9989 = vdwg.mxu0
      %9990 = vmatpush.bf16.msra.mxu0 %v9508
      %9991 = vmatpush.bf16.msra.mxu0 %v9506
      %9992 = vmatpush.bf16.msra.mxu0 %v9504
      %9993 = vmatpush.bf16.msra.mxu0 %v9502
      %9994 = vmatpush.bf16.msra.mxu0 %v9500
      %9995 = vmatpush.bf16.msra.mxu0 %v9498
      %9996 = vmatpush.bf16.msra.mxu0 %v9496
      %9997 = vmatpush.bf16.msra.mxu0 %v9494
      %9998 = vmatmul.bf16.gmra.mxu0 %v8328
      %v9999 = vpop.f32.mrf.mxu0
      %v10000 = vadd.f32 %v9986, %v9999
      %v10001 = vpop.f32.mrf.mxu0
      %v10002 = vadd.f32 %v9988, %v10001
      %10003 = vdwg.mxu0
      %10004 = vmatpush.bf16.msra.mxu0 %v9524
      %10005 = vmatpush.bf16.msra.mxu0 %v9522
      %10006 = vmatpush.bf16.msra.mxu0 %v9520
      %10007 = vmatpush.bf16.msra.mxu0 %v9518
      %10008 = vmatpush.bf16.msra.mxu0 %v9516
      %10009 = vmatpush.bf16.msra.mxu0 %v9514
      %10010 = vmatpush.bf16.msra.mxu0 %v9512
      %10011 = vmatpush.bf16.msra.mxu0 %v9510
      %10012 = vmatmul.bf16.gmra.mxu0 %v8329
      %v10013 = vpop.f32.mrf.mxu0
      %v10014 = vadd.f32 %v10000, %v10013
      %v10015 = vpop.f32.mrf.mxu0
      %v10016 = vadd.f32 %v10002, %v10015
      %10017 = vdwg.mxu0
      %10018 = vmatpush.bf16.msra.mxu0 %v9540
      %10019 = vmatpush.bf16.msra.mxu0 %v9538
      %10020 = vmatpush.bf16.msra.mxu0 %v9536
      %10021 = vmatpush.bf16.msra.mxu0 %v9534
      %10022 = vmatpush.bf16.msra.mxu0 %v9532
      %10023 = vmatpush.bf16.msra.mxu0 %v9530
      %10024 = vmatpush.bf16.msra.mxu0 %v9528
      %10025 = vmatpush.bf16.msra.mxu0 %v9526
      %10026 = vmatmul.bf16.gmra.mxu0 %v8330
      %v10027 = vpop.f32.mrf.mxu0
      %v10028 = vadd.f32 %v10014, %v10027
      %v10029 = vpop.f32.mrf.mxu0
      %v10030 = vadd.f32 %v10016, %v10029
      %10031 = vdwg.mxu0
      %10032 = vmatpush.bf16.msra.mxu0 %v9556
      %10033 = vmatpush.bf16.msra.mxu0 %v9554
      %10034 = vmatpush.bf16.msra.mxu0 %v9552
      %10035 = vmatpush.bf16.msra.mxu0 %v9550
      %10036 = vmatpush.bf16.msra.mxu0 %v9548
      %10037 = vmatpush.bf16.msra.mxu0 %v9546
      %10038 = vmatpush.bf16.msra.mxu0 %v9544
      %10039 = vmatpush.bf16.msra.mxu0 %v9542
      %10040 = vmatmul.bf16.gmra.mxu0 %v8331
      %v10041 = vpop.f32.mrf.mxu0
      %v10042 = vadd.f32 %v10028, %v10041
      %v10043 = vpop.f32.mrf.mxu0
      %v10044 = vadd.f32 %v10030, %v10043
      %10045 = vdwg.mxu0
      %10046 = vmatpush.bf16.msra.mxu0 %v9572
      %10047 = vmatpush.bf16.msra.mxu0 %v9570
      %10048 = vmatpush.bf16.msra.mxu0 %v9568
      %10049 = vmatpush.bf16.msra.mxu0 %v9566
      %10050 = vmatpush.bf16.msra.mxu0 %v9564
      %10051 = vmatpush.bf16.msra.mxu0 %v9562
      %10052 = vmatpush.bf16.msra.mxu0 %v9560
      %10053 = vmatpush.bf16.msra.mxu0 %v9558
      %10054 = vmatmul.bf16.gmra.mxu0 %v8332
      %v10055 = vpop.f32.mrf.mxu0
      %v10056 = vadd.f32 %v10042, %v10055
      %v10057 = vpop.f32.mrf.mxu0
      %v10058 = vadd.f32 %v10044, %v10057
      %10059 = vdwg.mxu0
      %10060 = vmatpush.bf16.msra.mxu0 %v9588
      %10061 = vmatpush.bf16.msra.mxu0 %v9586
      %10062 = vmatpush.bf16.msra.mxu0 %v9584
      %10063 = vmatpush.bf16.msra.mxu0 %v9582
      %10064 = vmatpush.bf16.msra.mxu0 %v9580
      %10065 = vmatpush.bf16.msra.mxu0 %v9578
      %10066 = vmatpush.bf16.msra.mxu0 %v9576
      %10067 = vmatpush.bf16.msra.mxu0 %v9574
      %10068 = vmatmul.bf16.gmra.mxu0 %v8333
      %v10069 = vpop.f32.mrf.mxu0
      %v10070 = vadd.f32 %v10056, %v10069
      %v10071 = vpop.f32.mrf.mxu0
      %v10072 = vadd.f32 %v10058, %v10071
      %10073 = vdwg.mxu0
      %10074 = vmatpush.bf16.msra.mxu0 %v9604
      %10075 = vmatpush.bf16.msra.mxu0 %v9602
      %10076 = vmatpush.bf16.msra.mxu0 %v9600
      %10077 = vmatpush.bf16.msra.mxu0 %v9598
      %10078 = vmatpush.bf16.msra.mxu0 %v9596
      %10079 = vmatpush.bf16.msra.mxu0 %v9594
      %10080 = vmatpush.bf16.msra.mxu0 %v9592
      %10081 = vmatpush.bf16.msra.mxu0 %v9590
      %10082 = vmatmul.bf16.gmra.mxu0 %v8334
      %v10083 = vpop.f32.mrf.mxu0
      %v10084 = vadd.f32 %v10070, %v10083
      %v10085 = vpop.f32.mrf.mxu0
      %v10086 = vadd.f32 %v10072, %v10085
      %10087 = vdwg.mxu0
      %10088 = vmatpush.bf16.msra.mxu0 %v9620
      %10089 = vmatpush.bf16.msra.mxu0 %v9618
      %10090 = vmatpush.bf16.msra.mxu0 %v9616
      %10091 = vmatpush.bf16.msra.mxu0 %v9614
      %10092 = vmatpush.bf16.msra.mxu0 %v9612
      %10093 = vmatpush.bf16.msra.mxu0 %v9610
      %10094 = vmatpush.bf16.msra.mxu0 %v9608
      %10095 = vmatpush.bf16.msra.mxu0 %v9606
      %10096 = vmatmul.bf16.gmra.mxu0 %v8335
      %v10097 = vpop.f32.mrf.mxu0
      %v10098 = vadd.f32 %v10084, %v10097
      %v10099 = vpop.f32.mrf.mxu0
      %v10100 = vadd.f32 %v10086, %v10099
      %10101 = vdwg.mxu0
      %10102 = vmatpush.bf16.msra.mxu0 %v9381
      %10103 = vmatpush.bf16.msra.mxu0 %v9379
      %10104 = vmatpush.bf16.msra.mxu0 %v9377
      %10105 = vmatpush.bf16.msra.mxu0 %v9375
      %10106 = vmatpush.bf16.msra.mxu0 %v9373
      %10107 = vmatpush.bf16.msra.mxu0 %v9371
      %10108 = vmatpush.bf16.msra.mxu0 %v9369
      %10109 = vmatpush.bf16.msra.mxu0 %v9367
      %10110 = vmatmul.bf16.gmra.mxu0 %v8320
      %v10111 = vpop.f32.mrf.mxu0
      %v10112 = vadd.f32 %v8595, %v10111
      %v10113 = vpop.f32.mrf.mxu0
      %v10114 = vadd.f32 %v8595, %v10113
      %10115 = vdwg.mxu0
      %10116 = vmatpush.bf16.msra.mxu0 %v9397
      %10117 = vmatpush.bf16.msra.mxu0 %v9395
      %10118 = vmatpush.bf16.msra.mxu0 %v9393
      %10119 = vmatpush.bf16.msra.mxu0 %v9391
      %10120 = vmatpush.bf16.msra.mxu0 %v9389
      %10121 = vmatpush.bf16.msra.mxu0 %v9387
      %10122 = vmatpush.bf16.msra.mxu0 %v9385
      %10123 = vmatpush.bf16.msra.mxu0 %v9383
      %10124 = vmatmul.bf16.gmra.mxu0 %v8321
      %v10125 = vpop.f32.mrf.mxu0
      %v10126 = vadd.f32 %v10112, %v10125
      %v10127 = vpop.f32.mrf.mxu0
      %v10128 = vadd.f32 %v10114, %v10127
      %10129 = vdwg.mxu0
      %10130 = vmatpush.bf16.msra.mxu0 %v9413
      %10131 = vmatpush.bf16.msra.mxu0 %v9411
      %10132 = vmatpush.bf16.msra.mxu0 %v9409
      %10133 = vmatpush.bf16.msra.mxu0 %v9407
      %10134 = vmatpush.bf16.msra.mxu0 %v9405
      %10135 = vmatpush.bf16.msra.mxu0 %v9403
      %10136 = vmatpush.bf16.msra.mxu0 %v9401
      %10137 = vmatpush.bf16.msra.mxu0 %v9399
      %10138 = vmatmul.bf16.gmra.mxu0 %v8322
      %v10139 = vpop.f32.mrf.mxu0
      %v10140 = vadd.f32 %v10126, %v10139
      %v10141 = vpop.f32.mrf.mxu0
      %v10142 = vadd.f32 %v10128, %v10141
      %10143 = vdwg.mxu0
      %10144 = vmatpush.bf16.msra.mxu0 %v9429
      %10145 = vmatpush.bf16.msra.mxu0 %v9427
      %10146 = vmatpush.bf16.msra.mxu0 %v9425
      %10147 = vmatpush.bf16.msra.mxu0 %v9423
      %10148 = vmatpush.bf16.msra.mxu0 %v9421
      %10149 = vmatpush.bf16.msra.mxu0 %v9419
      %10150 = vmatpush.bf16.msra.mxu0 %v9417
      %10151 = vmatpush.bf16.msra.mxu0 %v9415
      %10152 = vmatmul.bf16.gmra.mxu0 %v8323
      %v10153 = vpop.f32.mrf.mxu0
      %v10154 = vadd.f32 %v10140, %v10153
      %v10155 = vpop.f32.mrf.mxu0
      %v10156 = vadd.f32 %v10142, %v10155
      %10157 = vdwg.mxu0
      %10158 = vmatpush.bf16.msra.mxu0 %v9445
      %10159 = vmatpush.bf16.msra.mxu0 %v9443
      %10160 = vmatpush.bf16.msra.mxu0 %v9441
      %10161 = vmatpush.bf16.msra.mxu0 %v9439
      %10162 = vmatpush.bf16.msra.mxu0 %v9437
      %10163 = vmatpush.bf16.msra.mxu0 %v9435
      %10164 = vmatpush.bf16.msra.mxu0 %v9433
      %10165 = vmatpush.bf16.msra.mxu0 %v9431
      %10166 = vmatmul.bf16.gmra.mxu0 %v8324
      %v10167 = vpop.f32.mrf.mxu0
      %v10168 = vadd.f32 %v10154, %v10167
      %v10169 = vpop.f32.mrf.mxu0
      %v10170 = vadd.f32 %v10156, %v10169
      %10171 = vdwg.mxu0
      %10172 = vmatpush.bf16.msra.mxu0 %v9461
      %10173 = vmatpush.bf16.msra.mxu0 %v9459
      %10174 = vmatpush.bf16.msra.mxu0 %v9457
      %10175 = vmatpush.bf16.msra.mxu0 %v9455
      %10176 = vmatpush.bf16.msra.mxu0 %v9453
      %10177 = vmatpush.bf16.msra.mxu0 %v9451
      %10178 = vmatpush.bf16.msra.mxu0 %v9449
      %10179 = vmatpush.bf16.msra.mxu0 %v9447
      %10180 = vmatmul.bf16.gmra.mxu0 %v8325
      %v10181 = vpop.f32.mrf.mxu0
      %v10182 = vadd.f32 %v10168, %v10181
      %v10183 = vpop.f32.mrf.mxu0
      %v10184 = vadd.f32 %v10170, %v10183
      %10185 = vdwg.mxu0
      %10186 = vmatpush.bf16.msra.mxu0 %v9477
      %10187 = vmatpush.bf16.msra.mxu0 %v9475
      %10188 = vmatpush.bf16.msra.mxu0 %v9473
      %10189 = vmatpush.bf16.msra.mxu0 %v9471
      %10190 = vmatpush.bf16.msra.mxu0 %v9469
      %10191 = vmatpush.bf16.msra.mxu0 %v9467
      %10192 = vmatpush.bf16.msra.mxu0 %v9465
      %10193 = vmatpush.bf16.msra.mxu0 %v9463
      %10194 = vmatmul.bf16.gmra.mxu0 %v8326
      %v10195 = vpop.f32.mrf.mxu0
      %v10196 = vadd.f32 %v10182, %v10195
      %v10197 = vpop.f32.mrf.mxu0
      %v10198 = vadd.f32 %v10184, %v10197
      %10199 = vdwg.mxu0
      %10200 = vmatpush.bf16.msra.mxu0 %v9493
      %10201 = vmatpush.bf16.msra.mxu0 %v9491
      %10202 = vmatpush.bf16.msra.mxu0 %v9489
      %10203 = vmatpush.bf16.msra.mxu0 %v9487
      %10204 = vmatpush.bf16.msra.mxu0 %v9485
      %10205 = vmatpush.bf16.msra.mxu0 %v9483
      %10206 = vmatpush.bf16.msra.mxu0 %v9481
      %10207 = vmatpush.bf16.msra.mxu0 %v9479
      %10208 = vmatmul.bf16.gmra.mxu0 %v8327
      %v10209 = vpop.f32.mrf.mxu0
      %v10210 = vadd.f32 %v10196, %v10209
      %v10211 = vpop.f32.mrf.mxu0
      %v10212 = vadd.f32 %v10198, %v10211
      %10213 = vdwg.mxu0
      %10214 = vmatpush.bf16.msra.mxu0 %v9509
      %10215 = vmatpush.bf16.msra.mxu0 %v9507
      %10216 = vmatpush.bf16.msra.mxu0 %v9505
      %10217 = vmatpush.bf16.msra.mxu0 %v9503
      %10218 = vmatpush.bf16.msra.mxu0 %v9501
      %10219 = vmatpush.bf16.msra.mxu0 %v9499
      %10220 = vmatpush.bf16.msra.mxu0 %v9497
      %10221 = vmatpush.bf16.msra.mxu0 %v9495
      %10222 = vmatmul.bf16.gmra.mxu0 %v8328
      %v10223 = vpop.f32.mrf.mxu0
      %v10224 = vadd.f32 %v10210, %v10223
      %v10225 = vpop.f32.mrf.mxu0
      %v10226 = vadd.f32 %v10212, %v10225
      %10227 = vdwg.mxu0
      %10228 = vmatpush.bf16.msra.mxu0 %v9525
      %10229 = vmatpush.bf16.msra.mxu0 %v9523
      %10230 = vmatpush.bf16.msra.mxu0 %v9521
      %10231 = vmatpush.bf16.msra.mxu0 %v9519
      %10232 = vmatpush.bf16.msra.mxu0 %v9517
      %10233 = vmatpush.bf16.msra.mxu0 %v9515
      %10234 = vmatpush.bf16.msra.mxu0 %v9513
      %10235 = vmatpush.bf16.msra.mxu0 %v9511
      %10236 = vmatmul.bf16.gmra.mxu0 %v8329
      %v10237 = vpop.f32.mrf.mxu0
      %v10238 = vadd.f32 %v10224, %v10237
      %v10239 = vpop.f32.mrf.mxu0
      %v10240 = vadd.f32 %v10226, %v10239
      %10241 = vdwg.mxu0
      %10242 = vmatpush.bf16.msra.mxu0 %v9541
      %10243 = vmatpush.bf16.msra.mxu0 %v9539
      %10244 = vmatpush.bf16.msra.mxu0 %v9537
      %10245 = vmatpush.bf16.msra.mxu0 %v9535
      %10246 = vmatpush.bf16.msra.mxu0 %v9533
      %10247 = vmatpush.bf16.msra.mxu0 %v9531
      %10248 = vmatpush.bf16.msra.mxu0 %v9529
      %10249 = vmatpush.bf16.msra.mxu0 %v9527
      %10250 = vmatmul.bf16.gmra.mxu0 %v8330
      %v10251 = vpop.f32.mrf.mxu0
      %v10252 = vadd.f32 %v10238, %v10251
      %v10253 = vpop.f32.mrf.mxu0
      %v10254 = vadd.f32 %v10240, %v10253
      %10255 = vdwg.mxu0
      %10256 = vmatpush.bf16.msra.mxu0 %v9557
      %10257 = vmatpush.bf16.msra.mxu0 %v9555
      %10258 = vmatpush.bf16.msra.mxu0 %v9553
      %10259 = vmatpush.bf16.msra.mxu0 %v9551
      %10260 = vmatpush.bf16.msra.mxu0 %v9549
      %10261 = vmatpush.bf16.msra.mxu0 %v9547
      %10262 = vmatpush.bf16.msra.mxu0 %v9545
      %10263 = vmatpush.bf16.msra.mxu0 %v9543
      %10264 = vmatmul.bf16.gmra.mxu0 %v8331
      %v10265 = vpop.f32.mrf.mxu0
      %v10266 = vadd.f32 %v10252, %v10265
      %v10267 = vpop.f32.mrf.mxu0
      %v10268 = vadd.f32 %v10254, %v10267
      %10269 = vdwg.mxu0
      %10270 = vmatpush.bf16.msra.mxu0 %v9573
      %10271 = vmatpush.bf16.msra.mxu0 %v9571
      %10272 = vmatpush.bf16.msra.mxu0 %v9569
      %10273 = vmatpush.bf16.msra.mxu0 %v9567
      %10274 = vmatpush.bf16.msra.mxu0 %v9565
      %10275 = vmatpush.bf16.msra.mxu0 %v9563
      %10276 = vmatpush.bf16.msra.mxu0 %v9561
      %10277 = vmatpush.bf16.msra.mxu0 %v9559
      %10278 = vmatmul.bf16.gmra.mxu0 %v8332
      %v10279 = vpop.f32.mrf.mxu0
      %v10280 = vadd.f32 %v10266, %v10279
      %v10281 = vpop.f32.mrf.mxu0
      %v10282 = vadd.f32 %v10268, %v10281
      %10283 = vdwg.mxu0
      %10284 = vmatpush.bf16.msra.mxu0 %v9589
      %10285 = vmatpush.bf16.msra.mxu0 %v9587
      %10286 = vmatpush.bf16.msra.mxu0 %v9585
      %10287 = vmatpush.bf16.msra.mxu0 %v9583
      %10288 = vmatpush.bf16.msra.mxu0 %v9581
      %10289 = vmatpush.bf16.msra.mxu0 %v9579
      %10290 = vmatpush.bf16.msra.mxu0 %v9577
      %10291 = vmatpush.bf16.msra.mxu0 %v9575
      %10292 = vmatmul.bf16.gmra.mxu0 %v8333
      %v10293 = vpop.f32.mrf.mxu0
      %v10294 = vadd.f32 %v10280, %v10293
      %v10295 = vpop.f32.mrf.mxu0
      %v10296 = vadd.f32 %v10282, %v10295
      %10297 = vdwg.mxu0
      %10298 = vmatpush.bf16.msra.mxu0 %v9605
      %10299 = vmatpush.bf16.msra.mxu0 %v9603
      %10300 = vmatpush.bf16.msra.mxu0 %v9601
      %10301 = vmatpush.bf16.msra.mxu0 %v9599
      %10302 = vmatpush.bf16.msra.mxu0 %v9597
      %10303 = vmatpush.bf16.msra.mxu0 %v9595
      %10304 = vmatpush.bf16.msra.mxu0 %v9593
      %10305 = vmatpush.bf16.msra.mxu0 %v9591
      %10306 = vmatmul.bf16.gmra.mxu0 %v8334
      %v10307 = vpop.f32.mrf.mxu0
      %v10308 = vadd.f32 %v10294, %v10307
      %v10309 = vpop.f32.mrf.mxu0
      %v10310 = vadd.f32 %v10296, %v10309
      %10311 = vdwg.mxu0
      %10312 = vmatpush.bf16.msra.mxu0 %v9621
      %10313 = vmatpush.bf16.msra.mxu0 %v9619
      %10314 = vmatpush.bf16.msra.mxu0 %v9617
      %10315 = vmatpush.bf16.msra.mxu0 %v9615
      %10316 = vmatpush.bf16.msra.mxu0 %v9613
      %10317 = vmatpush.bf16.msra.mxu0 %v9611
      %10318 = vmatpush.bf16.msra.mxu0 %v9609
      %10319 = vmatpush.bf16.msra.mxu0 %v9607
      %10320 = vmatmul.bf16.gmra.mxu0 %v8335
      %v10321 = vpop.f32.mrf.mxu0
      %v10322 = vadd.f32 %v10308, %v10321
      %v10323 = vpop.f32.mrf.mxu0
      %v10324 = vadd.f32 %v10310, %v10323
      %10325 = vdwg.mxu0
      %v10326 = vmax.f32 %v10098, 0.0
      %v10327 = vmax.f32 %v10322, 0.0
      %v10328 = vmax.f32 %v10100, 0.0
      %v10329 = vmax.f32 %v10324, 0.0
      %10330 = vst [vmem:[#allocation15] sm:$0xff] %v10326
      %10331 = vst [vmem:[#allocation15 + $0x8] sm:$0xff] %v10327
      %10332 = vst [vmem:[#allocation15 + $0x10] sm:$0xff] %v10328
      %10333 = vst [vmem:[#allocation15 + $0x18] sm:$0xff] %v10329
      %v10334 = vpack.c.bf16 %v10328, %v10326
      %v10335 = vpack.c.bf16 %v10329, %v10327
      %v10336 = vld [vmem:[#allocation12] sm:$0xf]
      %v10337 = vld [vmem:[#allocation12 + $0x4] sm:$0xf]
      %v10338 = vld [vmem:[#allocation12 + $0x8] sm:$0xf]
      %v10339 = vld [vmem:[#allocation12 + $0xc] sm:$0xf]
      %v10340 = vld [vmem:[#allocation12 + $0x10] sm:$0xf]
      %v10341 = vld [vmem:[#allocation12 + $0x14] sm:$0xf]
      %v10342 = vld [vmem:[#allocation12 + $0x18] sm:$0xf]
      %v10343 = vld [vmem:[#allocation12 + $0x1c] sm:$0xf]
      %v10344 = vld [vmem:[#allocation12 + $0x20] sm:$0xf]
      %v10345 = vld [vmem:[#allocation12 + $0x24] sm:$0xf]
      %v10346 = vld [vmem:[#allocation12 + $0x28] sm:$0xf]
      %v10347 = vld [vmem:[#allocation12 + $0x2c] sm:$0xf]
      %v10348 = vld [vmem:[#allocation12 + $0x30] sm:$0xf]
      %v10349 = vld [vmem:[#allocation12 + $0x34] sm:$0xf]
      %v10350 = vld [vmem:[#allocation12 + $0x38] sm:$0xf]
      %v10351 = vld [vmem:[#allocation12 + $0x3c] sm:$0xf]
      %v10352 = vld [vmem:[#allocation12 + $0x40] sm:$0xf]
      %v10353 = vld [vmem:[#allocation12 + $0x44] sm:$0xf]
      %v10354 = vld [vmem:[#allocation12 + $0x48] sm:$0xf]
      %v10355 = vld [vmem:[#allocation12 + $0x4c] sm:$0xf]
      %v10356 = vld [vmem:[#allocation12 + $0x50] sm:$0xf]
      %v10357 = vld [vmem:[#allocation12 + $0x54] sm:$0xf]
      %v10358 = vld [vmem:[#allocation12 + $0x58] sm:$0xf]
      %v10359 = vld [vmem:[#allocation12 + $0x5c] sm:$0xf]
      %v10360 = vld [vmem:[#allocation12 + $0x60] sm:$0xf]
      %v10361 = vld [vmem:[#allocation12 + $0x64] sm:$0xf]
      %v10362 = vld [vmem:[#allocation12 + $0x68] sm:$0xf]
      %v10363 = vld [vmem:[#allocation12 + $0x6c] sm:$0xf]
      %v10364 = vld [vmem:[#allocation12 + $0x70] sm:$0xf]
      %v10365 = vld [vmem:[#allocation12 + $0x74] sm:$0xf]
      %v10366 = vld [vmem:[#allocation12 + $0x78] sm:$0xf]
      %v10367 = vld [vmem:[#allocation12 + $0x7c] sm:$0xf]
      %v10368 = vld [vmem:[#allocation14] sm:$0x1]
      %v10370 = vperm.slane %v10368, 0
      %v10404 = vunpack.c.l.b16 %v10336
      %v10405 = vunpack.c.l.b16 %v10337
      %v10406 = vunpack.c.l.b16 %v10338
      %v10407 = vunpack.c.l.b16 %v10339
      %v10408 = vunpack.c.l.b16 %v10340
      %v10409 = vunpack.c.l.b16 %v10341
      %v10410 = vunpack.c.l.b16 %v10342
      %v10411 = vunpack.c.l.b16 %v10343
      %v10412 = vunpack.c.l.b16 %v10344
      %v10413 = vunpack.c.l.b16 %v10345
      %v10414 = vunpack.c.l.b16 %v10346
      %v10415 = vunpack.c.l.b16 %v10347
      %v10416 = vunpack.c.l.b16 %v10348
      %v10417 = vunpack.c.l.b16 %v10349
      %v10418 = vunpack.c.l.b16 %v10350
      %v10419 = vunpack.c.l.b16 %v10351
      %v10420 = vunpack.c.l.b16 %v10352
      %v10421 = vunpack.c.l.b16 %v10353
      %v10422 = vunpack.c.l.b16 %v10354
      %v10423 = vunpack.c.l.b16 %v10355
      %v10424 = vunpack.c.l.b16 %v10356
      %v10425 = vunpack.c.l.b16 %v10357
      %v10426 = vunpack.c.l.b16 %v10358
      %v10427 = vunpack.c.l.b16 %v10359
      %v10428 = vunpack.c.l.b16 %v10360
      %v10429 = vunpack.c.l.b16 %v10361
      %v10430 = vunpack.c.l.b16 %v10362
      %v10431 = vunpack.c.l.b16 %v10363
      %v10432 = vunpack.c.l.b16 %v10364
      %v10433 = vunpack.c.l.b16 %v10365
      %v10434 = vunpack.c.l.b16 %v10366
      %v10435 = vunpack.c.l.b16 %v10367
      %v10436 = vpack.c.b16 %v10405, %v10404
      %v10437 = vpack.c.b16 %v10407, %v10406
      %v10438 = vpack.c.b16 %v10409, %v10408
      %v10439 = vpack.c.b16 %v10411, %v10410
      %v10440 = vpack.c.b16 %v10413, %v10412
      %v10441 = vpack.c.b16 %v10415, %v10414
      %v10442 = vpack.c.b16 %v10417, %v10416
      %v10443 = vpack.c.b16 %v10419, %v10418
      %v10444 = vpack.c.b16 %v10421, %v10420
      %v10445 = vpack.c.b16 %v10423, %v10422
      %v10446 = vpack.c.b16 %v10425, %v10424
      %v10447 = vpack.c.b16 %v10427, %v10426
      %v10448 = vpack.c.b16 %v10429, %v10428
      %v10449 = vpack.c.b16 %v10431, %v10430
      %v10450 = vpack.c.b16 %v10433, %v10432
      %v10451 = vpack.c.b16 %v10435, %v10434
      %10468 = vmatpush.bf16.msra.mxu0 %v10443
      %10469 = vmatpush.bf16.msra.mxu0 %v10442
      %10470 = vmatpush.bf16.msra.mxu0 %v10441
      %10471 = vmatpush.bf16.msra.mxu0 %v10440
      %10472 = vmatpush.bf16.msra.mxu0 %v10439
      %10473 = vmatpush.bf16.msra.mxu0 %v10438
      %10474 = vmatpush.bf16.msra.mxu0 %v10437
      %10475 = vmatpush.bf16.msra.mxu0 %v10436
      %10476 = vmatmul.bf16.gmra.mxu0 %v10334
      %v10477 = vpop.f32.mrf.mxu0
      %v10478 = vadd.f32 %v10370, %v10477
      %v10479 = vpop.f32.mrf.mxu0
      %v10480 = vadd.f32 %v10370, %v10479
      %10481 = vdwg.mxu0
      %10482 = vmatpush.bf16.msra.mxu0 %v10451
      %10483 = vmatpush.bf16.msra.mxu0 %v10450
      %10484 = vmatpush.bf16.msra.mxu0 %v10449
      %10485 = vmatpush.bf16.msra.mxu0 %v10448
      %10486 = vmatpush.bf16.msra.mxu0 %v10447
      %10487 = vmatpush.bf16.msra.mxu0 %v10446
      %10488 = vmatpush.bf16.msra.mxu0 %v10445
      %10489 = vmatpush.bf16.msra.mxu0 %v10444
      %10490 = vmatmul.bf16.gmra.mxu0 %v10335
      %v10491 = vpop.f32.mrf.mxu0
      %v10492 = vadd.f32 %v10478, %v10491
      %v10493 = vpop.f32.mrf.mxu0
      %v10494 = vadd.f32 %v10480, %v10493
      %10495 = vdwg.mxu0
      %10496 = vst [vmem:[#allocation16] sm:$0xff] %v10492
      %10497 = vst [vmem:[#allocation16 + $0x8] sm:$0xff] %v10494
    $region65: #{tpu_custom_call.1} parent=1 // pred_fallthru
      _
    // Predicated region
    $region66: #{tpu_custom_call.1} parent=1 // pred_check
      _
    $region67: #{tpu_custom_call.1} parent=1 // pred_check_branch
      %10499 = sbr.rel (0) target = $region69
    $region68: #{tpu_custom_call.1} parent=1 // pred_region
      %10501 = vsyncadd [#allocation5], 0
      %s10502 = sshll.u32 [#allocation15], 4
      %s10503 = int_to_ptr.vmem [resolvable:$true] %s10502
      %s10504 = sshll.u32 %s7, 4
      %s10505 = int_to_ptr.hbm [resolvable:$true] %s10504
      %10510 = dma.vmem_to_hbm [thread:$0]  %s10503, 512, %s10505, [#allocation5], 256, 256, 16
    $region69: #{tpu_custom_call.1} parent=1 // pred_fallthru
      _
    // Predicated region
    $region70: #{tpu_custom_call.1} parent=1 // pred_check
      _
    $region71: #{tpu_custom_call.1} parent=1 // pred_check_branch
      %10512 = sbr.rel (0) target = $region73
    $region72: #{tpu_custom_call.1} parent=1 // pred_region
      %10514 = vsyncadd [#allocation17], 0
      %s10515 = sshll.u32 [#allocation16], 4
      %s10516 = int_to_ptr.vmem [resolvable:$true] %s10515
      %s10517 = sshll.u32 %s8, 4
      %s10518 = int_to_ptr.hbm [resolvable:$true] %s10517
      %10523 = dma.vmem_to_hbm [thread:$0]  %s10516, 256, %s10518, [#allocation17], 128, 128, 8
    $region73: #{tpu_custom_call.1} parent=1 // pred_fallthru
      _
    // Predicated region
    $region74: #{tpu_custom_call.1} parent=1 // pred_check
      _
    $region75: #{tpu_custom_call.1} parent=1 // pred_check_branch
      %10525 = sbr.rel (0) target = $region77
    $region76: #{tpu_custom_call.1} parent=1 // pred_region
      %10527 = dma.done [#allocation5], 512
    $region77: #{tpu_custom_call.1} parent=1 // pred_fallthru
      _
    // Predicated region
    $region78: #{tpu_custom_call.1} parent=1 // pred_check
      _
    $region79: #{tpu_custom_call.1} parent=1 // pred_check_branch
      %10529 = sbr.rel (0) target = $region81
    $region80: #{tpu_custom_call.1} parent=1 // pred_region
      %10531 = dma.done [#allocation17], 256
    $region81: #{tpu_custom_call.1} parent=1 // pred_fallthru
      _
    %10532 = vsyncpa [#allocation4], 1
    %10533 = vsyncpa [#allocation7], 1
    %10534 = vsyncpa [#allocation10], 1
    %10535 = vsyncpa [#allocation13], 1
    %10536 = vsyncpa [#allocation5], 1
    %10537 = vsyncpa [#allocation17], 1

</llo_original>
